<compile_context>
chip_gen: v5e
topology: v5e:2x2
jax: 0.10.0
libtpu: 0.0.40
codegen_flags: <defaults>
</compile_context>

<pallas_src>
import functools
import math

import jax
import jax.numpy as jnp
from jax.experimental import pallas as pl
from jax.experimental.pallas import tpu as pltpu


# ---------------------------------------------------------------------------
# Pallas kernels
# ---------------------------------------------------------------------------
def _matmul_bias_kernel(a_ref, w_ref, b_ref, o_ref, *, relu):
    acc = jnp.dot(a_ref[...], w_ref[...], preferred_element_type=jnp.float32)
    acc = acc + b_ref[...]
    if relu:
        acc = jnp.maximum(acc, 0.0)
    o_ref[...] = acc.astype(o_ref.dtype)


def matmul_bias(a, w, b, *, relu=False, tm_max=1024):
    """y = a @ w + b (optionally ReLU), row-tiled Pallas GEMM on the MXU."""
    M, K = a.shape
    K2, N = w.shape
    assert K == K2, (K, K2)
    if M <= tm_max:
        # Single block covering the full array -> no (8,128) alignment constraint,
        # no padding, one grid step.
        TM, grid_m, Mp = M, 1, M
    else:
        # >= 2 grid steps so megacore / dual-TC chips can split the work.
        grid_m = pl.cdiv(M, tm_max)
        TM = (-(-M // grid_m) + 7) // 8 * 8      # ceil(M/grid_m) rounded up to x8
        Mp = TM * grid_m
    a_in = a if Mp == M else jnp.pad(a, ((0, Mp - M), (0, 0)))
    out = pl.pallas_call(
        functools.partial(_matmul_bias_kernel, relu=relu),
        out_shape=jax.ShapeDtypeStruct((Mp, N), jnp.float32),
        grid_spec=pltpu.PrefetchScalarGridSpec(
            num_scalar_prefetch=0,
            grid=(grid_m,),
            in_specs=[
                pl.BlockSpec((TM, K), lambda i: (i, 0)),
                pl.BlockSpec((K, N), lambda i: (0, 0)),
                pl.BlockSpec((1, N), lambda i: (0, 0)),
            ],
            out_specs=pl.BlockSpec((TM, N), lambda i: (i, 0)),
        ),
        compiler_params=pltpu.CompilerParams(
            dimension_semantics=("parallel",)),
    )(a_in, w, b.reshape(1, N))
    return out if Mp == M else out[:M]


def _latent_kernel(h_ref, noise_ref,
                   wfc_ref, bfc_ref,
                   wml_ref, bml_ref,
                   wlat_ref, blat_ref,
                   wdec_ref, bdec_ref,
                   d_ref, z_ref, mean_ref, logvar_ref, *, n_latents):
    """Fused: fc -> (mean, logvar) -> reparameterize -> fc_latent -> fc_dec."""
    h1 = jnp.maximum(
        jnp.dot(h_ref[...], wfc_ref[...], preferred_element_type=jnp.float32)
        + bfc_ref[...], 0.0)
    ml = (jnp.dot(h1, wml_ref[...], preferred_element_type=jnp.float32)
          + bml_ref[...])
    mean = ml[:, :n_latents]
    logvar = ml[:, n_latents:]
    z = noise_ref[...] * jnp.exp(0.5 * logvar) + mean
    d1 = jnp.maximum(
        jnp.dot(z, wlat_ref[...], preferred_element_type=jnp.float32)
        + blat_ref[...], 0.0)
    d2 = jnp.maximum(
        jnp.dot(d1, wdec_ref[...], preferred_element_type=jnp.float32)
        + bdec_ref[...], 0.0)
    d_ref[...] = d2
    z_ref[...] = z
    mean_ref[...] = mean
    logvar_ref[...] = logvar


def latent_block(h, noise, params, n_latents):
    """Single pallas_call for the whole latent MLP + reparameterization."""
    wfc, bfc = params["fc"]              # PyTorch Linear layout: [out, in]
    wmean, bmean = params["fc_mean"]
    wlogvar, blogvar = params["fc_logvar"]
    wlat, blat = params["fc_latent"]
    wdec, bdec = params["fc_dec"]
    # Fuse mean/logvar projections into one GEMM (N = 2*n_latents).
    wml = jnp.concatenate([wmean.T, wlogvar.T], axis=1)      # [256, 2*nl]
    bml = jnp.concatenate([bmean, blogvar])                  # [2*nl]
    B = h.shape[0]
    out_shapes = (
        jax.ShapeDtypeStruct((B, 1024), jnp.float32),        # decoder fc output
        jax.ShapeDtypeStruct((B, n_latents), jnp.float32),   # z
        jax.ShapeDtypeStruct((B, n_latents), jnp.float32),   # z_mean
        jax.ShapeDtypeStruct((B, n_latents), jnp.float32),   # z_logvar
    )
    return pl.pallas_call(
        functools.partial(_latent_kernel, n_latents=n_latents),
        out_shape=out_shapes,
    )(h, noise,
      wfc.T, bfc.reshape(1, -1),
      wml, bml.reshape(1, -1),
      wlat.T, blat.reshape(1, -1),
      wdec.T, bdec.reshape(1, -1))


# ---------------------------------------------------------------------------
# Conv / deconv lowering (glue: data rearrangement only; GEMMs run in Pallas)
# ---------------------------------------------------------------------------
def conv2d_s2_nhwc(x, w, b, *, relu):
    """NHWC Conv2d, k=4, stride=2, pad=1.  w: [Cout, Cin, 4, 4] (PyTorch layout)."""
    B, H, W, Cin = x.shape
    Cout, _, k, _ = w.shape
    OH, OW = H // 2, W // 2
    xp = jnp.pad(x, ((0, 0), (1, 1), (1, 1), (0, 0)))
    cols = []
    for kh in range(k):
        for kw in range(k):
            cols.append(xp[:, kh:kh + 2 * OH:2, kw:kw + 2 * OW:2, :])
    A = jnp.stack(cols, axis=3).reshape(B * OH * OW, k * k * Cin)   # K=(kh,kw,cin)
    Wm = jnp.transpose(w, (2, 3, 1, 0)).reshape(k * k * Cin, Cout)  # matching order
    y = matmul_bias(A, Wm, b, relu=relu)
    return y.reshape(B, OH, OW, Cout)


def _deconv_phase_weight(wt):
    """Build the stacked phase weight [4*Cin, 4*Cout] for ConvTranspose2d(k=4,s=2,p=1).

    wt: PyTorch ConvTranspose2d weight [Cin, Cout, 4, 4].
    K order matches the im2col taps (dh, dw, cin) over a 2x2 window of the padded
    input; column blocks are the 4 output phases p = ph*2 + pw, where phase 0 is the
    odd output index and phase 1 is the even output index (per spatial dim).
      odd  output (2*qi-1):  tap dh=0 -> kernel index 2, tap dh=1 -> 0
      even output (2*qi)  :  tap dh=0 -> kernel index 3, tap dh=1 -> 1
    """
    sel = ((2, 0), (3, 1))   # sel[phase][d]
    rows = []
    for dh in range(2):
        for dw in range(2):
            cols = []
            for ph in range(2):
                for pw in range(2):
                    cols.append(wt[:, :, sel[ph][dh], sel[pw][dw]])  # [Cin, Cout]
            rows.append(jnp.concatenate(cols, axis=1))               # [Cin, 4*Cout]
    return jnp.concatenate(rows, axis=0)                             # [4*Cin, 4*Cout]


def conv_transpose2d_nhwc(x, wt, b, *, relu):
    """NHWC ConvTranspose2d, k=4, stride=2, pad=1, via sub-pixel phase GEMM.

    x: [B, H, W, Cin], wt: [Cin, Cout, 4, 4] (PyTorch layout) -> [B, 2H, 2W, Cout].
    """
    B, H, W, Cin = x.shape
    Cout = wt.shape[1]
    xp = jnp.pad(x, ((0, 0), (1, 1), (1, 1), (0, 0)))        # 1-pixel halo
    # 2x2-window im2col, stride 1, over (H+1) x (W+1) base positions.
    cols = []
    for dh in range(2):
        for dw in range(2):
            cols.append(xp[:, dh:dh + H + 1, dw:dw + W + 1, :])
    A = jnp.stack(cols, axis=3).reshape(B * (H + 1) * (W + 1), 4 * Cin)
    Wm = _deconv_phase_weight(wt)                            # [4*Cin, 4*Cout]
    bm = jnp.tile(b, 4)                                      # bias per phase
    Y = matmul_bias(A, Wm, bm, relu=relu)                    # [M, 4*Cout]
    # Pixel-shuffle the 4 phases: base qi contributes output rows (2*qi-1, 2*qi).
    Y = Y.reshape(B, H + 1, W + 1, 2, 2, Cout)
    Ybig = Y.transpose(0, 1, 3, 2, 4, 5).reshape(B, 2 * (H + 1), 2 * (W + 1), Cout)
    return Ybig[:, 1:2 * H + 1, 1:2 * W + 1, :]


# ---------------------------------------------------------------------------
# Deterministic parameter initialization (PyTorch-default-like uniform)
# ---------------------------------------------------------------------------
def _uniform(key, shape, bound):
    return jax.random.uniform(key, shape, jnp.float32, -bound, bound)


def _linear_params(key, fan_in, fan_out):
    k1, k2 = jax.random.split(key)
    bound = 1.0 / math.sqrt(fan_in)
    return _uniform(k1, (fan_out, fan_in), bound), _uniform(k2, (fan_out,), bound)


def _conv_params(key, cin, cout, k):
    k1, k2 = jax.random.split(key)
    bound = 1.0 / math.sqrt(cin * k * k)
    return _uniform(k1, (cout, cin, k, k), bound), _uniform(k2, (cout,), bound)


def _deconv_params(key, cin, cout, k):
    k1, k2 = jax.random.split(key)
    bound = 1.0 / math.sqrt(cout * k * k)
    # PyTorch ConvTranspose2d weight layout: [in_channels, out_channels, k, k]
    return _uniform(k1, (cin, cout, k, k), bound), _uniform(k2, (cout,), bound)


def init_betavae_params(key, img_channels, n_latents):
    keys = jax.random.split(key, 13)
    p = {}
    # Encoder
    p["conv1"] = _conv_params(keys[0], img_channels, 32, 4)
    p["conv2"] = _conv_params(keys[1], 32, 32, 4)
    p["conv3"] = _conv_params(keys[2], 32, 64, 4)
    p["conv4"] = _conv_params(keys[3], 64, 64, 4)
    p["fc"] = _linear_params(keys[4], 1024, 256)
    p["fc_mean"] = _linear_params(keys[5], 256, n_latents)
    p["fc_logvar"] = _linear_params(keys[6], 256, n_latents)
    # Decoder
    p["fc_latent"] = _linear_params(keys[7], n_latents, 256)
    p["fc_dec"] = _linear_params(keys[8], 256, 1024)
    p["deconv1"] = _deconv_params(keys[9], 64, 64, 4)
    p["deconv2"] = _deconv_params(keys[10], 64, 32, 4)
    p["deconv3"] = _deconv_params(keys[11], 32, 32, 4)
    p["deconv4"] = _deconv_params(keys[12], 32, img_channels, 4)
    return p


# ---------------------------------------------------------------------------
# Forward pass (matches BetaVAE.forward semantics; NCHW at the boundary)
# ---------------------------------------------------------------------------
def betavae_forward(params, x, noise):
    B = x.shape[0]
    n_latents = noise.shape[1]
    # ---- ConvEncoder (NHWC internally) ----
    out = jnp.transpose(x, (0, 2, 3, 1))                            # NCHW -> NHWC
    out = conv2d_s2_nhwc(out, *params["conv1"], relu=True)          # [B,32,32,32]
    out = conv2d_s2_nhwc(out, *params["conv2"], relu=True)          # [B,16,16,32]
    out = conv2d_s2_nhwc(out, *params["conv3"], relu=True)          # [B, 8, 8,64]
    out = conv2d_s2_nhwc(out, *params["conv4"], relu=True)          # [B, 4, 4,64]
    h = jnp.transpose(out, (0, 3, 1, 2)).reshape(B, 1024)           # PyTorch (c,h,w) flatten
    # ---- Fused latent MLP chain + reparameterization (1 Pallas kernel) ----
    d, z, z_mean, z_logvar = latent_block(h, noise, params, n_latents)
    # ---- DeconvDecoder (NHWC internally) ----
    dh = d.reshape(B, 64, 4, 4).transpose(0, 2, 3, 1)               # -> [B,4,4,64]
    dh = conv_transpose2d_nhwc(dh, *params["deconv1"], relu=True)   # [B, 8, 8,64]
    dh = conv_transpose2d_nhwc(dh, *params["deconv2"], relu=True)   # [B,16,16,32]
    dh = conv_transpose2d_nhwc(dh, *params["deconv3"], relu=True)   # [B,32,32,32]
    rec = conv_transpose2d_nhwc(dh, *params["deconv4"], relu=False) # [B,64,64, C]
    recon_x = jnp.transpose(rec, (0, 3, 1, 2))                      # NHWC -> NCHW
    return recon_x, z, z_mean, z_logvar


# ---------------------------------------------------------------------------
# Pure-XLA reference (for numerical validation of the Pallas path)
# ---------------------------------------------------------------------------
def _ref_conv(x, w, b, stride, pad):
    y = jax.lax.conv_general_dilated(
        x, w, window_strides=(stride, stride), padding=[(pad, pad)] * 2,
        dimension_numbers=("NCHW", "OIHW", "NCHW"),
        precision=jax.lax.Precision.HIGHEST)
    return y + b.reshape(1, -1, 1, 1)


def _ref_deconv(x, wt, b, stride, pad):
    k = wt.shape[-1]
    w = jnp.transpose(wt, (1, 0, 2, 3))[:, :, ::-1, ::-1]
    y = jax.lax.conv_general_dilated(
        x, w, window_strides=(1, 1), padding=[(k - 1 - pad, k - 1 - pad)] * 2,
        lhs_dilation=(stride, stride),
        dimension_numbers=("NCHW", "OIHW", "NCHW"),
        precision=jax.lax.Precision.HIGHEST)
    return y + b.reshape(1, -1, 1, 1)


def betavae_forward_ref(params, x, noise):
    B = x.shape[0]
    relu = lambda t: jnp.maximum(t, 0.0)
    out = relu(_ref_conv(x, *params["conv1"], 2, 1))
    out = relu(_ref_conv(out, *params["conv2"], 2, 1))
    out = relu(_ref_conv(out, *params["conv3"], 2, 1))
    out = relu(_ref_conv(out, *params["conv4"], 2, 1))
    out = out.reshape(B, 1024)
    Wfc, bfc = params["fc"]; out = relu(out @ Wfc.T + bfc)
    Wm, bm = params["fc_mean"]; z_mean = out @ Wm.T + bm
    Wl, bl = params["fc_logvar"]; z_logvar = out @ Wl.T + bl
    z = noise * jnp.exp(0.5 * z_logvar) + z_mean
    Wlat, blat = params["fc_latent"]; d = relu(z @ Wlat.T + blat)
    Wd, bd = params["fc_dec"]; d = relu(d @ Wd.T + bd)
    d = d.reshape(B, 64, 4, 4)
    d = relu(_ref_deconv(d, *params["deconv1"], 2, 1))
    d = relu(_ref_deconv(d, *params["deconv2"], 2, 1))
    d = relu(_ref_deconv(d, *params["deconv3"], 2, 1))
    recon = _ref_deconv(d, *params["deconv4"], 2, 1)
    return recon, z, z_mean, z_logvar


if __name__ == "__main__":
    # Architecture requires 64x64 inputs (encoder flattens to 1024 = 64*4*4).
    B, IMG_CHANNELS, N_LATENTS = 2, 3, 8
    key = jax.random.PRNGKey(0)
    k_param, k_x, k_noise = jax.random.split(key, 3)

    params = init_betavae_params(k_param, IMG_CHANNELS, N_LATENTS)
    x = jax.random.uniform(k_x, (B, IMG_CHANNELS, 64, 64), jnp.float32)
    noise = jax.random.normal(k_noise, (B, N_LATENTS), jnp.float32)

    fwd = jax.jit(betavae_forward)
    recon_x, z, z_mean, z_logvar = fwd(params, x, noise)
    jax.block_until_ready((recon_x, z, z_mean, z_logvar))

    assert recon_x.shape == (B, IMG_CHANNELS, 64, 64)
    assert z.shape == (B, N_LATENTS)
    assert z_mean.shape == (B, N_LATENTS)
    assert z_logvar.shape == (B, N_LATENTS)

    # Numerical cross-check against a pure-XLA reference of the same module.
    ref = jax.jit(betavae_forward_ref)(params, x, noise)
    for name, got, want in zip(("recon_x", "z", "z_mean", "z_logvar"),
                               (recon_x, z, z_mean, z_logvar), ref):
        rel = float(jnp.linalg.norm(got - want) / (jnp.linalg.norm(want) + 1e-6))
        assert rel < 3e-2, (name, rel)

    print("KERNEL_OK")
</pallas_src>

<mosaic_0001>
module attributes {stable_mosaic.version = 11 : i64} {
  func.func @_matmul_bias_kernel(%arg0: i32, %arg1: memref<1024x48xf32, #tpu.memory_space<vmem>>, %arg2: memref<48x32xf32, #tpu.memory_space<vmem>>, %arg3: memref<1x32xf32, #tpu.memory_space<vmem>>, %arg4: memref<1024x32xf32, #tpu.memory_space<vmem>>) attributes {dimension_semantics = [#tpu.dimension_semantics<parallel>], iteration_bounds = array<i64: 2>, scalar_prefetch = 0 : i64, scratch_operands = 0 : i64, tpu.core_type = #tpu.core_type<tc>, window_params = [{transform_indices = @transform_0, window_bounds = array<i64: 1024, 48>}, {pipeline_mode = #tpu.pipeline_mode<synchronous>, transform_indices = @transform_1, window_bounds = array<i64: 48, 32>}, {pipeline_mode = #tpu.pipeline_mode<synchronous>, transform_indices = @transform_2, window_bounds = array<i64: 1, 32>}, {transform_indices = @transform_3, window_bounds = array<i64: 1024, 32>}]} {
    %c0 = arith.constant 0 : index
    %c0_0 = arith.constant 0 : index
    %0 = vector.load %arg1[%c0, %c0_0] : memref<1024x48xf32, #tpu.memory_space<vmem>>, vector<1024x48xf32>
    %c0_1 = arith.constant 0 : index
    %c0_2 = arith.constant 0 : index
    %1 = vector.load %arg2[%c0_1, %c0_2] : memref<48x32xf32, #tpu.memory_space<vmem>>, vector<48x32xf32>
    %cst = arith.constant dense<0.000000e+00> : vector<1024x32xf32>
    %2 = tpu.matmul %0, %1, %cst {dimension_numbers = #tpu.dot_dimension_numbers<[1], [0], [0], [1], [0, 0, 1, 1], [], []>} : vector<1024x48xf32>, vector<48x32xf32>, vector<1024x32xf32> -> vector<1024x32xf32>
    %c0_3 = arith.constant 0 : index
    %c0_4 = arith.constant 0 : index
    %3 = vector.load %arg3[%c0_3, %c0_4] : memref<1x32xf32, #tpu.memory_space<vmem>>, vector<1x32xf32>
    %4 = vector.broadcast %3 : vector<1x32xf32> to vector<1024x32xf32>
    %5 = arith.addf %2, %4 : vector<1024x32xf32>
    %cst_5 = arith.constant 0.000000e+00 : f32
    %6 = vector.broadcast %cst_5 : f32 to vector<1024x32xf32>
    %7 = arith.maximumf %5, %6 : vector<1024x32xf32>
    %c0_6 = arith.constant 0 : index
    %c0_7 = arith.constant 0 : index
    %8 = vector.load %arg4[%c0_6, %c0_7] : memref<1024x32xf32, #tpu.memory_space<vmem>>, vector<1024x32xf32>
    tpu.vector_store %arg4[%c0_6, %c0_7], %7 {strides = array<i32>} : memref<1024x32xf32, #tpu.memory_space<vmem>>, vector<1024x32xf32>,
    return
  }
  func.func @transform_0(%arg0: i32) -> (i32, i32) {
    %c0_i32 = arith.constant 0 : i32
    %c0_i32_0 = arith.constant 0 : i32
    return %arg0, %c0_i32 : i32, i32
  }
  func.func @transform_1(%arg0: i32) -> (i32, i32) {
    %c0_i32 = arith.constant 0 : i32
    %c0_i32_0 = arith.constant 0 : i32
    %c0_i32_1 = arith.constant 0 : i32
    return %c0_i32, %c0_i32_0 : i32, i32
  }
  func.func @transform_2(%arg0: i32) -> (i32, i32) {
    %c0_i32 = arith.constant 0 : i32
    %c0_i32_0 = arith.constant 0 : i32
    %c0_i32_1 = arith.constant 0 : i32
    return %c0_i32, %c0_i32_0 : i32, i32
  }
  func.func @transform_3(%arg0: i32) -> (i32, i32) {
    %c0_i32 = arith.constant 0 : i32
    %c0_i32_0 = arith.constant 0 : i32
    return %arg0, %c0_i32 : i32, i32
  }
}

module attributes {stable_mosaic.version = 11 : i64} {
  func.func @_matmul_bias_kernel(%arg0: i32, %arg1: memref<512x512xf32, #tpu.memory_space<vmem>>, %arg2: memref<512x32xf32, #tpu.memory_space<vmem>>, %arg3: memref<1x32xf32, #tpu.memory_space<vmem>>, %arg4: memref<512x32xf32, #tpu.memory_space<vmem>>) attributes {dimension_semantics = [#tpu.dimension_semantics<parallel>], iteration_bounds = array<i64: 1>, scalar_prefetch = 0 : i64, scratch_operands = 0 : i64, tpu.core_type = #tpu.core_type<tc>, window_params = [{transform_indices = @transform_0, window_bounds = array<i64: 512, 512>}, {pipeline_mode = #tpu.pipeline_mode<synchronous>, transform_indices = @transform_1, window_bounds = array<i64: 512, 32>}, {pipeline_mode = #tpu.pipeline_mode<synchronous>, transform_indices = @transform_2, window_bounds = array<i64: 1, 32>}, {transform_indices = @transform_3, window_bounds = array<i64: 512, 32>}]} {
    %c0 = arith.constant 0 : index
    %c0_0 = arith.constant 0 : index
    %0 = vector.load %arg1[%c0, %c0_0] : memref<512x512xf32, #tpu.memory_space<vmem>>, vector<512x512xf32>
    %c0_1 = arith.constant 0 : index
    %c0_2 = arith.constant 0 : index
    %1 = vector.load %arg2[%c0_1, %c0_2] : memref<512x32xf32, #tpu.memory_space<vmem>>, vector<512x32xf32>
    %cst = arith.constant dense<0.000000e+00> : vector<512x32xf32>
    %2 = tpu.matmul %0, %1, %cst {dimension_numbers = #tpu.dot_dimension_numbers<[1], [0], [0], [1], [0, 0, 1, 1], [], []>} : vector<512x512xf32>, vector<512x32xf32>, vector<512x32xf32> -> vector<512x32xf32>
    %c0_3 = arith.constant 0 : index
    %c0_4 = arith.constant 0 : index
    %3 = vector.load %arg3[%c0_3, %c0_4] : memref<1x32xf32, #tpu.memory_space<vmem>>, vector<1x32xf32>
    %4 = vector.broadcast %3 : vector<1x32xf32> to vector<512x32xf32>
    %5 = arith.addf %2, %4 : vector<512x32xf32>
    %cst_5 = arith.constant 0.000000e+00 : f32
    %6 = vector.broadcast %cst_5 : f32 to vector<512x32xf32>
    %7 = arith.maximumf %5, %6 : vector<512x32xf32>
    %c0_6 = arith.constant 0 : index
    %c0_7 = arith.constant 0 : index
    %8 = vector.load %arg4[%c0_6, %c0_7] : memref<512x32xf32, #tpu.memory_space<vmem>>, vector<512x32xf32>
    tpu.vector_store %arg4[%c0_6, %c0_7], %7 {strides = array<i32>} : memref<512x32xf32, #tpu.memory_space<vmem>>, vector<512x32xf32>,
    return
  }
  func.func @transform_0(%arg0: i32) -> (i32, i32) {
    %c0_i32 = arith.constant 0 : i32
    %c0_i32_0 = arith.constant 0 : i32
    return %arg0, %c0_i32 : i32, i32
  }
  func.func @transform_1(%arg0: i32) -> (i32, i32) {
    %c0_i32 = arith.constant 0 : i32
    %c0_i32_0 = arith.constant 0 : i32
    %c0_i32_1 = arith.constant 0 : i32
    return %c0_i32, %c0_i32_0 : i32, i32
  }
  func.func @transform_2(%arg0: i32) -> (i32, i32) {
    %c0_i32 = arith.constant 0 : i32
    %c0_i32_0 = arith.constant 0 : i32
    %c0_i32_1 = arith.constant 0 : i32
    return %c0_i32, %c0_i32_0 : i32, i32
  }
  func.func @transform_3(%arg0: i32) -> (i32, i32) {
    %c0_i32 = arith.constant 0 : i32
    %c0_i32_0 = arith.constant 0 : i32
    return %arg0, %c0_i32 : i32, i32
  }
}

module attributes {stable_mosaic.version = 11 : i64} {
  func.func @_matmul_bias_kernel(%arg0: i32, %arg1: memref<128x512xf32, #tpu.memory_space<vmem>>, %arg2: memref<512x64xf32, #tpu.memory_space<vmem>>, %arg3: memref<1x64xf32, #tpu.memory_space<vmem>>, %arg4: memref<128x64xf32, #tpu.memory_space<vmem>>) attributes {dimension_semantics = [#tpu.dimension_semantics<parallel>], iteration_bounds = array<i64: 1>, scalar_prefetch = 0 : i64, scratch_operands = 0 : i64, tpu.core_type = #tpu.core_type<tc>, window_params = [{transform_indices = @transform_0, window_bounds = array<i64: 128, 512>}, {pipeline_mode = #tpu.pipeline_mode<synchronous>, transform_indices = @transform_1, window_bounds = array<i64: 512, 64>}, {pipeline_mode = #tpu.pipeline_mode<synchronous>, transform_indices = @transform_2, window_bounds = array<i64: 1, 64>}, {transform_indices = @transform_3, window_bounds = array<i64: 128, 64>}]} {
    %c0 = arith.constant 0 : index
    %c0_0 = arith.constant 0 : index
    %0 = vector.load %arg1[%c0, %c0_0] : memref<128x512xf32, #tpu.memory_space<vmem>>, vector<128x512xf32>
    %c0_1 = arith.constant 0 : index
    %c0_2 = arith.constant 0 : index
    %1 = vector.load %arg2[%c0_1, %c0_2] : memref<512x64xf32, #tpu.memory_space<vmem>>, vector<512x64xf32>
    %cst = arith.constant dense<0.000000e+00> : vector<128x64xf32>
    %2 = tpu.matmul %0, %1, %cst {dimension_numbers = #tpu.dot_dimension_numbers<[1], [0], [0], [1], [0, 0, 1, 1], [], []>} : vector<128x512xf32>, vector<512x64xf32>, vector<128x64xf32> -> vector<128x64xf32>
    %c0_3 = arith.constant 0 : index
    %c0_4 = arith.constant 0 : index
    %3 = vector.load %arg3[%c0_3, %c0_4] : memref<1x64xf32, #tpu.memory_space<vmem>>, vector<1x64xf32>
    %4 = vector.broadcast %3 : vector<1x64xf32> to vector<128x64xf32>
    %5 = arith.addf %2, %4 : vector<128x64xf32>
    %cst_5 = arith.constant 0.000000e+00 : f32
    %6 = vector.broadcast %cst_5 : f32 to vector<128x64xf32>
    %7 = arith.maximumf %5, %6 : vector<128x64xf32>
    %c0_6 = arith.constant 0 : index
    %c0_7 = arith.constant 0 : index
    %8 = vector.load %arg4[%c0_6, %c0_7] : memref<128x64xf32, #tpu.memory_space<vmem>>, vector<128x64xf32>
    tpu.vector_store %arg4[%c0_6, %c0_7], %7 {strides = array<i32>} : memref<128x64xf32, #tpu.memory_space<vmem>>, vector<128x64xf32>,
    return
  }
  func.func @transform_0(%arg0: i32) -> (i32, i32) {
    %c0_i32 = arith.constant 0 : i32
    %c0_i32_0 = arith.constant 0 : i32
    return %arg0, %c0_i32 : i32, i32
  }
  func.func @transform_1(%arg0: i32) -> (i32, i32) {
    %c0_i32 = arith.constant 0 : i32
    %c0_i32_0 = arith.constant 0 : i32
    %c0_i32_1 = arith.constant 0 : i32
    return %c0_i32, %c0_i32_0 : i32, i32
  }
  func.func @transform_2(%arg0: i32) -> (i32, i32) {
    %c0_i32 = arith.constant 0 : i32
    %c0_i32_0 = arith.constant 0 : i32
    %c0_i32_1 = arith.constant 0 : i32
    return %c0_i32, %c0_i32_0 : i32, i32
  }
  func.func @transform_3(%arg0: i32) -> (i32, i32) {
    %c0_i32 = arith.constant 0 : i32
    %c0_i32_0 = arith.constant 0 : i32
    return %arg0, %c0_i32 : i32, i32
  }
}

module attributes {stable_mosaic.version = 11 : i64} {
  func.func @_matmul_bias_kernel(%arg0: i32, %arg1: memref<32x1024xf32, #tpu.memory_space<vmem>>, %arg2: memref<1024x64xf32, #tpu.memory_space<vmem>>, %arg3: memref<1x64xf32, #tpu.memory_space<vmem>>, %arg4: memref<32x64xf32, #tpu.memory_space<vmem>>) attributes {dimension_semantics = [#tpu.dimension_semantics<parallel>], iteration_bounds = array<i64: 1>, scalar_prefetch = 0 : i64, scratch_operands = 0 : i64, tpu.core_type = #tpu.core_type<tc>, window_params = [{transform_indices = @transform_0, window_bounds = array<i64: 32, 1024>}, {pipeline_mode = #tpu.pipeline_mode<synchronous>, transform_indices = @transform_1, window_bounds = array<i64: 1024, 64>}, {pipeline_mode = #tpu.pipeline_mode<synchronous>, transform_indices = @transform_2, window_bounds = array<i64: 1, 64>}, {transform_indices = @transform_3, window_bounds = array<i64: 32, 64>}]} {
    %c0 = arith.constant 0 : index
    %c0_0 = arith.constant 0 : index
    %0 = vector.load %arg1[%c0, %c0_0] : memref<32x1024xf32, #tpu.memory_space<vmem>>, vector<32x1024xf32>
    %c0_1 = arith.constant 0 : index
    %c0_2 = arith.constant 0 : index
    %1 = vector.load %arg2[%c0_1, %c0_2] : memref<1024x64xf32, #tpu.memory_space<vmem>>, vector<1024x64xf32>
    %cst = arith.constant dense<0.000000e+00> : vector<32x64xf32>
    %2 = tpu.matmul %0, %1, %cst {dimension_numbers = #tpu.dot_dimension_numbers<[1], [0], [0], [1], [0, 0, 1, 1], [], []>} : vector<32x1024xf32>, vector<1024x64xf32>, vector<32x64xf32> -> vector<32x64xf32>
    %c0_3 = arith.constant 0 : index
    %c0_4 = arith.constant 0 : index
    %3 = vector.load %arg3[%c0_3, %c0_4] : memref<1x64xf32, #tpu.memory_space<vmem>>, vector<1x64xf32>
    %4 = vector.broadcast %3 : vector<1x64xf32> to vector<32x64xf32>
    %5 = arith.addf %2, %4 : vector<32x64xf32>
    %cst_5 = arith.constant 0.000000e+00 : f32
    %6 = vector.broadcast %cst_5 : f32 to vector<32x64xf32>
    %7 = arith.maximumf %5, %6 : vector<32x64xf32>
    %c0_6 = arith.constant 0 : index
    %c0_7 = arith.constant 0 : index
    %8 = vector.load %arg4[%c0_6, %c0_7] : memref<32x64xf32, #tpu.memory_space<vmem>>, vector<32x64xf32>
    tpu.vector_store %arg4[%c0_6, %c0_7], %7 {strides = array<i32>} : memref<32x64xf32, #tpu.memory_space<vmem>>, vector<32x64xf32>,
    return
  }
  func.func @transform_0(%arg0: i32) -> (i32, i32) {
    %c0_i32 = arith.constant 0 : i32
    %c0_i32_0 = arith.constant 0 : i32
    return %arg0, %c0_i32 : i32, i32
  }
  func.func @transform_1(%arg0: i32) -> (i32, i32) {
    %c0_i32 = arith.constant 0 : i32
    %c0_i32_0 = arith.constant 0 : i32
    %c0_i32_1 = arith.constant 0 : i32
    return %c0_i32, %c0_i32_0 : i32, i32
  }
  func.func @transform_2(%arg0: i32) -> (i32, i32) {
    %c0_i32 = arith.constant 0 : i32
    %c0_i32_0 = arith.constant 0 : i32
    %c0_i32_1 = arith.constant 0 : i32
    return %c0_i32, %c0_i32_0 : i32, i32
  }
  func.func @transform_3(%arg0: i32) -> (i32, i32) {
    %c0_i32 = arith.constant 0 : i32
    %c0_i32_0 = arith.constant 0 : i32
    return %arg0, %c0_i32 : i32, i32
  }
}

module attributes {stable_mosaic.version = 11 : i64} {
  func.func @_latent_kernel(%arg0: memref<2x1024xf32, #tpu.memory_space<vmem>>, %arg1: memref<2x8xf32, #tpu.memory_space<vmem>>, %arg2: memref<1024x256xf32, #tpu.memory_space<vmem>>, %arg3: memref<1x256xf32, #tpu.memory_space<vmem>>, %arg4: memref<256x16xf32, #tpu.memory_space<vmem>>, %arg5: memref<1x16xf32, #tpu.memory_space<vmem>>, %arg6: memref<8x256xf32, #tpu.memory_space<vmem>>, %arg7: memref<1x256xf32, #tpu.memory_space<vmem>>, %arg8: memref<256x1024xf32, #tpu.memory_space<vmem>>, %arg9: memref<1x1024xf32, #tpu.memory_space<vmem>>, %arg10: memref<2x1024xf32, #tpu.memory_space<vmem>>, %arg11: memref<2x8xf32, #tpu.memory_space<vmem>>, %arg12: memref<2x8xf32, #tpu.memory_space<vmem>>, %arg13: memref<2x8xf32, #tpu.memory_space<vmem>>) attributes {dimension_semantics = [], scalar_prefetch = 0 : i64, scratch_operands = 0 : i64, tpu.core_type = #tpu.core_type<tc>} {
    %c0 = arith.constant 0 : index
    %c0_0 = arith.constant 0 : index
    %0 = vector.load %arg0[%c0, %c0_0] : memref<2x1024xf32, #tpu.memory_space<vmem>>, vector<2x1024xf32>
    %c0_1 = arith.constant 0 : index
    %c0_2 = arith.constant 0 : index
    %1 = vector.load %arg2[%c0_1, %c0_2] : memref<1024x256xf32, #tpu.memory_space<vmem>>, vector<1024x256xf32>
    %cst = arith.constant dense<0.000000e+00> : vector<2x256xf32>
    %2 = tpu.matmul %0, %1, %cst {dimension_numbers = #tpu.dot_dimension_numbers<[1], [0], [0], [1], [0, 0, 1, 1], [], []>} : vector<2x1024xf32>, vector<1024x256xf32>, vector<2x256xf32> -> vector<2x256xf32>
    %c0_3 = arith.constant 0 : index
    %c0_4 = arith.constant 0 : index
    %3 = vector.load %arg3[%c0_3, %c0_4] : memref<1x256xf32, #tpu.memory_space<vmem>>, vector<1x256xf32>
    %4 = vector.broadcast %3 : vector<1x256xf32> to vector<2x256xf32>
    %5 = arith.addf %2, %4 : vector<2x256xf32>
    %cst_5 = arith.constant 0.000000e+00 : f32
    %6 = vector.broadcast %cst_5 : f32 to vector<2x256xf32>
    %7 = arith.maximumf %5, %6 : vector<2x256xf32>
    %c0_6 = arith.constant 0 : index
    %c0_7 = arith.constant 0 : index
    %8 = vector.load %arg4[%c0_6, %c0_7] : memref<256x16xf32, #tpu.memory_space<vmem>>, vector<256x16xf32>
    %cst_8 = arith.constant dense<0.000000e+00> : vector<2x16xf32>
    %9 = tpu.matmul %7, %8, %cst_8 {dimension_numbers = #tpu.dot_dimension_numbers<[1], [0], [0], [1], [0, 0, 1, 1], [], []>} : vector<2x256xf32>, vector<256x16xf32>, vector<2x16xf32> -> vector<2x16xf32>
    %c0_9 = arith.constant 0 : index
    %c0_10 = arith.constant 0 : index
    %10 = vector.load %arg5[%c0_9, %c0_10] : memref<1x16xf32, #tpu.memory_space<vmem>>, vector<1x16xf32>
    %11 = vector.broadcast %10 : vector<1x16xf32> to vector<2x16xf32>
    %12 = arith.addf %9, %11 : vector<2x16xf32>
    %13 = vector.extract_strided_slice %12 {offsets = [0, 0], sizes = [2, 8], strides = [1, 1]} : vector<2x16xf32> to vector<2x8xf32>
    %14 = vector.extract_strided_slice %12 {offsets = [0, 8], sizes = [2, 8], strides = [1, 1]} : vector<2x16xf32> to vector<2x8xf32>
    %c0_11 = arith.constant 0 : index
    %c0_12 = arith.constant 0 : index
    %15 = vector.load %arg1[%c0_11, %c0_12] : memref<2x8xf32, #tpu.memory_space<vmem>>, vector<2x8xf32>
    %cst_13 = arith.constant 5.000000e-01 : f32
    %16 = vector.broadcast %cst_13 : f32 to vector<2x8xf32>
    %17 = arith.mulf %16, %14 : vector<2x8xf32>
    %18 = math.exp %17 : vector<2x8xf32>
    %19 = arith.mulf %15, %18 : vector<2x8xf32>
    %20 = arith.addf %19, %13 : vector<2x8xf32>
    %c0_14 = arith.constant 0 : index
    %c0_15 = arith.constant 0 : index
    %21 = vector.load %arg6[%c0_14, %c0_15] : memref<8x256xf32, #tpu.memory_space<vmem>>, vector<8x256xf32>
    %cst_16 = arith.constant dense<0.000000e+00> : vector<2x256xf32>
    %22 = tpu.matmul %20, %21, %cst_16 {dimension_numbers = #tpu.dot_dimension_numbers<[1], [0], [0], [1], [0, 0, 1, 1], [], []>} : vector<2x8xf32>, vector<8x256xf32>, vector<2x256xf32> -> vector<2x256xf32>
    %c0_17 = arith.constant 0 : index
    %c0_18 = arith.constant 0 : index
    %23 = vector.load %arg7[%c0_17, %c0_18] : memref<1x256xf32, #tpu.memory_space<vmem>>, vector<1x256xf32>
    %24 = vector.broadcast %23 : vector<1x256xf32> to vector<2x256xf32>
    %25 = arith.addf %22, %24 : vector<2x256xf32>
    %cst_19 = arith.constant 0.000000e+00 : f32
    %26 = vector.broadcast %cst_19 : f32 to vector<2x256xf32>
    %27 = arith.maximumf %25, %26 : vector<2x256xf32>
    %c0_20 = arith.constant 0 : index
    %c0_21 = arith.constant 0 : index
    %28 = vector.load %arg8[%c0_20, %c0_21] : memref<256x1024xf32, #tpu.memory_space<vmem>>, vector<256x1024xf32>
    %cst_22 = arith.constant dense<0.000000e+00> : vector<2x1024xf32>
    %29 = tpu.matmul %27, %28, %cst_22 {dimension_numbers = #tpu.dot_dimension_numbers<[1], [0], [0], [1], [0, 0, 1, 1], [], []>} : vector<2x256xf32>, vector<256x1024xf32>, vector<2x1024xf32> -> vector<2x1024xf32>
    %c0_23 = arith.constant 0 : index
    %c0_24 = arith.constant 0 : index
    %30 = vector.load %arg9[%c0_23, %c0_24] : memref<1x1024xf32, #tpu.memory_space<vmem>>, vector<1x1024xf32>
    %31 = vector.broadcast %30 : vector<1x1024xf32> to vector<2x1024xf32>
    %32 = arith.addf %29, %31 : vector<2x1024xf32>
    %cst_25 = arith.constant 0.000000e+00 : f32
    %33 = vector.broadcast %cst_25 : f32 to vector<2x1024xf32>
    %34 = arith.maximumf %32, %33 : vector<2x1024xf32>
    %c0_26 = arith.constant 0 : index
    %c0_27 = arith.constant 0 : index
    %35 = vector.load %arg10[%c0_26, %c0_27] : memref<2x1024xf32, #tpu.memory_space<vmem>>, vector<2x1024xf32>
    tpu.vector_store %arg10[%c0_26, %c0_27], %34 {strides = array<i32>} : memref<2x1024xf32, #tpu.memory_space<vmem>>, vector<2x1024xf32>,
    %c0_28 = arith.constant 0 : index
    %c0_29 = arith.constant 0 : index
    %36 = vector.load %arg11[%c0_28, %c0_29] : memref<2x8xf32, #tpu.memory_space<vmem>>, vector<2x8xf32>
    tpu.vector_store %arg11[%c0_28, %c0_29], %20 {strides = array<i32>} : memref<2x8xf32, #tpu.memory_space<vmem>>, vector<2x8xf32>,
    %c0_30 = arith.constant 0 : index
    %c0_31 = arith.constant 0 : index
    %37 = vector.load %arg12[%c0_30, %c0_31] : memref<2x8xf32, #tpu.memory_space<vmem>>, vector<2x8xf32>
    tpu.vector_store %arg12[%c0_30, %c0_31], %13 {strides = array<i32>} : memref<2x8xf32, #tpu.memory_space<vmem>>, vector<2x8xf32>,
    %c0_32 = arith.constant 0 : index
    %c0_33 = arith.constant 0 : index
    %38 = vector.load %arg13[%c0_32, %c0_33] : memref<2x8xf32, #tpu.memory_space<vmem>>, vector<2x8xf32>
    tpu.vector_store %arg13[%c0_32, %c0_33], %14 {strides = array<i32>} : memref<2x8xf32, #tpu.memory_space<vmem>>, vector<2x8xf32>,
    return
  }
}

module attributes {stable_mosaic.version = 11 : i64} {
  func.func @_matmul_bias_kernel(%arg0: i32, %arg1: memref<50x256xf32, #tpu.memory_space<vmem>>, %arg2: memref<256x256xf32, #tpu.memory_space<vmem>>, %arg3: memref<1x256xf32, #tpu.memory_space<vmem>>, %arg4: memref<50x256xf32, #tpu.memory_space<vmem>>) attributes {dimension_semantics = [#tpu.dimension_semantics<parallel>], iteration_bounds = array<i64: 1>, scalar_prefetch = 0 : i64, scratch_operands = 0 : i64, tpu.core_type = #tpu.core_type<tc>, window_params = [{transform_indices = @transform_0, window_bounds = array<i64: 50, 256>}, {pipeline_mode = #tpu.pipeline_mode<synchronous>, transform_indices = @transform_1, window_bounds = array<i64: 256, 256>}, {pipeline_mode = #tpu.pipeline_mode<synchronous>, transform_indices = @transform_2, window_bounds = array<i64: 1, 256>}, {transform_indices = @transform_3, window_bounds = array<i64: 50, 256>}]} {
    %c0 = arith.constant 0 : index
    %c0_0 = arith.constant 0 : index
    %0 = vector.load %arg1[%c0, %c0_0] : memref<50x256xf32, #tpu.memory_space<vmem>>, vector<50x256xf32>
    %c0_1 = arith.constant 0 : index
    %c0_2 = arith.constant 0 : index
    %1 = vector.load %arg2[%c0_1, %c0_2] : memref<256x256xf32, #tpu.memory_space<vmem>>, vector<256x256xf32>
    %cst = arith.constant dense<0.000000e+00> : vector<50x256xf32>
    %2 = tpu.matmul %0, %1, %cst {dimension_numbers = #tpu.dot_dimension_numbers<[1], [0], [0], [1], [0, 0, 1, 1], [], []>} : vector<50x256xf32>, vector<256x256xf32>, vector<50x256xf32> -> vector<50x256xf32>
    %c0_3 = arith.constant 0 : index
    %c0_4 = arith.constant 0 : index
    %3 = vector.load %arg3[%c0_3, %c0_4] : memref<1x256xf32, #tpu.memory_space<vmem>>, vector<1x256xf32>
    %4 = vector.broadcast %3 : vector<1x256xf32> to vector<50x256xf32>
    %5 = arith.addf %2, %4 : vector<50x256xf32>
    %cst_5 = arith.constant 0.000000e+00 : f32
    %6 = vector.broadcast %cst_5 : f32 to vector<50x256xf32>
    %7 = arith.maximumf %5, %6 : vector<50x256xf32>
    %c0_6 = arith.constant 0 : index
    %c0_7 = arith.constant 0 : index
    %8 = vector.load %arg4[%c0_6, %c0_7] : memref<50x256xf32, #tpu.memory_space<vmem>>, vector<50x256xf32>
    tpu.vector_store %arg4[%c0_6, %c0_7], %7 {strides = array<i32>} : memref<50x256xf32, #tpu.memory_space<vmem>>, vector<50x256xf32>,
    return
  }
  func.func @transform_0(%arg0: i32) -> (i32, i32) {
    %c0_i32 = arith.constant 0 : i32
    %c0_i32_0 = arith.constant 0 : i32
    return %arg0, %c0_i32 : i32, i32
  }
  func.func @transform_1(%arg0: i32) -> (i32, i32) {
    %c0_i32 = arith.constant 0 : i32
    %c0_i32_0 = arith.constant 0 : i32
    %c0_i32_1 = arith.constant 0 : i32
    return %c0_i32, %c0_i32_0 : i32, i32
  }
  func.func @transform_2(%arg0: i32) -> (i32, i32) {
    %c0_i32 = arith.constant 0 : i32
    %c0_i32_0 = arith.constant 0 : i32
    %c0_i32_1 = arith.constant 0 : i32
    return %c0_i32, %c0_i32_0 : i32, i32
  }
  func.func @transform_3(%arg0: i32) -> (i32, i32) {
    %c0_i32 = arith.constant 0 : i32
    %c0_i32_0 = arith.constant 0 : i32
    return %arg0, %c0_i32 : i32, i32
  }
}

module attributes {stable_mosaic.version = 11 : i64} {
  func.func @_matmul_bias_kernel(%arg0: i32, %arg1: memref<162x256xf32, #tpu.memory_space<vmem>>, %arg2: memref<256x128xf32, #tpu.memory_space<vmem>>, %arg3: memref<1x128xf32, #tpu.memory_space<vmem>>, %arg4: memref<162x128xf32, #tpu.memory_space<vmem>>) attributes {dimension_semantics = [#tpu.dimension_semantics<parallel>], iteration_bounds = array<i64: 1>, scalar_prefetch = 0 : i64, scratch_operands = 0 : i64, tpu.core_type = #tpu.core_type<tc>, window_params = [{transform_indices = @transform_0, window_bounds = array<i64: 162, 256>}, {pipeline_mode = #tpu.pipeline_mode<synchronous>, transform_indices = @transform_1, window_bounds = array<i64: 256, 128>}, {pipeline_mode = #tpu.pipeline_mode<synchronous>, transform_indices = @transform_2, window_bounds = array<i64: 1, 128>}, {transform_indices = @transform_3, window_bounds = array<i64: 162, 128>}]} {
    %c0 = arith.constant 0 : index
    %c0_0 = arith.constant 0 : index
    %0 = vector.load %arg1[%c0, %c0_0] : memref<162x256xf32, #tpu.memory_space<vmem>>, vector<162x256xf32>
    %c0_1 = arith.constant 0 : index
    %c0_2 = arith.constant 0 : index
    %1 = vector.load %arg2[%c0_1, %c0_2] : memref<256x128xf32, #tpu.memory_space<vmem>>, vector<256x128xf32>
    %cst = arith.constant dense<0.000000e+00> : vector<162x128xf32>
    %2 = tpu.matmul %0, %1, %cst {dimension_numbers = #tpu.dot_dimension_numbers<[1], [0], [0], [1], [0, 0, 1, 1], [], []>} : vector<162x256xf32>, vector<256x128xf32>, vector<162x128xf32> -> vector<162x128xf32>
    %c0_3 = arith.constant 0 : index
    %c0_4 = arith.constant 0 : index
    %3 = vector.load %arg3[%c0_3, %c0_4] : memref<1x128xf32, #tpu.memory_space<vmem>>, vector<1x128xf32>
    %4 = vector.broadcast %3 : vector<1x128xf32> to vector<162x128xf32>
    %5 = arith.addf %2, %4 : vector<162x128xf32>
    %cst_5 = arith.constant 0.000000e+00 : f32
    %6 = vector.broadcast %cst_5 : f32 to vector<162x128xf32>
    %7 = arith.maximumf %5, %6 : vector<162x128xf32>
    %c0_6 = arith.constant 0 : index
    %c0_7 = arith.constant 0 : index
    %8 = vector.load %arg4[%c0_6, %c0_7] : memref<162x128xf32, #tpu.memory_space<vmem>>, vector<162x128xf32>
    tpu.vector_store %arg4[%c0_6, %c0_7], %7 {strides = array<i32>} : memref<162x128xf32, #tpu.memory_space<vmem>>, vector<162x128xf32>,
    return
  }
  func.func @transform_0(%arg0: i32) -> (i32, i32) {
    %c0_i32 = arith.constant 0 : i32
    %c0_i32_0 = arith.constant 0 : i32
    return %arg0, %c0_i32 : i32, i32
  }
  func.func @transform_1(%arg0: i32) -> (i32, i32) {
    %c0_i32 = arith.constant 0 : i32
    %c0_i32_0 = arith.constant 0 : i32
    %c0_i32_1 = arith.constant 0 : i32
    return %c0_i32, %c0_i32_0 : i32, i32
  }
  func.func @transform_2(%arg0: i32) -> (i32, i32) {
    %c0_i32 = arith.constant 0 : i32
    %c0_i32_0 = arith.constant 0 : i32
    %c0_i32_1 = arith.constant 0 : i32
    return %c0_i32, %c0_i32_0 : i32, i32
  }
  func.func @transform_3(%arg0: i32) -> (i32, i32) {
    %c0_i32 = arith.constant 0 : i32
    %c0_i32_0 = arith.constant 0 : i32
    return %arg0, %c0_i32 : i32, i32
  }
}

module attributes {stable_mosaic.version = 11 : i64} {
  func.func @_matmul_bias_kernel(%arg0: i32, %arg1: memref<578x128xf32, #tpu.memory_space<vmem>>, %arg2: memref<128x128xf32, #tpu.memory_space<vmem>>, %arg3: memref<1x128xf32, #tpu.memory_space<vmem>>, %arg4: memref<578x128xf32, #tpu.memory_space<vmem>>) attributes {dimension_semantics = [#tpu.dimension_semantics<parallel>], iteration_bounds = array<i64: 1>, scalar_prefetch = 0 : i64, scratch_operands = 0 : i64, tpu.core_type = #tpu.core_type<tc>, window_params = [{transform_indices = @transform_0, window_bounds = array<i64: 578, 128>}, {pipeline_mode = #tpu.pipeline_mode<synchronous>, transform_indices = @transform_1, window_bounds = array<i64: 128, 128>}, {pipeline_mode = #tpu.pipeline_mode<synchronous>, transform_indices = @transform_2, window_bounds = array<i64: 1, 128>}, {transform_indices = @transform_3, window_bounds = array<i64: 578, 128>}]} {
    %c0 = arith.constant 0 : index
    %c0_0 = arith.constant 0 : index
    %0 = vector.load %arg1[%c0, %c0_0] : memref<578x128xf32, #tpu.memory_space<vmem>>, vector<578x128xf32>
    %c0_1 = arith.constant 0 : index
    %c0_2 = arith.constant 0 : index
    %1 = vector.load %arg2[%c0_1, %c0_2] : memref<128x128xf32, #tpu.memory_space<vmem>>, vector<128x128xf32>
    %cst = arith.constant dense<0.000000e+00> : vector<578x128xf32>
    %2 = tpu.matmul %0, %1, %cst {dimension_numbers = #tpu.dot_dimension_numbers<[1], [0], [0], [1], [0, 0, 1, 1], [], []>} : vector<578x128xf32>, vector<128x128xf32>, vector<578x128xf32> -> vector<578x128xf32>
    %c0_3 = arith.constant 0 : index
    %c0_4 = arith.constant 0 : index
    %3 = vector.load %arg3[%c0_3, %c0_4] : memref<1x128xf32, #tpu.memory_space<vmem>>, vector<1x128xf32>
    %4 = vector.broadcast %3 : vector<1x128xf32> to vector<578x128xf32>
    %5 = arith.addf %2, %4 : vector<578x128xf32>
    %cst_5 = arith.constant 0.000000e+00 : f32
    %6 = vector.broadcast %cst_5 : f32 to vector<578x128xf32>
    %7 = arith.maximumf %5, %6 : vector<578x128xf32>
    %c0_6 = arith.constant 0 : index
    %c0_7 = arith.constant 0 : index
    %8 = vector.load %arg4[%c0_6, %c0_7] : memref<578x128xf32, #tpu.memory_space<vmem>>, vector<578x128xf32>
    tpu.vector_store %arg4[%c0_6, %c0_7], %7 {strides = array<i32>} : memref<578x128xf32, #tpu.memory_space<vmem>>, vector<578x128xf32>,
    return
  }
  func.func @transform_0(%arg0: i32) -> (i32, i32) {
    %c0_i32 = arith.constant 0 : i32
    %c0_i32_0 = arith.constant 0 : i32
    return %arg0, %c0_i32 : i32, i32
  }
  func.func @transform_1(%arg0: i32) -> (i32, i32) {
    %c0_i32 = arith.constant 0 : i32
    %c0_i32_0 = arith.constant 0 : i32
    %c0_i32_1 = arith.constant 0 : i32
    return %c0_i32, %c0_i32_0 : i32, i32
  }
  func.func @transform_2(%arg0: i32) -> (i32, i32) {
    %c0_i32 = arith.constant 0 : i32
    %c0_i32_0 = arith.constant 0 : i32
    %c0_i32_1 = arith.constant 0 : i32
    return %c0_i32, %c0_i32_0 : i32, i32
  }
  func.func @transform_3(%arg0: i32) -> (i32, i32) {
    %c0_i32 = arith.constant 0 : i32
    %c0_i32_0 = arith.constant 0 : i32
    return %arg0, %c0_i32 : i32, i32
  }
}

module attributes {stable_mosaic.version = 11 : i64} {
  func.func @_matmul_bias_kernel(%arg0: i32, %arg1: memref<728x128xf32, #tpu.memory_space<vmem>>, %arg2: memref<128x12xf32, #tpu.memory_space<vmem>>, %arg3: memref<1x12xf32, #tpu.memory_space<vmem>>, %arg4: memref<728x12xf32, #tpu.memory_space<vmem>>) attributes {dimension_semantics = [#tpu.dimension_semantics<parallel>], iteration_bounds = array<i64: 3>, scalar_prefetch = 0 : i64, scratch_operands = 0 : i64, tpu.core_type = #tpu.core_type<tc>, window_params = [{transform_indices = @transform_0, window_bounds = array<i64: 728, 128>}, {pipeline_mode = #tpu.pipeline_mode<synchronous>, transform_indices = @transform_1, window_bounds = array<i64: 128, 12>}, {pipeline_mode = #tpu.pipeline_mode<synchronous>, transform_indices = @transform_2, window_bounds = array<i64: 1, 12>}, {transform_indices = @transform_3, window_bounds = array<i64: 728, 12>}]} {
    %c0 = arith.constant 0 : index
    %c0_0 = arith.constant 0 : index
    %0 = vector.load %arg1[%c0, %c0_0] : memref<728x128xf32, #tpu.memory_space<vmem>>, vector<728x128xf32>
    %c0_1 = arith.constant 0 : index
    %c0_2 = arith.constant 0 : index
    %1 = vector.load %arg2[%c0_1, %c0_2] : memref<128x12xf32, #tpu.memory_space<vmem>>, vector<128x12xf32>
    %cst = arith.constant dense<0.000000e+00> : vector<728x12xf32>
    %2 = tpu.matmul %0, %1, %cst {dimension_numbers = #tpu.dot_dimension_numbers<[1], [0], [0], [1], [0, 0, 1, 1], [], []>} : vector<728x128xf32>, vector<128x12xf32>, vector<728x12xf32> -> vector<728x12xf32>
    %c0_3 = arith.constant 0 : index
    %c0_4 = arith.constant 0 : index
    %3 = vector.load %arg3[%c0_3, %c0_4] : memref<1x12xf32, #tpu.memory_space<vmem>>, vector<1x12xf32>
    %4 = vector.broadcast %3 : vector<1x12xf32> to vector<728x12xf32>
    %5 = arith.addf %2, %4 : vector<728x12xf32>
    %c0_5 = arith.constant 0 : index
    %c0_6 = arith.constant 0 : index
    %6 = vector.load %arg4[%c0_5, %c0_6] : memref<728x12xf32, #tpu.memory_space<vmem>>, vector<728x12xf32>
    tpu.vector_store %arg4[%c0_5, %c0_6], %5 {strides = array<i32>} : memref<728x12xf32, #tpu.memory_space<vmem>>, vector<728x12xf32>,
    return
  }
  func.func @transform_0(%arg0: i32) -> (i32, i32) {
    %c0_i32 = arith.constant 0 : i32
    %c0_i32_0 = arith.constant 0 : i32
    return %arg0, %c0_i32 : i32, i32
  }
  func.func @transform_1(%arg0: i32) -> (i32, i32) {
    %c0_i32 = arith.constant 0 : i32
    %c0_i32_0 = arith.constant 0 : i32
    %c0_i32_1 = arith.constant 0 : i32
    return %c0_i32, %c0_i32_0 : i32, i32
  }
  func.func @transform_2(%arg0: i32) -> (i32, i32) {
    %c0_i32 = arith.constant 0 : i32
    %c0_i32_0 = arith.constant 0 : i32
    %c0_i32_1 = arith.constant 0 : i32
    return %c0_i32, %c0_i32_0 : i32, i32
  }
  func.func @transform_3(%arg0: i32) -> (i32, i32) {
    %c0_i32 = arith.constant 0 : i32
    %c0_i32_0 = arith.constant 0 : i32
    return %arg0, %c0_i32 : i32, i32
  }
}

</mosaic_0001>

<llo_original>
// kernel: betavae_forward.9
$region0: #{betavae_forward.9}
  #allocation0 [shape = 'u32[]', space=smem, size = 0x4, offset = 0x4, fixed_abs, tag = 'smem constant byte address 0x4 - core index']
  #allocation1 [shape = 'u32[72,128]{1,0:T(1,128)}', space=vmem, size = 0x9000, scoped, tag = 'internal scratch']
  %s0 = inlined_call_operand.vmem [shape: f32[2048,48], index: 0, kind: input, shape index: {}]
  %s1 = inlined_call_operand.vmem [shape: f32[48,32], index: 1, kind: input, shape index: {}]
  %s2 = inlined_call_operand.vmem [shape: f32[1,32], index: 2, kind: input, shape index: {}]
  %s3 = inlined_call_operand.vmem [shape: f32[2048,32], index: 3, kind: output, shape index: {}]
  %s4 = sld [smem:[#allocation0]]
  $region45: #{betavae_forward.9} parent=0
    _
  %s6 = ssub.s32 1, %s4
  %s7 = scalar_select 0, %s6, %s4
  loop: start=0, step=1, limit=4
  $region2: #{betavae_forward.9} parent=0 // loop_pre_header
    _
  $region3: #{betavae_forward.9} parent=0 // loop_header
    %s9 = sphi 0, %s13
    %p10 = scmp.ge.s32.totalorder %s9, 4
    %s19 = sphi 0, %s21
    %s22 = sphi 0, %s19
    %s23 = sphi 0, %s22
    %s39 = sphi 0, %s23
    %s43 = sphi 0, %s43
    %s45 = sphi 0, %s43
    %s46 = sphi 0, %s45
    %s60 = sphi 0, %s46
    %s64 = sphi 0, %s64
    %s66 = sphi 0, %s64
    %s67 = sphi 0, %s66
    %s81 = sphi 0, %s67
    %s87 = sphi 0, %s89
    %s90 = sphi 0, %s87
    %s91 = sphi 0, %s90
    %s107 = sphi 0, %s91
  $region4: #{betavae_forward.9} parent=0 // loop_header_branch
    %12 = sbr.rel (%p10) target = $region8
  $region5: #{betavae_forward.9} parent=0 // loop_body
    %s14 = ssub.s32 %s9, 1
    %s15 = ssub.s32 %s9, 2
    %s16 = sadd.s32 %s9, 1
    %s17 = ssub.s32 %s9, %s16
    %p18 = scmp.eq.s32.totalorder %s17, 0
    %s20 = sadd.s32 %s19, 1
    %s21 = scalar_select %p18, %s19, %s20
    %p24 = pneg %p18
    %p25 = scmp.eq.s32.totalorder %s9, 1
    %p26 = por %p24, %p25
    %p27 = scmp.ne.s32.totalorder %s19, %s22
    %p28 = scmp.eq.s32.totalorder %s9, 0
    %p29 = por %p27, %p28
    %p30 = scmp.ne.s32.totalorder %s19, %s22
    %p31 = scmp.eq.s32.totalorder %s14, 1
    %p32 = por %p30, %p31
    %p33 = scmp.ne.s32.totalorder %s22, %s23
    %p34 = scmp.eq.s32.totalorder %s14, 0
    %p35 = por %p33, %p34
    %p36 = scmp.ne.s32.totalorder %s22, %s23
    %p37 = scmp.eq.s32.totalorder %s15, 1
    %p38 = por %p36, %p37
    %p40 = scmp.ne.s32.totalorder %s23, %s39
    %p41 = scmp.eq.s32.totalorder %s15, 0
    %p42 = por %p40, %p41
    %s44 = sadd.s32 %s43, 1
    %p47 = scmp.eq.s32.totalorder %s9, 1
    %p48 = scmp.ne.s32.totalorder %s43, %s45
    %p49 = scmp.eq.s32.totalorder %s9, 0
    %p50 = por %p48, %p49
    %p51 = scmp.ne.s32.totalorder %s43, %s45
    %p52 = scmp.eq.s32.totalorder %s14, 1
    %p53 = por %p51, %p52
    %p54 = scmp.ne.s32.totalorder %s45, %s46
    %p55 = scmp.eq.s32.totalorder %s14, 0
    %p56 = por %p54, %p55
    %p57 = scmp.ne.s32.totalorder %s45, %s46
    %p58 = scmp.eq.s32.totalorder %s15, 1
    %p59 = por %p57, %p58
    %p61 = scmp.ne.s32.totalorder %s46, %s60
    %p62 = scmp.eq.s32.totalorder %s15, 0
    %p63 = por %p61, %p62
    %s65 = sadd.s32 %s64, 1
    %p68 = scmp.eq.s32.totalorder %s9, 1
    %p69 = scmp.ne.s32.totalorder %s64, %s66
    %p70 = scmp.eq.s32.totalorder %s9, 0
    %p71 = por %p69, %p70
    %p72 = scmp.ne.s32.totalorder %s64, %s66
    %p73 = scmp.eq.s32.totalorder %s14, 1
    %p74 = por %p72, %p73
    %p75 = scmp.ne.s32.totalorder %s66, %s67
    %p76 = scmp.eq.s32.totalorder %s14, 0
    %p77 = por %p75, %p76
    %p78 = scmp.ne.s32.totalorder %s66, %s67
    %p79 = scmp.eq.s32.totalorder %s15, 1
    %p80 = por %p78, %p79
    %p82 = scmp.ne.s32.totalorder %s67, %s81
    %p83 = scmp.eq.s32.totalorder %s15, 0
    %p84 = por %p82, %p83
    %s85 = ssub.s32 %s9, %s16
    %p86 = scmp.eq.s32.totalorder %s85, 0
    %s88 = sadd.s32 %s87, 1
    %s89 = scalar_select %p86, %s87, %s88
    %p92 = pneg %p86
    %p93 = scmp.eq.s32.totalorder %s9, 1
    %p94 = por %p92, %p93
    %p95 = scmp.ne.s32.totalorder %s87, %s90
    %p96 = scmp.eq.s32.totalorder %s9, 0
    %p97 = por %p95, %p96
    %p98 = scmp.ne.s32.totalorder %s87, %s90
    %p99 = scmp.eq.s32.totalorder %s14, 1
    %p100 = por %p98, %p99
    %p101 = scmp.ne.s32.totalorder %s90, %s91
    %p102 = scmp.eq.s32.totalorder %s14, 0
    %p103 = por %p101, %p102
    %p104 = scmp.ne.s32.totalorder %s90, %s91
    %p105 = scmp.eq.s32.totalorder %s15, 1
    %p106 = por %p104, %p105
    %p108 = scmp.ne.s32.totalorder %s91, %s107
    %p109 = scmp.eq.s32.totalorder %s15, 0
    %p110 = por %p108, %p109
    %p111 = scmp.le.s32.totalorder 1, %s9
    %p112 = scmp.lt.s32.totalorder %s9, 3
    %p113 = pnand %p111, %p112
    %p114 = pneg %p113
    // Predicated region
    $region9: #{betavae_forward.9} parent=5 // pred_check
      _
    $region10: #{betavae_forward.9} parent=5 // pred_check_branch
      %116 = sbr.rel (%p113) target = $region12
    $region11: #{betavae_forward.9} parent=5 // pred_region
      %s117 = ssub.s32 %s9, 1
      // Predicated region
      $region13: #{betavae_forward.9} parent=11 // pred_check
        %p118 = pneg %p56
      $region14: #{betavae_forward.9} parent=11 // pred_check_branch
        %120 = sbr.rel (%p118) target = $region16
      $region15: #{betavae_forward.9} parent=11 // pred_region
        _
      $region16: #{betavae_forward.9} parent=11 // pred_fallthru
        _
      // Predicated region
      $region17: #{betavae_forward.9} parent=11 // pred_check
        %p121 = pneg %p77
      $region18: #{betavae_forward.9} parent=11 // pred_check_branch
        %123 = sbr.rel (%p121) target = $region20
      $region19: #{betavae_forward.9} parent=11 // pred_region
        _
      $region20: #{betavae_forward.9} parent=11 // pred_fallthru
        _
    $region12: #{betavae_forward.9} parent=5 // pred_fallthru
      _
    %p124 = scmp.lt.s32.totalorder %s9, 2
    // Predicated region
    $region21: #{betavae_forward.9} parent=5 // pred_check
      %p125 = pneg %p124
    $region22: #{betavae_forward.9} parent=5 // pred_check_branch
      %127 = sbr.rel (%p125) target = $region24
    $region23: #{betavae_forward.9} parent=5 // pred_region
      // Predicated region
      $region25: #{betavae_forward.9} parent=23 // pred_check
        %p128 = pneg %p29
      $region26: #{betavae_forward.9} parent=23 // pred_check_branch
        %130 = sbr.rel (%p128) target = $region28
      $region27: #{betavae_forward.9} parent=23 // pred_region
        %s131 = smul.u32 128, %s9
        %p132 = scmp.lt.s32.totalorder %s131, 255
        %s133 = scalar_select %p132, %s131, 255
        %s134 = smul.addr %s133, 8
        %s135 = scalar_lea.vmem %s0, %s134
        %s136 = smul.u32 128, %s9
      $region28: #{betavae_forward.9} parent=23 // pred_fallthru
        _
    $region24: #{betavae_forward.9} parent=5 // pred_fallthru
      _
    %p137 = scmp.le.s32.totalorder 1, %s9
    %p138 = scmp.lt.s32.totalorder %s9, 3
    %p139 = pnand %p137, %p138
    %p140 = pneg %p139
    // Predicated region
    $region29: #{betavae_forward.9} parent=5 // pred_check
      _
    $region30: #{betavae_forward.9} parent=5 // pred_check_branch
      %142 = sbr.rel (%p139) target = $region32
    $region31: #{betavae_forward.9} parent=5 // pred_region
      %s143 = ssub.s32 %s9, 1
      %s144 = smul.u32 128, %s14
      %p145 = scmp.lt.s32.totalorder %s144, 255
      %s146 = scalar_select %p145, %s144, 255
      %s147 = smul.addr %s146, 8
      %s148 = scalar_lea.vmem %s0, %s147
      %p149 = pneg %p35
      %p150 = pneg %p32
      %p151 = pneg %p56
      %p152 = pneg %p53
      %p153 = pneg %p77
      %p154 = pneg %p74
      %p155 = pneg %p103
      %p156 = pneg %p100
      %s157 = smul.u32 128, %s14
      %p158 = scmp.lt.s32.totalorder %s157, 255
      %s159 = scalar_select %p158, %s157, 255
      %s160 = smul.addr %s159, 8
      %s161 = scalar_lea.vmem %s3, %s160
      %s162 = smul.u32 128, %s14
      %p163 = scmp.lt.s32.totalorder %s162, 255
      %s164 = scalar_select %p163, %s162, 255
      %s165 = smul.addr %s164, 8
      %s166 = scalar_lea.vmem %s0, %s165
      %s167 = smul.u32 128, %s14
      %s168 = smul.u32 128, %s14
      %p169 = scmp.lt.s32.totalorder %s168, 255
      %s170 = scalar_select %p169, %s168, 255
      %s171 = smul.addr %s170, 8
      %s172 = scalar_lea.vmem %s3, %s171
      %s173 = smul.u32 128, %s14
      %v174 = vld [vmem:[%s166] sm:$0xff]
      %v175 = vld [vmem:[%s166 + $0x8] sm:$0xff]
      %v176 = vld [vmem:[%s166 + $0x10] sm:$0xff]
      %v177 = vld [vmem:[%s166 + $0x18] sm:$0xff]
      %v178 = vld [vmem:[%s166 + $0x20] sm:$0xff]
      %v179 = vld [vmem:[%s166 + $0x28] sm:$0xff]
      %v180 = vld [vmem:[%s166 + $0x30] sm:$0xff]
      %v181 = vld [vmem:[%s166 + $0x38] sm:$0xff]
      %v182 = vld [vmem:[%s166 + $0x40] sm:$0xff]
      %v183 = vld [vmem:[%s166 + $0x48] sm:$0xff]
      %v184 = vld [vmem:[%s166 + $0x50] sm:$0xff]
      %v185 = vld [vmem:[%s166 + $0x58] sm:$0xff]
      %v186 = vld [vmem:[%s166 + $0x60] sm:$0xff]
      %v187 = vld [vmem:[%s166 + $0x68] sm:$0xff]
      %v188 = vld [vmem:[%s166 + $0x70] sm:$0xff]
      %v189 = vld [vmem:[%s166 + $0x78] sm:$0xff]
      %v190 = vld [vmem:[%s166 + $0x80] sm:$0xff]
      %v191 = vld [vmem:[%s166 + $0x88] sm:$0xff]
      %v192 = vld [vmem:[%s166 + $0x90] sm:$0xff]
      %v193 = vld [vmem:[%s166 + $0x98] sm:$0xff]
      %v194 = vld [vmem:[%s166 + $0xa0] sm:$0xff]
      %v195 = vld [vmem:[%s166 + $0xa8] sm:$0xff]
      %v196 = vld [vmem:[%s166 + $0xb0] sm:$0xff]
      %v197 = vld [vmem:[%s166 + $0xb8] sm:$0xff]
      %v198 = vld [vmem:[%s166 + $0xc0] sm:$0xff]
      %v199 = vld [vmem:[%s166 + $0xc8] sm:$0xff]
      %v200 = vld [vmem:[%s166 + $0xd0] sm:$0xff]
      %v201 = vld [vmem:[%s166 + $0xd8] sm:$0xff]
      %v202 = vld [vmem:[%s166 + $0xe0] sm:$0xff]
      %v203 = vld [vmem:[%s166 + $0xe8] sm:$0xff]
      %v204 = vld [vmem:[%s166 + $0xf0] sm:$0xff]
      %v205 = vld [vmem:[%s166 + $0xf8] sm:$0xff]
      %v206 = vld [vmem:[%s166 + $0x100] sm:$0xff]
      %v207 = vld [vmem:[%s166 + $0x108] sm:$0xff]
      %v208 = vld [vmem:[%s166 + $0x110] sm:$0xff]
      %v209 = vld [vmem:[%s166 + $0x118] sm:$0xff]
      %v210 = vld [vmem:[%s166 + $0x120] sm:$0xff]
      %v211 = vld [vmem:[%s166 + $0x128] sm:$0xff]
      %v212 = vld [vmem:[%s166 + $0x130] sm:$0xff]
      %v213 = vld [vmem:[%s166 + $0x138] sm:$0xff]
      %v214 = vld [vmem:[%s166 + $0x140] sm:$0xff]
      %v215 = vld [vmem:[%s166 + $0x148] sm:$0xff]
      %v216 = vld [vmem:[%s166 + $0x150] sm:$0xff]
      %v217 = vld [vmem:[%s166 + $0x158] sm:$0xff]
      %v218 = vld [vmem:[%s166 + $0x160] sm:$0xff]
      %v219 = vld [vmem:[%s166 + $0x168] sm:$0xff]
      %v220 = vld [vmem:[%s166 + $0x170] sm:$0xff]
      %v221 = vld [vmem:[%s166 + $0x178] sm:$0xff]
      %v222 = vld [vmem:[%s166 + $0x180] sm:$0xff]
      %v223 = vld [vmem:[%s166 + $0x188] sm:$0xff]
      %v224 = vld [vmem:[%s166 + $0x190] sm:$0xff]
      %v225 = vld [vmem:[%s166 + $0x198] sm:$0xff]
      %v226 = vld [vmem:[%s166 + $0x1a0] sm:$0xff]
      %v227 = vld [vmem:[%s166 + $0x1a8] sm:$0xff]
      %v228 = vld [vmem:[%s166 + $0x1b0] sm:$0xff]
      %v229 = vld [vmem:[%s166 + $0x1b8] sm:$0xff]
      %v230 = vld [vmem:[%s166 + $0x1c0] sm:$0xff]
      %v231 = vld [vmem:[%s166 + $0x1c8] sm:$0xff]
      %v232 = vld [vmem:[%s166 + $0x1d0] sm:$0xff]
      %v233 = vld [vmem:[%s166 + $0x1d8] sm:$0xff]
      %v234 = vld [vmem:[%s166 + $0x1e0] sm:$0xff]
      %v235 = vld [vmem:[%s166 + $0x1e8] sm:$0xff]
      %v236 = vld [vmem:[%s166 + $0x1f0] sm:$0xff]
      %v237 = vld [vmem:[%s166 + $0x1f8] sm:$0xff]
      %v238 = vld [vmem:[%s166 + $0x200] sm:$0xff]
      %v239 = vld [vmem:[%s166 + $0x208] sm:$0xff]
      %v240 = vld [vmem:[%s166 + $0x210] sm:$0xff]
      %v241 = vld [vmem:[%s166 + $0x218] sm:$0xff]
      %v242 = vld [vmem:[%s166 + $0x220] sm:$0xff]
      %v243 = vld [vmem:[%s166 + $0x228] sm:$0xff]
      %v244 = vld [vmem:[%s166 + $0x230] sm:$0xff]
      %v245 = vld [vmem:[%s166 + $0x238] sm:$0xff]
      %v246 = vld [vmem:[%s166 + $0x240] sm:$0xff]
      %v247 = vld [vmem:[%s166 + $0x248] sm:$0xff]
      %v248 = vld [vmem:[%s166 + $0x250] sm:$0xff]
      %v249 = vld [vmem:[%s166 + $0x258] sm:$0xff]
      %v250 = vld [vmem:[%s166 + $0x260] sm:$0xff]
      %v251 = vld [vmem:[%s166 + $0x268] sm:$0xff]
      %v252 = vld [vmem:[%s166 + $0x270] sm:$0xff]
      %v253 = vld [vmem:[%s166 + $0x278] sm:$0xff]
      %v254 = vld [vmem:[%s166 + $0x280] sm:$0xff]
      %v255 = vld [vmem:[%s166 + $0x288] sm:$0xff]
      %v256 = vld [vmem:[%s166 + $0x290] sm:$0xff]
      %v257 = vld [vmem:[%s166 + $0x298] sm:$0xff]
      %v258 = vld [vmem:[%s166 + $0x2a0] sm:$0xff]
      %v259 = vld [vmem:[%s166 + $0x2a8] sm:$0xff]
      %v260 = vld [vmem:[%s166 + $0x2b0] sm:$0xff]
      %v261 = vld [vmem:[%s166 + $0x2b8] sm:$0xff]
      %v262 = vld [vmem:[%s166 + $0x2c0] sm:$0xff]
      %v263 = vld [vmem:[%s166 + $0x2c8] sm:$0xff]
      %v264 = vld [vmem:[%s166 + $0x2d0] sm:$0xff]
      %v265 = vld [vmem:[%s166 + $0x2d8] sm:$0xff]
      %v266 = vld [vmem:[%s166 + $0x2e0] sm:$0xff]
      %v267 = vld [vmem:[%s166 + $0x2e8] sm:$0xff]
      %v268 = vld [vmem:[%s166 + $0x2f0] sm:$0xff]
      %v269 = vld [vmem:[%s166 + $0x2f8] sm:$0xff]
      %v270 = vld [vmem:[%s166 + $0x300] sm:$0xff]
      %v271 = vld [vmem:[%s166 + $0x308] sm:$0xff]
      %v272 = vld [vmem:[%s166 + $0x310] sm:$0xff]
      %v273 = vld [vmem:[%s166 + $0x318] sm:$0xff]
      %v274 = vld [vmem:[%s166 + $0x320] sm:$0xff]
      %v275 = vld [vmem:[%s166 + $0x328] sm:$0xff]
      %v276 = vld [vmem:[%s166 + $0x330] sm:$0xff]
      %v277 = vld [vmem:[%s166 + $0x338] sm:$0xff]
      %v278 = vld [vmem:[%s166 + $0x340] sm:$0xff]
      %v279 = vld [vmem:[%s166 + $0x348] sm:$0xff]
      %v280 = vld [vmem:[%s166 + $0x350] sm:$0xff]
      %v281 = vld [vmem:[%s166 + $0x358] sm:$0xff]
      %v282 = vld [vmem:[%s166 + $0x360] sm:$0xff]
      %v283 = vld [vmem:[%s166 + $0x368] sm:$0xff]
      %v284 = vld [vmem:[%s166 + $0x370] sm:$0xff]
      %v285 = vld [vmem:[%s166 + $0x378] sm:$0xff]
      %v286 = vld [vmem:[%s166 + $0x380] sm:$0xff]
      %v287 = vld [vmem:[%s166 + $0x388] sm:$0xff]
      %v288 = vld [vmem:[%s166 + $0x390] sm:$0xff]
      %v289 = vld [vmem:[%s166 + $0x398] sm:$0xff]
      %v290 = vld [vmem:[%s166 + $0x3a0] sm:$0xff]
      %v291 = vld [vmem:[%s166 + $0x3a8] sm:$0xff]
      %v292 = vld [vmem:[%s166 + $0x3b0] sm:$0xff]
      %v293 = vld [vmem:[%s166 + $0x3b8] sm:$0xff]
      %v294 = vld [vmem:[%s166 + $0x3c0] sm:$0xff]
      %v295 = vld [vmem:[%s166 + $0x3c8] sm:$0xff]
      %v296 = vld [vmem:[%s166 + $0x3d0] sm:$0xff]
      %v297 = vld [vmem:[%s166 + $0x3d8] sm:$0xff]
      %v298 = vld [vmem:[%s166 + $0x3e0] sm:$0xff]
      %v299 = vld [vmem:[%s166 + $0x3e8] sm:$0xff]
      %v300 = vld [vmem:[%s166 + $0x3f0] sm:$0xff]
      %v301 = vld [vmem:[%s166 + $0x3f8] sm:$0xff]
      %v302 = vld [vmem:[%s1] sm:$0xff]
      %v303 = vld [vmem:[%s1 + $0x8] sm:$0xff]
      %v304 = vld [vmem:[%s1 + $0x10] sm:$0xff]
      %v305 = vld [vmem:[%s1 + $0x18] sm:$0xff]
      %v306 = vld [vmem:[%s1 + $0x20] sm:$0xff]
      %v307 = vld [vmem:[%s1 + $0x28] sm:$0xff]
      %v308 = vld [vmem:[%s2] sm:$0x1]
      %v310 = vperm.slane %v308, 0
      %vm312 = vcmask 392192
      %v314 = vsel %vm312, %v174, 0
      %v317 = vsel %vm312, %v175, 0
      %v320 = vsel %vm312, %v176, 0
      %v323 = vsel %vm312, %v177, 0
      %v326 = vsel %vm312, %v178, 0
      %v329 = vsel %vm312, %v179, 0
      %v332 = vsel %vm312, %v180, 0
      %v335 = vsel %vm312, %v181, 0
      %v338 = vsel %vm312, %v182, 0
      %v341 = vsel %vm312, %v183, 0
      %v344 = vsel %vm312, %v184, 0
      %v347 = vsel %vm312, %v185, 0
      %v350 = vsel %vm312, %v186, 0
      %v353 = vsel %vm312, %v187, 0
      %v356 = vsel %vm312, %v188, 0
      %v359 = vsel %vm312, %v189, 0
      %v362 = vsel %vm312, %v190, 0
      %v365 = vsel %vm312, %v191, 0
      %v368 = vsel %vm312, %v192, 0
      %v371 = vsel %vm312, %v193, 0
      %v374 = vsel %vm312, %v194, 0
      %v377 = vsel %vm312, %v195, 0
      %v380 = vsel %vm312, %v196, 0
      %v383 = vsel %vm312, %v197, 0
      %v386 = vsel %vm312, %v198, 0
      %v389 = vsel %vm312, %v199, 0
      %v392 = vsel %vm312, %v200, 0
      %v395 = vsel %vm312, %v201, 0
      %v398 = vsel %vm312, %v202, 0
      %v401 = vsel %vm312, %v203, 0
      %v404 = vsel %vm312, %v204, 0
      %v407 = vsel %vm312, %v205, 0
      %v410 = vsel %vm312, %v206, 0
      %v413 = vsel %vm312, %v207, 0
      %v416 = vsel %vm312, %v208, 0
      %v419 = vsel %vm312, %v209, 0
      %v422 = vsel %vm312, %v210, 0
      %v425 = vsel %vm312, %v211, 0
      %v428 = vsel %vm312, %v212, 0
      %v431 = vsel %vm312, %v213, 0
      %v434 = vsel %vm312, %v214, 0
      %v437 = vsel %vm312, %v215, 0
      %v440 = vsel %vm312, %v216, 0
      %v443 = vsel %vm312, %v217, 0
      %v446 = vsel %vm312, %v218, 0
      %v449 = vsel %vm312, %v219, 0
      %v452 = vsel %vm312, %v220, 0
      %v455 = vsel %vm312, %v221, 0
      %v458 = vsel %vm312, %v222, 0
      %v461 = vsel %vm312, %v223, 0
      %v464 = vsel %vm312, %v224, 0
      %v467 = vsel %vm312, %v225, 0
      %v470 = vsel %vm312, %v226, 0
      %v473 = vsel %vm312, %v227, 0
      %v476 = vsel %vm312, %v228, 0
      %v479 = vsel %vm312, %v229, 0
      %v482 = vsel %vm312, %v230, 0
      %v485 = vsel %vm312, %v231, 0
      %v488 = vsel %vm312, %v232, 0
      %v491 = vsel %vm312, %v233, 0
      %v494 = vsel %vm312, %v234, 0
      %v497 = vsel %vm312, %v235, 0
      %v500 = vsel %vm312, %v236, 0
      %v503 = vsel %vm312, %v237, 0
      %v506 = vsel %vm312, %v238, 0
      %v509 = vsel %vm312, %v239, 0
      %v512 = vsel %vm312, %v240, 0
      %v515 = vsel %vm312, %v241, 0
      %v518 = vsel %vm312, %v242, 0
      %v521 = vsel %vm312, %v243, 0
      %v524 = vsel %vm312, %v244, 0
      %v527 = vsel %vm312, %v245, 0
      %v530 = vsel %vm312, %v246, 0
      %v533 = vsel %vm312, %v247, 0
      %v536 = vsel %vm312, %v248, 0
      %v539 = vsel %vm312, %v249, 0
      %v542 = vsel %vm312, %v250, 0
      %v545 = vsel %vm312, %v251, 0
      %v548 = vsel %vm312, %v252, 0
      %v551 = vsel %vm312, %v253, 0
      %v554 = vsel %vm312, %v254, 0
      %v557 = vsel %vm312, %v255, 0
      %v560 = vsel %vm312, %v256, 0
      %v563 = vsel %vm312, %v257, 0
      %v566 = vsel %vm312, %v258, 0
      %v569 = vsel %vm312, %v259, 0
      %v572 = vsel %vm312, %v260, 0
      %v575 = vsel %vm312, %v261, 0
      %v578 = vsel %vm312, %v262, 0
      %v581 = vsel %vm312, %v263, 0
      %v584 = vsel %vm312, %v264, 0
      %v587 = vsel %vm312, %v265, 0
      %v590 = vsel %vm312, %v266, 0
      %v593 = vsel %vm312, %v267, 0
      %v596 = vsel %vm312, %v268, 0
      %v599 = vsel %vm312, %v269, 0
      %v602 = vsel %vm312, %v270, 0
      %v605 = vsel %vm312, %v271, 0
      %v608 = vsel %vm312, %v272, 0
      %v611 = vsel %vm312, %v273, 0
      %v614 = vsel %vm312, %v274, 0
      %v617 = vsel %vm312, %v275, 0
      %v620 = vsel %vm312, %v276, 0
      %v623 = vsel %vm312, %v277, 0
      %v626 = vsel %vm312, %v278, 0
      %v629 = vsel %vm312, %v279, 0
      %v632 = vsel %vm312, %v280, 0
      %v635 = vsel %vm312, %v281, 0
      %v638 = vsel %vm312, %v282, 0
      %v641 = vsel %vm312, %v283, 0
      %v644 = vsel %vm312, %v284, 0
      %v647 = vsel %vm312, %v285, 0
      %v650 = vsel %vm312, %v286, 0
      %v653 = vsel %vm312, %v287, 0
      %v656 = vsel %vm312, %v288, 0
      %v659 = vsel %vm312, %v289, 0
      %v662 = vsel %vm312, %v290, 0
      %v665 = vsel %vm312, %v291, 0
      %v668 = vsel %vm312, %v292, 0
      %v671 = vsel %vm312, %v293, 0
      %v674 = vsel %vm312, %v294, 0
      %v677 = vsel %vm312, %v295, 0
      %v680 = vsel %vm312, %v296, 0
      %v683 = vsel %vm312, %v297, 0
      %v686 = vsel %vm312, %v298, 0
      %v689 = vsel %vm312, %v299, 0
      %v692 = vsel %vm312, %v300, 0
      %v695 = vsel %vm312, %v301, 0
      %697 = vmatpush.msra.mxu0 0.0
      %698 = vmatpush.msra.mxu0 0.0
      %699 = vmatpush.msra.mxu0 0.0
      %700 = vmatpush.msra.mxu0 0.0
      %701 = vmatpush.msra.mxu0 0.0
      %702 = vmatpush.msra.mxu0 0.0
      %703 = vmatpush.msra.mxu0 0.0
      %704 = vmatpush.msra.mxu0 0.0
      %705 = vmatpush.msra.mxu0 0.0
      %706 = vmatpush.msra.mxu0 0.0
      %707 = vmatpush.msra.mxu0 %v307
      %708 = vmatpush.msra.mxu0 %v306
      %709 = vmatpush.msra.mxu0 %v305
      %710 = vmatpush.msra.mxu0 %v304
      %711 = vmatpush.msra.mxu0 %v303
      %712 = vmatpush.msra.mxu0 %v302
      %713 = vmatmul.f32.gmra.mxu0 %v314
      %v714 = vpop.f32.mrf.mxu0
      %v715 = vadd.f32 %v310, %v714
      %716 = vmatmul.f32.gmra.mxu0 %v317
      %v717 = vpop.f32.mrf.mxu0
      %v718 = vadd.f32 %v310, %v717
      %719 = vmatmul.f32.gmra.mxu0 %v320
      %v720 = vpop.f32.mrf.mxu0
      %v721 = vadd.f32 %v310, %v720
      %722 = vmatmul.f32.gmra.mxu0 %v323
      %v723 = vpop.f32.mrf.mxu0
      %v724 = vadd.f32 %v310, %v723
      %725 = vmatmul.f32.gmra.mxu0 %v326
      %v726 = vpop.f32.mrf.mxu0
      %v727 = vadd.f32 %v310, %v726
      %728 = vmatmul.f32.gmra.mxu0 %v329
      %v729 = vpop.f32.mrf.mxu0
      %v730 = vadd.f32 %v310, %v729
      %731 = vmatmul.f32.gmra.mxu0 %v332
      %v732 = vpop.f32.mrf.mxu0
      %v733 = vadd.f32 %v310, %v732
      %734 = vmatmul.f32.gmra.mxu0 %v335
      %v735 = vpop.f32.mrf.mxu0
      %v736 = vadd.f32 %v310, %v735
      %737 = vmatmul.f32.gmra.mxu0 %v338
      %v738 = vpop.f32.mrf.mxu0
      %v739 = vadd.f32 %v310, %v738
      %740 = vmatmul.f32.gmra.mxu0 %v341
      %v741 = vpop.f32.mrf.mxu0
      %v742 = vadd.f32 %v310, %v741
      %743 = vmatmul.f32.gmra.mxu0 %v344
      %v744 = vpop.f32.mrf.mxu0
      %v745 = vadd.f32 %v310, %v744
      %746 = vmatmul.f32.gmra.mxu0 %v347
      %v747 = vpop.f32.mrf.mxu0
      %v748 = vadd.f32 %v310, %v747
      %749 = vmatmul.f32.gmra.mxu0 %v350
      %v750 = vpop.f32.mrf.mxu0
      %v751 = vadd.f32 %v310, %v750
      %752 = vmatmul.f32.gmra.mxu0 %v353
      %v753 = vpop.f32.mrf.mxu0
      %v754 = vadd.f32 %v310, %v753
      %755 = vmatmul.f32.gmra.mxu0 %v356
      %v756 = vpop.f32.mrf.mxu0
      %v757 = vadd.f32 %v310, %v756
      %758 = vmatmul.f32.gmra.mxu0 %v359
      %v759 = vpop.f32.mrf.mxu0
      %v760 = vadd.f32 %v310, %v759
      %761 = vmatmul.f32.gmra.mxu0 %v362
      %v762 = vpop.f32.mrf.mxu0
      %v763 = vadd.f32 %v310, %v762
      %764 = vmatmul.f32.gmra.mxu0 %v365
      %v765 = vpop.f32.mrf.mxu0
      %v766 = vadd.f32 %v310, %v765
      %767 = vmatmul.f32.gmra.mxu0 %v368
      %v768 = vpop.f32.mrf.mxu0
      %v769 = vadd.f32 %v310, %v768
      %770 = vmatmul.f32.gmra.mxu0 %v371
      %v771 = vpop.f32.mrf.mxu0
      %v772 = vadd.f32 %v310, %v771
      %773 = vmatmul.f32.gmra.mxu0 %v374
      %v774 = vpop.f32.mrf.mxu0
      %v775 = vadd.f32 %v310, %v774
      %776 = vmatmul.f32.gmra.mxu0 %v377
      %v777 = vpop.f32.mrf.mxu0
      %v778 = vadd.f32 %v310, %v777
      %779 = vmatmul.f32.gmra.mxu0 %v380
      %v780 = vpop.f32.mrf.mxu0
      %v781 = vadd.f32 %v310, %v780
      %782 = vmatmul.f32.gmra.mxu0 %v383
      %v783 = vpop.f32.mrf.mxu0
      %v784 = vadd.f32 %v310, %v783
      %785 = vmatmul.f32.gmra.mxu0 %v386
      %v786 = vpop.f32.mrf.mxu0
      %v787 = vadd.f32 %v310, %v786
      %788 = vmatmul.f32.gmra.mxu0 %v389
      %v789 = vpop.f32.mrf.mxu0
      %v790 = vadd.f32 %v310, %v789
      %791 = vmatmul.f32.gmra.mxu0 %v392
      %v792 = vpop.f32.mrf.mxu0
      %v793 = vadd.f32 %v310, %v792
      %794 = vmatmul.f32.gmra.mxu0 %v395
      %v795 = vpop.f32.mrf.mxu0
      %v796 = vadd.f32 %v310, %v795
      %797 = vmatmul.f32.gmra.mxu0 %v398
      %v798 = vpop.f32.mrf.mxu0
      %v799 = vadd.f32 %v310, %v798
      %800 = vmatmul.f32.gmra.mxu0 %v401
      %v801 = vpop.f32.mrf.mxu0
      %v802 = vadd.f32 %v310, %v801
      %803 = vmatmul.f32.gmra.mxu0 %v404
      %v804 = vpop.f32.mrf.mxu0
      %v805 = vadd.f32 %v310, %v804
      %806 = vmatmul.f32.gmra.mxu0 %v407
      %v807 = vpop.f32.mrf.mxu0
      %v808 = vadd.f32 %v310, %v807
      %809 = vmatmul.f32.gmra.mxu0 %v410
      %v810 = vpop.f32.mrf.mxu0
      %v811 = vadd.f32 %v310, %v810
      %812 = vmatmul.f32.gmra.mxu0 %v413
      %v813 = vpop.f32.mrf.mxu0
      %v814 = vadd.f32 %v310, %v813
      %815 = vmatmul.f32.gmra.mxu0 %v416
      %v816 = vpop.f32.mrf.mxu0
      %v817 = vadd.f32 %v310, %v816
      %818 = vmatmul.f32.gmra.mxu0 %v419
      %v819 = vpop.f32.mrf.mxu0
      %v820 = vadd.f32 %v310, %v819
      %821 = vmatmul.f32.gmra.mxu0 %v422
      %v822 = vpop.f32.mrf.mxu0
      %v823 = vadd.f32 %v310, %v822
      %824 = vmatmul.f32.gmra.mxu0 %v425
      %v825 = vpop.f32.mrf.mxu0
      %v826 = vadd.f32 %v310, %v825
      %827 = vmatmul.f32.gmra.mxu0 %v428
      %v828 = vpop.f32.mrf.mxu0
      %v829 = vadd.f32 %v310, %v828
      %830 = vmatmul.f32.gmra.mxu0 %v431
      %v831 = vpop.f32.mrf.mxu0
      %v832 = vadd.f32 %v310, %v831
      %833 = vmatmul.f32.gmra.mxu0 %v434
      %v834 = vpop.f32.mrf.mxu0
      %v835 = vadd.f32 %v310, %v834
      %836 = vmatmul.f32.gmra.mxu0 %v437
      %v837 = vpop.f32.mrf.mxu0
      %v838 = vadd.f32 %v310, %v837
      %839 = vmatmul.f32.gmra.mxu0 %v440
      %v840 = vpop.f32.mrf.mxu0
      %v841 = vadd.f32 %v310, %v840
      %842 = vmatmul.f32.gmra.mxu0 %v443
      %v843 = vpop.f32.mrf.mxu0
      %v844 = vadd.f32 %v310, %v843
      %845 = vmatmul.f32.gmra.mxu0 %v446
      %v846 = vpop.f32.mrf.mxu0
      %v847 = vadd.f32 %v310, %v846
      %848 = vmatmul.f32.gmra.mxu0 %v449
      %v849 = vpop.f32.mrf.mxu0
      %v850 = vadd.f32 %v310, %v849
      %851 = vmatmul.f32.gmra.mxu0 %v452
      %v852 = vpop.f32.mrf.mxu0
      %v853 = vadd.f32 %v310, %v852
      %854 = vmatmul.f32.gmra.mxu0 %v455
      %v855 = vpop.f32.mrf.mxu0
      %v856 = vadd.f32 %v310, %v855
      %857 = vmatmul.f32.gmra.mxu0 %v458
      %v858 = vpop.f32.mrf.mxu0
      %v859 = vadd.f32 %v310, %v858
      %860 = vmatmul.f32.gmra.mxu0 %v461
      %v861 = vpop.f32.mrf.mxu0
      %v862 = vadd.f32 %v310, %v861
      %863 = vmatmul.f32.gmra.mxu0 %v464
      %v864 = vpop.f32.mrf.mxu0
      %v865 = vadd.f32 %v310, %v864
      %866 = vmatmul.f32.gmra.mxu0 %v467
      %v867 = vpop.f32.mrf.mxu0
      %v868 = vadd.f32 %v310, %v867
      %869 = vmatmul.f32.gmra.mxu0 %v470
      %v870 = vpop.f32.mrf.mxu0
      %v871 = vadd.f32 %v310, %v870
      %872 = vmatmul.f32.gmra.mxu0 %v473
      %v873 = vpop.f32.mrf.mxu0
      %v874 = vadd.f32 %v310, %v873
      %875 = vmatmul.f32.gmra.mxu0 %v476
      %v876 = vpop.f32.mrf.mxu0
      %v877 = vadd.f32 %v310, %v876
      %878 = vmatmul.f32.gmra.mxu0 %v479
      %v879 = vpop.f32.mrf.mxu0
      %v880 = vadd.f32 %v310, %v879
      %881 = vmatmul.f32.gmra.mxu0 %v482
      %v882 = vpop.f32.mrf.mxu0
      %v883 = vadd.f32 %v310, %v882
      %884 = vmatmul.f32.gmra.mxu0 %v485
      %v885 = vpop.f32.mrf.mxu0
      %v886 = vadd.f32 %v310, %v885
      %887 = vmatmul.f32.gmra.mxu0 %v488
      %v888 = vpop.f32.mrf.mxu0
      %v889 = vadd.f32 %v310, %v888
      %890 = vmatmul.f32.gmra.mxu0 %v491
      %v891 = vpop.f32.mrf.mxu0
      %v892 = vadd.f32 %v310, %v891
      %893 = vmatmul.f32.gmra.mxu0 %v494
      %v894 = vpop.f32.mrf.mxu0
      %v895 = vadd.f32 %v310, %v894
      %896 = vmatmul.f32.gmra.mxu0 %v497
      %v897 = vpop.f32.mrf.mxu0
      %v898 = vadd.f32 %v310, %v897
      %899 = vmatmul.f32.gmra.mxu0 %v500
      %v900 = vpop.f32.mrf.mxu0
      %v901 = vadd.f32 %v310, %v900
      %902 = vmatmul.f32.gmra.mxu0 %v503
      %v903 = vpop.f32.mrf.mxu0
      %v904 = vadd.f32 %v310, %v903
      %905 = vmatmul.f32.gmra.mxu0 %v506
      %v906 = vpop.f32.mrf.mxu0
      %v907 = vadd.f32 %v310, %v906
      %908 = vmatmul.f32.gmra.mxu0 %v509
      %v909 = vpop.f32.mrf.mxu0
      %v910 = vadd.f32 %v310, %v909
      %911 = vmatmul.f32.gmra.mxu0 %v512
      %v912 = vpop.f32.mrf.mxu0
      %v913 = vadd.f32 %v310, %v912
      %914 = vmatmul.f32.gmra.mxu0 %v515
      %v915 = vpop.f32.mrf.mxu0
      %v916 = vadd.f32 %v310, %v915
      %917 = vmatmul.f32.gmra.mxu0 %v518
      %v918 = vpop.f32.mrf.mxu0
      %v919 = vadd.f32 %v310, %v918
      %920 = vmatmul.f32.gmra.mxu0 %v521
      %v921 = vpop.f32.mrf.mxu0
      %v922 = vadd.f32 %v310, %v921
      %923 = vmatmul.f32.gmra.mxu0 %v524
      %v924 = vpop.f32.mrf.mxu0
      %v925 = vadd.f32 %v310, %v924
      %926 = vmatmul.f32.gmra.mxu0 %v527
      %v927 = vpop.f32.mrf.mxu0
      %v928 = vadd.f32 %v310, %v927
      %929 = vmatmul.f32.gmra.mxu0 %v530
      %v930 = vpop.f32.mrf.mxu0
      %v931 = vadd.f32 %v310, %v930
      %932 = vmatmul.f32.gmra.mxu0 %v533
      %v933 = vpop.f32.mrf.mxu0
      %v934 = vadd.f32 %v310, %v933
      %935 = vmatmul.f32.gmra.mxu0 %v536
      %v936 = vpop.f32.mrf.mxu0
      %v937 = vadd.f32 %v310, %v936
      %938 = vmatmul.f32.gmra.mxu0 %v539
      %v939 = vpop.f32.mrf.mxu0
      %v940 = vadd.f32 %v310, %v939
      %941 = vmatmul.f32.gmra.mxu0 %v542
      %v942 = vpop.f32.mrf.mxu0
      %v943 = vadd.f32 %v310, %v942
      %944 = vmatmul.f32.gmra.mxu0 %v545
      %v945 = vpop.f32.mrf.mxu0
      %v946 = vadd.f32 %v310, %v945
      %947 = vmatmul.f32.gmra.mxu0 %v548
      %v948 = vpop.f32.mrf.mxu0
      %v949 = vadd.f32 %v310, %v948
      %950 = vmatmul.f32.gmra.mxu0 %v551
      %v951 = vpop.f32.mrf.mxu0
      %v952 = vadd.f32 %v310, %v951
      %953 = vmatmul.f32.gmra.mxu0 %v554
      %v954 = vpop.f32.mrf.mxu0
      %v955 = vadd.f32 %v310, %v954
      %956 = vmatmul.f32.gmra.mxu0 %v557
      %v957 = vpop.f32.mrf.mxu0
      %v958 = vadd.f32 %v310, %v957
      %959 = vmatmul.f32.gmra.mxu0 %v560
      %v960 = vpop.f32.mrf.mxu0
      %v961 = vadd.f32 %v310, %v960
      %962 = vmatmul.f32.gmra.mxu0 %v563
      %v963 = vpop.f32.mrf.mxu0
      %v964 = vadd.f32 %v310, %v963
      %965 = vmatmul.f32.gmra.mxu0 %v566
      %v966 = vpop.f32.mrf.mxu0
      %v967 = vadd.f32 %v310, %v966
      %968 = vmatmul.f32.gmra.mxu0 %v569
      %v969 = vpop.f32.mrf.mxu0
      %v970 = vadd.f32 %v310, %v969
      %971 = vmatmul.f32.gmra.mxu0 %v572
      %v972 = vpop.f32.mrf.mxu0
      %v973 = vadd.f32 %v310, %v972
      %974 = vmatmul.f32.gmra.mxu0 %v575
      %v975 = vpop.f32.mrf.mxu0
      %v976 = vadd.f32 %v310, %v975
      %977 = vmatmul.f32.gmra.mxu0 %v578
      %v978 = vpop.f32.mrf.mxu0
      %v979 = vadd.f32 %v310, %v978
      %980 = vmatmul.f32.gmra.mxu0 %v581
      %v981 = vpop.f32.mrf.mxu0
      %v982 = vadd.f32 %v310, %v981
      %983 = vmatmul.f32.gmra.mxu0 %v584
      %v984 = vpop.f32.mrf.mxu0
      %v985 = vadd.f32 %v310, %v984
      %986 = vmatmul.f32.gmra.mxu0 %v587
      %v987 = vpop.f32.mrf.mxu0
      %v988 = vadd.f32 %v310, %v987
      %989 = vmatmul.f32.gmra.mxu0 %v590
      %v990 = vpop.f32.mrf.mxu0
      %v991 = vadd.f32 %v310, %v990
      %992 = vmatmul.f32.gmra.mxu0 %v593
      %v993 = vpop.f32.mrf.mxu0
      %v994 = vadd.f32 %v310, %v993
      %995 = vmatmul.f32.gmra.mxu0 %v596
      %v996 = vpop.f32.mrf.mxu0
      %v997 = vadd.f32 %v310, %v996
      %998 = vmatmul.f32.gmra.mxu0 %v599
      %v999 = vpop.f32.mrf.mxu0
      %v1000 = vadd.f32 %v310, %v999
      %1001 = vmatmul.f32.gmra.mxu0 %v602
      %v1002 = vpop.f32.mrf.mxu0
      %v1003 = vadd.f32 %v310, %v1002
      %1004 = vmatmul.f32.gmra.mxu0 %v605
      %v1005 = vpop.f32.mrf.mxu0
      %v1006 = vadd.f32 %v310, %v1005
      %1007 = vmatmul.f32.gmra.mxu0 %v608
      %v1008 = vpop.f32.mrf.mxu0
      %v1009 = vadd.f32 %v310, %v1008
      %1010 = vmatmul.f32.gmra.mxu0 %v611
      %v1011 = vpop.f32.mrf.mxu0
      %v1012 = vadd.f32 %v310, %v1011
      %1013 = vmatmul.f32.gmra.mxu0 %v614
      %v1014 = vpop.f32.mrf.mxu0
      %v1015 = vadd.f32 %v310, %v1014
      %1016 = vmatmul.f32.gmra.mxu0 %v617
      %v1017 = vpop.f32.mrf.mxu0
      %v1018 = vadd.f32 %v310, %v1017
      %1019 = vmatmul.f32.gmra.mxu0 %v620
      %v1020 = vpop.f32.mrf.mxu0
      %v1021 = vadd.f32 %v310, %v1020
      %1022 = vmatmul.f32.gmra.mxu0 %v623
      %v1023 = vpop.f32.mrf.mxu0
      %v1024 = vadd.f32 %v310, %v1023
      %1025 = vmatmul.f32.gmra.mxu0 %v626
      %v1026 = vpop.f32.mrf.mxu0
      %v1027 = vadd.f32 %v310, %v1026
      %1028 = vmatmul.f32.gmra.mxu0 %v629
      %v1029 = vpop.f32.mrf.mxu0
      %v1030 = vadd.f32 %v310, %v1029
      %1031 = vmatmul.f32.gmra.mxu0 %v632
      %v1032 = vpop.f32.mrf.mxu0
      %v1033 = vadd.f32 %v310, %v1032
      %1034 = vmatmul.f32.gmra.mxu0 %v635
      %v1035 = vpop.f32.mrf.mxu0
      %v1036 = vadd.f32 %v310, %v1035
      %1037 = vmatmul.f32.gmra.mxu0 %v638
      %v1038 = vpop.f32.mrf.mxu0
      %v1039 = vadd.f32 %v310, %v1038
      %1040 = vmatmul.f32.gmra.mxu0 %v641
      %v1041 = vpop.f32.mrf.mxu0
      %v1042 = vadd.f32 %v310, %v1041
      %1043 = vmatmul.f32.gmra.mxu0 %v644
      %v1044 = vpop.f32.mrf.mxu0
      %v1045 = vadd.f32 %v310, %v1044
      %1046 = vmatmul.f32.gmra.mxu0 %v647
      %v1047 = vpop.f32.mrf.mxu0
      %v1048 = vadd.f32 %v310, %v1047
      %1049 = vmatmul.f32.gmra.mxu0 %v650
      %v1050 = vpop.f32.mrf.mxu0
      %v1051 = vadd.f32 %v310, %v1050
      %1052 = vmatmul.f32.gmra.mxu0 %v653
      %v1053 = vpop.f32.mrf.mxu0
      %v1054 = vadd.f32 %v310, %v1053
      %1055 = vmatmul.f32.gmra.mxu0 %v656
      %v1056 = vpop.f32.mrf.mxu0
      %v1057 = vadd.f32 %v310, %v1056
      %1058 = vmatmul.f32.gmra.mxu0 %v659
      %v1059 = vpop.f32.mrf.mxu0
      %v1060 = vadd.f32 %v310, %v1059
      %1061 = vmatmul.f32.gmra.mxu0 %v662
      %v1062 = vpop.f32.mrf.mxu0
      %v1063 = vadd.f32 %v310, %v1062
      %1064 = vmatmul.f32.gmra.mxu0 %v665
      %v1065 = vpop.f32.mrf.mxu0
      %v1066 = vadd.f32 %v310, %v1065
      %1067 = vmatmul.f32.gmra.mxu0 %v668
      %v1068 = vpop.f32.mrf.mxu0
      %v1069 = vadd.f32 %v310, %v1068
      %1070 = vmatmul.f32.gmra.mxu0 %v671
      %v1071 = vpop.f32.mrf.mxu0
      %v1072 = vadd.f32 %v310, %v1071
      %1073 = vmatmul.f32.gmra.mxu0 %v674
      %v1074 = vpop.f32.mrf.mxu0
      %v1075 = vadd.f32 %v310, %v1074
      %1076 = vmatmul.f32.gmra.mxu0 %v677
      %v1077 = vpop.f32.mrf.mxu0
      %v1078 = vadd.f32 %v310, %v1077
      %1079 = vmatmul.f32.gmra.mxu0 %v680
      %v1080 = vpop.f32.mrf.mxu0
      %v1081 = vadd.f32 %v310, %v1080
      %1082 = vmatmul.f32.gmra.mxu0 %v683
      %v1083 = vpop.f32.mrf.mxu0
      %v1084 = vadd.f32 %v310, %v1083
      %1085 = vmatmul.f32.gmra.mxu0 %v686
      %v1086 = vpop.f32.mrf.mxu0
      %v1087 = vadd.f32 %v310, %v1086
      %1088 = vmatmul.f32.gmra.mxu0 %v689
      %v1089 = vpop.f32.mrf.mxu0
      %v1090 = vadd.f32 %v310, %v1089
      %1091 = vmatmul.f32.gmra.mxu0 %v692
      %v1092 = vpop.f32.mrf.mxu0
      %v1093 = vadd.f32 %v310, %v1092
      %1094 = vmatmul.f32.gmra.mxu0 %v695
      %v1095 = vpop.f32.mrf.mxu0
      %v1096 = vadd.f32 %v310, %v1095
      %1097 = vdwg.mxu0
      %v1098 = vmax.f32 %v715, 0.0
      %v1099 = vmax.f32 %v718, 0.0
      %v1100 = vmax.f32 %v721, 0.0
      %v1101 = vmax.f32 %v724, 0.0
      %v1102 = vmax.f32 %v727, 0.0
      %v1103 = vmax.f32 %v730, 0.0
      %v1104 = vmax.f32 %v733, 0.0
      %v1105 = vmax.f32 %v736, 0.0
      %v1106 = vmax.f32 %v739, 0.0
      %v1107 = vmax.f32 %v742, 0.0
      %v1108 = vmax.f32 %v745, 0.0
      %v1109 = vmax.f32 %v748, 0.0
      %v1110 = vmax.f32 %v751, 0.0
      %v1111 = vmax.f32 %v754, 0.0
      %v1112 = vmax.f32 %v757, 0.0
      %v1113 = vmax.f32 %v760, 0.0
      %v1114 = vmax.f32 %v763, 0.0
      %v1115 = vmax.f32 %v766, 0.0
      %v1116 = vmax.f32 %v769, 0.0
      %v1117 = vmax.f32 %v772, 0.0
      %v1118 = vmax.f32 %v775, 0.0
      %v1119 = vmax.f32 %v778, 0.0
      %v1120 = vmax.f32 %v781, 0.0
      %v1121 = vmax.f32 %v784, 0.0
      %v1122 = vmax.f32 %v787, 0.0
      %v1123 = vmax.f32 %v790, 0.0
      %v1124 = vmax.f32 %v793, 0.0
      %v1125 = vmax.f32 %v796, 0.0
      %v1126 = vmax.f32 %v799, 0.0
      %v1127 = vmax.f32 %v802, 0.0
      %v1128 = vmax.f32 %v805, 0.0
      %v1129 = vmax.f32 %v808, 0.0
      %v1130 = vmax.f32 %v811, 0.0
      %v1131 = vmax.f32 %v814, 0.0
      %v1132 = vmax.f32 %v817, 0.0
      %v1133 = vmax.f32 %v820, 0.0
      %v1134 = vmax.f32 %v823, 0.0
      %v1135 = vmax.f32 %v826, 0.0
      %v1136 = vmax.f32 %v829, 0.0
      %v1137 = vmax.f32 %v832, 0.0
      %v1138 = vmax.f32 %v835, 0.0
      %v1139 = vmax.f32 %v838, 0.0
      %v1140 = vmax.f32 %v841, 0.0
      %v1141 = vmax.f32 %v844, 0.0
      %v1142 = vmax.f32 %v847, 0.0
      %v1143 = vmax.f32 %v850, 0.0
      %v1144 = vmax.f32 %v853, 0.0
      %v1145 = vmax.f32 %v856, 0.0
      %v1146 = vmax.f32 %v859, 0.0
      %v1147 = vmax.f32 %v862, 0.0
      %v1148 = vmax.f32 %v865, 0.0
      %v1149 = vmax.f32 %v868, 0.0
      %v1150 = vmax.f32 %v871, 0.0
      %v1151 = vmax.f32 %v874, 0.0
      %v1152 = vmax.f32 %v877, 0.0
      %v1153 = vmax.f32 %v880, 0.0
      %v1154 = vmax.f32 %v883, 0.0
      %v1155 = vmax.f32 %v886, 0.0
      %v1156 = vmax.f32 %v889, 0.0
      %v1157 = vmax.f32 %v892, 0.0
      %v1158 = vmax.f32 %v895, 0.0
      %v1159 = vmax.f32 %v898, 0.0
      %v1160 = vmax.f32 %v901, 0.0
      %v1161 = vmax.f32 %v904, 0.0
      %v1162 = vmax.f32 %v907, 0.0
      %v1163 = vmax.f32 %v910, 0.0
      %v1164 = vmax.f32 %v913, 0.0
      %v1165 = vmax.f32 %v916, 0.0
      %v1166 = vmax.f32 %v919, 0.0
      %v1167 = vmax.f32 %v922, 0.0
      %v1168 = vmax.f32 %v925, 0.0
      %v1169 = vmax.f32 %v928, 0.0
      %v1170 = vmax.f32 %v931, 0.0
      %v1171 = vmax.f32 %v934, 0.0
      %v1172 = vmax.f32 %v937, 0.0
      %v1173 = vmax.f32 %v940, 0.0
      %v1174 = vmax.f32 %v943, 0.0
      %v1175 = vmax.f32 %v946, 0.0
      %v1176 = vmax.f32 %v949, 0.0
      %v1177 = vmax.f32 %v952, 0.0
      %v1178 = vmax.f32 %v955, 0.0
      %v1179 = vmax.f32 %v958, 0.0
      %v1180 = vmax.f32 %v961, 0.0
      %v1181 = vmax.f32 %v964, 0.0
      %v1182 = vmax.f32 %v967, 0.0
      %v1183 = vmax.f32 %v970, 0.0
      %v1184 = vmax.f32 %v973, 0.0
      %v1185 = vmax.f32 %v976, 0.0
      %v1186 = vmax.f32 %v979, 0.0
      %v1187 = vmax.f32 %v982, 0.0
      %v1188 = vmax.f32 %v985, 0.0
      %v1189 = vmax.f32 %v988, 0.0
      %v1190 = vmax.f32 %v991, 0.0
      %v1191 = vmax.f32 %v994, 0.0
      %v1192 = vmax.f32 %v997, 0.0
      %v1193 = vmax.f32 %v1000, 0.0
      %v1194 = vmax.f32 %v1003, 0.0
      %v1195 = vmax.f32 %v1006, 0.0
      %v1196 = vmax.f32 %v1009, 0.0
      %v1197 = vmax.f32 %v1012, 0.0
      %v1198 = vmax.f32 %v1015, 0.0
      %v1199 = vmax.f32 %v1018, 0.0
      %v1200 = vmax.f32 %v1021, 0.0
      %v1201 = vmax.f32 %v1024, 0.0
      %v1202 = vmax.f32 %v1027, 0.0
      %v1203 = vmax.f32 %v1030, 0.0
      %v1204 = vmax.f32 %v1033, 0.0
      %v1205 = vmax.f32 %v1036, 0.0
      %v1206 = vmax.f32 %v1039, 0.0
      %v1207 = vmax.f32 %v1042, 0.0
      %v1208 = vmax.f32 %v1045, 0.0
      %v1209 = vmax.f32 %v1048, 0.0
      %v1210 = vmax.f32 %v1051, 0.0
      %v1211 = vmax.f32 %v1054, 0.0
      %v1212 = vmax.f32 %v1057, 0.0
      %v1213 = vmax.f32 %v1060, 0.0
      %v1214 = vmax.f32 %v1063, 0.0
      %v1215 = vmax.f32 %v1066, 0.0
      %v1216 = vmax.f32 %v1069, 0.0
      %v1217 = vmax.f32 %v1072, 0.0
      %v1218 = vmax.f32 %v1075, 0.0
      %v1219 = vmax.f32 %v1078, 0.0
      %v1220 = vmax.f32 %v1081, 0.0
      %v1221 = vmax.f32 %v1084, 0.0
      %v1222 = vmax.f32 %v1087, 0.0
      %v1223 = vmax.f32 %v1090, 0.0
      %v1224 = vmax.f32 %v1093, 0.0
      %v1225 = vmax.f32 %v1096, 0.0
      %vm1226 = vcmask 261120
      %1227 = vst.msk [vmem:[%s172] sm:$0xff] %vm1226, %v1098
      %1228 = vst.msk [vmem:[%s172 + $0x8] sm:$0xff] %vm1226, %v1099
      %1229 = vst.msk [vmem:[%s172 + $0x10] sm:$0xff] %vm1226, %v1100
      %1230 = vst.msk [vmem:[%s172 + $0x18] sm:$0xff] %vm1226, %v1101
      %1231 = vst.msk [vmem:[%s172 + $0x20] sm:$0xff] %vm1226, %v1102
      %1232 = vst.msk [vmem:[%s172 + $0x28] sm:$0xff] %vm1226, %v1103
      %1233 = vst.msk [vmem:[%s172 + $0x30] sm:$0xff] %vm1226, %v1104
      %1234 = vst.msk [vmem:[%s172 + $0x38] sm:$0xff] %vm1226, %v1105
      %1235 = vst.msk [vmem:[%s172 + $0x40] sm:$0xff] %vm1226, %v1106
      %1236 = vst.msk [vmem:[%s172 + $0x48] sm:$0xff] %vm1226, %v1107
      %1237 = vst.msk [vmem:[%s172 + $0x50] sm:$0xff] %vm1226, %v1108
      %1238 = vst.msk [vmem:[%s172 + $0x58] sm:$0xff] %vm1226, %v1109
      %1239 = vst.msk [vmem:[%s172 + $0x60] sm:$0xff] %vm1226, %v1110
      %1240 = vst.msk [vmem:[%s172 + $0x68] sm:$0xff] %vm1226, %v1111
      %1241 = vst.msk [vmem:[%s172 + $0x70] sm:$0xff] %vm1226, %v1112
      %1242 = vst.msk [vmem:[%s172 + $0x78] sm:$0xff] %vm1226, %v1113
      %1243 = vst.msk [vmem:[%s172 + $0x80] sm:$0xff] %vm1226, %v1114
      %1244 = vst.msk [vmem:[%s172 + $0x88] sm:$0xff] %vm1226, %v1115
      %1245 = vst.msk [vmem:[%s172 + $0x90] sm:$0xff] %vm1226, %v1116
      %1246 = vst.msk [vmem:[%s172 + $0x98] sm:$0xff] %vm1226, %v1117
      %1247 = vst.msk [vmem:[%s172 + $0xa0] sm:$0xff] %vm1226, %v1118
      %1248 = vst.msk [vmem:[%s172 + $0xa8] sm:$0xff] %vm1226, %v1119
      %1249 = vst.msk [vmem:[%s172 + $0xb0] sm:$0xff] %vm1226, %v1120
      %1250 = vst.msk [vmem:[%s172 + $0xb8] sm:$0xff] %vm1226, %v1121
      %1251 = vst.msk [vmem:[%s172 + $0xc0] sm:$0xff] %vm1226, %v1122
      %1252 = vst.msk [vmem:[%s172 + $0xc8] sm:$0xff] %vm1226, %v1123
      %1253 = vst.msk [vmem:[%s172 + $0xd0] sm:$0xff] %vm1226, %v1124
      %1254 = vst.msk [vmem:[%s172 + $0xd8] sm:$0xff] %vm1226, %v1125
      %1255 = vst.msk [vmem:[%s172 + $0xe0] sm:$0xff] %vm1226, %v1126
      %1256 = vst.msk [vmem:[%s172 + $0xe8] sm:$0xff] %vm1226, %v1127
      %1257 = vst.msk [vmem:[%s172 + $0xf0] sm:$0xff] %vm1226, %v1128
      %1258 = vst.msk [vmem:[%s172 + $0xf8] sm:$0xff] %vm1226, %v1129
      %1259 = vst.msk [vmem:[%s172 + $0x100] sm:$0xff] %vm1226, %v1130
      %1260 = vst.msk [vmem:[%s172 + $0x108] sm:$0xff] %vm1226, %v1131
      %1261 = vst.msk [vmem:[%s172 + $0x110] sm:$0xff] %vm1226, %v1132
      %1262 = vst.msk [vmem:[%s172 + $0x118] sm:$0xff] %vm1226, %v1133
      %1263 = vst.msk [vmem:[%s172 + $0x120] sm:$0xff] %vm1226, %v1134
      %1264 = vst.msk [vmem:[%s172 + $0x128] sm:$0xff] %vm1226, %v1135
      %1265 = vst.msk [vmem:[%s172 + $0x130] sm:$0xff] %vm1226, %v1136
      %1266 = vst.msk [vmem:[%s172 + $0x138] sm:$0xff] %vm1226, %v1137
      %1267 = vst.msk [vmem:[%s172 + $0x140] sm:$0xff] %vm1226, %v1138
      %1268 = vst.msk [vmem:[%s172 + $0x148] sm:$0xff] %vm1226, %v1139
      %1269 = vst.msk [vmem:[%s172 + $0x150] sm:$0xff] %vm1226, %v1140
      %1270 = vst.msk [vmem:[%s172 + $0x158] sm:$0xff] %vm1226, %v1141
      %1271 = vst.msk [vmem:[%s172 + $0x160] sm:$0xff] %vm1226, %v1142
      %1272 = vst.msk [vmem:[%s172 + $0x168] sm:$0xff] %vm1226, %v1143
      %1273 = vst.msk [vmem:[%s172 + $0x170] sm:$0xff] %vm1226, %v1144
      %1274 = vst.msk [vmem:[%s172 + $0x178] sm:$0xff] %vm1226, %v1145
      %1275 = vst.msk [vmem:[%s172 + $0x180] sm:$0xff] %vm1226, %v1146
      %1276 = vst.msk [vmem:[%s172 + $0x188] sm:$0xff] %vm1226, %v1147
      %1277 = vst.msk [vmem:[%s172 + $0x190] sm:$0xff] %vm1226, %v1148
      %1278 = vst.msk [vmem:[%s172 + $0x198] sm:$0xff] %vm1226, %v1149
      %1279 = vst.msk [vmem:[%s172 + $0x1a0] sm:$0xff] %vm1226, %v1150
      %1280 = vst.msk [vmem:[%s172 + $0x1a8] sm:$0xff] %vm1226, %v1151
      %1281 = vst.msk [vmem:[%s172 + $0x1b0] sm:$0xff] %vm1226, %v1152
      %1282 = vst.msk [vmem:[%s172 + $0x1b8] sm:$0xff] %vm1226, %v1153
      %1283 = vst.msk [vmem:[%s172 + $0x1c0] sm:$0xff] %vm1226, %v1154
      %1284 = vst.msk [vmem:[%s172 + $0x1c8] sm:$0xff] %vm1226, %v1155
      %1285 = vst.msk [vmem:[%s172 + $0x1d0] sm:$0xff] %vm1226, %v1156
      %1286 = vst.msk [vmem:[%s172 + $0x1d8] sm:$0xff] %vm1226, %v1157
      %1287 = vst.msk [vmem:[%s172 + $0x1e0] sm:$0xff] %vm1226, %v1158
      %1288 = vst.msk [vmem:[%s172 + $0x1e8] sm:$0xff] %vm1226, %v1159
      %1289 = vst.msk [vmem:[%s172 + $0x1f0] sm:$0xff] %vm1226, %v1160
      %1290 = vst.msk [vmem:[%s172 + $0x1f8] sm:$0xff] %vm1226, %v1161
      %1291 = vst.msk [vmem:[%s172 + $0x200] sm:$0xff] %vm1226, %v1162
      %1292 = vst.msk [vmem:[%s172 + $0x208] sm:$0xff] %vm1226, %v1163
      %1293 = vst.msk [vmem:[%s172 + $0x210] sm:$0xff] %vm1226, %v1164
      %1294 = vst.msk [vmem:[%s172 + $0x218] sm:$0xff] %vm1226, %v1165
      %1295 = vst.msk [vmem:[%s172 + $0x220] sm:$0xff] %vm1226, %v1166
      %1296 = vst.msk [vmem:[%s172 + $0x228] sm:$0xff] %vm1226, %v1167
      %1297 = vst.msk [vmem:[%s172 + $0x230] sm:$0xff] %vm1226, %v1168
      %1298 = vst.msk [vmem:[%s172 + $0x238] sm:$0xff] %vm1226, %v1169
      %1299 = vst.msk [vmem:[%s172 + $0x240] sm:$0xff] %vm1226, %v1170
      %1300 = vst.msk [vmem:[%s172 + $0x248] sm:$0xff] %vm1226, %v1171
      %1301 = vst.msk [vmem:[%s172 + $0x250] sm:$0xff] %vm1226, %v1172
      %1302 = vst.msk [vmem:[%s172 + $0x258] sm:$0xff] %vm1226, %v1173
      %1303 = vst.msk [vmem:[%s172 + $0x260] sm:$0xff] %vm1226, %v1174
      %1304 = vst.msk [vmem:[%s172 + $0x268] sm:$0xff] %vm1226, %v1175
      %1305 = vst.msk [vmem:[%s172 + $0x270] sm:$0xff] %vm1226, %v1176
      %1306 = vst.msk [vmem:[%s172 + $0x278] sm:$0xff] %vm1226, %v1177
      %1307 = vst.msk [vmem:[%s172 + $0x280] sm:$0xff] %vm1226, %v1178
      %1308 = vst.msk [vmem:[%s172 + $0x288] sm:$0xff] %vm1226, %v1179
      %1309 = vst.msk [vmem:[%s172 + $0x290] sm:$0xff] %vm1226, %v1180
      %1310 = vst.msk [vmem:[%s172 + $0x298] sm:$0xff] %vm1226, %v1181
      %1311 = vst.msk [vmem:[%s172 + $0x2a0] sm:$0xff] %vm1226, %v1182
      %1312 = vst.msk [vmem:[%s172 + $0x2a8] sm:$0xff] %vm1226, %v1183
      %1313 = vst.msk [vmem:[%s172 + $0x2b0] sm:$0xff] %vm1226, %v1184
      %1314 = vst.msk [vmem:[%s172 + $0x2b8] sm:$0xff] %vm1226, %v1185
      %1315 = vst.msk [vmem:[%s172 + $0x2c0] sm:$0xff] %vm1226, %v1186
      %1316 = vst.msk [vmem:[%s172 + $0x2c8] sm:$0xff] %vm1226, %v1187
      %1317 = vst.msk [vmem:[%s172 + $0x2d0] sm:$0xff] %vm1226, %v1188
      %1318 = vst.msk [vmem:[%s172 + $0x2d8] sm:$0xff] %vm1226, %v1189
      %1319 = vst.msk [vmem:[%s172 + $0x2e0] sm:$0xff] %vm1226, %v1190
      %1320 = vst.msk [vmem:[%s172 + $0x2e8] sm:$0xff] %vm1226, %v1191
      %1321 = vst.msk [vmem:[%s172 + $0x2f0] sm:$0xff] %vm1226, %v1192
      %1322 = vst.msk [vmem:[%s172 + $0x2f8] sm:$0xff] %vm1226, %v1193
      %1323 = vst.msk [vmem:[%s172 + $0x300] sm:$0xff] %vm1226, %v1194
      %1324 = vst.msk [vmem:[%s172 + $0x308] sm:$0xff] %vm1226, %v1195
      %1325 = vst.msk [vmem:[%s172 + $0x310] sm:$0xff] %vm1226, %v1196
      %1326 = vst.msk [vmem:[%s172 + $0x318] sm:$0xff] %vm1226, %v1197
      %1327 = vst.msk [vmem:[%s172 + $0x320] sm:$0xff] %vm1226, %v1198
      %1328 = vst.msk [vmem:[%s172 + $0x328] sm:$0xff] %vm1226, %v1199
      %1329 = vst.msk [vmem:[%s172 + $0x330] sm:$0xff] %vm1226, %v1200
      %1330 = vst.msk [vmem:[%s172 + $0x338] sm:$0xff] %vm1226, %v1201
      %1331 = vst.msk [vmem:[%s172 + $0x340] sm:$0xff] %vm1226, %v1202
      %1332 = vst.msk [vmem:[%s172 + $0x348] sm:$0xff] %vm1226, %v1203
      %1333 = vst.msk [vmem:[%s172 + $0x350] sm:$0xff] %vm1226, %v1204
      %1334 = vst.msk [vmem:[%s172 + $0x358] sm:$0xff] %vm1226, %v1205
      %1335 = vst.msk [vmem:[%s172 + $0x360] sm:$0xff] %vm1226, %v1206
      %1336 = vst.msk [vmem:[%s172 + $0x368] sm:$0xff] %vm1226, %v1207
      %1337 = vst.msk [vmem:[%s172 + $0x370] sm:$0xff] %vm1226, %v1208
      %1338 = vst.msk [vmem:[%s172 + $0x378] sm:$0xff] %vm1226, %v1209
      %1339 = vst.msk [vmem:[%s172 + $0x380] sm:$0xff] %vm1226, %v1210
      %1340 = vst.msk [vmem:[%s172 + $0x388] sm:$0xff] %vm1226, %v1211
      %1341 = vst.msk [vmem:[%s172 + $0x390] sm:$0xff] %vm1226, %v1212
      %1342 = vst.msk [vmem:[%s172 + $0x398] sm:$0xff] %vm1226, %v1213
      %1343 = vst.msk [vmem:[%s172 + $0x3a0] sm:$0xff] %vm1226, %v1214
      %1344 = vst.msk [vmem:[%s172 + $0x3a8] sm:$0xff] %vm1226, %v1215
      %1345 = vst.msk [vmem:[%s172 + $0x3b0] sm:$0xff] %vm1226, %v1216
      %1346 = vst.msk [vmem:[%s172 + $0x3b8] sm:$0xff] %vm1226, %v1217
      %1347 = vst.msk [vmem:[%s172 + $0x3c0] sm:$0xff] %vm1226, %v1218
      %1348 = vst.msk [vmem:[%s172 + $0x3c8] sm:$0xff] %vm1226, %v1219
      %1349 = vst.msk [vmem:[%s172 + $0x3d0] sm:$0xff] %vm1226, %v1220
      %1350 = vst.msk [vmem:[%s172 + $0x3d8] sm:$0xff] %vm1226, %v1221
      %1351 = vst.msk [vmem:[%s172 + $0x3e0] sm:$0xff] %vm1226, %v1222
      %1352 = vst.msk [vmem:[%s172 + $0x3e8] sm:$0xff] %vm1226, %v1223
      %1353 = vst.msk [vmem:[%s172 + $0x3f0] sm:$0xff] %vm1226, %v1224
      %1354 = vst.msk [vmem:[%s172 + $0x3f8] sm:$0xff] %vm1226, %v1225
      %s1355 = smul.u32 128, %s14
      %p1356 = scmp.lt.s32.totalorder %s1355, 255
      %s1357 = scalar_select %p1356, %s1355, 255
      %s1358 = smul.addr %s1357, 8
      %s1359 = scalar_lea.vmem %s3, %s1358
      // Predicated region
      $region33: #{betavae_forward.9} parent=31 // pred_check
        %p1360 = pneg %p100
      $region34: #{betavae_forward.9} parent=31 // pred_check_branch
        %1362 = sbr.rel (%p1360) target = $region36
      $region35: #{betavae_forward.9} parent=31 // pred_region
        %s1363 = smul.u32 128, %s14
      $region36: #{betavae_forward.9} parent=31 // pred_fallthru
        _
    $region32: #{betavae_forward.9} parent=5 // pred_fallthru
      _
    %p1364 = scmp.le.s32.totalorder 2, %s9
    // Predicated region
    $region37: #{betavae_forward.9} parent=5 // pred_check
      %p1365 = pneg %p1364
    $region38: #{betavae_forward.9} parent=5 // pred_check_branch
      %1367 = sbr.rel (%p1365) target = $region40
    $region39: #{betavae_forward.9} parent=5 // pred_region
      %s1368 = ssub.s32 %s9, 2
      // Predicated region
      $region41: #{betavae_forward.9} parent=39 // pred_check
        %p1369 = pneg %p106
      $region42: #{betavae_forward.9} parent=39 // pred_check_branch
        %1371 = sbr.rel (%p1369) target = $region44
      $region43: #{betavae_forward.9} parent=39 // pred_region
        %s1372 = smul.u32 128, %s15
        %p1373 = scmp.lt.s32.totalorder %s1372, 255
        %s1374 = scalar_select %p1373, %s1372, 255
        %s1375 = smul.addr %s1374, 8
        %s1376 = scalar_lea.vmem %s3, %s1375
      $region44: #{betavae_forward.9} parent=39 // pred_fallthru
        _
    $region40: #{betavae_forward.9} parent=5 // pred_fallthru
      _
  $region6: #{betavae_forward.9} parent=0 // loop_footer
    %s13 = sadd.s32 1, %s9
  $region7: #{betavae_forward.9} parent=0 // loop_footer_branch
    %8 = sbr.rel target = $region3
  $region8: #{betavae_forward.9} parent=0 // loop_exit
    _

// kernel: betavae_forward.10
$region0: #{betavae_forward.10}
  #allocation0 [shape = 'u32[]', space=smem, size = 0x4, offset = 0x4, fixed_abs, tag = 'smem constant byte address 0x4 - core index']
  #allocation1 [shape = 'u32[72,128]{1,0:T(1,128)}', space=vmem, size = 0x9000, scoped, tag = 'internal scratch']
  %s0 = inlined_call_operand.vmem [shape: f32[512,512], index: 0, kind: input, shape index: {}]
  %s1 = inlined_call_operand.vmem [shape: f32[512,32], index: 1, kind: input, shape index: {}]
  %s2 = inlined_call_operand.vmem [shape: f32[1,32], index: 2, kind: input, shape index: {}]
  %s3 = inlined_call_operand.vmem [shape: f32[512,32], index: 3, kind: output, shape index: {}]
  %s4 = sld [smem:[#allocation0]]
  $region22: #{betavae_forward.10} parent=0
    _
  %s6 = ssub.s32 1, %s4
  %s7 = scalar_select 0, %s6, %s4
  // Predicated region
  $region2: #{betavae_forward.10} parent=0 // pred_check
    _
  $region3: #{betavae_forward.10} parent=0 // pred_check_branch
    %9 = sbr.rel (0) target = $region5
  $region4: #{betavae_forward.10} parent=0 // pred_region
    _
  $region5: #{betavae_forward.10} parent=0 // pred_fallthru
    _
  // Predicated region
  $region6: #{betavae_forward.10} parent=0 // pred_check
    _
  $region7: #{betavae_forward.10} parent=0 // pred_check_branch
    %11 = sbr.rel (0) target = $region9
  $region8: #{betavae_forward.10} parent=0 // pred_region
    _
  $region9: #{betavae_forward.10} parent=0 // pred_fallthru
    _
  // Predicated region
  $region10: #{betavae_forward.10} parent=0 // pred_check
    _
  $region11: #{betavae_forward.10} parent=0 // pred_check_branch
    %13 = sbr.rel (0) target = $region13
  $region12: #{betavae_forward.10} parent=0 // pred_region
    _
  $region13: #{betavae_forward.10} parent=0 // pred_fallthru
    _
  %v14 = vld [vmem:[%s0] sm:$0xff]
  %v15 = vld [vmem:[%s0 + $0x8] sm:$0xff]
  %v16 = vld [vmem:[%s0 + $0x10] sm:$0xff]
  %v17 = vld [vmem:[%s0 + $0x18] sm:$0xff]
  %v18 = vld [vmem:[%s0 + $0x20] sm:$0xff]
  %v19 = vld [vmem:[%s0 + $0x28] sm:$0xff]
  %v20 = vld [vmem:[%s0 + $0x30] sm:$0xff]
  %v21 = vld [vmem:[%s0 + $0x38] sm:$0xff]
  %v22 = vld [vmem:[%s0 + $0x40] sm:$0xff]
  %v23 = vld [vmem:[%s0 + $0x48] sm:$0xff]
  %v24 = vld [vmem:[%s0 + $0x50] sm:$0xff]
  %v25 = vld [vmem:[%s0 + $0x58] sm:$0xff]
  %v26 = vld [vmem:[%s0 + $0x60] sm:$0xff]
  %v27 = vld [vmem:[%s0 + $0x68] sm:$0xff]
  %v28 = vld [vmem:[%s0 + $0x70] sm:$0xff]
  %v29 = vld [vmem:[%s0 + $0x78] sm:$0xff]
  %v30 = vld [vmem:[%s0 + $0x80] sm:$0xff]
  %v31 = vld [vmem:[%s0 + $0x88] sm:$0xff]
  %v32 = vld [vmem:[%s0 + $0x90] sm:$0xff]
  %v33 = vld [vmem:[%s0 + $0x98] sm:$0xff]
  %v34 = vld [vmem:[%s0 + $0xa0] sm:$0xff]
  %v35 = vld [vmem:[%s0 + $0xa8] sm:$0xff]
  %v36 = vld [vmem:[%s0 + $0xb0] sm:$0xff]
  %v37 = vld [vmem:[%s0 + $0xb8] sm:$0xff]
  %v38 = vld [vmem:[%s0 + $0xc0] sm:$0xff]
  %v39 = vld [vmem:[%s0 + $0xc8] sm:$0xff]
  %v40 = vld [vmem:[%s0 + $0xd0] sm:$0xff]
  %v41 = vld [vmem:[%s0 + $0xd8] sm:$0xff]
  %v42 = vld [vmem:[%s0 + $0xe0] sm:$0xff]
  %v43 = vld [vmem:[%s0 + $0xe8] sm:$0xff]
  %v44 = vld [vmem:[%s0 + $0xf0] sm:$0xff]
  %v45 = vld [vmem:[%s0 + $0xf8] sm:$0xff]
  %v46 = vld [vmem:[%s0 + $0x100] sm:$0xff]
  %v47 = vld [vmem:[%s0 + $0x108] sm:$0xff]
  %v48 = vld [vmem:[%s0 + $0x110] sm:$0xff]
  %v49 = vld [vmem:[%s0 + $0x118] sm:$0xff]
  %v50 = vld [vmem:[%s0 + $0x120] sm:$0xff]
  %v51 = vld [vmem:[%s0 + $0x128] sm:$0xff]
  %v52 = vld [vmem:[%s0 + $0x130] sm:$0xff]
  %v53 = vld [vmem:[%s0 + $0x138] sm:$0xff]
  %v54 = vld [vmem:[%s0 + $0x140] sm:$0xff]
  %v55 = vld [vmem:[%s0 + $0x148] sm:$0xff]
  %v56 = vld [vmem:[%s0 + $0x150] sm:$0xff]
  %v57 = vld [vmem:[%s0 + $0x158] sm:$0xff]
  %v58 = vld [vmem:[%s0 + $0x160] sm:$0xff]
  %v59 = vld [vmem:[%s0 + $0x168] sm:$0xff]
  %v60 = vld [vmem:[%s0 + $0x170] sm:$0xff]
  %v61 = vld [vmem:[%s0 + $0x178] sm:$0xff]
  %v62 = vld [vmem:[%s0 + $0x180] sm:$0xff]
  %v63 = vld [vmem:[%s0 + $0x188] sm:$0xff]
  %v64 = vld [vmem:[%s0 + $0x190] sm:$0xff]
  %v65 = vld [vmem:[%s0 + $0x198] sm:$0xff]
  %v66 = vld [vmem:[%s0 + $0x1a0] sm:$0xff]
  %v67 = vld [vmem:[%s0 + $0x1a8] sm:$0xff]
  %v68 = vld [vmem:[%s0 + $0x1b0] sm:$0xff]
  %v69 = vld [vmem:[%s0 + $0x1b8] sm:$0xff]
  %v70 = vld [vmem:[%s0 + $0x1c0] sm:$0xff]
  %v71 = vld [vmem:[%s0 + $0x1c8] sm:$0xff]
  %v72 = vld [vmem:[%s0 + $0x1d0] sm:$0xff]
  %v73 = vld [vmem:[%s0 + $0x1d8] sm:$0xff]
  %v74 = vld [vmem:[%s0 + $0x1e0] sm:$0xff]
  %v75 = vld [vmem:[%s0 + $0x1e8] sm:$0xff]
  %v76 = vld [vmem:[%s0 + $0x1f0] sm:$0xff]
  %v77 = vld [vmem:[%s0 + $0x1f8] sm:$0xff]
  %v78 = vld [vmem:[%s0 + $0x200] sm:$0xff]
  %v79 = vld [vmem:[%s0 + $0x208] sm:$0xff]
  %v80 = vld [vmem:[%s0 + $0x210] sm:$0xff]
  %v81 = vld [vmem:[%s0 + $0x218] sm:$0xff]
  %v82 = vld [vmem:[%s0 + $0x220] sm:$0xff]
  %v83 = vld [vmem:[%s0 + $0x228] sm:$0xff]
  %v84 = vld [vmem:[%s0 + $0x230] sm:$0xff]
  %v85 = vld [vmem:[%s0 + $0x238] sm:$0xff]
  %v86 = vld [vmem:[%s0 + $0x240] sm:$0xff]
  %v87 = vld [vmem:[%s0 + $0x248] sm:$0xff]
  %v88 = vld [vmem:[%s0 + $0x250] sm:$0xff]
  %v89 = vld [vmem:[%s0 + $0x258] sm:$0xff]
  %v90 = vld [vmem:[%s0 + $0x260] sm:$0xff]
  %v91 = vld [vmem:[%s0 + $0x268] sm:$0xff]
  %v92 = vld [vmem:[%s0 + $0x270] sm:$0xff]
  %v93 = vld [vmem:[%s0 + $0x278] sm:$0xff]
  %v94 = vld [vmem:[%s0 + $0x280] sm:$0xff]
  %v95 = vld [vmem:[%s0 + $0x288] sm:$0xff]
  %v96 = vld [vmem:[%s0 + $0x290] sm:$0xff]
  %v97 = vld [vmem:[%s0 + $0x298] sm:$0xff]
  %v98 = vld [vmem:[%s0 + $0x2a0] sm:$0xff]
  %v99 = vld [vmem:[%s0 + $0x2a8] sm:$0xff]
  %v100 = vld [vmem:[%s0 + $0x2b0] sm:$0xff]
  %v101 = vld [vmem:[%s0 + $0x2b8] sm:$0xff]
  %v102 = vld [vmem:[%s0 + $0x2c0] sm:$0xff]
  %v103 = vld [vmem:[%s0 + $0x2c8] sm:$0xff]
  %v104 = vld [vmem:[%s0 + $0x2d0] sm:$0xff]
  %v105 = vld [vmem:[%s0 + $0x2d8] sm:$0xff]
  %v106 = vld [vmem:[%s0 + $0x2e0] sm:$0xff]
  %v107 = vld [vmem:[%s0 + $0x2e8] sm:$0xff]
  %v108 = vld [vmem:[%s0 + $0x2f0] sm:$0xff]
  %v109 = vld [vmem:[%s0 + $0x2f8] sm:$0xff]
  %v110 = vld [vmem:[%s0 + $0x300] sm:$0xff]
  %v111 = vld [vmem:[%s0 + $0x308] sm:$0xff]
  %v112 = vld [vmem:[%s0 + $0x310] sm:$0xff]
  %v113 = vld [vmem:[%s0 + $0x318] sm:$0xff]
  %v114 = vld [vmem:[%s0 + $0x320] sm:$0xff]
  %v115 = vld [vmem:[%s0 + $0x328] sm:$0xff]
  %v116 = vld [vmem:[%s0 + $0x330] sm:$0xff]
  %v117 = vld [vmem:[%s0 + $0x338] sm:$0xff]
  %v118 = vld [vmem:[%s0 + $0x340] sm:$0xff]
  %v119 = vld [vmem:[%s0 + $0x348] sm:$0xff]
  %v120 = vld [vmem:[%s0 + $0x350] sm:$0xff]
  %v121 = vld [vmem:[%s0 + $0x358] sm:$0xff]
  %v122 = vld [vmem:[%s0 + $0x360] sm:$0xff]
  %v123 = vld [vmem:[%s0 + $0x368] sm:$0xff]
  %v124 = vld [vmem:[%s0 + $0x370] sm:$0xff]
  %v125 = vld [vmem:[%s0 + $0x378] sm:$0xff]
  %v126 = vld [vmem:[%s0 + $0x380] sm:$0xff]
  %v127 = vld [vmem:[%s0 + $0x388] sm:$0xff]
  %v128 = vld [vmem:[%s0 + $0x390] sm:$0xff]
  %v129 = vld [vmem:[%s0 + $0x398] sm:$0xff]
  %v130 = vld [vmem:[%s0 + $0x3a0] sm:$0xff]
  %v131 = vld [vmem:[%s0 + $0x3a8] sm:$0xff]
  %v132 = vld [vmem:[%s0 + $0x3b0] sm:$0xff]
  %v133 = vld [vmem:[%s0 + $0x3b8] sm:$0xff]
  %v134 = vld [vmem:[%s0 + $0x3c0] sm:$0xff]
  %v135 = vld [vmem:[%s0 + $0x3c8] sm:$0xff]
  %v136 = vld [vmem:[%s0 + $0x3d0] sm:$0xff]
  %v137 = vld [vmem:[%s0 + $0x3d8] sm:$0xff]
  %v138 = vld [vmem:[%s0 + $0x3e0] sm:$0xff]
  %v139 = vld [vmem:[%s0 + $0x3e8] sm:$0xff]
  %v140 = vld [vmem:[%s0 + $0x3f0] sm:$0xff]
  %v141 = vld [vmem:[%s0 + $0x3f8] sm:$0xff]
  %v142 = vld [vmem:[%s0 + $0x400] sm:$0xff]
  %v143 = vld [vmem:[%s0 + $0x408] sm:$0xff]
  %v144 = vld [vmem:[%s0 + $0x410] sm:$0xff]
  %v145 = vld [vmem:[%s0 + $0x418] sm:$0xff]
  %v146 = vld [vmem:[%s0 + $0x420] sm:$0xff]
  %v147 = vld [vmem:[%s0 + $0x428] sm:$0xff]
  %v148 = vld [vmem:[%s0 + $0x430] sm:$0xff]
  %v149 = vld [vmem:[%s0 + $0x438] sm:$0xff]
  %v150 = vld [vmem:[%s0 + $0x440] sm:$0xff]
  %v151 = vld [vmem:[%s0 + $0x448] sm:$0xff]
  %v152 = vld [vmem:[%s0 + $0x450] sm:$0xff]
  %v153 = vld [vmem:[%s0 + $0x458] sm:$0xff]
  %v154 = vld [vmem:[%s0 + $0x460] sm:$0xff]
  %v155 = vld [vmem:[%s0 + $0x468] sm:$0xff]
  %v156 = vld [vmem:[%s0 + $0x470] sm:$0xff]
  %v157 = vld [vmem:[%s0 + $0x478] sm:$0xff]
  %v158 = vld [vmem:[%s0 + $0x480] sm:$0xff]
  %v159 = vld [vmem:[%s0 + $0x488] sm:$0xff]
  %v160 = vld [vmem:[%s0 + $0x490] sm:$0xff]
  %v161 = vld [vmem:[%s0 + $0x498] sm:$0xff]
  %v162 = vld [vmem:[%s0 + $0x4a0] sm:$0xff]
  %v163 = vld [vmem:[%s0 + $0x4a8] sm:$0xff]
  %v164 = vld [vmem:[%s0 + $0x4b0] sm:$0xff]
  %v165 = vld [vmem:[%s0 + $0x4b8] sm:$0xff]
  %v166 = vld [vmem:[%s0 + $0x4c0] sm:$0xff]
  %v167 = vld [vmem:[%s0 + $0x4c8] sm:$0xff]
  %v168 = vld [vmem:[%s0 + $0x4d0] sm:$0xff]
  %v169 = vld [vmem:[%s0 + $0x4d8] sm:$0xff]
  %v170 = vld [vmem:[%s0 + $0x4e0] sm:$0xff]
  %v171 = vld [vmem:[%s0 + $0x4e8] sm:$0xff]
  %v172 = vld [vmem:[%s0 + $0x4f0] sm:$0xff]
  %v173 = vld [vmem:[%s0 + $0x4f8] sm:$0xff]
  %v174 = vld [vmem:[%s0 + $0x500] sm:$0xff]
  %v175 = vld [vmem:[%s0 + $0x508] sm:$0xff]
  %v176 = vld [vmem:[%s0 + $0x510] sm:$0xff]
  %v177 = vld [vmem:[%s0 + $0x518] sm:$0xff]
  %v178 = vld [vmem:[%s0 + $0x520] sm:$0xff]
  %v179 = vld [vmem:[%s0 + $0x528] sm:$0xff]
  %v180 = vld [vmem:[%s0 + $0x530] sm:$0xff]
  %v181 = vld [vmem:[%s0 + $0x538] sm:$0xff]
  %v182 = vld [vmem:[%s0 + $0x540] sm:$0xff]
  %v183 = vld [vmem:[%s0 + $0x548] sm:$0xff]
  %v184 = vld [vmem:[%s0 + $0x550] sm:$0xff]
  %v185 = vld [vmem:[%s0 + $0x558] sm:$0xff]
  %v186 = vld [vmem:[%s0 + $0x560] sm:$0xff]
  %v187 = vld [vmem:[%s0 + $0x568] sm:$0xff]
  %v188 = vld [vmem:[%s0 + $0x570] sm:$0xff]
  %v189 = vld [vmem:[%s0 + $0x578] sm:$0xff]
  %v190 = vld [vmem:[%s0 + $0x580] sm:$0xff]
  %v191 = vld [vmem:[%s0 + $0x588] sm:$0xff]
  %v192 = vld [vmem:[%s0 + $0x590] sm:$0xff]
  %v193 = vld [vmem:[%s0 + $0x598] sm:$0xff]
  %v194 = vld [vmem:[%s0 + $0x5a0] sm:$0xff]
  %v195 = vld [vmem:[%s0 + $0x5a8] sm:$0xff]
  %v196 = vld [vmem:[%s0 + $0x5b0] sm:$0xff]
  %v197 = vld [vmem:[%s0 + $0x5b8] sm:$0xff]
  %v198 = vld [vmem:[%s0 + $0x5c0] sm:$0xff]
  %v199 = vld [vmem:[%s0 + $0x5c8] sm:$0xff]
  %v200 = vld [vmem:[%s0 + $0x5d0] sm:$0xff]
  %v201 = vld [vmem:[%s0 + $0x5d8] sm:$0xff]
  %v202 = vld [vmem:[%s0 + $0x5e0] sm:$0xff]
  %v203 = vld [vmem:[%s0 + $0x5e8] sm:$0xff]
  %v204 = vld [vmem:[%s0 + $0x5f0] sm:$0xff]
  %v205 = vld [vmem:[%s0 + $0x5f8] sm:$0xff]
  %v206 = vld [vmem:[%s0 + $0x600] sm:$0xff]
  %v207 = vld [vmem:[%s0 + $0x608] sm:$0xff]
  %v208 = vld [vmem:[%s0 + $0x610] sm:$0xff]
  %v209 = vld [vmem:[%s0 + $0x618] sm:$0xff]
  %v210 = vld [vmem:[%s0 + $0x620] sm:$0xff]
  %v211 = vld [vmem:[%s0 + $0x628] sm:$0xff]
  %v212 = vld [vmem:[%s0 + $0x630] sm:$0xff]
  %v213 = vld [vmem:[%s0 + $0x638] sm:$0xff]
  %v214 = vld [vmem:[%s0 + $0x640] sm:$0xff]
  %v215 = vld [vmem:[%s0 + $0x648] sm:$0xff]
  %v216 = vld [vmem:[%s0 + $0x650] sm:$0xff]
  %v217 = vld [vmem:[%s0 + $0x658] sm:$0xff]
  %v218 = vld [vmem:[%s0 + $0x660] sm:$0xff]
  %v219 = vld [vmem:[%s0 + $0x668] sm:$0xff]
  %v220 = vld [vmem:[%s0 + $0x670] sm:$0xff]
  %v221 = vld [vmem:[%s0 + $0x678] sm:$0xff]
  %v222 = vld [vmem:[%s0 + $0x680] sm:$0xff]
  %v223 = vld [vmem:[%s0 + $0x688] sm:$0xff]
  %v224 = vld [vmem:[%s0 + $0x690] sm:$0xff]
  %v225 = vld [vmem:[%s0 + $0x698] sm:$0xff]
  %v226 = vld [vmem:[%s0 + $0x6a0] sm:$0xff]
  %v227 = vld [vmem:[%s0 + $0x6a8] sm:$0xff]
  %v228 = vld [vmem:[%s0 + $0x6b0] sm:$0xff]
  %v229 = vld [vmem:[%s0 + $0x6b8] sm:$0xff]
  %v230 = vld [vmem:[%s0 + $0x6c0] sm:$0xff]
  %v231 = vld [vmem:[%s0 + $0x6c8] sm:$0xff]
  %v232 = vld [vmem:[%s0 + $0x6d0] sm:$0xff]
  %v233 = vld [vmem:[%s0 + $0x6d8] sm:$0xff]
  %v234 = vld [vmem:[%s0 + $0x6e0] sm:$0xff]
  %v235 = vld [vmem:[%s0 + $0x6e8] sm:$0xff]
  %v236 = vld [vmem:[%s0 + $0x6f0] sm:$0xff]
  %v237 = vld [vmem:[%s0 + $0x6f8] sm:$0xff]
  %v238 = vld [vmem:[%s0 + $0x700] sm:$0xff]
  %v239 = vld [vmem:[%s0 + $0x708] sm:$0xff]
  %v240 = vld [vmem:[%s0 + $0x710] sm:$0xff]
  %v241 = vld [vmem:[%s0 + $0x718] sm:$0xff]
  %v242 = vld [vmem:[%s0 + $0x720] sm:$0xff]
  %v243 = vld [vmem:[%s0 + $0x728] sm:$0xff]
  %v244 = vld [vmem:[%s0 + $0x730] sm:$0xff]
  %v245 = vld [vmem:[%s0 + $0x738] sm:$0xff]
  %v246 = vld [vmem:[%s0 + $0x740] sm:$0xff]
  %v247 = vld [vmem:[%s0 + $0x748] sm:$0xff]
  %v248 = vld [vmem:[%s0 + $0x750] sm:$0xff]
  %v249 = vld [vmem:[%s0 + $0x758] sm:$0xff]
  %v250 = vld [vmem:[%s0 + $0x760] sm:$0xff]
  %v251 = vld [vmem:[%s0 + $0x768] sm:$0xff]
  %v252 = vld [vmem:[%s0 + $0x770] sm:$0xff]
  %v253 = vld [vmem:[%s0 + $0x778] sm:$0xff]
  %v254 = vld [vmem:[%s0 + $0x780] sm:$0xff]
  %v255 = vld [vmem:[%s0 + $0x788] sm:$0xff]
  %v256 = vld [vmem:[%s0 + $0x790] sm:$0xff]
  %v257 = vld [vmem:[%s0 + $0x798] sm:$0xff]
  %v258 = vld [vmem:[%s0 + $0x7a0] sm:$0xff]
  %v259 = vld [vmem:[%s0 + $0x7a8] sm:$0xff]
  %v260 = vld [vmem:[%s0 + $0x7b0] sm:$0xff]
  %v261 = vld [vmem:[%s0 + $0x7b8] sm:$0xff]
  %v262 = vld [vmem:[%s0 + $0x7c0] sm:$0xff]
  %v263 = vld [vmem:[%s0 + $0x7c8] sm:$0xff]
  %v264 = vld [vmem:[%s0 + $0x7d0] sm:$0xff]
  %v265 = vld [vmem:[%s0 + $0x7d8] sm:$0xff]
  %v266 = vld [vmem:[%s0 + $0x7e0] sm:$0xff]
  %v267 = vld [vmem:[%s0 + $0x7e8] sm:$0xff]
  %v268 = vld [vmem:[%s0 + $0x7f0] sm:$0xff]
  %v269 = vld [vmem:[%s0 + $0x7f8] sm:$0xff]
  %v270 = vld [vmem:[%s1] sm:$0xff]
  %v271 = vld [vmem:[%s1 + $0x8] sm:$0xff]
  %v272 = vld [vmem:[%s1 + $0x10] sm:$0xff]
  %v273 = vld [vmem:[%s1 + $0x18] sm:$0xff]
  %v274 = vld [vmem:[%s1 + $0x20] sm:$0xff]
  %v275 = vld [vmem:[%s1 + $0x28] sm:$0xff]
  %v276 = vld [vmem:[%s1 + $0x30] sm:$0xff]
  %v277 = vld [vmem:[%s1 + $0x38] sm:$0xff]
  %v278 = vld [vmem:[%s1 + $0x40] sm:$0xff]
  %v279 = vld [vmem:[%s1 + $0x48] sm:$0xff]
  %v280 = vld [vmem:[%s1 + $0x50] sm:$0xff]
  %v281 = vld [vmem:[%s1 + $0x58] sm:$0xff]
  %v282 = vld [vmem:[%s1 + $0x60] sm:$0xff]
  %v283 = vld [vmem:[%s1 + $0x68] sm:$0xff]
  %v284 = vld [vmem:[%s1 + $0x70] sm:$0xff]
  %v285 = vld [vmem:[%s1 + $0x78] sm:$0xff]
  %v286 = vld [vmem:[%s1 + $0x80] sm:$0xff]
  %v287 = vld [vmem:[%s1 + $0x88] sm:$0xff]
  %v288 = vld [vmem:[%s1 + $0x90] sm:$0xff]
  %v289 = vld [vmem:[%s1 + $0x98] sm:$0xff]
  %v290 = vld [vmem:[%s1 + $0xa0] sm:$0xff]
  %v291 = vld [vmem:[%s1 + $0xa8] sm:$0xff]
  %v292 = vld [vmem:[%s1 + $0xb0] sm:$0xff]
  %v293 = vld [vmem:[%s1 + $0xb8] sm:$0xff]
  %v294 = vld [vmem:[%s1 + $0xc0] sm:$0xff]
  %v295 = vld [vmem:[%s1 + $0xc8] sm:$0xff]
  %v296 = vld [vmem:[%s1 + $0xd0] sm:$0xff]
  %v297 = vld [vmem:[%s1 + $0xd8] sm:$0xff]
  %v298 = vld [vmem:[%s1 + $0xe0] sm:$0xff]
  %v299 = vld [vmem:[%s1 + $0xe8] sm:$0xff]
  %v300 = vld [vmem:[%s1 + $0xf0] sm:$0xff]
  %v301 = vld [vmem:[%s1 + $0xf8] sm:$0xff]
  %v302 = vld [vmem:[%s1 + $0x100] sm:$0xff]
  %v303 = vld [vmem:[%s1 + $0x108] sm:$0xff]
  %v304 = vld [vmem:[%s1 + $0x110] sm:$0xff]
  %v305 = vld [vmem:[%s1 + $0x118] sm:$0xff]
  %v306 = vld [vmem:[%s1 + $0x120] sm:$0xff]
  %v307 = vld [vmem:[%s1 + $0x128] sm:$0xff]
  %v308 = vld [vmem:[%s1 + $0x130] sm:$0xff]
  %v309 = vld [vmem:[%s1 + $0x138] sm:$0xff]
  %v310 = vld [vmem:[%s1 + $0x140] sm:$0xff]
  %v311 = vld [vmem:[%s1 + $0x148] sm:$0xff]
  %v312 = vld [vmem:[%s1 + $0x150] sm:$0xff]
  %v313 = vld [vmem:[%s1 + $0x158] sm:$0xff]
  %v314 = vld [vmem:[%s1 + $0x160] sm:$0xff]
  %v315 = vld [vmem:[%s1 + $0x168] sm:$0xff]
  %v316 = vld [vmem:[%s1 + $0x170] sm:$0xff]
  %v317 = vld [vmem:[%s1 + $0x178] sm:$0xff]
  %v318 = vld [vmem:[%s1 + $0x180] sm:$0xff]
  %v319 = vld [vmem:[%s1 + $0x188] sm:$0xff]
  %v320 = vld [vmem:[%s1 + $0x190] sm:$0xff]
  %v321 = vld [vmem:[%s1 + $0x198] sm:$0xff]
  %v322 = vld [vmem:[%s1 + $0x1a0] sm:$0xff]
  %v323 = vld [vmem:[%s1 + $0x1a8] sm:$0xff]
  %v324 = vld [vmem:[%s1 + $0x1b0] sm:$0xff]
  %v325 = vld [vmem:[%s1 + $0x1b8] sm:$0xff]
  %v326 = vld [vmem:[%s1 + $0x1c0] sm:$0xff]
  %v327 = vld [vmem:[%s1 + $0x1c8] sm:$0xff]
  %v328 = vld [vmem:[%s1 + $0x1d0] sm:$0xff]
  %v329 = vld [vmem:[%s1 + $0x1d8] sm:$0xff]
  %v330 = vld [vmem:[%s1 + $0x1e0] sm:$0xff]
  %v331 = vld [vmem:[%s1 + $0x1e8] sm:$0xff]
  %v332 = vld [vmem:[%s1 + $0x1f0] sm:$0xff]
  %v333 = vld [vmem:[%s1 + $0x1f8] sm:$0xff]
  %v334 = vld [vmem:[%s2] sm:$0x1]
  %v336 = vperm.slane %v334, 0
  %338 = vmatpush.msra.mxu0 %v285
  %339 = vmatpush.msra.mxu0 %v284
  %340 = vmatpush.msra.mxu0 %v283
  %341 = vmatpush.msra.mxu0 %v282
  %342 = vmatpush.msra.mxu0 %v281
  %343 = vmatpush.msra.mxu0 %v280
  %344 = vmatpush.msra.mxu0 %v279
  %345 = vmatpush.msra.mxu0 %v278
  %346 = vmatpush.msra.mxu0 %v277
  %347 = vmatpush.msra.mxu0 %v276
  %348 = vmatpush.msra.mxu0 %v275
  %349 = vmatpush.msra.mxu0 %v274
  %350 = vmatpush.msra.mxu0 %v273
  %351 = vmatpush.msra.mxu0 %v272
  %352 = vmatpush.msra.mxu0 %v271
  %353 = vmatpush.msra.mxu0 %v270
  %354 = vmatmul.f32.gmra.mxu0 %v14
  %v355 = vpop.f32.mrf.mxu0
  %v356 = vadd.f32 %v336, %v355
  %357 = vmatmul.f32.gmra.mxu0 %v18
  %v358 = vpop.f32.mrf.mxu0
  %v359 = vadd.f32 %v336, %v358
  %360 = vmatmul.f32.gmra.mxu0 %v22
  %v361 = vpop.f32.mrf.mxu0
  %v362 = vadd.f32 %v336, %v361
  %363 = vmatmul.f32.gmra.mxu0 %v26
  %v364 = vpop.f32.mrf.mxu0
  %v365 = vadd.f32 %v336, %v364
  %366 = vmatmul.f32.gmra.mxu0 %v30
  %v367 = vpop.f32.mrf.mxu0
  %v368 = vadd.f32 %v336, %v367
  %369 = vmatmul.f32.gmra.mxu0 %v34
  %v370 = vpop.f32.mrf.mxu0
  %v371 = vadd.f32 %v336, %v370
  %372 = vmatmul.f32.gmra.mxu0 %v38
  %v373 = vpop.f32.mrf.mxu0
  %v374 = vadd.f32 %v336, %v373
  %375 = vmatmul.f32.gmra.mxu0 %v42
  %v376 = vpop.f32.mrf.mxu0
  %v377 = vadd.f32 %v336, %v376
  %378 = vmatmul.f32.gmra.mxu0 %v46
  %v379 = vpop.f32.mrf.mxu0
  %v380 = vadd.f32 %v336, %v379
  %381 = vmatmul.f32.gmra.mxu0 %v50
  %v382 = vpop.f32.mrf.mxu0
  %v383 = vadd.f32 %v336, %v382
  %384 = vmatmul.f32.gmra.mxu0 %v54
  %v385 = vpop.f32.mrf.mxu0
  %v386 = vadd.f32 %v336, %v385
  %387 = vmatmul.f32.gmra.mxu0 %v58
  %v388 = vpop.f32.mrf.mxu0
  %v389 = vadd.f32 %v336, %v388
  %390 = vmatmul.f32.gmra.mxu0 %v62
  %v391 = vpop.f32.mrf.mxu0
  %v392 = vadd.f32 %v336, %v391
  %393 = vmatmul.f32.gmra.mxu0 %v66
  %v394 = vpop.f32.mrf.mxu0
  %v395 = vadd.f32 %v336, %v394
  %396 = vmatmul.f32.gmra.mxu0 %v70
  %v397 = vpop.f32.mrf.mxu0
  %v398 = vadd.f32 %v336, %v397
  %399 = vmatmul.f32.gmra.mxu0 %v74
  %v400 = vpop.f32.mrf.mxu0
  %v401 = vadd.f32 %v336, %v400
  %402 = vmatmul.f32.gmra.mxu0 %v78
  %v403 = vpop.f32.mrf.mxu0
  %v404 = vadd.f32 %v336, %v403
  %405 = vmatmul.f32.gmra.mxu0 %v82
  %v406 = vpop.f32.mrf.mxu0
  %v407 = vadd.f32 %v336, %v406
  %408 = vmatmul.f32.gmra.mxu0 %v86
  %v409 = vpop.f32.mrf.mxu0
  %v410 = vadd.f32 %v336, %v409
  %411 = vmatmul.f32.gmra.mxu0 %v90
  %v412 = vpop.f32.mrf.mxu0
  %v413 = vadd.f32 %v336, %v412
  %414 = vmatmul.f32.gmra.mxu0 %v94
  %v415 = vpop.f32.mrf.mxu0
  %v416 = vadd.f32 %v336, %v415
  %417 = vmatmul.f32.gmra.mxu0 %v98
  %v418 = vpop.f32.mrf.mxu0
  %v419 = vadd.f32 %v336, %v418
  %420 = vmatmul.f32.gmra.mxu0 %v102
  %v421 = vpop.f32.mrf.mxu0
  %v422 = vadd.f32 %v336, %v421
  %423 = vmatmul.f32.gmra.mxu0 %v106
  %v424 = vpop.f32.mrf.mxu0
  %v425 = vadd.f32 %v336, %v424
  %426 = vmatmul.f32.gmra.mxu0 %v110
  %v427 = vpop.f32.mrf.mxu0
  %v428 = vadd.f32 %v336, %v427
  %429 = vmatmul.f32.gmra.mxu0 %v114
  %v430 = vpop.f32.mrf.mxu0
  %v431 = vadd.f32 %v336, %v430
  %432 = vmatmul.f32.gmra.mxu0 %v118
  %v433 = vpop.f32.mrf.mxu0
  %v434 = vadd.f32 %v336, %v433
  %435 = vmatmul.f32.gmra.mxu0 %v122
  %v436 = vpop.f32.mrf.mxu0
  %v437 = vadd.f32 %v336, %v436
  %438 = vmatmul.f32.gmra.mxu0 %v126
  %v439 = vpop.f32.mrf.mxu0
  %v440 = vadd.f32 %v336, %v439
  %441 = vmatmul.f32.gmra.mxu0 %v130
  %v442 = vpop.f32.mrf.mxu0
  %v443 = vadd.f32 %v336, %v442
  %444 = vmatmul.f32.gmra.mxu0 %v134
  %v445 = vpop.f32.mrf.mxu0
  %v446 = vadd.f32 %v336, %v445
  %447 = vmatmul.f32.gmra.mxu0 %v138
  %v448 = vpop.f32.mrf.mxu0
  %v449 = vadd.f32 %v336, %v448
  %450 = vmatmul.f32.gmra.mxu0 %v142
  %v451 = vpop.f32.mrf.mxu0
  %v452 = vadd.f32 %v336, %v451
  %453 = vmatmul.f32.gmra.mxu0 %v146
  %v454 = vpop.f32.mrf.mxu0
  %v455 = vadd.f32 %v336, %v454
  %456 = vmatmul.f32.gmra.mxu0 %v150
  %v457 = vpop.f32.mrf.mxu0
  %v458 = vadd.f32 %v336, %v457
  %459 = vmatmul.f32.gmra.mxu0 %v154
  %v460 = vpop.f32.mrf.mxu0
  %v461 = vadd.f32 %v336, %v460
  %462 = vmatmul.f32.gmra.mxu0 %v158
  %v463 = vpop.f32.mrf.mxu0
  %v464 = vadd.f32 %v336, %v463
  %465 = vmatmul.f32.gmra.mxu0 %v162
  %v466 = vpop.f32.mrf.mxu0
  %v467 = vadd.f32 %v336, %v466
  %468 = vmatmul.f32.gmra.mxu0 %v166
  %v469 = vpop.f32.mrf.mxu0
  %v470 = vadd.f32 %v336, %v469
  %471 = vmatmul.f32.gmra.mxu0 %v170
  %v472 = vpop.f32.mrf.mxu0
  %v473 = vadd.f32 %v336, %v472
  %474 = vmatmul.f32.gmra.mxu0 %v174
  %v475 = vpop.f32.mrf.mxu0
  %v476 = vadd.f32 %v336, %v475
  %477 = vmatmul.f32.gmra.mxu0 %v178
  %v478 = vpop.f32.mrf.mxu0
  %v479 = vadd.f32 %v336, %v478
  %480 = vmatmul.f32.gmra.mxu0 %v182
  %v481 = vpop.f32.mrf.mxu0
  %v482 = vadd.f32 %v336, %v481
  %483 = vmatmul.f32.gmra.mxu0 %v186
  %v484 = vpop.f32.mrf.mxu0
  %v485 = vadd.f32 %v336, %v484
  %486 = vmatmul.f32.gmra.mxu0 %v190
  %v487 = vpop.f32.mrf.mxu0
  %v488 = vadd.f32 %v336, %v487
  %489 = vmatmul.f32.gmra.mxu0 %v194
  %v490 = vpop.f32.mrf.mxu0
  %v491 = vadd.f32 %v336, %v490
  %492 = vmatmul.f32.gmra.mxu0 %v198
  %v493 = vpop.f32.mrf.mxu0
  %v494 = vadd.f32 %v336, %v493
  %495 = vmatmul.f32.gmra.mxu0 %v202
  %v496 = vpop.f32.mrf.mxu0
  %v497 = vadd.f32 %v336, %v496
  %498 = vmatmul.f32.gmra.mxu0 %v206
  %v499 = vpop.f32.mrf.mxu0
  %v500 = vadd.f32 %v336, %v499
  %501 = vmatmul.f32.gmra.mxu0 %v210
  %v502 = vpop.f32.mrf.mxu0
  %v503 = vadd.f32 %v336, %v502
  %504 = vmatmul.f32.gmra.mxu0 %v214
  %v505 = vpop.f32.mrf.mxu0
  %v506 = vadd.f32 %v336, %v505
  %507 = vmatmul.f32.gmra.mxu0 %v218
  %v508 = vpop.f32.mrf.mxu0
  %v509 = vadd.f32 %v336, %v508
  %510 = vmatmul.f32.gmra.mxu0 %v222
  %v511 = vpop.f32.mrf.mxu0
  %v512 = vadd.f32 %v336, %v511
  %513 = vmatmul.f32.gmra.mxu0 %v226
  %v514 = vpop.f32.mrf.mxu0
  %v515 = vadd.f32 %v336, %v514
  %516 = vmatmul.f32.gmra.mxu0 %v230
  %v517 = vpop.f32.mrf.mxu0
  %v518 = vadd.f32 %v336, %v517
  %519 = vmatmul.f32.gmra.mxu0 %v234
  %v520 = vpop.f32.mrf.mxu0
  %v521 = vadd.f32 %v336, %v520
  %522 = vmatmul.f32.gmra.mxu0 %v238
  %v523 = vpop.f32.mrf.mxu0
  %v524 = vadd.f32 %v336, %v523
  %525 = vmatmul.f32.gmra.mxu0 %v242
  %v526 = vpop.f32.mrf.mxu0
  %v527 = vadd.f32 %v336, %v526
  %528 = vmatmul.f32.gmra.mxu0 %v246
  %v529 = vpop.f32.mrf.mxu0
  %v530 = vadd.f32 %v336, %v529
  %531 = vmatmul.f32.gmra.mxu0 %v250
  %v532 = vpop.f32.mrf.mxu0
  %v533 = vadd.f32 %v336, %v532
  %534 = vmatmul.f32.gmra.mxu0 %v254
  %v535 = vpop.f32.mrf.mxu0
  %v536 = vadd.f32 %v336, %v535
  %537 = vmatmul.f32.gmra.mxu0 %v258
  %v538 = vpop.f32.mrf.mxu0
  %v539 = vadd.f32 %v336, %v538
  %540 = vmatmul.f32.gmra.mxu0 %v262
  %v541 = vpop.f32.mrf.mxu0
  %v542 = vadd.f32 %v336, %v541
  %543 = vmatmul.f32.gmra.mxu0 %v266
  %v544 = vpop.f32.mrf.mxu0
  %v545 = vadd.f32 %v336, %v544
  %546 = vdwg.mxu0
  %547 = vmatpush.msra.mxu0 %v301
  %548 = vmatpush.msra.mxu0 %v300
  %549 = vmatpush.msra.mxu0 %v299
  %550 = vmatpush.msra.mxu0 %v298
  %551 = vmatpush.msra.mxu0 %v297
  %552 = vmatpush.msra.mxu0 %v296
  %553 = vmatpush.msra.mxu0 %v295
  %554 = vmatpush.msra.mxu0 %v294
  %555 = vmatpush.msra.mxu0 %v293
  %556 = vmatpush.msra.mxu0 %v292
  %557 = vmatpush.msra.mxu0 %v291
  %558 = vmatpush.msra.mxu0 %v290
  %559 = vmatpush.msra.mxu0 %v289
  %560 = vmatpush.msra.mxu0 %v288
  %561 = vmatpush.msra.mxu0 %v287
  %562 = vmatpush.msra.mxu0 %v286
  %563 = vmatmul.f32.gmra.mxu0 %v15
  %v564 = vpop.f32.mrf.mxu0
  %v565 = vadd.f32 %v356, %v564
  %566 = vmatmul.f32.gmra.mxu0 %v19
  %v567 = vpop.f32.mrf.mxu0
  %v568 = vadd.f32 %v359, %v567
  %569 = vmatmul.f32.gmra.mxu0 %v23
  %v570 = vpop.f32.mrf.mxu0
  %v571 = vadd.f32 %v362, %v570
  %572 = vmatmul.f32.gmra.mxu0 %v27
  %v573 = vpop.f32.mrf.mxu0
  %v574 = vadd.f32 %v365, %v573
  %575 = vmatmul.f32.gmra.mxu0 %v31
  %v576 = vpop.f32.mrf.mxu0
  %v577 = vadd.f32 %v368, %v576
  %578 = vmatmul.f32.gmra.mxu0 %v35
  %v579 = vpop.f32.mrf.mxu0
  %v580 = vadd.f32 %v371, %v579
  %581 = vmatmul.f32.gmra.mxu0 %v39
  %v582 = vpop.f32.mrf.mxu0
  %v583 = vadd.f32 %v374, %v582
  %584 = vmatmul.f32.gmra.mxu0 %v43
  %v585 = vpop.f32.mrf.mxu0
  %v586 = vadd.f32 %v377, %v585
  %587 = vmatmul.f32.gmra.mxu0 %v47
  %v588 = vpop.f32.mrf.mxu0
  %v589 = vadd.f32 %v380, %v588
  %590 = vmatmul.f32.gmra.mxu0 %v51
  %v591 = vpop.f32.mrf.mxu0
  %v592 = vadd.f32 %v383, %v591
  %593 = vmatmul.f32.gmra.mxu0 %v55
  %v594 = vpop.f32.mrf.mxu0
  %v595 = vadd.f32 %v386, %v594
  %596 = vmatmul.f32.gmra.mxu0 %v59
  %v597 = vpop.f32.mrf.mxu0
  %v598 = vadd.f32 %v389, %v597
  %599 = vmatmul.f32.gmra.mxu0 %v63
  %v600 = vpop.f32.mrf.mxu0
  %v601 = vadd.f32 %v392, %v600
  %602 = vmatmul.f32.gmra.mxu0 %v67
  %v603 = vpop.f32.mrf.mxu0
  %v604 = vadd.f32 %v395, %v603
  %605 = vmatmul.f32.gmra.mxu0 %v71
  %v606 = vpop.f32.mrf.mxu0
  %v607 = vadd.f32 %v398, %v606
  %608 = vmatmul.f32.gmra.mxu0 %v75
  %v609 = vpop.f32.mrf.mxu0
  %v610 = vadd.f32 %v401, %v609
  %611 = vmatmul.f32.gmra.mxu0 %v79
  %v612 = vpop.f32.mrf.mxu0
  %v613 = vadd.f32 %v404, %v612
  %614 = vmatmul.f32.gmra.mxu0 %v83
  %v615 = vpop.f32.mrf.mxu0
  %v616 = vadd.f32 %v407, %v615
  %617 = vmatmul.f32.gmra.mxu0 %v87
  %v618 = vpop.f32.mrf.mxu0
  %v619 = vadd.f32 %v410, %v618
  %620 = vmatmul.f32.gmra.mxu0 %v91
  %v621 = vpop.f32.mrf.mxu0
  %v622 = vadd.f32 %v413, %v621
  %623 = vmatmul.f32.gmra.mxu0 %v95
  %v624 = vpop.f32.mrf.mxu0
  %v625 = vadd.f32 %v416, %v624
  %626 = vmatmul.f32.gmra.mxu0 %v99
  %v627 = vpop.f32.mrf.mxu0
  %v628 = vadd.f32 %v419, %v627
  %629 = vmatmul.f32.gmra.mxu0 %v103
  %v630 = vpop.f32.mrf.mxu0
  %v631 = vadd.f32 %v422, %v630
  %632 = vmatmul.f32.gmra.mxu0 %v107
  %v633 = vpop.f32.mrf.mxu0
  %v634 = vadd.f32 %v425, %v633
  %635 = vmatmul.f32.gmra.mxu0 %v111
  %v636 = vpop.f32.mrf.mxu0
  %v637 = vadd.f32 %v428, %v636
  %638 = vmatmul.f32.gmra.mxu0 %v115
  %v639 = vpop.f32.mrf.mxu0
  %v640 = vadd.f32 %v431, %v639
  %641 = vmatmul.f32.gmra.mxu0 %v119
  %v642 = vpop.f32.mrf.mxu0
  %v643 = vadd.f32 %v434, %v642
  %644 = vmatmul.f32.gmra.mxu0 %v123
  %v645 = vpop.f32.mrf.mxu0
  %v646 = vadd.f32 %v437, %v645
  %647 = vmatmul.f32.gmra.mxu0 %v127
  %v648 = vpop.f32.mrf.mxu0
  %v649 = vadd.f32 %v440, %v648
  %650 = vmatmul.f32.gmra.mxu0 %v131
  %v651 = vpop.f32.mrf.mxu0
  %v652 = vadd.f32 %v443, %v651
  %653 = vmatmul.f32.gmra.mxu0 %v135
  %v654 = vpop.f32.mrf.mxu0
  %v655 = vadd.f32 %v446, %v654
  %656 = vmatmul.f32.gmra.mxu0 %v139
  %v657 = vpop.f32.mrf.mxu0
  %v658 = vadd.f32 %v449, %v657
  %659 = vmatmul.f32.gmra.mxu0 %v143
  %v660 = vpop.f32.mrf.mxu0
  %v661 = vadd.f32 %v452, %v660
  %662 = vmatmul.f32.gmra.mxu0 %v147
  %v663 = vpop.f32.mrf.mxu0
  %v664 = vadd.f32 %v455, %v663
  %665 = vmatmul.f32.gmra.mxu0 %v151
  %v666 = vpop.f32.mrf.mxu0
  %v667 = vadd.f32 %v458, %v666
  %668 = vmatmul.f32.gmra.mxu0 %v155
  %v669 = vpop.f32.mrf.mxu0
  %v670 = vadd.f32 %v461, %v669
  %671 = vmatmul.f32.gmra.mxu0 %v159
  %v672 = vpop.f32.mrf.mxu0
  %v673 = vadd.f32 %v464, %v672
  %674 = vmatmul.f32.gmra.mxu0 %v163
  %v675 = vpop.f32.mrf.mxu0
  %v676 = vadd.f32 %v467, %v675
  %677 = vmatmul.f32.gmra.mxu0 %v167
  %v678 = vpop.f32.mrf.mxu0
  %v679 = vadd.f32 %v470, %v678
  %680 = vmatmul.f32.gmra.mxu0 %v171
  %v681 = vpop.f32.mrf.mxu0
  %v682 = vadd.f32 %v473, %v681
  %683 = vmatmul.f32.gmra.mxu0 %v175
  %v684 = vpop.f32.mrf.mxu0
  %v685 = vadd.f32 %v476, %v684
  %686 = vmatmul.f32.gmra.mxu0 %v179
  %v687 = vpop.f32.mrf.mxu0
  %v688 = vadd.f32 %v479, %v687
  %689 = vmatmul.f32.gmra.mxu0 %v183
  %v690 = vpop.f32.mrf.mxu0
  %v691 = vadd.f32 %v482, %v690
  %692 = vmatmul.f32.gmra.mxu0 %v187
  %v693 = vpop.f32.mrf.mxu0
  %v694 = vadd.f32 %v485, %v693
  %695 = vmatmul.f32.gmra.mxu0 %v191
  %v696 = vpop.f32.mrf.mxu0
  %v697 = vadd.f32 %v488, %v696
  %698 = vmatmul.f32.gmra.mxu0 %v195
  %v699 = vpop.f32.mrf.mxu0
  %v700 = vadd.f32 %v491, %v699
  %701 = vmatmul.f32.gmra.mxu0 %v199
  %v702 = vpop.f32.mrf.mxu0
  %v703 = vadd.f32 %v494, %v702
  %704 = vmatmul.f32.gmra.mxu0 %v203
  %v705 = vpop.f32.mrf.mxu0
  %v706 = vadd.f32 %v497, %v705
  %707 = vmatmul.f32.gmra.mxu0 %v207
  %v708 = vpop.f32.mrf.mxu0
  %v709 = vadd.f32 %v500, %v708
  %710 = vmatmul.f32.gmra.mxu0 %v211
  %v711 = vpop.f32.mrf.mxu0
  %v712 = vadd.f32 %v503, %v711
  %713 = vmatmul.f32.gmra.mxu0 %v215
  %v714 = vpop.f32.mrf.mxu0
  %v715 = vadd.f32 %v506, %v714
  %716 = vmatmul.f32.gmra.mxu0 %v219
  %v717 = vpop.f32.mrf.mxu0
  %v718 = vadd.f32 %v509, %v717
  %719 = vmatmul.f32.gmra.mxu0 %v223
  %v720 = vpop.f32.mrf.mxu0
  %v721 = vadd.f32 %v512, %v720
  %722 = vmatmul.f32.gmra.mxu0 %v227
  %v723 = vpop.f32.mrf.mxu0
  %v724 = vadd.f32 %v515, %v723
  %725 = vmatmul.f32.gmra.mxu0 %v231
  %v726 = vpop.f32.mrf.mxu0
  %v727 = vadd.f32 %v518, %v726
  %728 = vmatmul.f32.gmra.mxu0 %v235
  %v729 = vpop.f32.mrf.mxu0
  %v730 = vadd.f32 %v521, %v729
  %731 = vmatmul.f32.gmra.mxu0 %v239
  %v732 = vpop.f32.mrf.mxu0
  %v733 = vadd.f32 %v524, %v732
  %734 = vmatmul.f32.gmra.mxu0 %v243
  %v735 = vpop.f32.mrf.mxu0
  %v736 = vadd.f32 %v527, %v735
  %737 = vmatmul.f32.gmra.mxu0 %v247
  %v738 = vpop.f32.mrf.mxu0
  %v739 = vadd.f32 %v530, %v738
  %740 = vmatmul.f32.gmra.mxu0 %v251
  %v741 = vpop.f32.mrf.mxu0
  %v742 = vadd.f32 %v533, %v741
  %743 = vmatmul.f32.gmra.mxu0 %v255
  %v744 = vpop.f32.mrf.mxu0
  %v745 = vadd.f32 %v536, %v744
  %746 = vmatmul.f32.gmra.mxu0 %v259
  %v747 = vpop.f32.mrf.mxu0
  %v748 = vadd.f32 %v539, %v747
  %749 = vmatmul.f32.gmra.mxu0 %v263
  %v750 = vpop.f32.mrf.mxu0
  %v751 = vadd.f32 %v542, %v750
  %752 = vmatmul.f32.gmra.mxu0 %v267
  %v753 = vpop.f32.mrf.mxu0
  %v754 = vadd.f32 %v545, %v753
  %755 = vdwg.mxu0
  %756 = vmatpush.msra.mxu0 %v317
  %757 = vmatpush.msra.mxu0 %v316
  %758 = vmatpush.msra.mxu0 %v315
  %759 = vmatpush.msra.mxu0 %v314
  %760 = vmatpush.msra.mxu0 %v313
  %761 = vmatpush.msra.mxu0 %v312
  %762 = vmatpush.msra.mxu0 %v311
  %763 = vmatpush.msra.mxu0 %v310
  %764 = vmatpush.msra.mxu0 %v309
  %765 = vmatpush.msra.mxu0 %v308
  %766 = vmatpush.msra.mxu0 %v307
  %767 = vmatpush.msra.mxu0 %v306
  %768 = vmatpush.msra.mxu0 %v305
  %769 = vmatpush.msra.mxu0 %v304
  %770 = vmatpush.msra.mxu0 %v303
  %771 = vmatpush.msra.mxu0 %v302
  %772 = vmatmul.f32.gmra.mxu0 %v16
  %v773 = vpop.f32.mrf.mxu0
  %v774 = vadd.f32 %v565, %v773
  %775 = vmatmul.f32.gmra.mxu0 %v20
  %v776 = vpop.f32.mrf.mxu0
  %v777 = vadd.f32 %v568, %v776
  %778 = vmatmul.f32.gmra.mxu0 %v24
  %v779 = vpop.f32.mrf.mxu0
  %v780 = vadd.f32 %v571, %v779
  %781 = vmatmul.f32.gmra.mxu0 %v28
  %v782 = vpop.f32.mrf.mxu0
  %v783 = vadd.f32 %v574, %v782
  %784 = vmatmul.f32.gmra.mxu0 %v32
  %v785 = vpop.f32.mrf.mxu0
  %v786 = vadd.f32 %v577, %v785
  %787 = vmatmul.f32.gmra.mxu0 %v36
  %v788 = vpop.f32.mrf.mxu0
  %v789 = vadd.f32 %v580, %v788
  %790 = vmatmul.f32.gmra.mxu0 %v40
  %v791 = vpop.f32.mrf.mxu0
  %v792 = vadd.f32 %v583, %v791
  %793 = vmatmul.f32.gmra.mxu0 %v44
  %v794 = vpop.f32.mrf.mxu0
  %v795 = vadd.f32 %v586, %v794
  %796 = vmatmul.f32.gmra.mxu0 %v48
  %v797 = vpop.f32.mrf.mxu0
  %v798 = vadd.f32 %v589, %v797
  %799 = vmatmul.f32.gmra.mxu0 %v52
  %v800 = vpop.f32.mrf.mxu0
  %v801 = vadd.f32 %v592, %v800
  %802 = vmatmul.f32.gmra.mxu0 %v56
  %v803 = vpop.f32.mrf.mxu0
  %v804 = vadd.f32 %v595, %v803
  %805 = vmatmul.f32.gmra.mxu0 %v60
  %v806 = vpop.f32.mrf.mxu0
  %v807 = vadd.f32 %v598, %v806
  %808 = vmatmul.f32.gmra.mxu0 %v64
  %v809 = vpop.f32.mrf.mxu0
  %v810 = vadd.f32 %v601, %v809
  %811 = vmatmul.f32.gmra.mxu0 %v68
  %v812 = vpop.f32.mrf.mxu0
  %v813 = vadd.f32 %v604, %v812
  %814 = vmatmul.f32.gmra.mxu0 %v72
  %v815 = vpop.f32.mrf.mxu0
  %v816 = vadd.f32 %v607, %v815
  %817 = vmatmul.f32.gmra.mxu0 %v76
  %v818 = vpop.f32.mrf.mxu0
  %v819 = vadd.f32 %v610, %v818
  %820 = vmatmul.f32.gmra.mxu0 %v80
  %v821 = vpop.f32.mrf.mxu0
  %v822 = vadd.f32 %v613, %v821
  %823 = vmatmul.f32.gmra.mxu0 %v84
  %v824 = vpop.f32.mrf.mxu0
  %v825 = vadd.f32 %v616, %v824
  %826 = vmatmul.f32.gmra.mxu0 %v88
  %v827 = vpop.f32.mrf.mxu0
  %v828 = vadd.f32 %v619, %v827
  %829 = vmatmul.f32.gmra.mxu0 %v92
  %v830 = vpop.f32.mrf.mxu0
  %v831 = vadd.f32 %v622, %v830
  %832 = vmatmul.f32.gmra.mxu0 %v96
  %v833 = vpop.f32.mrf.mxu0
  %v834 = vadd.f32 %v625, %v833
  %835 = vmatmul.f32.gmra.mxu0 %v100
  %v836 = vpop.f32.mrf.mxu0
  %v837 = vadd.f32 %v628, %v836
  %838 = vmatmul.f32.gmra.mxu0 %v104
  %v839 = vpop.f32.mrf.mxu0
  %v840 = vadd.f32 %v631, %v839
  %841 = vmatmul.f32.gmra.mxu0 %v108
  %v842 = vpop.f32.mrf.mxu0
  %v843 = vadd.f32 %v634, %v842
  %844 = vmatmul.f32.gmra.mxu0 %v112
  %v845 = vpop.f32.mrf.mxu0
  %v846 = vadd.f32 %v637, %v845
  %847 = vmatmul.f32.gmra.mxu0 %v116
  %v848 = vpop.f32.mrf.mxu0
  %v849 = vadd.f32 %v640, %v848
  %850 = vmatmul.f32.gmra.mxu0 %v120
  %v851 = vpop.f32.mrf.mxu0
  %v852 = vadd.f32 %v643, %v851
  %853 = vmatmul.f32.gmra.mxu0 %v124
  %v854 = vpop.f32.mrf.mxu0
  %v855 = vadd.f32 %v646, %v854
  %856 = vmatmul.f32.gmra.mxu0 %v128
  %v857 = vpop.f32.mrf.mxu0
  %v858 = vadd.f32 %v649, %v857
  %859 = vmatmul.f32.gmra.mxu0 %v132
  %v860 = vpop.f32.mrf.mxu0
  %v861 = vadd.f32 %v652, %v860
  %862 = vmatmul.f32.gmra.mxu0 %v136
  %v863 = vpop.f32.mrf.mxu0
  %v864 = vadd.f32 %v655, %v863
  %865 = vmatmul.f32.gmra.mxu0 %v140
  %v866 = vpop.f32.mrf.mxu0
  %v867 = vadd.f32 %v658, %v866
  %868 = vmatmul.f32.gmra.mxu0 %v144
  %v869 = vpop.f32.mrf.mxu0
  %v870 = vadd.f32 %v661, %v869
  %871 = vmatmul.f32.gmra.mxu0 %v148
  %v872 = vpop.f32.mrf.mxu0
  %v873 = vadd.f32 %v664, %v872
  %874 = vmatmul.f32.gmra.mxu0 %v152
  %v875 = vpop.f32.mrf.mxu0
  %v876 = vadd.f32 %v667, %v875
  %877 = vmatmul.f32.gmra.mxu0 %v156
  %v878 = vpop.f32.mrf.mxu0
  %v879 = vadd.f32 %v670, %v878
  %880 = vmatmul.f32.gmra.mxu0 %v160
  %v881 = vpop.f32.mrf.mxu0
  %v882 = vadd.f32 %v673, %v881
  %883 = vmatmul.f32.gmra.mxu0 %v164
  %v884 = vpop.f32.mrf.mxu0
  %v885 = vadd.f32 %v676, %v884
  %886 = vmatmul.f32.gmra.mxu0 %v168
  %v887 = vpop.f32.mrf.mxu0
  %v888 = vadd.f32 %v679, %v887
  %889 = vmatmul.f32.gmra.mxu0 %v172
  %v890 = vpop.f32.mrf.mxu0
  %v891 = vadd.f32 %v682, %v890
  %892 = vmatmul.f32.gmra.mxu0 %v176
  %v893 = vpop.f32.mrf.mxu0
  %v894 = vadd.f32 %v685, %v893
  %895 = vmatmul.f32.gmra.mxu0 %v180
  %v896 = vpop.f32.mrf.mxu0
  %v897 = vadd.f32 %v688, %v896
  %898 = vmatmul.f32.gmra.mxu0 %v184
  %v899 = vpop.f32.mrf.mxu0
  %v900 = vadd.f32 %v691, %v899
  %901 = vmatmul.f32.gmra.mxu0 %v188
  %v902 = vpop.f32.mrf.mxu0
  %v903 = vadd.f32 %v694, %v902
  %904 = vmatmul.f32.gmra.mxu0 %v192
  %v905 = vpop.f32.mrf.mxu0
  %v906 = vadd.f32 %v697, %v905
  %907 = vmatmul.f32.gmra.mxu0 %v196
  %v908 = vpop.f32.mrf.mxu0
  %v909 = vadd.f32 %v700, %v908
  %910 = vmatmul.f32.gmra.mxu0 %v200
  %v911 = vpop.f32.mrf.mxu0
  %v912 = vadd.f32 %v703, %v911
  %913 = vmatmul.f32.gmra.mxu0 %v204
  %v914 = vpop.f32.mrf.mxu0
  %v915 = vadd.f32 %v706, %v914
  %916 = vmatmul.f32.gmra.mxu0 %v208
  %v917 = vpop.f32.mrf.mxu0
  %v918 = vadd.f32 %v709, %v917
  %919 = vmatmul.f32.gmra.mxu0 %v212
  %v920 = vpop.f32.mrf.mxu0
  %v921 = vadd.f32 %v712, %v920
  %922 = vmatmul.f32.gmra.mxu0 %v216
  %v923 = vpop.f32.mrf.mxu0
  %v924 = vadd.f32 %v715, %v923
  %925 = vmatmul.f32.gmra.mxu0 %v220
  %v926 = vpop.f32.mrf.mxu0
  %v927 = vadd.f32 %v718, %v926
  %928 = vmatmul.f32.gmra.mxu0 %v224
  %v929 = vpop.f32.mrf.mxu0
  %v930 = vadd.f32 %v721, %v929
  %931 = vmatmul.f32.gmra.mxu0 %v228
  %v932 = vpop.f32.mrf.mxu0
  %v933 = vadd.f32 %v724, %v932
  %934 = vmatmul.f32.gmra.mxu0 %v232
  %v935 = vpop.f32.mrf.mxu0
  %v936 = vadd.f32 %v727, %v935
  %937 = vmatmul.f32.gmra.mxu0 %v236
  %v938 = vpop.f32.mrf.mxu0
  %v939 = vadd.f32 %v730, %v938
  %940 = vmatmul.f32.gmra.mxu0 %v240
  %v941 = vpop.f32.mrf.mxu0
  %v942 = vadd.f32 %v733, %v941
  %943 = vmatmul.f32.gmra.mxu0 %v244
  %v944 = vpop.f32.mrf.mxu0
  %v945 = vadd.f32 %v736, %v944
  %946 = vmatmul.f32.gmra.mxu0 %v248
  %v947 = vpop.f32.mrf.mxu0
  %v948 = vadd.f32 %v739, %v947
  %949 = vmatmul.f32.gmra.mxu0 %v252
  %v950 = vpop.f32.mrf.mxu0
  %v951 = vadd.f32 %v742, %v950
  %952 = vmatmul.f32.gmra.mxu0 %v256
  %v953 = vpop.f32.mrf.mxu0
  %v954 = vadd.f32 %v745, %v953
  %955 = vmatmul.f32.gmra.mxu0 %v260
  %v956 = vpop.f32.mrf.mxu0
  %v957 = vadd.f32 %v748, %v956
  %958 = vmatmul.f32.gmra.mxu0 %v264
  %v959 = vpop.f32.mrf.mxu0
  %v960 = vadd.f32 %v751, %v959
  %961 = vmatmul.f32.gmra.mxu0 %v268
  %v962 = vpop.f32.mrf.mxu0
  %v963 = vadd.f32 %v754, %v962
  %964 = vdwg.mxu0
  %965 = vmatpush.msra.mxu0 %v333
  %966 = vmatpush.msra.mxu0 %v332
  %967 = vmatpush.msra.mxu0 %v331
  %968 = vmatpush.msra.mxu0 %v330
  %969 = vmatpush.msra.mxu0 %v329
  %970 = vmatpush.msra.mxu0 %v328
  %971 = vmatpush.msra.mxu0 %v327
  %972 = vmatpush.msra.mxu0 %v326
  %973 = vmatpush.msra.mxu0 %v325
  %974 = vmatpush.msra.mxu0 %v324
  %975 = vmatpush.msra.mxu0 %v323
  %976 = vmatpush.msra.mxu0 %v322
  %977 = vmatpush.msra.mxu0 %v321
  %978 = vmatpush.msra.mxu0 %v320
  %979 = vmatpush.msra.mxu0 %v319
  %980 = vmatpush.msra.mxu0 %v318
  %981 = vmatmul.f32.gmra.mxu0 %v17
  %v982 = vpop.f32.mrf.mxu0
  %v983 = vadd.f32 %v774, %v982
  %984 = vmatmul.f32.gmra.mxu0 %v21
  %v985 = vpop.f32.mrf.mxu0
  %v986 = vadd.f32 %v777, %v985
  %987 = vmatmul.f32.gmra.mxu0 %v25
  %v988 = vpop.f32.mrf.mxu0
  %v989 = vadd.f32 %v780, %v988
  %990 = vmatmul.f32.gmra.mxu0 %v29
  %v991 = vpop.f32.mrf.mxu0
  %v992 = vadd.f32 %v783, %v991
  %993 = vmatmul.f32.gmra.mxu0 %v33
  %v994 = vpop.f32.mrf.mxu0
  %v995 = vadd.f32 %v786, %v994
  %996 = vmatmul.f32.gmra.mxu0 %v37
  %v997 = vpop.f32.mrf.mxu0
  %v998 = vadd.f32 %v789, %v997
  %999 = vmatmul.f32.gmra.mxu0 %v41
  %v1000 = vpop.f32.mrf.mxu0
  %v1001 = vadd.f32 %v792, %v1000
  %1002 = vmatmul.f32.gmra.mxu0 %v45
  %v1003 = vpop.f32.mrf.mxu0
  %v1004 = vadd.f32 %v795, %v1003
  %1005 = vmatmul.f32.gmra.mxu0 %v49
  %v1006 = vpop.f32.mrf.mxu0
  %v1007 = vadd.f32 %v798, %v1006
  %1008 = vmatmul.f32.gmra.mxu0 %v53
  %v1009 = vpop.f32.mrf.mxu0
  %v1010 = vadd.f32 %v801, %v1009
  %1011 = vmatmul.f32.gmra.mxu0 %v57
  %v1012 = vpop.f32.mrf.mxu0
  %v1013 = vadd.f32 %v804, %v1012
  %1014 = vmatmul.f32.gmra.mxu0 %v61
  %v1015 = vpop.f32.mrf.mxu0
  %v1016 = vadd.f32 %v807, %v1015
  %1017 = vmatmul.f32.gmra.mxu0 %v65
  %v1018 = vpop.f32.mrf.mxu0
  %v1019 = vadd.f32 %v810, %v1018
  %1020 = vmatmul.f32.gmra.mxu0 %v69
  %v1021 = vpop.f32.mrf.mxu0
  %v1022 = vadd.f32 %v813, %v1021
  %1023 = vmatmul.f32.gmra.mxu0 %v73
  %v1024 = vpop.f32.mrf.mxu0
  %v1025 = vadd.f32 %v816, %v1024
  %1026 = vmatmul.f32.gmra.mxu0 %v77
  %v1027 = vpop.f32.mrf.mxu0
  %v1028 = vadd.f32 %v819, %v1027
  %1029 = vmatmul.f32.gmra.mxu0 %v81
  %v1030 = vpop.f32.mrf.mxu0
  %v1031 = vadd.f32 %v822, %v1030
  %1032 = vmatmul.f32.gmra.mxu0 %v85
  %v1033 = vpop.f32.mrf.mxu0
  %v1034 = vadd.f32 %v825, %v1033
  %1035 = vmatmul.f32.gmra.mxu0 %v89
  %v1036 = vpop.f32.mrf.mxu0
  %v1037 = vadd.f32 %v828, %v1036
  %1038 = vmatmul.f32.gmra.mxu0 %v93
  %v1039 = vpop.f32.mrf.mxu0
  %v1040 = vadd.f32 %v831, %v1039
  %1041 = vmatmul.f32.gmra.mxu0 %v97
  %v1042 = vpop.f32.mrf.mxu0
  %v1043 = vadd.f32 %v834, %v1042
  %1044 = vmatmul.f32.gmra.mxu0 %v101
  %v1045 = vpop.f32.mrf.mxu0
  %v1046 = vadd.f32 %v837, %v1045
  %1047 = vmatmul.f32.gmra.mxu0 %v105
  %v1048 = vpop.f32.mrf.mxu0
  %v1049 = vadd.f32 %v840, %v1048
  %1050 = vmatmul.f32.gmra.mxu0 %v109
  %v1051 = vpop.f32.mrf.mxu0
  %v1052 = vadd.f32 %v843, %v1051
  %1053 = vmatmul.f32.gmra.mxu0 %v113
  %v1054 = vpop.f32.mrf.mxu0
  %v1055 = vadd.f32 %v846, %v1054
  %1056 = vmatmul.f32.gmra.mxu0 %v117
  %v1057 = vpop.f32.mrf.mxu0
  %v1058 = vadd.f32 %v849, %v1057
  %1059 = vmatmul.f32.gmra.mxu0 %v121
  %v1060 = vpop.f32.mrf.mxu0
  %v1061 = vadd.f32 %v852, %v1060
  %1062 = vmatmul.f32.gmra.mxu0 %v125
  %v1063 = vpop.f32.mrf.mxu0
  %v1064 = vadd.f32 %v855, %v1063
  %1065 = vmatmul.f32.gmra.mxu0 %v129
  %v1066 = vpop.f32.mrf.mxu0
  %v1067 = vadd.f32 %v858, %v1066
  %1068 = vmatmul.f32.gmra.mxu0 %v133
  %v1069 = vpop.f32.mrf.mxu0
  %v1070 = vadd.f32 %v861, %v1069
  %1071 = vmatmul.f32.gmra.mxu0 %v137
  %v1072 = vpop.f32.mrf.mxu0
  %v1073 = vadd.f32 %v864, %v1072
  %1074 = vmatmul.f32.gmra.mxu0 %v141
  %v1075 = vpop.f32.mrf.mxu0
  %v1076 = vadd.f32 %v867, %v1075
  %1077 = vmatmul.f32.gmra.mxu0 %v145
  %v1078 = vpop.f32.mrf.mxu0
  %v1079 = vadd.f32 %v870, %v1078
  %1080 = vmatmul.f32.gmra.mxu0 %v149
  %v1081 = vpop.f32.mrf.mxu0
  %v1082 = vadd.f32 %v873, %v1081
  %1083 = vmatmul.f32.gmra.mxu0 %v153
  %v1084 = vpop.f32.mrf.mxu0
  %v1085 = vadd.f32 %v876, %v1084
  %1086 = vmatmul.f32.gmra.mxu0 %v157
  %v1087 = vpop.f32.mrf.mxu0
  %v1088 = vadd.f32 %v879, %v1087
  %1089 = vmatmul.f32.gmra.mxu0 %v161
  %v1090 = vpop.f32.mrf.mxu0
  %v1091 = vadd.f32 %v882, %v1090
  %1092 = vmatmul.f32.gmra.mxu0 %v165
  %v1093 = vpop.f32.mrf.mxu0
  %v1094 = vadd.f32 %v885, %v1093
  %1095 = vmatmul.f32.gmra.mxu0 %v169
  %v1096 = vpop.f32.mrf.mxu0
  %v1097 = vadd.f32 %v888, %v1096
  %1098 = vmatmul.f32.gmra.mxu0 %v173
  %v1099 = vpop.f32.mrf.mxu0
  %v1100 = vadd.f32 %v891, %v1099
  %1101 = vmatmul.f32.gmra.mxu0 %v177
  %v1102 = vpop.f32.mrf.mxu0
  %v1103 = vadd.f32 %v894, %v1102
  %1104 = vmatmul.f32.gmra.mxu0 %v181
  %v1105 = vpop.f32.mrf.mxu0
  %v1106 = vadd.f32 %v897, %v1105
  %1107 = vmatmul.f32.gmra.mxu0 %v185
  %v1108 = vpop.f32.mrf.mxu0
  %v1109 = vadd.f32 %v900, %v1108
  %1110 = vmatmul.f32.gmra.mxu0 %v189
  %v1111 = vpop.f32.mrf.mxu0
  %v1112 = vadd.f32 %v903, %v1111
  %1113 = vmatmul.f32.gmra.mxu0 %v193
  %v1114 = vpop.f32.mrf.mxu0
  %v1115 = vadd.f32 %v906, %v1114
  %1116 = vmatmul.f32.gmra.mxu0 %v197
  %v1117 = vpop.f32.mrf.mxu0
  %v1118 = vadd.f32 %v909, %v1117
  %1119 = vmatmul.f32.gmra.mxu0 %v201
  %v1120 = vpop.f32.mrf.mxu0
  %v1121 = vadd.f32 %v912, %v1120
  %1122 = vmatmul.f32.gmra.mxu0 %v205
  %v1123 = vpop.f32.mrf.mxu0
  %v1124 = vadd.f32 %v915, %v1123
  %1125 = vmatmul.f32.gmra.mxu0 %v209
  %v1126 = vpop.f32.mrf.mxu0
  %v1127 = vadd.f32 %v918, %v1126
  %1128 = vmatmul.f32.gmra.mxu0 %v213
  %v1129 = vpop.f32.mrf.mxu0
  %v1130 = vadd.f32 %v921, %v1129
  %1131 = vmatmul.f32.gmra.mxu0 %v217
  %v1132 = vpop.f32.mrf.mxu0
  %v1133 = vadd.f32 %v924, %v1132
  %1134 = vmatmul.f32.gmra.mxu0 %v221
  %v1135 = vpop.f32.mrf.mxu0
  %v1136 = vadd.f32 %v927, %v1135
  %1137 = vmatmul.f32.gmra.mxu0 %v225
  %v1138 = vpop.f32.mrf.mxu0
  %v1139 = vadd.f32 %v930, %v1138
  %1140 = vmatmul.f32.gmra.mxu0 %v229
  %v1141 = vpop.f32.mrf.mxu0
  %v1142 = vadd.f32 %v933, %v1141
  %1143 = vmatmul.f32.gmra.mxu0 %v233
  %v1144 = vpop.f32.mrf.mxu0
  %v1145 = vadd.f32 %v936, %v1144
  %1146 = vmatmul.f32.gmra.mxu0 %v237
  %v1147 = vpop.f32.mrf.mxu0
  %v1148 = vadd.f32 %v939, %v1147
  %1149 = vmatmul.f32.gmra.mxu0 %v241
  %v1150 = vpop.f32.mrf.mxu0
  %v1151 = vadd.f32 %v942, %v1150
  %1152 = vmatmul.f32.gmra.mxu0 %v245
  %v1153 = vpop.f32.mrf.mxu0
  %v1154 = vadd.f32 %v945, %v1153
  %1155 = vmatmul.f32.gmra.mxu0 %v249
  %v1156 = vpop.f32.mrf.mxu0
  %v1157 = vadd.f32 %v948, %v1156
  %1158 = vmatmul.f32.gmra.mxu0 %v253
  %v1159 = vpop.f32.mrf.mxu0
  %v1160 = vadd.f32 %v951, %v1159
  %1161 = vmatmul.f32.gmra.mxu0 %v257
  %v1162 = vpop.f32.mrf.mxu0
  %v1163 = vadd.f32 %v954, %v1162
  %1164 = vmatmul.f32.gmra.mxu0 %v261
  %v1165 = vpop.f32.mrf.mxu0
  %v1166 = vadd.f32 %v957, %v1165
  %1167 = vmatmul.f32.gmra.mxu0 %v265
  %v1168 = vpop.f32.mrf.mxu0
  %v1169 = vadd.f32 %v960, %v1168
  %1170 = vmatmul.f32.gmra.mxu0 %v269
  %v1171 = vpop.f32.mrf.mxu0
  %v1172 = vadd.f32 %v963, %v1171
  %1173 = vdwg.mxu0
  %v1174 = vmax.f32 %v983, 0.0
  %v1175 = vmax.f32 %v986, 0.0
  %v1176 = vmax.f32 %v989, 0.0
  %v1177 = vmax.f32 %v992, 0.0
  %v1178 = vmax.f32 %v995, 0.0
  %v1179 = vmax.f32 %v998, 0.0
  %v1180 = vmax.f32 %v1001, 0.0
  %v1181 = vmax.f32 %v1004, 0.0
  %v1182 = vmax.f32 %v1007, 0.0
  %v1183 = vmax.f32 %v1010, 0.0
  %v1184 = vmax.f32 %v1013, 0.0
  %v1185 = vmax.f32 %v1016, 0.0
  %v1186 = vmax.f32 %v1019, 0.0
  %v1187 = vmax.f32 %v1022, 0.0
  %v1188 = vmax.f32 %v1025, 0.0
  %v1189 = vmax.f32 %v1028, 0.0
  %v1190 = vmax.f32 %v1031, 0.0
  %v1191 = vmax.f32 %v1034, 0.0
  %v1192 = vmax.f32 %v1037, 0.0
  %v1193 = vmax.f32 %v1040, 0.0
  %v1194 = vmax.f32 %v1043, 0.0
  %v1195 = vmax.f32 %v1046, 0.0
  %v1196 = vmax.f32 %v1049, 0.0
  %v1197 = vmax.f32 %v1052, 0.0
  %v1198 = vmax.f32 %v1055, 0.0
  %v1199 = vmax.f32 %v1058, 0.0
  %v1200 = vmax.f32 %v1061, 0.0
  %v1201 = vmax.f32 %v1064, 0.0
  %v1202 = vmax.f32 %v1067, 0.0
  %v1203 = vmax.f32 %v1070, 0.0
  %v1204 = vmax.f32 %v1073, 0.0
  %v1205 = vmax.f32 %v1076, 0.0
  %v1206 = vmax.f32 %v1079, 0.0
  %v1207 = vmax.f32 %v1082, 0.0
  %v1208 = vmax.f32 %v1085, 0.0
  %v1209 = vmax.f32 %v1088, 0.0
  %v1210 = vmax.f32 %v1091, 0.0
  %v1211 = vmax.f32 %v1094, 0.0
  %v1212 = vmax.f32 %v1097, 0.0
  %v1213 = vmax.f32 %v1100, 0.0
  %v1214 = vmax.f32 %v1103, 0.0
  %v1215 = vmax.f32 %v1106, 0.0
  %v1216 = vmax.f32 %v1109, 0.0
  %v1217 = vmax.f32 %v1112, 0.0
  %v1218 = vmax.f32 %v1115, 0.0
  %v1219 = vmax.f32 %v1118, 0.0
  %v1220 = vmax.f32 %v1121, 0.0
  %v1221 = vmax.f32 %v1124, 0.0
  %v1222 = vmax.f32 %v1127, 0.0
  %v1223 = vmax.f32 %v1130, 0.0
  %v1224 = vmax.f32 %v1133, 0.0
  %v1225 = vmax.f32 %v1136, 0.0
  %v1226 = vmax.f32 %v1139, 0.0
  %v1227 = vmax.f32 %v1142, 0.0
  %v1228 = vmax.f32 %v1145, 0.0
  %v1229 = vmax.f32 %v1148, 0.0
  %v1230 = vmax.f32 %v1151, 0.0
  %v1231 = vmax.f32 %v1154, 0.0
  %v1232 = vmax.f32 %v1157, 0.0
  %v1233 = vmax.f32 %v1160, 0.0
  %v1234 = vmax.f32 %v1163, 0.0
  %v1235 = vmax.f32 %v1166, 0.0
  %v1236 = vmax.f32 %v1169, 0.0
  %v1237 = vmax.f32 %v1172, 0.0
  %vm1238 = vcmask 261120
  %1239 = vst.msk [vmem:[%s3] sm:$0xff] %vm1238, %v1174
  %1240 = vst.msk [vmem:[%s3 + $0x8] sm:$0xff] %vm1238, %v1175
  %1241 = vst.msk [vmem:[%s3 + $0x10] sm:$0xff] %vm1238, %v1176
  %1242 = vst.msk [vmem:[%s3 + $0x18] sm:$0xff] %vm1238, %v1177
  %1243 = vst.msk [vmem:[%s3 + $0x20] sm:$0xff] %vm1238, %v1178
  %1244 = vst.msk [vmem:[%s3 + $0x28] sm:$0xff] %vm1238, %v1179
  %1245 = vst.msk [vmem:[%s3 + $0x30] sm:$0xff] %vm1238, %v1180
  %1246 = vst.msk [vmem:[%s3 + $0x38] sm:$0xff] %vm1238, %v1181
  %1247 = vst.msk [vmem:[%s3 + $0x40] sm:$0xff] %vm1238, %v1182
  %1248 = vst.msk [vmem:[%s3 + $0x48] sm:$0xff] %vm1238, %v1183
  %1249 = vst.msk [vmem:[%s3 + $0x50] sm:$0xff] %vm1238, %v1184
  %1250 = vst.msk [vmem:[%s3 + $0x58] sm:$0xff] %vm1238, %v1185
  %1251 = vst.msk [vmem:[%s3 + $0x60] sm:$0xff] %vm1238, %v1186
  %1252 = vst.msk [vmem:[%s3 + $0x68] sm:$0xff] %vm1238, %v1187
  %1253 = vst.msk [vmem:[%s3 + $0x70] sm:$0xff] %vm1238, %v1188
  %1254 = vst.msk [vmem:[%s3 + $0x78] sm:$0xff] %vm1238, %v1189
  %1255 = vst.msk [vmem:[%s3 + $0x80] sm:$0xff] %vm1238, %v1190
  %1256 = vst.msk [vmem:[%s3 + $0x88] sm:$0xff] %vm1238, %v1191
  %1257 = vst.msk [vmem:[%s3 + $0x90] sm:$0xff] %vm1238, %v1192
  %1258 = vst.msk [vmem:[%s3 + $0x98] sm:$0xff] %vm1238, %v1193
  %1259 = vst.msk [vmem:[%s3 + $0xa0] sm:$0xff] %vm1238, %v1194
  %1260 = vst.msk [vmem:[%s3 + $0xa8] sm:$0xff] %vm1238, %v1195
  %1261 = vst.msk [vmem:[%s3 + $0xb0] sm:$0xff] %vm1238, %v1196
  %1262 = vst.msk [vmem:[%s3 + $0xb8] sm:$0xff] %vm1238, %v1197
  %1263 = vst.msk [vmem:[%s3 + $0xc0] sm:$0xff] %vm1238, %v1198
  %1264 = vst.msk [vmem:[%s3 + $0xc8] sm:$0xff] %vm1238, %v1199
  %1265 = vst.msk [vmem:[%s3 + $0xd0] sm:$0xff] %vm1238, %v1200
  %1266 = vst.msk [vmem:[%s3 + $0xd8] sm:$0xff] %vm1238, %v1201
  %1267 = vst.msk [vmem:[%s3 + $0xe0] sm:$0xff] %vm1238, %v1202
  %1268 = vst.msk [vmem:[%s3 + $0xe8] sm:$0xff] %vm1238, %v1203
  %1269 = vst.msk [vmem:[%s3 + $0xf0] sm:$0xff] %vm1238, %v1204
  %1270 = vst.msk [vmem:[%s3 + $0xf8] sm:$0xff] %vm1238, %v1205
  %1271 = vst.msk [vmem:[%s3 + $0x100] sm:$0xff] %vm1238, %v1206
  %1272 = vst.msk [vmem:[%s3 + $0x108] sm:$0xff] %vm1238, %v1207
  %1273 = vst.msk [vmem:[%s3 + $0x110] sm:$0xff] %vm1238, %v1208
  %1274 = vst.msk [vmem:[%s3 + $0x118] sm:$0xff] %vm1238, %v1209
  %1275 = vst.msk [vmem:[%s3 + $0x120] sm:$0xff] %vm1238, %v1210
  %1276 = vst.msk [vmem:[%s3 + $0x128] sm:$0xff] %vm1238, %v1211
  %1277 = vst.msk [vmem:[%s3 + $0x130] sm:$0xff] %vm1238, %v1212
  %1278 = vst.msk [vmem:[%s3 + $0x138] sm:$0xff] %vm1238, %v1213
  %1279 = vst.msk [vmem:[%s3 + $0x140] sm:$0xff] %vm1238, %v1214
  %1280 = vst.msk [vmem:[%s3 + $0x148] sm:$0xff] %vm1238, %v1215
  %1281 = vst.msk [vmem:[%s3 + $0x150] sm:$0xff] %vm1238, %v1216
  %1282 = vst.msk [vmem:[%s3 + $0x158] sm:$0xff] %vm1238, %v1217
  %1283 = vst.msk [vmem:[%s3 + $0x160] sm:$0xff] %vm1238, %v1218
  %1284 = vst.msk [vmem:[%s3 + $0x168] sm:$0xff] %vm1238, %v1219
  %1285 = vst.msk [vmem:[%s3 + $0x170] sm:$0xff] %vm1238, %v1220
  %1286 = vst.msk [vmem:[%s3 + $0x178] sm:$0xff] %vm1238, %v1221
  %1287 = vst.msk [vmem:[%s3 + $0x180] sm:$0xff] %vm1238, %v1222
  %1288 = vst.msk [vmem:[%s3 + $0x188] sm:$0xff] %vm1238, %v1223
  %1289 = vst.msk [vmem:[%s3 + $0x190] sm:$0xff] %vm1238, %v1224
  %1290 = vst.msk [vmem:[%s3 + $0x198] sm:$0xff] %vm1238, %v1225
  %1291 = vst.msk [vmem:[%s3 + $0x1a0] sm:$0xff] %vm1238, %v1226
  %1292 = vst.msk [vmem:[%s3 + $0x1a8] sm:$0xff] %vm1238, %v1227
  %1293 = vst.msk [vmem:[%s3 + $0x1b0] sm:$0xff] %vm1238, %v1228
  %1294 = vst.msk [vmem:[%s3 + $0x1b8] sm:$0xff] %vm1238, %v1229
  %1295 = vst.msk [vmem:[%s3 + $0x1c0] sm:$0xff] %vm1238, %v1230
  %1296 = vst.msk [vmem:[%s3 + $0x1c8] sm:$0xff] %vm1238, %v1231
  %1297 = vst.msk [vmem:[%s3 + $0x1d0] sm:$0xff] %vm1238, %v1232
  %1298 = vst.msk [vmem:[%s3 + $0x1d8] sm:$0xff] %vm1238, %v1233
  %1299 = vst.msk [vmem:[%s3 + $0x1e0] sm:$0xff] %vm1238, %v1234
  %1300 = vst.msk [vmem:[%s3 + $0x1e8] sm:$0xff] %vm1238, %v1235
  %1301 = vst.msk [vmem:[%s3 + $0x1f0] sm:$0xff] %vm1238, %v1236
  %1302 = vst.msk [vmem:[%s3 + $0x1f8] sm:$0xff] %vm1238, %v1237
  // Predicated region
  $region14: #{betavae_forward.10} parent=0 // pred_check
    _
  $region15: #{betavae_forward.10} parent=0 // pred_check_branch
    %1304 = sbr.rel (0) target = $region17
  $region16: #{betavae_forward.10} parent=0 // pred_region
    _
  $region17: #{betavae_forward.10} parent=0 // pred_fallthru
    _
  // Predicated region
  $region18: #{betavae_forward.10} parent=0 // pred_check
    _
  $region19: #{betavae_forward.10} parent=0 // pred_check_branch
    %1306 = sbr.rel (0) target = $region21
  $region20: #{betavae_forward.10} parent=0 // pred_region
    _
  $region21: #{betavae_forward.10} parent=0 // pred_fallthru
    _

// kernel: betavae_forward.11
$region0: #{betavae_forward.11}
  #allocation0 [shape = 'u32[]', space=smem, size = 0x4, offset = 0x4, fixed_abs, tag = 'smem constant byte address 0x4 - core index']
  #allocation1 [shape = 'u32[72,128]{1,0:T(1,128)}', space=vmem, size = 0x9000, scoped, tag = 'internal scratch']
  %s0 = inlined_call_operand.vmem [shape: f32[128,512], index: 0, kind: input, shape index: {}]
  %s1 = inlined_call_operand.vmem [shape: f32[512,64], index: 1, kind: input, shape index: {}]
  %s2 = inlined_call_operand.vmem [shape: f32[1,64], index: 2, kind: input, shape index: {}]
  %s3 = inlined_call_operand.vmem [shape: f32[128,64], index: 3, kind: output, shape index: {}]
  %s4 = sld [smem:[#allocation0]]
  $region22: #{betavae_forward.11} parent=0
    _
  %s6 = ssub.s32 1, %s4
  %s7 = scalar_select 0, %s6, %s4
  // Predicated region
  $region2: #{betavae_forward.11} parent=0 // pred_check
    _
  $region3: #{betavae_forward.11} parent=0 // pred_check_branch
    %9 = sbr.rel (0) target = $region5
  $region4: #{betavae_forward.11} parent=0 // pred_region
    _
  $region5: #{betavae_forward.11} parent=0 // pred_fallthru
    _
  // Predicated region
  $region6: #{betavae_forward.11} parent=0 // pred_check
    _
  $region7: #{betavae_forward.11} parent=0 // pred_check_branch
    %11 = sbr.rel (0) target = $region9
  $region8: #{betavae_forward.11} parent=0 // pred_region
    _
  $region9: #{betavae_forward.11} parent=0 // pred_fallthru
    _
  // Predicated region
  $region10: #{betavae_forward.11} parent=0 // pred_check
    _
  $region11: #{betavae_forward.11} parent=0 // pred_check_branch
    %13 = sbr.rel (0) target = $region13
  $region12: #{betavae_forward.11} parent=0 // pred_region
    _
  $region13: #{betavae_forward.11} parent=0 // pred_fallthru
    _
  %v14 = vld [vmem:[%s0] sm:$0xff]
  %v15 = vld [vmem:[%s0 + $0x8] sm:$0xff]
  %v16 = vld [vmem:[%s0 + $0x10] sm:$0xff]
  %v17 = vld [vmem:[%s0 + $0x18] sm:$0xff]
  %v18 = vld [vmem:[%s0 + $0x20] sm:$0xff]
  %v19 = vld [vmem:[%s0 + $0x28] sm:$0xff]
  %v20 = vld [vmem:[%s0 + $0x30] sm:$0xff]
  %v21 = vld [vmem:[%s0 + $0x38] sm:$0xff]
  %v22 = vld [vmem:[%s0 + $0x40] sm:$0xff]
  %v23 = vld [vmem:[%s0 + $0x48] sm:$0xff]
  %v24 = vld [vmem:[%s0 + $0x50] sm:$0xff]
  %v25 = vld [vmem:[%s0 + $0x58] sm:$0xff]
  %v26 = vld [vmem:[%s0 + $0x60] sm:$0xff]
  %v27 = vld [vmem:[%s0 + $0x68] sm:$0xff]
  %v28 = vld [vmem:[%s0 + $0x70] sm:$0xff]
  %v29 = vld [vmem:[%s0 + $0x78] sm:$0xff]
  %v30 = vld [vmem:[%s0 + $0x80] sm:$0xff]
  %v31 = vld [vmem:[%s0 + $0x88] sm:$0xff]
  %v32 = vld [vmem:[%s0 + $0x90] sm:$0xff]
  %v33 = vld [vmem:[%s0 + $0x98] sm:$0xff]
  %v34 = vld [vmem:[%s0 + $0xa0] sm:$0xff]
  %v35 = vld [vmem:[%s0 + $0xa8] sm:$0xff]
  %v36 = vld [vmem:[%s0 + $0xb0] sm:$0xff]
  %v37 = vld [vmem:[%s0 + $0xb8] sm:$0xff]
  %v38 = vld [vmem:[%s0 + $0xc0] sm:$0xff]
  %v39 = vld [vmem:[%s0 + $0xc8] sm:$0xff]
  %v40 = vld [vmem:[%s0 + $0xd0] sm:$0xff]
  %v41 = vld [vmem:[%s0 + $0xd8] sm:$0xff]
  %v42 = vld [vmem:[%s0 + $0xe0] sm:$0xff]
  %v43 = vld [vmem:[%s0 + $0xe8] sm:$0xff]
  %v44 = vld [vmem:[%s0 + $0xf0] sm:$0xff]
  %v45 = vld [vmem:[%s0 + $0xf8] sm:$0xff]
  %v46 = vld [vmem:[%s0 + $0x100] sm:$0xff]
  %v47 = vld [vmem:[%s0 + $0x108] sm:$0xff]
  %v48 = vld [vmem:[%s0 + $0x110] sm:$0xff]
  %v49 = vld [vmem:[%s0 + $0x118] sm:$0xff]
  %v50 = vld [vmem:[%s0 + $0x120] sm:$0xff]
  %v51 = vld [vmem:[%s0 + $0x128] sm:$0xff]
  %v52 = vld [vmem:[%s0 + $0x130] sm:$0xff]
  %v53 = vld [vmem:[%s0 + $0x138] sm:$0xff]
  %v54 = vld [vmem:[%s0 + $0x140] sm:$0xff]
  %v55 = vld [vmem:[%s0 + $0x148] sm:$0xff]
  %v56 = vld [vmem:[%s0 + $0x150] sm:$0xff]
  %v57 = vld [vmem:[%s0 + $0x158] sm:$0xff]
  %v58 = vld [vmem:[%s0 + $0x160] sm:$0xff]
  %v59 = vld [vmem:[%s0 + $0x168] sm:$0xff]
  %v60 = vld [vmem:[%s0 + $0x170] sm:$0xff]
  %v61 = vld [vmem:[%s0 + $0x178] sm:$0xff]
  %v62 = vld [vmem:[%s0 + $0x180] sm:$0xff]
  %v63 = vld [vmem:[%s0 + $0x188] sm:$0xff]
  %v64 = vld [vmem:[%s0 + $0x190] sm:$0xff]
  %v65 = vld [vmem:[%s0 + $0x198] sm:$0xff]
  %v66 = vld [vmem:[%s0 + $0x1a0] sm:$0xff]
  %v67 = vld [vmem:[%s0 + $0x1a8] sm:$0xff]
  %v68 = vld [vmem:[%s0 + $0x1b0] sm:$0xff]
  %v69 = vld [vmem:[%s0 + $0x1b8] sm:$0xff]
  %v70 = vld [vmem:[%s0 + $0x1c0] sm:$0xff]
  %v71 = vld [vmem:[%s0 + $0x1c8] sm:$0xff]
  %v72 = vld [vmem:[%s0 + $0x1d0] sm:$0xff]
  %v73 = vld [vmem:[%s0 + $0x1d8] sm:$0xff]
  %v74 = vld [vmem:[%s0 + $0x1e0] sm:$0xff]
  %v75 = vld [vmem:[%s0 + $0x1e8] sm:$0xff]
  %v76 = vld [vmem:[%s0 + $0x1f0] sm:$0xff]
  %v77 = vld [vmem:[%s0 + $0x1f8] sm:$0xff]
  %v78 = vld [vmem:[%s1] sm:$0xff]
  %v79 = vld [vmem:[%s1 + $0x8] sm:$0xff]
  %v80 = vld [vmem:[%s1 + $0x10] sm:$0xff]
  %v81 = vld [vmem:[%s1 + $0x18] sm:$0xff]
  %v82 = vld [vmem:[%s1 + $0x20] sm:$0xff]
  %v83 = vld [vmem:[%s1 + $0x28] sm:$0xff]
  %v84 = vld [vmem:[%s1 + $0x30] sm:$0xff]
  %v85 = vld [vmem:[%s1 + $0x38] sm:$0xff]
  %v86 = vld [vmem:[%s1 + $0x40] sm:$0xff]
  %v87 = vld [vmem:[%s1 + $0x48] sm:$0xff]
  %v88 = vld [vmem:[%s1 + $0x50] sm:$0xff]
  %v89 = vld [vmem:[%s1 + $0x58] sm:$0xff]
  %v90 = vld [vmem:[%s1 + $0x60] sm:$0xff]
  %v91 = vld [vmem:[%s1 + $0x68] sm:$0xff]
  %v92 = vld [vmem:[%s1 + $0x70] sm:$0xff]
  %v93 = vld [vmem:[%s1 + $0x78] sm:$0xff]
  %v94 = vld [vmem:[%s1 + $0x80] sm:$0xff]
  %v95 = vld [vmem:[%s1 + $0x88] sm:$0xff]
  %v96 = vld [vmem:[%s1 + $0x90] sm:$0xff]
  %v97 = vld [vmem:[%s1 + $0x98] sm:$0xff]
  %v98 = vld [vmem:[%s1 + $0xa0] sm:$0xff]
  %v99 = vld [vmem:[%s1 + $0xa8] sm:$0xff]
  %v100 = vld [vmem:[%s1 + $0xb0] sm:$0xff]
  %v101 = vld [vmem:[%s1 + $0xb8] sm:$0xff]
  %v102 = vld [vmem:[%s1 + $0xc0] sm:$0xff]
  %v103 = vld [vmem:[%s1 + $0xc8] sm:$0xff]
  %v104 = vld [vmem:[%s1 + $0xd0] sm:$0xff]
  %v105 = vld [vmem:[%s1 + $0xd8] sm:$0xff]
  %v106 = vld [vmem:[%s1 + $0xe0] sm:$0xff]
  %v107 = vld [vmem:[%s1 + $0xe8] sm:$0xff]
  %v108 = vld [vmem:[%s1 + $0xf0] sm:$0xff]
  %v109 = vld [vmem:[%s1 + $0xf8] sm:$0xff]
  %v110 = vld [vmem:[%s1 + $0x100] sm:$0xff]
  %v111 = vld [vmem:[%s1 + $0x108] sm:$0xff]
  %v112 = vld [vmem:[%s1 + $0x110] sm:$0xff]
  %v113 = vld [vmem:[%s1 + $0x118] sm:$0xff]
  %v114 = vld [vmem:[%s1 + $0x120] sm:$0xff]
  %v115 = vld [vmem:[%s1 + $0x128] sm:$0xff]
  %v116 = vld [vmem:[%s1 + $0x130] sm:$0xff]
  %v117 = vld [vmem:[%s1 + $0x138] sm:$0xff]
  %v118 = vld [vmem:[%s1 + $0x140] sm:$0xff]
  %v119 = vld [vmem:[%s1 + $0x148] sm:$0xff]
  %v120 = vld [vmem:[%s1 + $0x150] sm:$0xff]
  %v121 = vld [vmem:[%s1 + $0x158] sm:$0xff]
  %v122 = vld [vmem:[%s1 + $0x160] sm:$0xff]
  %v123 = vld [vmem:[%s1 + $0x168] sm:$0xff]
  %v124 = vld [vmem:[%s1 + $0x170] sm:$0xff]
  %v125 = vld [vmem:[%s1 + $0x178] sm:$0xff]
  %v126 = vld [vmem:[%s1 + $0x180] sm:$0xff]
  %v127 = vld [vmem:[%s1 + $0x188] sm:$0xff]
  %v128 = vld [vmem:[%s1 + $0x190] sm:$0xff]
  %v129 = vld [vmem:[%s1 + $0x198] sm:$0xff]
  %v130 = vld [vmem:[%s1 + $0x1a0] sm:$0xff]
  %v131 = vld [vmem:[%s1 + $0x1a8] sm:$0xff]
  %v132 = vld [vmem:[%s1 + $0x1b0] sm:$0xff]
  %v133 = vld [vmem:[%s1 + $0x1b8] sm:$0xff]
  %v134 = vld [vmem:[%s1 + $0x1c0] sm:$0xff]
  %v135 = vld [vmem:[%s1 + $0x1c8] sm:$0xff]
  %v136 = vld [vmem:[%s1 + $0x1d0] sm:$0xff]
  %v137 = vld [vmem:[%s1 + $0x1d8] sm:$0xff]
  %v138 = vld [vmem:[%s1 + $0x1e0] sm:$0xff]
  %v139 = vld [vmem:[%s1 + $0x1e8] sm:$0xff]
  %v140 = vld [vmem:[%s1 + $0x1f0] sm:$0xff]
  %v141 = vld [vmem:[%s1 + $0x1f8] sm:$0xff]
  %v142 = vld [vmem:[%s2] sm:$0x1]
  %v144 = vperm.slane %v142, 0
  %146 = vmatpush.msra.mxu0 %v93
  %147 = vmatpush.msra.mxu0 %v92
  %148 = vmatpush.msra.mxu0 %v91
  %149 = vmatpush.msra.mxu0 %v90
  %150 = vmatpush.msra.mxu0 %v89
  %151 = vmatpush.msra.mxu0 %v88
  %152 = vmatpush.msra.mxu0 %v87
  %153 = vmatpush.msra.mxu0 %v86
  %154 = vmatpush.msra.mxu0 %v85
  %155 = vmatpush.msra.mxu0 %v84
  %156 = vmatpush.msra.mxu0 %v83
  %157 = vmatpush.msra.mxu0 %v82
  %158 = vmatpush.msra.mxu0 %v81
  %159 = vmatpush.msra.mxu0 %v80
  %160 = vmatpush.msra.mxu0 %v79
  %161 = vmatpush.msra.mxu0 %v78
  %162 = vmatmul.f32.gmra.mxu0 %v14
  %v163 = vpop.f32.mrf.mxu0
  %v164 = vadd.f32 %v144, %v163
  %165 = vmatmul.f32.gmra.mxu0 %v18
  %v166 = vpop.f32.mrf.mxu0
  %v167 = vadd.f32 %v144, %v166
  %168 = vmatmul.f32.gmra.mxu0 %v22
  %v169 = vpop.f32.mrf.mxu0
  %v170 = vadd.f32 %v144, %v169
  %171 = vmatmul.f32.gmra.mxu0 %v26
  %v172 = vpop.f32.mrf.mxu0
  %v173 = vadd.f32 %v144, %v172
  %174 = vmatmul.f32.gmra.mxu0 %v30
  %v175 = vpop.f32.mrf.mxu0
  %v176 = vadd.f32 %v144, %v175
  %177 = vmatmul.f32.gmra.mxu0 %v34
  %v178 = vpop.f32.mrf.mxu0
  %v179 = vadd.f32 %v144, %v178
  %180 = vmatmul.f32.gmra.mxu0 %v38
  %v181 = vpop.f32.mrf.mxu0
  %v182 = vadd.f32 %v144, %v181
  %183 = vmatmul.f32.gmra.mxu0 %v42
  %v184 = vpop.f32.mrf.mxu0
  %v185 = vadd.f32 %v144, %v184
  %186 = vmatmul.f32.gmra.mxu0 %v46
  %v187 = vpop.f32.mrf.mxu0
  %v188 = vadd.f32 %v144, %v187
  %189 = vmatmul.f32.gmra.mxu0 %v50
  %v190 = vpop.f32.mrf.mxu0
  %v191 = vadd.f32 %v144, %v190
  %192 = vmatmul.f32.gmra.mxu0 %v54
  %v193 = vpop.f32.mrf.mxu0
  %v194 = vadd.f32 %v144, %v193
  %195 = vmatmul.f32.gmra.mxu0 %v58
  %v196 = vpop.f32.mrf.mxu0
  %v197 = vadd.f32 %v144, %v196
  %198 = vmatmul.f32.gmra.mxu0 %v62
  %v199 = vpop.f32.mrf.mxu0
  %v200 = vadd.f32 %v144, %v199
  %201 = vmatmul.f32.gmra.mxu0 %v66
  %v202 = vpop.f32.mrf.mxu0
  %v203 = vadd.f32 %v144, %v202
  %204 = vmatmul.f32.gmra.mxu0 %v70
  %v205 = vpop.f32.mrf.mxu0
  %v206 = vadd.f32 %v144, %v205
  %207 = vmatmul.f32.gmra.mxu0 %v74
  %v208 = vpop.f32.mrf.mxu0
  %v209 = vadd.f32 %v144, %v208
  %210 = vdwg.mxu0
  %211 = vmatpush.msra.mxu0 %v109
  %212 = vmatpush.msra.mxu0 %v108
  %213 = vmatpush.msra.mxu0 %v107
  %214 = vmatpush.msra.mxu0 %v106
  %215 = vmatpush.msra.mxu0 %v105
  %216 = vmatpush.msra.mxu0 %v104
  %217 = vmatpush.msra.mxu0 %v103
  %218 = vmatpush.msra.mxu0 %v102
  %219 = vmatpush.msra.mxu0 %v101
  %220 = vmatpush.msra.mxu0 %v100
  %221 = vmatpush.msra.mxu0 %v99
  %222 = vmatpush.msra.mxu0 %v98
  %223 = vmatpush.msra.mxu0 %v97
  %224 = vmatpush.msra.mxu0 %v96
  %225 = vmatpush.msra.mxu0 %v95
  %226 = vmatpush.msra.mxu0 %v94
  %227 = vmatmul.f32.gmra.mxu0 %v15
  %v228 = vpop.f32.mrf.mxu0
  %v229 = vadd.f32 %v164, %v228
  %230 = vmatmul.f32.gmra.mxu0 %v19
  %v231 = vpop.f32.mrf.mxu0
  %v232 = vadd.f32 %v167, %v231
  %233 = vmatmul.f32.gmra.mxu0 %v23
  %v234 = vpop.f32.mrf.mxu0
  %v235 = vadd.f32 %v170, %v234
  %236 = vmatmul.f32.gmra.mxu0 %v27
  %v237 = vpop.f32.mrf.mxu0
  %v238 = vadd.f32 %v173, %v237
  %239 = vmatmul.f32.gmra.mxu0 %v31
  %v240 = vpop.f32.mrf.mxu0
  %v241 = vadd.f32 %v176, %v240
  %242 = vmatmul.f32.gmra.mxu0 %v35
  %v243 = vpop.f32.mrf.mxu0
  %v244 = vadd.f32 %v179, %v243
  %245 = vmatmul.f32.gmra.mxu0 %v39
  %v246 = vpop.f32.mrf.mxu0
  %v247 = vadd.f32 %v182, %v246
  %248 = vmatmul.f32.gmra.mxu0 %v43
  %v249 = vpop.f32.mrf.mxu0
  %v250 = vadd.f32 %v185, %v249
  %251 = vmatmul.f32.gmra.mxu0 %v47
  %v252 = vpop.f32.mrf.mxu0
  %v253 = vadd.f32 %v188, %v252
  %254 = vmatmul.f32.gmra.mxu0 %v51
  %v255 = vpop.f32.mrf.mxu0
  %v256 = vadd.f32 %v191, %v255
  %257 = vmatmul.f32.gmra.mxu0 %v55
  %v258 = vpop.f32.mrf.mxu0
  %v259 = vadd.f32 %v194, %v258
  %260 = vmatmul.f32.gmra.mxu0 %v59
  %v261 = vpop.f32.mrf.mxu0
  %v262 = vadd.f32 %v197, %v261
  %263 = vmatmul.f32.gmra.mxu0 %v63
  %v264 = vpop.f32.mrf.mxu0
  %v265 = vadd.f32 %v200, %v264
  %266 = vmatmul.f32.gmra.mxu0 %v67
  %v267 = vpop.f32.mrf.mxu0
  %v268 = vadd.f32 %v203, %v267
  %269 = vmatmul.f32.gmra.mxu0 %v71
  %v270 = vpop.f32.mrf.mxu0
  %v271 = vadd.f32 %v206, %v270
  %272 = vmatmul.f32.gmra.mxu0 %v75
  %v273 = vpop.f32.mrf.mxu0
  %v274 = vadd.f32 %v209, %v273
  %275 = vdwg.mxu0
  %276 = vmatpush.msra.mxu0 %v125
  %277 = vmatpush.msra.mxu0 %v124
  %278 = vmatpush.msra.mxu0 %v123
  %279 = vmatpush.msra.mxu0 %v122
  %280 = vmatpush.msra.mxu0 %v121
  %281 = vmatpush.msra.mxu0 %v120
  %282 = vmatpush.msra.mxu0 %v119
  %283 = vmatpush.msra.mxu0 %v118
  %284 = vmatpush.msra.mxu0 %v117
  %285 = vmatpush.msra.mxu0 %v116
  %286 = vmatpush.msra.mxu0 %v115
  %287 = vmatpush.msra.mxu0 %v114
  %288 = vmatpush.msra.mxu0 %v113
  %289 = vmatpush.msra.mxu0 %v112
  %290 = vmatpush.msra.mxu0 %v111
  %291 = vmatpush.msra.mxu0 %v110
  %292 = vmatmul.f32.gmra.mxu0 %v16
  %v293 = vpop.f32.mrf.mxu0
  %v294 = vadd.f32 %v229, %v293
  %295 = vmatmul.f32.gmra.mxu0 %v20
  %v296 = vpop.f32.mrf.mxu0
  %v297 = vadd.f32 %v232, %v296
  %298 = vmatmul.f32.gmra.mxu0 %v24
  %v299 = vpop.f32.mrf.mxu0
  %v300 = vadd.f32 %v235, %v299
  %301 = vmatmul.f32.gmra.mxu0 %v28
  %v302 = vpop.f32.mrf.mxu0
  %v303 = vadd.f32 %v238, %v302
  %304 = vmatmul.f32.gmra.mxu0 %v32
  %v305 = vpop.f32.mrf.mxu0
  %v306 = vadd.f32 %v241, %v305
  %307 = vmatmul.f32.gmra.mxu0 %v36
  %v308 = vpop.f32.mrf.mxu0
  %v309 = vadd.f32 %v244, %v308
  %310 = vmatmul.f32.gmra.mxu0 %v40
  %v311 = vpop.f32.mrf.mxu0
  %v312 = vadd.f32 %v247, %v311
  %313 = vmatmul.f32.gmra.mxu0 %v44
  %v314 = vpop.f32.mrf.mxu0
  %v315 = vadd.f32 %v250, %v314
  %316 = vmatmul.f32.gmra.mxu0 %v48
  %v317 = vpop.f32.mrf.mxu0
  %v318 = vadd.f32 %v253, %v317
  %319 = vmatmul.f32.gmra.mxu0 %v52
  %v320 = vpop.f32.mrf.mxu0
  %v321 = vadd.f32 %v256, %v320
  %322 = vmatmul.f32.gmra.mxu0 %v56
  %v323 = vpop.f32.mrf.mxu0
  %v324 = vadd.f32 %v259, %v323
  %325 = vmatmul.f32.gmra.mxu0 %v60
  %v326 = vpop.f32.mrf.mxu0
  %v327 = vadd.f32 %v262, %v326
  %328 = vmatmul.f32.gmra.mxu0 %v64
  %v329 = vpop.f32.mrf.mxu0
  %v330 = vadd.f32 %v265, %v329
  %331 = vmatmul.f32.gmra.mxu0 %v68
  %v332 = vpop.f32.mrf.mxu0
  %v333 = vadd.f32 %v268, %v332
  %334 = vmatmul.f32.gmra.mxu0 %v72
  %v335 = vpop.f32.mrf.mxu0
  %v336 = vadd.f32 %v271, %v335
  %337 = vmatmul.f32.gmra.mxu0 %v76
  %v338 = vpop.f32.mrf.mxu0
  %v339 = vadd.f32 %v274, %v338
  %340 = vdwg.mxu0
  %341 = vmatpush.msra.mxu0 %v141
  %342 = vmatpush.msra.mxu0 %v140
  %343 = vmatpush.msra.mxu0 %v139
  %344 = vmatpush.msra.mxu0 %v138
  %345 = vmatpush.msra.mxu0 %v137
  %346 = vmatpush.msra.mxu0 %v136
  %347 = vmatpush.msra.mxu0 %v135
  %348 = vmatpush.msra.mxu0 %v134
  %349 = vmatpush.msra.mxu0 %v133
  %350 = vmatpush.msra.mxu0 %v132
  %351 = vmatpush.msra.mxu0 %v131
  %352 = vmatpush.msra.mxu0 %v130
  %353 = vmatpush.msra.mxu0 %v129
  %354 = vmatpush.msra.mxu0 %v128
  %355 = vmatpush.msra.mxu0 %v127
  %356 = vmatpush.msra.mxu0 %v126
  %357 = vmatmul.f32.gmra.mxu0 %v17
  %v358 = vpop.f32.mrf.mxu0
  %v359 = vadd.f32 %v294, %v358
  %360 = vmatmul.f32.gmra.mxu0 %v21
  %v361 = vpop.f32.mrf.mxu0
  %v362 = vadd.f32 %v297, %v361
  %363 = vmatmul.f32.gmra.mxu0 %v25
  %v364 = vpop.f32.mrf.mxu0
  %v365 = vadd.f32 %v300, %v364
  %366 = vmatmul.f32.gmra.mxu0 %v29
  %v367 = vpop.f32.mrf.mxu0
  %v368 = vadd.f32 %v303, %v367
  %369 = vmatmul.f32.gmra.mxu0 %v33
  %v370 = vpop.f32.mrf.mxu0
  %v371 = vadd.f32 %v306, %v370
  %372 = vmatmul.f32.gmra.mxu0 %v37
  %v373 = vpop.f32.mrf.mxu0
  %v374 = vadd.f32 %v309, %v373
  %375 = vmatmul.f32.gmra.mxu0 %v41
  %v376 = vpop.f32.mrf.mxu0
  %v377 = vadd.f32 %v312, %v376
  %378 = vmatmul.f32.gmra.mxu0 %v45
  %v379 = vpop.f32.mrf.mxu0
  %v380 = vadd.f32 %v315, %v379
  %381 = vmatmul.f32.gmra.mxu0 %v49
  %v382 = vpop.f32.mrf.mxu0
  %v383 = vadd.f32 %v318, %v382
  %384 = vmatmul.f32.gmra.mxu0 %v53
  %v385 = vpop.f32.mrf.mxu0
  %v386 = vadd.f32 %v321, %v385
  %387 = vmatmul.f32.gmra.mxu0 %v57
  %v388 = vpop.f32.mrf.mxu0
  %v389 = vadd.f32 %v324, %v388
  %390 = vmatmul.f32.gmra.mxu0 %v61
  %v391 = vpop.f32.mrf.mxu0
  %v392 = vadd.f32 %v327, %v391
  %393 = vmatmul.f32.gmra.mxu0 %v65
  %v394 = vpop.f32.mrf.mxu0
  %v395 = vadd.f32 %v330, %v394
  %396 = vmatmul.f32.gmra.mxu0 %v69
  %v397 = vpop.f32.mrf.mxu0
  %v398 = vadd.f32 %v333, %v397
  %399 = vmatmul.f32.gmra.mxu0 %v73
  %v400 = vpop.f32.mrf.mxu0
  %v401 = vadd.f32 %v336, %v400
  %402 = vmatmul.f32.gmra.mxu0 %v77
  %v403 = vpop.f32.mrf.mxu0
  %v404 = vadd.f32 %v339, %v403
  %405 = vdwg.mxu0
  %v406 = vmax.f32 %v359, 0.0
  %v407 = vmax.f32 %v362, 0.0
  %v408 = vmax.f32 %v365, 0.0
  %v409 = vmax.f32 %v368, 0.0
  %v410 = vmax.f32 %v371, 0.0
  %v411 = vmax.f32 %v374, 0.0
  %v412 = vmax.f32 %v377, 0.0
  %v413 = vmax.f32 %v380, 0.0
  %v414 = vmax.f32 %v383, 0.0
  %v415 = vmax.f32 %v386, 0.0
  %v416 = vmax.f32 %v389, 0.0
  %v417 = vmax.f32 %v392, 0.0
  %v418 = vmax.f32 %v395, 0.0
  %v419 = vmax.f32 %v398, 0.0
  %v420 = vmax.f32 %v401, 0.0
  %v421 = vmax.f32 %v404, 0.0
  %vm422 = vcmask 523264
  %423 = vst.msk [vmem:[%s3] sm:$0xff] %vm422, %v406
  %424 = vst.msk [vmem:[%s3 + $0x8] sm:$0xff] %vm422, %v407
  %425 = vst.msk [vmem:[%s3 + $0x10] sm:$0xff] %vm422, %v408
  %426 = vst.msk [vmem:[%s3 + $0x18] sm:$0xff] %vm422, %v409
  %427 = vst.msk [vmem:[%s3 + $0x20] sm:$0xff] %vm422, %v410
  %428 = vst.msk [vmem:[%s3 + $0x28] sm:$0xff] %vm422, %v411
  %429 = vst.msk [vmem:[%s3 + $0x30] sm:$0xff] %vm422, %v412
  %430 = vst.msk [vmem:[%s3 + $0x38] sm:$0xff] %vm422, %v413
  %431 = vst.msk [vmem:[%s3 + $0x40] sm:$0xff] %vm422, %v414
  %432 = vst.msk [vmem:[%s3 + $0x48] sm:$0xff] %vm422, %v415
  %433 = vst.msk [vmem:[%s3 + $0x50] sm:$0xff] %vm422, %v416
  %434 = vst.msk [vmem:[%s3 + $0x58] sm:$0xff] %vm422, %v417
  %435 = vst.msk [vmem:[%s3 + $0x60] sm:$0xff] %vm422, %v418
  %436 = vst.msk [vmem:[%s3 + $0x68] sm:$0xff] %vm422, %v419
  %437 = vst.msk [vmem:[%s3 + $0x70] sm:$0xff] %vm422, %v420
  %438 = vst.msk [vmem:[%s3 + $0x78] sm:$0xff] %vm422, %v421
  // Predicated region
  $region14: #{betavae_forward.11} parent=0 // pred_check
    _
  $region15: #{betavae_forward.11} parent=0 // pred_check_branch
    %440 = sbr.rel (0) target = $region17
  $region16: #{betavae_forward.11} parent=0 // pred_region
    _
  $region17: #{betavae_forward.11} parent=0 // pred_fallthru
    _
  // Predicated region
  $region18: #{betavae_forward.11} parent=0 // pred_check
    _
  $region19: #{betavae_forward.11} parent=0 // pred_check_branch
    %442 = sbr.rel (0) target = $region21
  $region20: #{betavae_forward.11} parent=0 // pred_region
    _
  $region21: #{betavae_forward.11} parent=0 // pred_fallthru
    _

// kernel: betavae_forward.12
$region0: #{betavae_forward.12}
  #allocation0 [shape = 'u32[]', space=smem, size = 0x4, offset = 0x4, fixed_abs, tag = 'smem constant byte address 0x4 - core index']
  #allocation1 [shape = 'u32[72,128]{1,0:T(1,128)}', space=vmem, size = 0x9000, scoped, tag = 'internal scratch']
  %s0 = inlined_call_operand.vmem [shape: f32[32,1024], index: 0, kind: input, shape index: {}]
  %s1 = inlined_call_operand.vmem [shape: f32[1024,64], index: 1, kind: input, shape index: {}]
  %s2 = inlined_call_operand.vmem [shape: f32[1,64], index: 2, kind: input, shape index: {}]
  %s3 = inlined_call_operand.vmem [shape: f32[32,64], index: 3, kind: output, shape index: {}]
  %s4 = sld [smem:[#allocation0]]
  $region22: #{betavae_forward.12} parent=0
    _
  %s6 = ssub.s32 1, %s4
  %s7 = scalar_select 0, %s6, %s4
  // Predicated region
  $region2: #{betavae_forward.12} parent=0 // pred_check
    _
  $region3: #{betavae_forward.12} parent=0 // pred_check_branch
    %9 = sbr.rel (0) target = $region5
  $region4: #{betavae_forward.12} parent=0 // pred_region
    _
  $region5: #{betavae_forward.12} parent=0 // pred_fallthru
    _
  // Predicated region
  $region6: #{betavae_forward.12} parent=0 // pred_check
    _
  $region7: #{betavae_forward.12} parent=0 // pred_check_branch
    %11 = sbr.rel (0) target = $region9
  $region8: #{betavae_forward.12} parent=0 // pred_region
    _
  $region9: #{betavae_forward.12} parent=0 // pred_fallthru
    _
  // Predicated region
  $region10: #{betavae_forward.12} parent=0 // pred_check
    _
  $region11: #{betavae_forward.12} parent=0 // pred_check_branch
    %13 = sbr.rel (0) target = $region13
  $region12: #{betavae_forward.12} parent=0 // pred_region
    _
  $region13: #{betavae_forward.12} parent=0 // pred_fallthru
    _
  %v14 = vld [vmem:[%s0] sm:$0xff]
  %v15 = vld [vmem:[%s0 + $0x8] sm:$0xff]
  %v16 = vld [vmem:[%s0 + $0x10] sm:$0xff]
  %v17 = vld [vmem:[%s0 + $0x18] sm:$0xff]
  %v18 = vld [vmem:[%s0 + $0x20] sm:$0xff]
  %v19 = vld [vmem:[%s0 + $0x28] sm:$0xff]
  %v20 = vld [vmem:[%s0 + $0x30] sm:$0xff]
  %v21 = vld [vmem:[%s0 + $0x38] sm:$0xff]
  %v22 = vld [vmem:[%s0 + $0x40] sm:$0xff]
  %v23 = vld [vmem:[%s0 + $0x48] sm:$0xff]
  %v24 = vld [vmem:[%s0 + $0x50] sm:$0xff]
  %v25 = vld [vmem:[%s0 + $0x58] sm:$0xff]
  %v26 = vld [vmem:[%s0 + $0x60] sm:$0xff]
  %v27 = vld [vmem:[%s0 + $0x68] sm:$0xff]
  %v28 = vld [vmem:[%s0 + $0x70] sm:$0xff]
  %v29 = vld [vmem:[%s0 + $0x78] sm:$0xff]
  %v30 = vld [vmem:[%s0 + $0x80] sm:$0xff]
  %v31 = vld [vmem:[%s0 + $0x88] sm:$0xff]
  %v32 = vld [vmem:[%s0 + $0x90] sm:$0xff]
  %v33 = vld [vmem:[%s0 + $0x98] sm:$0xff]
  %v34 = vld [vmem:[%s0 + $0xa0] sm:$0xff]
  %v35 = vld [vmem:[%s0 + $0xa8] sm:$0xff]
  %v36 = vld [vmem:[%s0 + $0xb0] sm:$0xff]
  %v37 = vld [vmem:[%s0 + $0xb8] sm:$0xff]
  %v38 = vld [vmem:[%s0 + $0xc0] sm:$0xff]
  %v39 = vld [vmem:[%s0 + $0xc8] sm:$0xff]
  %v40 = vld [vmem:[%s0 + $0xd0] sm:$0xff]
  %v41 = vld [vmem:[%s0 + $0xd8] sm:$0xff]
  %v42 = vld [vmem:[%s0 + $0xe0] sm:$0xff]
  %v43 = vld [vmem:[%s0 + $0xe8] sm:$0xff]
  %v44 = vld [vmem:[%s0 + $0xf0] sm:$0xff]
  %v45 = vld [vmem:[%s0 + $0xf8] sm:$0xff]
  %v46 = vld [vmem:[%s1] sm:$0xff]
  %v47 = vld [vmem:[%s1 + $0x8] sm:$0xff]
  %v48 = vld [vmem:[%s1 + $0x10] sm:$0xff]
  %v49 = vld [vmem:[%s1 + $0x18] sm:$0xff]
  %v50 = vld [vmem:[%s1 + $0x20] sm:$0xff]
  %v51 = vld [vmem:[%s1 + $0x28] sm:$0xff]
  %v52 = vld [vmem:[%s1 + $0x30] sm:$0xff]
  %v53 = vld [vmem:[%s1 + $0x38] sm:$0xff]
  %v54 = vld [vmem:[%s1 + $0x40] sm:$0xff]
  %v55 = vld [vmem:[%s1 + $0x48] sm:$0xff]
  %v56 = vld [vmem:[%s1 + $0x50] sm:$0xff]
  %v57 = vld [vmem:[%s1 + $0x58] sm:$0xff]
  %v58 = vld [vmem:[%s1 + $0x60] sm:$0xff]
  %v59 = vld [vmem:[%s1 + $0x68] sm:$0xff]
  %v60 = vld [vmem:[%s1 + $0x70] sm:$0xff]
  %v61 = vld [vmem:[%s1 + $0x78] sm:$0xff]
  %v62 = vld [vmem:[%s1 + $0x80] sm:$0xff]
  %v63 = vld [vmem:[%s1 + $0x88] sm:$0xff]
  %v64 = vld [vmem:[%s1 + $0x90] sm:$0xff]
  %v65 = vld [vmem:[%s1 + $0x98] sm:$0xff]
  %v66 = vld [vmem:[%s1 + $0xa0] sm:$0xff]
  %v67 = vld [vmem:[%s1 + $0xa8] sm:$0xff]
  %v68 = vld [vmem:[%s1 + $0xb0] sm:$0xff]
  %v69 = vld [vmem:[%s1 + $0xb8] sm:$0xff]
  %v70 = vld [vmem:[%s1 + $0xc0] sm:$0xff]
  %v71 = vld [vmem:[%s1 + $0xc8] sm:$0xff]
  %v72 = vld [vmem:[%s1 + $0xd0] sm:$0xff]
  %v73 = vld [vmem:[%s1 + $0xd8] sm:$0xff]
  %v74 = vld [vmem:[%s1 + $0xe0] sm:$0xff]
  %v75 = vld [vmem:[%s1 + $0xe8] sm:$0xff]
  %v76 = vld [vmem:[%s1 + $0xf0] sm:$0xff]
  %v77 = vld [vmem:[%s1 + $0xf8] sm:$0xff]
  %v78 = vld [vmem:[%s1 + $0x100] sm:$0xff]
  %v79 = vld [vmem:[%s1 + $0x108] sm:$0xff]
  %v80 = vld [vmem:[%s1 + $0x110] sm:$0xff]
  %v81 = vld [vmem:[%s1 + $0x118] sm:$0xff]
  %v82 = vld [vmem:[%s1 + $0x120] sm:$0xff]
  %v83 = vld [vmem:[%s1 + $0x128] sm:$0xff]
  %v84 = vld [vmem:[%s1 + $0x130] sm:$0xff]
  %v85 = vld [vmem:[%s1 + $0x138] sm:$0xff]
  %v86 = vld [vmem:[%s1 + $0x140] sm:$0xff]
  %v87 = vld [vmem:[%s1 + $0x148] sm:$0xff]
  %v88 = vld [vmem:[%s1 + $0x150] sm:$0xff]
  %v89 = vld [vmem:[%s1 + $0x158] sm:$0xff]
  %v90 = vld [vmem:[%s1 + $0x160] sm:$0xff]
  %v91 = vld [vmem:[%s1 + $0x168] sm:$0xff]
  %v92 = vld [vmem:[%s1 + $0x170] sm:$0xff]
  %v93 = vld [vmem:[%s1 + $0x178] sm:$0xff]
  %v94 = vld [vmem:[%s1 + $0x180] sm:$0xff]
  %v95 = vld [vmem:[%s1 + $0x188] sm:$0xff]
  %v96 = vld [vmem:[%s1 + $0x190] sm:$0xff]
  %v97 = vld [vmem:[%s1 + $0x198] sm:$0xff]
  %v98 = vld [vmem:[%s1 + $0x1a0] sm:$0xff]
  %v99 = vld [vmem:[%s1 + $0x1a8] sm:$0xff]
  %v100 = vld [vmem:[%s1 + $0x1b0] sm:$0xff]
  %v101 = vld [vmem:[%s1 + $0x1b8] sm:$0xff]
  %v102 = vld [vmem:[%s1 + $0x1c0] sm:$0xff]
  %v103 = vld [vmem:[%s1 + $0x1c8] sm:$0xff]
  %v104 = vld [vmem:[%s1 + $0x1d0] sm:$0xff]
  %v105 = vld [vmem:[%s1 + $0x1d8] sm:$0xff]
  %v106 = vld [vmem:[%s1 + $0x1e0] sm:$0xff]
  %v107 = vld [vmem:[%s1 + $0x1e8] sm:$0xff]
  %v108 = vld [vmem:[%s1 + $0x1f0] sm:$0xff]
  %v109 = vld [vmem:[%s1 + $0x1f8] sm:$0xff]
  %v110 = vld [vmem:[%s1 + $0x200] sm:$0xff]
  %v111 = vld [vmem:[%s1 + $0x208] sm:$0xff]
  %v112 = vld [vmem:[%s1 + $0x210] sm:$0xff]
  %v113 = vld [vmem:[%s1 + $0x218] sm:$0xff]
  %v114 = vld [vmem:[%s1 + $0x220] sm:$0xff]
  %v115 = vld [vmem:[%s1 + $0x228] sm:$0xff]
  %v116 = vld [vmem:[%s1 + $0x230] sm:$0xff]
  %v117 = vld [vmem:[%s1 + $0x238] sm:$0xff]
  %v118 = vld [vmem:[%s1 + $0x240] sm:$0xff]
  %v119 = vld [vmem:[%s1 + $0x248] sm:$0xff]
  %v120 = vld [vmem:[%s1 + $0x250] sm:$0xff]
  %v121 = vld [vmem:[%s1 + $0x258] sm:$0xff]
  %v122 = vld [vmem:[%s1 + $0x260] sm:$0xff]
  %v123 = vld [vmem:[%s1 + $0x268] sm:$0xff]
  %v124 = vld [vmem:[%s1 + $0x270] sm:$0xff]
  %v125 = vld [vmem:[%s1 + $0x278] sm:$0xff]
  %v126 = vld [vmem:[%s1 + $0x280] sm:$0xff]
  %v127 = vld [vmem:[%s1 + $0x288] sm:$0xff]
  %v128 = vld [vmem:[%s1 + $0x290] sm:$0xff]
  %v129 = vld [vmem:[%s1 + $0x298] sm:$0xff]
  %v130 = vld [vmem:[%s1 + $0x2a0] sm:$0xff]
  %v131 = vld [vmem:[%s1 + $0x2a8] sm:$0xff]
  %v132 = vld [vmem:[%s1 + $0x2b0] sm:$0xff]
  %v133 = vld [vmem:[%s1 + $0x2b8] sm:$0xff]
  %v134 = vld [vmem:[%s1 + $0x2c0] sm:$0xff]
  %v135 = vld [vmem:[%s1 + $0x2c8] sm:$0xff]
  %v136 = vld [vmem:[%s1 + $0x2d0] sm:$0xff]
  %v137 = vld [vmem:[%s1 + $0x2d8] sm:$0xff]
  %v138 = vld [vmem:[%s1 + $0x2e0] sm:$0xff]
  %v139 = vld [vmem:[%s1 + $0x2e8] sm:$0xff]
  %v140 = vld [vmem:[%s1 + $0x2f0] sm:$0xff]
  %v141 = vld [vmem:[%s1 + $0x2f8] sm:$0xff]
  %v142 = vld [vmem:[%s1 + $0x300] sm:$0xff]
  %v143 = vld [vmem:[%s1 + $0x308] sm:$0xff]
  %v144 = vld [vmem:[%s1 + $0x310] sm:$0xff]
  %v145 = vld [vmem:[%s1 + $0x318] sm:$0xff]
  %v146 = vld [vmem:[%s1 + $0x320] sm:$0xff]
  %v147 = vld [vmem:[%s1 + $0x328] sm:$0xff]
  %v148 = vld [vmem:[%s1 + $0x330] sm:$0xff]
  %v149 = vld [vmem:[%s1 + $0x338] sm:$0xff]
  %v150 = vld [vmem:[%s1 + $0x340] sm:$0xff]
  %v151 = vld [vmem:[%s1 + $0x348] sm:$0xff]
  %v152 = vld [vmem:[%s1 + $0x350] sm:$0xff]
  %v153 = vld [vmem:[%s1 + $0x358] sm:$0xff]
  %v154 = vld [vmem:[%s1 + $0x360] sm:$0xff]
  %v155 = vld [vmem:[%s1 + $0x368] sm:$0xff]
  %v156 = vld [vmem:[%s1 + $0x370] sm:$0xff]
  %v157 = vld [vmem:[%s1 + $0x378] sm:$0xff]
  %v158 = vld [vmem:[%s1 + $0x380] sm:$0xff]
  %v159 = vld [vmem:[%s1 + $0x388] sm:$0xff]
  %v160 = vld [vmem:[%s1 + $0x390] sm:$0xff]
  %v161 = vld [vmem:[%s1 + $0x398] sm:$0xff]
  %v162 = vld [vmem:[%s1 + $0x3a0] sm:$0xff]
  %v163 = vld [vmem:[%s1 + $0x3a8] sm:$0xff]
  %v164 = vld [vmem:[%s1 + $0x3b0] sm:$0xff]
  %v165 = vld [vmem:[%s1 + $0x3b8] sm:$0xff]
  %v166 = vld [vmem:[%s1 + $0x3c0] sm:$0xff]
  %v167 = vld [vmem:[%s1 + $0x3c8] sm:$0xff]
  %v168 = vld [vmem:[%s1 + $0x3d0] sm:$0xff]
  %v169 = vld [vmem:[%s1 + $0x3d8] sm:$0xff]
  %v170 = vld [vmem:[%s1 + $0x3e0] sm:$0xff]
  %v171 = vld [vmem:[%s1 + $0x3e8] sm:$0xff]
  %v172 = vld [vmem:[%s1 + $0x3f0] sm:$0xff]
  %v173 = vld [vmem:[%s1 + $0x3f8] sm:$0xff]
  %v174 = vld [vmem:[%s2] sm:$0x1]
  %v176 = vperm.slane %v174, 0
  %178 = vmatpush.msra.mxu0 %v61
  %179 = vmatpush.msra.mxu0 %v60
  %180 = vmatpush.msra.mxu0 %v59
  %181 = vmatpush.msra.mxu0 %v58
  %182 = vmatpush.msra.mxu0 %v57
  %183 = vmatpush.msra.mxu0 %v56
  %184 = vmatpush.msra.mxu0 %v55
  %185 = vmatpush.msra.mxu0 %v54
  %186 = vmatpush.msra.mxu0 %v53
  %187 = vmatpush.msra.mxu0 %v52
  %188 = vmatpush.msra.mxu0 %v51
  %189 = vmatpush.msra.mxu0 %v50
  %190 = vmatpush.msra.mxu0 %v49
  %191 = vmatpush.msra.mxu0 %v48
  %192 = vmatpush.msra.mxu0 %v47
  %193 = vmatpush.msra.mxu0 %v46
  %194 = vmatmul.f32.gmra.mxu0 %v14
  %v195 = vpop.f32.mrf.mxu0
  %v196 = vadd.f32 %v176, %v195
  %197 = vmatmul.f32.gmra.mxu0 %v22
  %v198 = vpop.f32.mrf.mxu0
  %v199 = vadd.f32 %v176, %v198
  %200 = vmatmul.f32.gmra.mxu0 %v30
  %v201 = vpop.f32.mrf.mxu0
  %v202 = vadd.f32 %v176, %v201
  %203 = vmatmul.f32.gmra.mxu0 %v38
  %v204 = vpop.f32.mrf.mxu0
  %v205 = vadd.f32 %v176, %v204
  %206 = vdwg.mxu0
  %207 = vmatpush.msra.mxu0 %v77
  %208 = vmatpush.msra.mxu0 %v76
  %209 = vmatpush.msra.mxu0 %v75
  %210 = vmatpush.msra.mxu0 %v74
  %211 = vmatpush.msra.mxu0 %v73
  %212 = vmatpush.msra.mxu0 %v72
  %213 = vmatpush.msra.mxu0 %v71
  %214 = vmatpush.msra.mxu0 %v70
  %215 = vmatpush.msra.mxu0 %v69
  %216 = vmatpush.msra.mxu0 %v68
  %217 = vmatpush.msra.mxu0 %v67
  %218 = vmatpush.msra.mxu0 %v66
  %219 = vmatpush.msra.mxu0 %v65
  %220 = vmatpush.msra.mxu0 %v64
  %221 = vmatpush.msra.mxu0 %v63
  %222 = vmatpush.msra.mxu0 %v62
  %223 = vmatmul.f32.gmra.mxu0 %v15
  %v224 = vpop.f32.mrf.mxu0
  %v225 = vadd.f32 %v196, %v224
  %226 = vmatmul.f32.gmra.mxu0 %v23
  %v227 = vpop.f32.mrf.mxu0
  %v228 = vadd.f32 %v199, %v227
  %229 = vmatmul.f32.gmra.mxu0 %v31
  %v230 = vpop.f32.mrf.mxu0
  %v231 = vadd.f32 %v202, %v230
  %232 = vmatmul.f32.gmra.mxu0 %v39
  %v233 = vpop.f32.mrf.mxu0
  %v234 = vadd.f32 %v205, %v233
  %235 = vdwg.mxu0
  %236 = vmatpush.msra.mxu0 %v93
  %237 = vmatpush.msra.mxu0 %v92
  %238 = vmatpush.msra.mxu0 %v91
  %239 = vmatpush.msra.mxu0 %v90
  %240 = vmatpush.msra.mxu0 %v89
  %241 = vmatpush.msra.mxu0 %v88
  %242 = vmatpush.msra.mxu0 %v87
  %243 = vmatpush.msra.mxu0 %v86
  %244 = vmatpush.msra.mxu0 %v85
  %245 = vmatpush.msra.mxu0 %v84
  %246 = vmatpush.msra.mxu0 %v83
  %247 = vmatpush.msra.mxu0 %v82
  %248 = vmatpush.msra.mxu0 %v81
  %249 = vmatpush.msra.mxu0 %v80
  %250 = vmatpush.msra.mxu0 %v79
  %251 = vmatpush.msra.mxu0 %v78
  %252 = vmatmul.f32.gmra.mxu0 %v16
  %v253 = vpop.f32.mrf.mxu0
  %v254 = vadd.f32 %v225, %v253
  %255 = vmatmul.f32.gmra.mxu0 %v24
  %v256 = vpop.f32.mrf.mxu0
  %v257 = vadd.f32 %v228, %v256
  %258 = vmatmul.f32.gmra.mxu0 %v32
  %v259 = vpop.f32.mrf.mxu0
  %v260 = vadd.f32 %v231, %v259
  %261 = vmatmul.f32.gmra.mxu0 %v40
  %v262 = vpop.f32.mrf.mxu0
  %v263 = vadd.f32 %v234, %v262
  %264 = vdwg.mxu0
  %265 = vmatpush.msra.mxu0 %v109
  %266 = vmatpush.msra.mxu0 %v108
  %267 = vmatpush.msra.mxu0 %v107
  %268 = vmatpush.msra.mxu0 %v106
  %269 = vmatpush.msra.mxu0 %v105
  %270 = vmatpush.msra.mxu0 %v104
  %271 = vmatpush.msra.mxu0 %v103
  %272 = vmatpush.msra.mxu0 %v102
  %273 = vmatpush.msra.mxu0 %v101
  %274 = vmatpush.msra.mxu0 %v100
  %275 = vmatpush.msra.mxu0 %v99
  %276 = vmatpush.msra.mxu0 %v98
  %277 = vmatpush.msra.mxu0 %v97
  %278 = vmatpush.msra.mxu0 %v96
  %279 = vmatpush.msra.mxu0 %v95
  %280 = vmatpush.msra.mxu0 %v94
  %281 = vmatmul.f32.gmra.mxu0 %v17
  %v282 = vpop.f32.mrf.mxu0
  %v283 = vadd.f32 %v254, %v282
  %284 = vmatmul.f32.gmra.mxu0 %v25
  %v285 = vpop.f32.mrf.mxu0
  %v286 = vadd.f32 %v257, %v285
  %287 = vmatmul.f32.gmra.mxu0 %v33
  %v288 = vpop.f32.mrf.mxu0
  %v289 = vadd.f32 %v260, %v288
  %290 = vmatmul.f32.gmra.mxu0 %v41
  %v291 = vpop.f32.mrf.mxu0
  %v292 = vadd.f32 %v263, %v291
  %293 = vdwg.mxu0
  %294 = vmatpush.msra.mxu0 %v125
  %295 = vmatpush.msra.mxu0 %v124
  %296 = vmatpush.msra.mxu0 %v123
  %297 = vmatpush.msra.mxu0 %v122
  %298 = vmatpush.msra.mxu0 %v121
  %299 = vmatpush.msra.mxu0 %v120
  %300 = vmatpush.msra.mxu0 %v119
  %301 = vmatpush.msra.mxu0 %v118
  %302 = vmatpush.msra.mxu0 %v117
  %303 = vmatpush.msra.mxu0 %v116
  %304 = vmatpush.msra.mxu0 %v115
  %305 = vmatpush.msra.mxu0 %v114
  %306 = vmatpush.msra.mxu0 %v113
  %307 = vmatpush.msra.mxu0 %v112
  %308 = vmatpush.msra.mxu0 %v111
  %309 = vmatpush.msra.mxu0 %v110
  %310 = vmatmul.f32.gmra.mxu0 %v18
  %v311 = vpop.f32.mrf.mxu0
  %v312 = vadd.f32 %v283, %v311
  %313 = vmatmul.f32.gmra.mxu0 %v26
  %v314 = vpop.f32.mrf.mxu0
  %v315 = vadd.f32 %v286, %v314
  %316 = vmatmul.f32.gmra.mxu0 %v34
  %v317 = vpop.f32.mrf.mxu0
  %v318 = vadd.f32 %v289, %v317
  %319 = vmatmul.f32.gmra.mxu0 %v42
  %v320 = vpop.f32.mrf.mxu0
  %v321 = vadd.f32 %v292, %v320
  %322 = vdwg.mxu0
  %323 = vmatpush.msra.mxu0 %v141
  %324 = vmatpush.msra.mxu0 %v140
  %325 = vmatpush.msra.mxu0 %v139
  %326 = vmatpush.msra.mxu0 %v138
  %327 = vmatpush.msra.mxu0 %v137
  %328 = vmatpush.msra.mxu0 %v136
  %329 = vmatpush.msra.mxu0 %v135
  %330 = vmatpush.msra.mxu0 %v134
  %331 = vmatpush.msra.mxu0 %v133
  %332 = vmatpush.msra.mxu0 %v132
  %333 = vmatpush.msra.mxu0 %v131
  %334 = vmatpush.msra.mxu0 %v130
  %335 = vmatpush.msra.mxu0 %v129
  %336 = vmatpush.msra.mxu0 %v128
  %337 = vmatpush.msra.mxu0 %v127
  %338 = vmatpush.msra.mxu0 %v126
  %339 = vmatmul.f32.gmra.mxu0 %v19
  %v340 = vpop.f32.mrf.mxu0
  %v341 = vadd.f32 %v312, %v340
  %342 = vmatmul.f32.gmra.mxu0 %v27
  %v343 = vpop.f32.mrf.mxu0
  %v344 = vadd.f32 %v315, %v343
  %345 = vmatmul.f32.gmra.mxu0 %v35
  %v346 = vpop.f32.mrf.mxu0
  %v347 = vadd.f32 %v318, %v346
  %348 = vmatmul.f32.gmra.mxu0 %v43
  %v349 = vpop.f32.mrf.mxu0
  %v350 = vadd.f32 %v321, %v349
  %351 = vdwg.mxu0
  %352 = vmatpush.msra.mxu0 %v157
  %353 = vmatpush.msra.mxu0 %v156
  %354 = vmatpush.msra.mxu0 %v155
  %355 = vmatpush.msra.mxu0 %v154
  %356 = vmatpush.msra.mxu0 %v153
  %357 = vmatpush.msra.mxu0 %v152
  %358 = vmatpush.msra.mxu0 %v151
  %359 = vmatpush.msra.mxu0 %v150
  %360 = vmatpush.msra.mxu0 %v149
  %361 = vmatpush.msra.mxu0 %v148
  %362 = vmatpush.msra.mxu0 %v147
  %363 = vmatpush.msra.mxu0 %v146
  %364 = vmatpush.msra.mxu0 %v145
  %365 = vmatpush.msra.mxu0 %v144
  %366 = vmatpush.msra.mxu0 %v143
  %367 = vmatpush.msra.mxu0 %v142
  %368 = vmatmul.f32.gmra.mxu0 %v20
  %v369 = vpop.f32.mrf.mxu0
  %v370 = vadd.f32 %v341, %v369
  %371 = vmatmul.f32.gmra.mxu0 %v28
  %v372 = vpop.f32.mrf.mxu0
  %v373 = vadd.f32 %v344, %v372
  %374 = vmatmul.f32.gmra.mxu0 %v36
  %v375 = vpop.f32.mrf.mxu0
  %v376 = vadd.f32 %v347, %v375
  %377 = vmatmul.f32.gmra.mxu0 %v44
  %v378 = vpop.f32.mrf.mxu0
  %v379 = vadd.f32 %v350, %v378
  %380 = vdwg.mxu0
  %381 = vmatpush.msra.mxu0 %v173
  %382 = vmatpush.msra.mxu0 %v172
  %383 = vmatpush.msra.mxu0 %v171
  %384 = vmatpush.msra.mxu0 %v170
  %385 = vmatpush.msra.mxu0 %v169
  %386 = vmatpush.msra.mxu0 %v168
  %387 = vmatpush.msra.mxu0 %v167
  %388 = vmatpush.msra.mxu0 %v166
  %389 = vmatpush.msra.mxu0 %v165
  %390 = vmatpush.msra.mxu0 %v164
  %391 = vmatpush.msra.mxu0 %v163
  %392 = vmatpush.msra.mxu0 %v162
  %393 = vmatpush.msra.mxu0 %v161
  %394 = vmatpush.msra.mxu0 %v160
  %395 = vmatpush.msra.mxu0 %v159
  %396 = vmatpush.msra.mxu0 %v158
  %397 = vmatmul.f32.gmra.mxu0 %v21
  %v398 = vpop.f32.mrf.mxu0
  %v399 = vadd.f32 %v370, %v398
  %400 = vmatmul.f32.gmra.mxu0 %v29
  %v401 = vpop.f32.mrf.mxu0
  %v402 = vadd.f32 %v373, %v401
  %403 = vmatmul.f32.gmra.mxu0 %v37
  %v404 = vpop.f32.mrf.mxu0
  %v405 = vadd.f32 %v376, %v404
  %406 = vmatmul.f32.gmra.mxu0 %v45
  %v407 = vpop.f32.mrf.mxu0
  %v408 = vadd.f32 %v379, %v407
  %409 = vdwg.mxu0
  %v410 = vmax.f32 %v399, 0.0
  %v411 = vmax.f32 %v402, 0.0
  %v412 = vmax.f32 %v405, 0.0
  %v413 = vmax.f32 %v408, 0.0
  %vm414 = vcmask 523264
  %415 = vst.msk [vmem:[%s3] sm:$0xff] %vm414, %v410
  %416 = vst.msk [vmem:[%s3 + $0x8] sm:$0xff] %vm414, %v411
  %417 = vst.msk [vmem:[%s3 + $0x10] sm:$0xff] %vm414, %v412
  %418 = vst.msk [vmem:[%s3 + $0x18] sm:$0xff] %vm414, %v413
  // Predicated region
  $region14: #{betavae_forward.12} parent=0 // pred_check
    _
  $region15: #{betavae_forward.12} parent=0 // pred_check_branch
    %420 = sbr.rel (0) target = $region17
  $region16: #{betavae_forward.12} parent=0 // pred_region
    _
  $region17: #{betavae_forward.12} parent=0 // pred_fallthru
    _
  // Predicated region
  $region18: #{betavae_forward.12} parent=0 // pred_check
    _
  $region19: #{betavae_forward.12} parent=0 // pred_check_branch
    %422 = sbr.rel (0) target = $region21
  $region20: #{betavae_forward.12} parent=0 // pred_region
    _
  $region21: #{betavae_forward.12} parent=0 // pred_fallthru
    _

// kernel: betavae_forward.13
$region0: #{betavae_forward.13}
  #allocation0 [shape = 'u32[]', space=smem, size = 0x4, offset = 0x4, fixed_abs, tag = 'smem constant byte address 0x4 - core index']
  #allocation1 [shape = 'u32[72,128]{1,0:T(1,128)}', space=vmem, size = 0x9000, scoped, tag = 'internal scratch']
  %s0 = inlined_call_operand.vmem [shape: f32[2,1024], index: 0, kind: input, shape index: {}]
  %s1 = inlined_call_operand.vmem [shape: f32[2,8], index: 1, kind: input, shape index: {}]
  %s2 = inlined_call_operand.vmem [shape: f32[1024,256], index: 2, kind: input, shape index: {}]
  %s3 = inlined_call_operand.vmem [shape: f32[1,256], index: 3, kind: input, shape index: {}]
  %s4 = inlined_call_operand.vmem [shape: f32[256,16], index: 4, kind: input, shape index: {}]
  %s5 = inlined_call_operand.vmem [shape: f32[1,16], index: 5, kind: input, shape index: {}]
  %s6 = inlined_call_operand.vmem [shape: f32[8,256], index: 6, kind: input, shape index: {}]
  %s7 = inlined_call_operand.vmem [shape: f32[1,256], index: 7, kind: input, shape index: {}]
  %s8 = inlined_call_operand.vmem [shape: f32[256,1024], index: 8, kind: input, shape index: {}]
  %s9 = inlined_call_operand.vmem [shape: f32[1,1024], index: 9, kind: input, shape index: {}]
  %s10 = inlined_call_operand.vmem [shape: f32[2,1024], index: 10, kind: output, shape index: {0}]
  %s11 = inlined_call_operand.hbm [shape: f32[2,8], index: 11, kind: output, shape index: {1}]
  %s12 = inlined_call_operand.hbm [shape: f32[2,8], index: 12, kind: output, shape index: {2}]
  %s13 = inlined_call_operand.hbm [shape: f32[2,8], index: 13, kind: output, shape index: {3}]
  %14 = xla_tuple %s10, %s11, %s12, %s13
  %s15 = sld [smem:[#allocation0]]
  $region74: #{betavae_forward.13} parent=0
    _
  %s17 = ssub.s32 1, %s15
  %s18 = scalar_select 0, %s17, %s15
  $region1: #{betavae_forward.13} parent=0
    #allocation2 [shape = 'u8[1024]{0}', space=vmem, size = 0x400, scoped, tag = 'output window, operand 1, single buffered']
    #allocation3 [shape = 's32[1]{0}', space=sflag, size = 0x4, scoped, tag = 'scoped memory for betavae_forward.13']
    #allocation4 [shape = 'u8[1024]{0}', space=vmem, size = 0x400, scoped, tag = 'output window, operand 2, single buffered']
    #allocation5 [shape = 's32[1]{0}', space=sflag, size = 0x4, scoped, tag = 'scoped memory for betavae_forward.13']
    #allocation6 [shape = 'u8[1024]{0}', space=vmem, size = 0x400, scoped, tag = 'output window, operand 3, single buffered']
    %19 = vsyncpa [#allocation3], 0
    %20 = vsyncpa [#allocation5], 0
    // Predicated region
    $region2: #{betavae_forward.13} parent=1 // pred_check
      _
    $region3: #{betavae_forward.13} parent=1 // pred_check_branch
      %22 = sbr.rel (0) target = $region5
    $region4: #{betavae_forward.13} parent=1 // pred_region
      _
    $region5: #{betavae_forward.13} parent=1 // pred_fallthru
      _
    // Predicated region
    $region6: #{betavae_forward.13} parent=1 // pred_check
      _
    $region7: #{betavae_forward.13} parent=1 // pred_check_branch
      %24 = sbr.rel (0) target = $region9
    $region8: #{betavae_forward.13} parent=1 // pred_region
      _
    $region9: #{betavae_forward.13} parent=1 // pred_fallthru
      _
    // Predicated region
    $region10: #{betavae_forward.13} parent=1 // pred_check
      _
    $region11: #{betavae_forward.13} parent=1 // pred_check_branch
      %26 = sbr.rel (0) target = $region13
    $region12: #{betavae_forward.13} parent=1 // pred_region
      _
    $region13: #{betavae_forward.13} parent=1 // pred_fallthru
      _
    // Predicated region
    $region14: #{betavae_forward.13} parent=1 // pred_check
      _
    $region15: #{betavae_forward.13} parent=1 // pred_check_branch
      %28 = sbr.rel (0) target = $region17
    $region16: #{betavae_forward.13} parent=1 // pred_region
      _
    $region17: #{betavae_forward.13} parent=1 // pred_fallthru
      _
    // Predicated region
    $region18: #{betavae_forward.13} parent=1 // pred_check
      _
    $region19: #{betavae_forward.13} parent=1 // pred_check_branch
      %30 = sbr.rel (0) target = $region21
    $region20: #{betavae_forward.13} parent=1 // pred_region
      _
    $region21: #{betavae_forward.13} parent=1 // pred_fallthru
      _
    // Predicated region
    $region22: #{betavae_forward.13} parent=1 // pred_check
      _
    $region23: #{betavae_forward.13} parent=1 // pred_check_branch
      %32 = sbr.rel (0) target = $region25
    $region24: #{betavae_forward.13} parent=1 // pred_region
      _
    $region25: #{betavae_forward.13} parent=1 // pred_fallthru
      _
    // Predicated region
    $region26: #{betavae_forward.13} parent=1 // pred_check
      _
    $region27: #{betavae_forward.13} parent=1 // pred_check_branch
      %34 = sbr.rel (0) target = $region29
    $region28: #{betavae_forward.13} parent=1 // pred_region
      _
    $region29: #{betavae_forward.13} parent=1 // pred_fallthru
      _
    // Predicated region
    $region30: #{betavae_forward.13} parent=1 // pred_check
      _
    $region31: #{betavae_forward.13} parent=1 // pred_check_branch
      %36 = sbr.rel (0) target = $region33
    $region32: #{betavae_forward.13} parent=1 // pred_region
      _
    $region33: #{betavae_forward.13} parent=1 // pred_fallthru
      _
    // Predicated region
    $region34: #{betavae_forward.13} parent=1 // pred_check
      _
    $region35: #{betavae_forward.13} parent=1 // pred_check_branch
      %38 = sbr.rel (0) target = $region37
    $region36: #{betavae_forward.13} parent=1 // pred_region
      _
    $region37: #{betavae_forward.13} parent=1 // pred_fallthru
      _
    // Predicated region
    $region38: #{betavae_forward.13} parent=1 // pred_check
      _
    $region39: #{betavae_forward.13} parent=1 // pred_check_branch
      %40 = sbr.rel (0) target = $region41
    $region40: #{betavae_forward.13} parent=1 // pred_region
      _
    $region41: #{betavae_forward.13} parent=1 // pred_fallthru
      _
    %v41 = vld [vmem:[%s0] sm:$0xff]
    %v42 = vld [vmem:[%s0 + $0x8] sm:$0xff]
    %v43 = vld [vmem:[%s2] sm:$0xff]
    %v44 = vld [vmem:[%s2 + $0x8] sm:$0xff]
    %v45 = vld [vmem:[%s2 + $0x10] sm:$0xff]
    %v46 = vld [vmem:[%s2 + $0x18] sm:$0xff]
    %v47 = vld [vmem:[%s2 + $0x20] sm:$0xff]
    %v48 = vld [vmem:[%s2 + $0x28] sm:$0xff]
    %v49 = vld [vmem:[%s2 + $0x30] sm:$0xff]
    %v50 = vld [vmem:[%s2 + $0x38] sm:$0xff]
    %v51 = vld [vmem:[%s2 + $0x40] sm:$0xff]
    %v52 = vld [vmem:[%s2 + $0x48] sm:$0xff]
    %v53 = vld [vmem:[%s2 + $0x50] sm:$0xff]
    %v54 = vld [vmem:[%s2 + $0x58] sm:$0xff]
    %v55 = vld [vmem:[%s2 + $0x60] sm:$0xff]
    %v56 = vld [vmem:[%s2 + $0x68] sm:$0xff]
    %v57 = vld [vmem:[%s2 + $0x70] sm:$0xff]
    %v58 = vld [vmem:[%s2 + $0x78] sm:$0xff]
    %v59 = vld [vmem:[%s2 + $0x80] sm:$0xff]
    %v60 = vld [vmem:[%s2 + $0x88] sm:$0xff]
    %v61 = vld [vmem:[%s2 + $0x90] sm:$0xff]
    %v62 = vld [vmem:[%s2 + $0x98] sm:$0xff]
    %v63 = vld [vmem:[%s2 + $0xa0] sm:$0xff]
    %v64 = vld [vmem:[%s2 + $0xa8] sm:$0xff]
    %v65 = vld [vmem:[%s2 + $0xb0] sm:$0xff]
    %v66 = vld [vmem:[%s2 + $0xb8] sm:$0xff]
    %v67 = vld [vmem:[%s2 + $0xc0] sm:$0xff]
    %v68 = vld [vmem:[%s2 + $0xc8] sm:$0xff]
    %v69 = vld [vmem:[%s2 + $0xd0] sm:$0xff]
    %v70 = vld [vmem:[%s2 + $0xd8] sm:$0xff]
    %v71 = vld [vmem:[%s2 + $0xe0] sm:$0xff]
    %v72 = vld [vmem:[%s2 + $0xe8] sm:$0xff]
    %v73 = vld [vmem:[%s2 + $0xf0] sm:$0xff]
    %v74 = vld [vmem:[%s2 + $0xf8] sm:$0xff]
    %v75 = vld [vmem:[%s2 + $0x100] sm:$0xff]
    %v76 = vld [vmem:[%s2 + $0x108] sm:$0xff]
    %v77 = vld [vmem:[%s2 + $0x110] sm:$0xff]
    %v78 = vld [vmem:[%s2 + $0x118] sm:$0xff]
    %v79 = vld [vmem:[%s2 + $0x120] sm:$0xff]
    %v80 = vld [vmem:[%s2 + $0x128] sm:$0xff]
    %v81 = vld [vmem:[%s2 + $0x130] sm:$0xff]
    %v82 = vld [vmem:[%s2 + $0x138] sm:$0xff]
    %v83 = vld [vmem:[%s2 + $0x140] sm:$0xff]
    %v84 = vld [vmem:[%s2 + $0x148] sm:$0xff]
    %v85 = vld [vmem:[%s2 + $0x150] sm:$0xff]
    %v86 = vld [vmem:[%s2 + $0x158] sm:$0xff]
    %v87 = vld [vmem:[%s2 + $0x160] sm:$0xff]
    %v88 = vld [vmem:[%s2 + $0x168] sm:$0xff]
    %v89 = vld [vmem:[%s2 + $0x170] sm:$0xff]
    %v90 = vld [vmem:[%s2 + $0x178] sm:$0xff]
    %v91 = vld [vmem:[%s2 + $0x180] sm:$0xff]
    %v92 = vld [vmem:[%s2 + $0x188] sm:$0xff]
    %v93 = vld [vmem:[%s2 + $0x190] sm:$0xff]
    %v94 = vld [vmem:[%s2 + $0x198] sm:$0xff]
    %v95 = vld [vmem:[%s2 + $0x1a0] sm:$0xff]
    %v96 = vld [vmem:[%s2 + $0x1a8] sm:$0xff]
    %v97 = vld [vmem:[%s2 + $0x1b0] sm:$0xff]
    %v98 = vld [vmem:[%s2 + $0x1b8] sm:$0xff]
    %v99 = vld [vmem:[%s2 + $0x1c0] sm:$0xff]
    %v100 = vld [vmem:[%s2 + $0x1c8] sm:$0xff]
    %v101 = vld [vmem:[%s2 + $0x1d0] sm:$0xff]
    %v102 = vld [vmem:[%s2 + $0x1d8] sm:$0xff]
    %v103 = vld [vmem:[%s2 + $0x1e0] sm:$0xff]
    %v104 = vld [vmem:[%s2 + $0x1e8] sm:$0xff]
    %v105 = vld [vmem:[%s2 + $0x1f0] sm:$0xff]
    %v106 = vld [vmem:[%s2 + $0x1f8] sm:$0xff]
    %v107 = vld [vmem:[%s2 + $0x200] sm:$0xff]
    %v108 = vld [vmem:[%s2 + $0x208] sm:$0xff]
    %v109 = vld [vmem:[%s2 + $0x210] sm:$0xff]
    %v110 = vld [vmem:[%s2 + $0x218] sm:$0xff]
    %v111 = vld [vmem:[%s2 + $0x220] sm:$0xff]
    %v112 = vld [vmem:[%s2 + $0x228] sm:$0xff]
    %v113 = vld [vmem:[%s2 + $0x230] sm:$0xff]
    %v114 = vld [vmem:[%s2 + $0x238] sm:$0xff]
    %v115 = vld [vmem:[%s2 + $0x240] sm:$0xff]
    %v116 = vld [vmem:[%s2 + $0x248] sm:$0xff]
    %v117 = vld [vmem:[%s2 + $0x250] sm:$0xff]
    %v118 = vld [vmem:[%s2 + $0x258] sm:$0xff]
    %v119 = vld [vmem:[%s2 + $0x260] sm:$0xff]
    %v120 = vld [vmem:[%s2 + $0x268] sm:$0xff]
    %v121 = vld [vmem:[%s2 + $0x270] sm:$0xff]
    %v122 = vld [vmem:[%s2 + $0x278] sm:$0xff]
    %v123 = vld [vmem:[%s2 + $0x280] sm:$0xff]
    %v124 = vld [vmem:[%s2 + $0x288] sm:$0xff]
    %v125 = vld [vmem:[%s2 + $0x290] sm:$0xff]
    %v126 = vld [vmem:[%s2 + $0x298] sm:$0xff]
    %v127 = vld [vmem:[%s2 + $0x2a0] sm:$0xff]
    %v128 = vld [vmem:[%s2 + $0x2a8] sm:$0xff]
    %v129 = vld [vmem:[%s2 + $0x2b0] sm:$0xff]
    %v130 = vld [vmem:[%s2 + $0x2b8] sm:$0xff]
    %v131 = vld [vmem:[%s2 + $0x2c0] sm:$0xff]
    %v132 = vld [vmem:[%s2 + $0x2c8] sm:$0xff]
    %v133 = vld [vmem:[%s2 + $0x2d0] sm:$0xff]
    %v134 = vld [vmem:[%s2 + $0x2d8] sm:$0xff]
    %v135 = vld [vmem:[%s2 + $0x2e0] sm:$0xff]
    %v136 = vld [vmem:[%s2 + $0x2e8] sm:$0xff]
    %v137 = vld [vmem:[%s2 + $0x2f0] sm:$0xff]
    %v138 = vld [vmem:[%s2 + $0x2f8] sm:$0xff]
    %v139 = vld [vmem:[%s2 + $0x300] sm:$0xff]
    %v140 = vld [vmem:[%s2 + $0x308] sm:$0xff]
    %v141 = vld [vmem:[%s2 + $0x310] sm:$0xff]
    %v142 = vld [vmem:[%s2 + $0x318] sm:$0xff]
    %v143 = vld [vmem:[%s2 + $0x320] sm:$0xff]
    %v144 = vld [vmem:[%s2 + $0x328] sm:$0xff]
    %v145 = vld [vmem:[%s2 + $0x330] sm:$0xff]
    %v146 = vld [vmem:[%s2 + $0x338] sm:$0xff]
    %v147 = vld [vmem:[%s2 + $0x340] sm:$0xff]
    %v148 = vld [vmem:[%s2 + $0x348] sm:$0xff]
    %v149 = vld [vmem:[%s2 + $0x350] sm:$0xff]
    %v150 = vld [vmem:[%s2 + $0x358] sm:$0xff]
    %v151 = vld [vmem:[%s2 + $0x360] sm:$0xff]
    %v152 = vld [vmem:[%s2 + $0x368] sm:$0xff]
    %v153 = vld [vmem:[%s2 + $0x370] sm:$0xff]
    %v154 = vld [vmem:[%s2 + $0x378] sm:$0xff]
    %v155 = vld [vmem:[%s2 + $0x380] sm:$0xff]
    %v156 = vld [vmem:[%s2 + $0x388] sm:$0xff]
    %v157 = vld [vmem:[%s2 + $0x390] sm:$0xff]
    %v158 = vld [vmem:[%s2 + $0x398] sm:$0xff]
    %v159 = vld [vmem:[%s2 + $0x3a0] sm:$0xff]
    %v160 = vld [vmem:[%s2 + $0x3a8] sm:$0xff]
    %v161 = vld [vmem:[%s2 + $0x3b0] sm:$0xff]
    %v162 = vld [vmem:[%s2 + $0x3b8] sm:$0xff]
    %v163 = vld [vmem:[%s2 + $0x3c0] sm:$0xff]
    %v164 = vld [vmem:[%s2 + $0x3c8] sm:$0xff]
    %v165 = vld [vmem:[%s2 + $0x3d0] sm:$0xff]
    %v166 = vld [vmem:[%s2 + $0x3d8] sm:$0xff]
    %v167 = vld [vmem:[%s2 + $0x3e0] sm:$0xff]
    %v168 = vld [vmem:[%s2 + $0x3e8] sm:$0xff]
    %v169 = vld [vmem:[%s2 + $0x3f0] sm:$0xff]
    %v170 = vld [vmem:[%s2 + $0x3f8] sm:$0xff]
    %v171 = vld [vmem:[%s2 + $0x400] sm:$0xff]
    %v172 = vld [vmem:[%s2 + $0x408] sm:$0xff]
    %v173 = vld [vmem:[%s2 + $0x410] sm:$0xff]
    %v174 = vld [vmem:[%s2 + $0x418] sm:$0xff]
    %v175 = vld [vmem:[%s2 + $0x420] sm:$0xff]
    %v176 = vld [vmem:[%s2 + $0x428] sm:$0xff]
    %v177 = vld [vmem:[%s2 + $0x430] sm:$0xff]
    %v178 = vld [vmem:[%s2 + $0x438] sm:$0xff]
    %v179 = vld [vmem:[%s2 + $0x440] sm:$0xff]
    %v180 = vld [vmem:[%s2 + $0x448] sm:$0xff]
    %v181 = vld [vmem:[%s2 + $0x450] sm:$0xff]
    %v182 = vld [vmem:[%s2 + $0x458] sm:$0xff]
    %v183 = vld [vmem:[%s2 + $0x460] sm:$0xff]
    %v184 = vld [vmem:[%s2 + $0x468] sm:$0xff]
    %v185 = vld [vmem:[%s2 + $0x470] sm:$0xff]
    %v186 = vld [vmem:[%s2 + $0x478] sm:$0xff]
    %v187 = vld [vmem:[%s2 + $0x480] sm:$0xff]
    %v188 = vld [vmem:[%s2 + $0x488] sm:$0xff]
    %v189 = vld [vmem:[%s2 + $0x490] sm:$0xff]
    %v190 = vld [vmem:[%s2 + $0x498] sm:$0xff]
    %v191 = vld [vmem:[%s2 + $0x4a0] sm:$0xff]
    %v192 = vld [vmem:[%s2 + $0x4a8] sm:$0xff]
    %v193 = vld [vmem:[%s2 + $0x4b0] sm:$0xff]
    %v194 = vld [vmem:[%s2 + $0x4b8] sm:$0xff]
    %v195 = vld [vmem:[%s2 + $0x4c0] sm:$0xff]
    %v196 = vld [vmem:[%s2 + $0x4c8] sm:$0xff]
    %v197 = vld [vmem:[%s2 + $0x4d0] sm:$0xff]
    %v198 = vld [vmem:[%s2 + $0x4d8] sm:$0xff]
    %v199 = vld [vmem:[%s2 + $0x4e0] sm:$0xff]
    %v200 = vld [vmem:[%s2 + $0x4e8] sm:$0xff]
    %v201 = vld [vmem:[%s2 + $0x4f0] sm:$0xff]
    %v202 = vld [vmem:[%s2 + $0x4f8] sm:$0xff]
    %v203 = vld [vmem:[%s2 + $0x500] sm:$0xff]
    %v204 = vld [vmem:[%s2 + $0x508] sm:$0xff]
    %v205 = vld [vmem:[%s2 + $0x510] sm:$0xff]
    %v206 = vld [vmem:[%s2 + $0x518] sm:$0xff]
    %v207 = vld [vmem:[%s2 + $0x520] sm:$0xff]
    %v208 = vld [vmem:[%s2 + $0x528] sm:$0xff]
    %v209 = vld [vmem:[%s2 + $0x530] sm:$0xff]
    %v210 = vld [vmem:[%s2 + $0x538] sm:$0xff]
    %v211 = vld [vmem:[%s2 + $0x540] sm:$0xff]
    %v212 = vld [vmem:[%s2 + $0x548] sm:$0xff]
    %v213 = vld [vmem:[%s2 + $0x550] sm:$0xff]
    %v214 = vld [vmem:[%s2 + $0x558] sm:$0xff]
    %v215 = vld [vmem:[%s2 + $0x560] sm:$0xff]
    %v216 = vld [vmem:[%s2 + $0x568] sm:$0xff]
    %v217 = vld [vmem:[%s2 + $0x570] sm:$0xff]
    %v218 = vld [vmem:[%s2 + $0x578] sm:$0xff]
    %v219 = vld [vmem:[%s2 + $0x580] sm:$0xff]
    %v220 = vld [vmem:[%s2 + $0x588] sm:$0xff]
    %v221 = vld [vmem:[%s2 + $0x590] sm:$0xff]
    %v222 = vld [vmem:[%s2 + $0x598] sm:$0xff]
    %v223 = vld [vmem:[%s2 + $0x5a0] sm:$0xff]
    %v224 = vld [vmem:[%s2 + $0x5a8] sm:$0xff]
    %v225 = vld [vmem:[%s2 + $0x5b0] sm:$0xff]
    %v226 = vld [vmem:[%s2 + $0x5b8] sm:$0xff]
    %v227 = vld [vmem:[%s2 + $0x5c0] sm:$0xff]
    %v228 = vld [vmem:[%s2 + $0x5c8] sm:$0xff]
    %v229 = vld [vmem:[%s2 + $0x5d0] sm:$0xff]
    %v230 = vld [vmem:[%s2 + $0x5d8] sm:$0xff]
    %v231 = vld [vmem:[%s2 + $0x5e0] sm:$0xff]
    %v232 = vld [vmem:[%s2 + $0x5e8] sm:$0xff]
    %v233 = vld [vmem:[%s2 + $0x5f0] sm:$0xff]
    %v234 = vld [vmem:[%s2 + $0x5f8] sm:$0xff]
    %v235 = vld [vmem:[%s2 + $0x600] sm:$0xff]
    %v236 = vld [vmem:[%s2 + $0x608] sm:$0xff]
    %v237 = vld [vmem:[%s2 + $0x610] sm:$0xff]
    %v238 = vld [vmem:[%s2 + $0x618] sm:$0xff]
    %v239 = vld [vmem:[%s2 + $0x620] sm:$0xff]
    %v240 = vld [vmem:[%s2 + $0x628] sm:$0xff]
    %v241 = vld [vmem:[%s2 + $0x630] sm:$0xff]
    %v242 = vld [vmem:[%s2 + $0x638] sm:$0xff]
    %v243 = vld [vmem:[%s2 + $0x640] sm:$0xff]
    %v244 = vld [vmem:[%s2 + $0x648] sm:$0xff]
    %v245 = vld [vmem:[%s2 + $0x650] sm:$0xff]
    %v246 = vld [vmem:[%s2 + $0x658] sm:$0xff]
    %v247 = vld [vmem:[%s2 + $0x660] sm:$0xff]
    %v248 = vld [vmem:[%s2 + $0x668] sm:$0xff]
    %v249 = vld [vmem:[%s2 + $0x670] sm:$0xff]
    %v250 = vld [vmem:[%s2 + $0x678] sm:$0xff]
    %v251 = vld [vmem:[%s2 + $0x680] sm:$0xff]
    %v252 = vld [vmem:[%s2 + $0x688] sm:$0xff]
    %v253 = vld [vmem:[%s2 + $0x690] sm:$0xff]
    %v254 = vld [vmem:[%s2 + $0x698] sm:$0xff]
    %v255 = vld [vmem:[%s2 + $0x6a0] sm:$0xff]
    %v256 = vld [vmem:[%s2 + $0x6a8] sm:$0xff]
    %v257 = vld [vmem:[%s2 + $0x6b0] sm:$0xff]
    %v258 = vld [vmem:[%s2 + $0x6b8] sm:$0xff]
    %v259 = vld [vmem:[%s2 + $0x6c0] sm:$0xff]
    %v260 = vld [vmem:[%s2 + $0x6c8] sm:$0xff]
    %v261 = vld [vmem:[%s2 + $0x6d0] sm:$0xff]
    %v262 = vld [vmem:[%s2 + $0x6d8] sm:$0xff]
    %v263 = vld [vmem:[%s2 + $0x6e0] sm:$0xff]
    %v264 = vld [vmem:[%s2 + $0x6e8] sm:$0xff]
    %v265 = vld [vmem:[%s2 + $0x6f0] sm:$0xff]
    %v266 = vld [vmem:[%s2 + $0x6f8] sm:$0xff]
    %v267 = vld [vmem:[%s2 + $0x700] sm:$0xff]
    %v268 = vld [vmem:[%s2 + $0x708] sm:$0xff]
    %v269 = vld [vmem:[%s2 + $0x710] sm:$0xff]
    %v270 = vld [vmem:[%s2 + $0x718] sm:$0xff]
    %v271 = vld [vmem:[%s2 + $0x720] sm:$0xff]
    %v272 = vld [vmem:[%s2 + $0x728] sm:$0xff]
    %v273 = vld [vmem:[%s2 + $0x730] sm:$0xff]
    %v274 = vld [vmem:[%s2 + $0x738] sm:$0xff]
    %v275 = vld [vmem:[%s2 + $0x740] sm:$0xff]
    %v276 = vld [vmem:[%s2 + $0x748] sm:$0xff]
    %v277 = vld [vmem:[%s2 + $0x750] sm:$0xff]
    %v278 = vld [vmem:[%s2 + $0x758] sm:$0xff]
    %v279 = vld [vmem:[%s2 + $0x760] sm:$0xff]
    %v280 = vld [vmem:[%s2 + $0x768] sm:$0xff]
    %v281 = vld [vmem:[%s2 + $0x770] sm:$0xff]
    %v282 = vld [vmem:[%s2 + $0x778] sm:$0xff]
    %v283 = vld [vmem:[%s2 + $0x780] sm:$0xff]
    %v284 = vld [vmem:[%s2 + $0x788] sm:$0xff]
    %v285 = vld [vmem:[%s2 + $0x790] sm:$0xff]
    %v286 = vld [vmem:[%s2 + $0x798] sm:$0xff]
    %v287 = vld [vmem:[%s2 + $0x7a0] sm:$0xff]
    %v288 = vld [vmem:[%s2 + $0x7a8] sm:$0xff]
    %v289 = vld [vmem:[%s2 + $0x7b0] sm:$0xff]
    %v290 = vld [vmem:[%s2 + $0x7b8] sm:$0xff]
    %v291 = vld [vmem:[%s2 + $0x7c0] sm:$0xff]
    %v292 = vld [vmem:[%s2 + $0x7c8] sm:$0xff]
    %v293 = vld [vmem:[%s2 + $0x7d0] sm:$0xff]
    %v294 = vld [vmem:[%s2 + $0x7d8] sm:$0xff]
    %v295 = vld [vmem:[%s2 + $0x7e0] sm:$0xff]
    %v296 = vld [vmem:[%s2 + $0x7e8] sm:$0xff]
    %v297 = vld [vmem:[%s2 + $0x7f0] sm:$0xff]
    %v298 = vld [vmem:[%s2 + $0x7f8] sm:$0xff]
    %v299 = vld [vmem:[%s3] sm:$0x3]
    %v301 = vperm.slane %v299, 0
    %v302 = vperm.slane %v299, 1
    %307 = vst [vmem:[#allocation1] ss:$4 sm:$0xff] %v41
    %s308 = scalar_lea.vmem [#allocation1], 32
    %309 = vst [vmem:[%s308] ss:$4 sm:$0xff] %v42
    %v310 = vld.sshfl [vmem:[#allocation1] sm:$0xff pattern:$0x73625140]
    %v311 = vld.sshfl [vmem:[#allocation1 + $0x8] sm:$0xff pattern:$0x73625140]
    %v312 = vld.sshfl [vmem:[#allocation1 + $0x10] sm:$0xff pattern:$0x73625140]
    %v313 = vld.sshfl [vmem:[#allocation1 + $0x18] sm:$0xff pattern:$0x73625140]
    %v314 = vld.sshfl [vmem:[#allocation1 + $0x20] sm:$0xff pattern:$0x73625140]
    %v315 = vld.sshfl [vmem:[#allocation1 + $0x28] sm:$0xff pattern:$0x73625140]
    %v316 = vld.sshfl [vmem:[#allocation1 + $0x30] sm:$0xff pattern:$0x73625140]
    %v317 = vld.sshfl [vmem:[#allocation1 + $0x38] sm:$0xff pattern:$0x73625140]
    %326 = vmatpush.msra.mxu0 %v73
    %327 = vmatpush.msra.mxu0 %v71
    %328 = vmatpush.msra.mxu0 %v69
    %329 = vmatpush.msra.mxu0 %v67
    %330 = vmatpush.msra.mxu0 %v65
    %331 = vmatpush.msra.mxu0 %v63
    %332 = vmatpush.msra.mxu0 %v61
    %333 = vmatpush.msra.mxu0 %v59
    %334 = vmatpush.msra.mxu0 %v57
    %335 = vmatpush.msra.mxu0 %v55
    %336 = vmatpush.msra.mxu0 %v53
    %337 = vmatpush.msra.mxu0 %v51
    %338 = vmatpush.msra.mxu0 %v49
    %339 = vmatpush.msra.mxu0 %v47
    %340 = vmatpush.msra.mxu0 %v45
    %341 = vmatpush.msra.mxu0 %v43
    %342 = vmatmul.f32.gmra.mxu0 %v310
    %v343 = vpop.f32.mrf.mxu0
    %v344 = vadd.f32 %v301, %v343
    %345 = vdwg.mxu0
    %346 = vmatpush.msra.mxu0 %v105
    %347 = vmatpush.msra.mxu0 %v103
    %348 = vmatpush.msra.mxu0 %v101
    %349 = vmatpush.msra.mxu0 %v99
    %350 = vmatpush.msra.mxu0 %v97
    %351 = vmatpush.msra.mxu0 %v95
    %352 = vmatpush.msra.mxu0 %v93
    %353 = vmatpush.msra.mxu0 %v91
    %354 = vmatpush.msra.mxu0 %v89
    %355 = vmatpush.msra.mxu0 %v87
    %356 = vmatpush.msra.mxu0 %v85
    %357 = vmatpush.msra.mxu0 %v83
    %358 = vmatpush.msra.mxu0 %v81
    %359 = vmatpush.msra.mxu0 %v79
    %360 = vmatpush.msra.mxu0 %v77
    %361 = vmatpush.msra.mxu0 %v75
    %362 = vmatmul.f32.gmra.mxu0 %v311
    %v363 = vpop.f32.mrf.mxu0
    %v364 = vadd.f32 %v344, %v363
    %365 = vdwg.mxu0
    %366 = vmatpush.msra.mxu0 %v137
    %367 = vmatpush.msra.mxu0 %v135
    %368 = vmatpush.msra.mxu0 %v133
    %369 = vmatpush.msra.mxu0 %v131
    %370 = vmatpush.msra.mxu0 %v129
    %371 = vmatpush.msra.mxu0 %v127
    %372 = vmatpush.msra.mxu0 %v125
    %373 = vmatpush.msra.mxu0 %v123
    %374 = vmatpush.msra.mxu0 %v121
    %375 = vmatpush.msra.mxu0 %v119
    %376 = vmatpush.msra.mxu0 %v117
    %377 = vmatpush.msra.mxu0 %v115
    %378 = vmatpush.msra.mxu0 %v113
    %379 = vmatpush.msra.mxu0 %v111
    %380 = vmatpush.msra.mxu0 %v109
    %381 = vmatpush.msra.mxu0 %v107
    %382 = vmatmul.f32.gmra.mxu0 %v312
    %v383 = vpop.f32.mrf.mxu0
    %v384 = vadd.f32 %v364, %v383
    %385 = vdwg.mxu0
    %386 = vmatpush.msra.mxu0 %v169
    %387 = vmatpush.msra.mxu0 %v167
    %388 = vmatpush.msra.mxu0 %v165
    %389 = vmatpush.msra.mxu0 %v163
    %390 = vmatpush.msra.mxu0 %v161
    %391 = vmatpush.msra.mxu0 %v159
    %392 = vmatpush.msra.mxu0 %v157
    %393 = vmatpush.msra.mxu0 %v155
    %394 = vmatpush.msra.mxu0 %v153
    %395 = vmatpush.msra.mxu0 %v151
    %396 = vmatpush.msra.mxu0 %v149
    %397 = vmatpush.msra.mxu0 %v147
    %398 = vmatpush.msra.mxu0 %v145
    %399 = vmatpush.msra.mxu0 %v143
    %400 = vmatpush.msra.mxu0 %v141
    %401 = vmatpush.msra.mxu0 %v139
    %402 = vmatmul.f32.gmra.mxu0 %v313
    %v403 = vpop.f32.mrf.mxu0
    %v404 = vadd.f32 %v384, %v403
    %405 = vdwg.mxu0
    %406 = vmatpush.msra.mxu0 %v201
    %407 = vmatpush.msra.mxu0 %v199
    %408 = vmatpush.msra.mxu0 %v197
    %409 = vmatpush.msra.mxu0 %v195
    %410 = vmatpush.msra.mxu0 %v193
    %411 = vmatpush.msra.mxu0 %v191
    %412 = vmatpush.msra.mxu0 %v189
    %413 = vmatpush.msra.mxu0 %v187
    %414 = vmatpush.msra.mxu0 %v185
    %415 = vmatpush.msra.mxu0 %v183
    %416 = vmatpush.msra.mxu0 %v181
    %417 = vmatpush.msra.mxu0 %v179
    %418 = vmatpush.msra.mxu0 %v177
    %419 = vmatpush.msra.mxu0 %v175
    %420 = vmatpush.msra.mxu0 %v173
    %421 = vmatpush.msra.mxu0 %v171
    %422 = vmatmul.f32.gmra.mxu0 %v314
    %v423 = vpop.f32.mrf.mxu0
    %v424 = vadd.f32 %v404, %v423
    %425 = vdwg.mxu0
    %426 = vmatpush.msra.mxu0 %v233
    %427 = vmatpush.msra.mxu0 %v231
    %428 = vmatpush.msra.mxu0 %v229
    %429 = vmatpush.msra.mxu0 %v227
    %430 = vmatpush.msra.mxu0 %v225
    %431 = vmatpush.msra.mxu0 %v223
    %432 = vmatpush.msra.mxu0 %v221
    %433 = vmatpush.msra.mxu0 %v219
    %434 = vmatpush.msra.mxu0 %v217
    %435 = vmatpush.msra.mxu0 %v215
    %436 = vmatpush.msra.mxu0 %v213
    %437 = vmatpush.msra.mxu0 %v211
    %438 = vmatpush.msra.mxu0 %v209
    %439 = vmatpush.msra.mxu0 %v207
    %440 = vmatpush.msra.mxu0 %v205
    %441 = vmatpush.msra.mxu0 %v203
    %442 = vmatmul.f32.gmra.mxu0 %v315
    %v443 = vpop.f32.mrf.mxu0
    %v444 = vadd.f32 %v424, %v443
    %445 = vdwg.mxu0
    %446 = vmatpush.msra.mxu0 %v265
    %447 = vmatpush.msra.mxu0 %v263
    %448 = vmatpush.msra.mxu0 %v261
    %449 = vmatpush.msra.mxu0 %v259
    %450 = vmatpush.msra.mxu0 %v257
    %451 = vmatpush.msra.mxu0 %v255
    %452 = vmatpush.msra.mxu0 %v253
    %453 = vmatpush.msra.mxu0 %v251
    %454 = vmatpush.msra.mxu0 %v249
    %455 = vmatpush.msra.mxu0 %v247
    %456 = vmatpush.msra.mxu0 %v245
    %457 = vmatpush.msra.mxu0 %v243
    %458 = vmatpush.msra.mxu0 %v241
    %459 = vmatpush.msra.mxu0 %v239
    %460 = vmatpush.msra.mxu0 %v237
    %461 = vmatpush.msra.mxu0 %v235
    %462 = vmatmul.f32.gmra.mxu0 %v316
    %v463 = vpop.f32.mrf.mxu0
    %v464 = vadd.f32 %v444, %v463
    %465 = vdwg.mxu0
    %466 = vmatpush.msra.mxu0 %v297
    %467 = vmatpush.msra.mxu0 %v295
    %468 = vmatpush.msra.mxu0 %v293
    %469 = vmatpush.msra.mxu0 %v291
    %470 = vmatpush.msra.mxu0 %v289
    %471 = vmatpush.msra.mxu0 %v287
    %472 = vmatpush.msra.mxu0 %v285
    %473 = vmatpush.msra.mxu0 %v283
    %474 = vmatpush.msra.mxu0 %v281
    %475 = vmatpush.msra.mxu0 %v279
    %476 = vmatpush.msra.mxu0 %v277
    %477 = vmatpush.msra.mxu0 %v275
    %478 = vmatpush.msra.mxu0 %v273
    %479 = vmatpush.msra.mxu0 %v271
    %480 = vmatpush.msra.mxu0 %v269
    %481 = vmatpush.msra.mxu0 %v267
    %482 = vmatmul.f32.gmra.mxu0 %v317
    %v483 = vpop.f32.mrf.mxu0
    %v484 = vadd.f32 %v464, %v483
    %485 = vdwg.mxu0
    %486 = vmatpush.msra.mxu0 %v74
    %487 = vmatpush.msra.mxu0 %v72
    %488 = vmatpush.msra.mxu0 %v70
    %489 = vmatpush.msra.mxu0 %v68
    %490 = vmatpush.msra.mxu0 %v66
    %491 = vmatpush.msra.mxu0 %v64
    %492 = vmatpush.msra.mxu0 %v62
    %493 = vmatpush.msra.mxu0 %v60
    %494 = vmatpush.msra.mxu0 %v58
    %495 = vmatpush.msra.mxu0 %v56
    %496 = vmatpush.msra.mxu0 %v54
    %497 = vmatpush.msra.mxu0 %v52
    %498 = vmatpush.msra.mxu0 %v50
    %499 = vmatpush.msra.mxu0 %v48
    %500 = vmatpush.msra.mxu0 %v46
    %501 = vmatpush.msra.mxu0 %v44
    %502 = vmatmul.f32.gmra.mxu0 %v310
    %v503 = vpop.f32.mrf.mxu0
    %v504 = vadd.f32 %v302, %v503
    %505 = vdwg.mxu0
    %506 = vmatpush.msra.mxu0 %v106
    %507 = vmatpush.msra.mxu0 %v104
    %508 = vmatpush.msra.mxu0 %v102
    %509 = vmatpush.msra.mxu0 %v100
    %510 = vmatpush.msra.mxu0 %v98
    %511 = vmatpush.msra.mxu0 %v96
    %512 = vmatpush.msra.mxu0 %v94
    %513 = vmatpush.msra.mxu0 %v92
    %514 = vmatpush.msra.mxu0 %v90
    %515 = vmatpush.msra.mxu0 %v88
    %516 = vmatpush.msra.mxu0 %v86
    %517 = vmatpush.msra.mxu0 %v84
    %518 = vmatpush.msra.mxu0 %v82
    %519 = vmatpush.msra.mxu0 %v80
    %520 = vmatpush.msra.mxu0 %v78
    %521 = vmatpush.msra.mxu0 %v76
    %522 = vmatmul.f32.gmra.mxu0 %v311
    %v523 = vpop.f32.mrf.mxu0
    %v524 = vadd.f32 %v504, %v523
    %525 = vdwg.mxu0
    %526 = vmatpush.msra.mxu0 %v138
    %527 = vmatpush.msra.mxu0 %v136
    %528 = vmatpush.msra.mxu0 %v134
    %529 = vmatpush.msra.mxu0 %v132
    %530 = vmatpush.msra.mxu0 %v130
    %531 = vmatpush.msra.mxu0 %v128
    %532 = vmatpush.msra.mxu0 %v126
    %533 = vmatpush.msra.mxu0 %v124
    %534 = vmatpush.msra.mxu0 %v122
    %535 = vmatpush.msra.mxu0 %v120
    %536 = vmatpush.msra.mxu0 %v118
    %537 = vmatpush.msra.mxu0 %v116
    %538 = vmatpush.msra.mxu0 %v114
    %539 = vmatpush.msra.mxu0 %v112
    %540 = vmatpush.msra.mxu0 %v110
    %541 = vmatpush.msra.mxu0 %v108
    %542 = vmatmul.f32.gmra.mxu0 %v312
    %v543 = vpop.f32.mrf.mxu0
    %v544 = vadd.f32 %v524, %v543
    %545 = vdwg.mxu0
    %546 = vmatpush.msra.mxu0 %v170
    %547 = vmatpush.msra.mxu0 %v168
    %548 = vmatpush.msra.mxu0 %v166
    %549 = vmatpush.msra.mxu0 %v164
    %550 = vmatpush.msra.mxu0 %v162
    %551 = vmatpush.msra.mxu0 %v160
    %552 = vmatpush.msra.mxu0 %v158
    %553 = vmatpush.msra.mxu0 %v156
    %554 = vmatpush.msra.mxu0 %v154
    %555 = vmatpush.msra.mxu0 %v152
    %556 = vmatpush.msra.mxu0 %v150
    %557 = vmatpush.msra.mxu0 %v148
    %558 = vmatpush.msra.mxu0 %v146
    %559 = vmatpush.msra.mxu0 %v144
    %560 = vmatpush.msra.mxu0 %v142
    %561 = vmatpush.msra.mxu0 %v140
    %562 = vmatmul.f32.gmra.mxu0 %v313
    %v563 = vpop.f32.mrf.mxu0
    %v564 = vadd.f32 %v544, %v563
    %565 = vdwg.mxu0
    %566 = vmatpush.msra.mxu0 %v202
    %567 = vmatpush.msra.mxu0 %v200
    %568 = vmatpush.msra.mxu0 %v198
    %569 = vmatpush.msra.mxu0 %v196
    %570 = vmatpush.msra.mxu0 %v194
    %571 = vmatpush.msra.mxu0 %v192
    %572 = vmatpush.msra.mxu0 %v190
    %573 = vmatpush.msra.mxu0 %v188
    %574 = vmatpush.msra.mxu0 %v186
    %575 = vmatpush.msra.mxu0 %v184
    %576 = vmatpush.msra.mxu0 %v182
    %577 = vmatpush.msra.mxu0 %v180
    %578 = vmatpush.msra.mxu0 %v178
    %579 = vmatpush.msra.mxu0 %v176
    %580 = vmatpush.msra.mxu0 %v174
    %581 = vmatpush.msra.mxu0 %v172
    %582 = vmatmul.f32.gmra.mxu0 %v314
    %v583 = vpop.f32.mrf.mxu0
    %v584 = vadd.f32 %v564, %v583
    %585 = vdwg.mxu0
    %586 = vmatpush.msra.mxu0 %v234
    %587 = vmatpush.msra.mxu0 %v232
    %588 = vmatpush.msra.mxu0 %v230
    %589 = vmatpush.msra.mxu0 %v228
    %590 = vmatpush.msra.mxu0 %v226
    %591 = vmatpush.msra.mxu0 %v224
    %592 = vmatpush.msra.mxu0 %v222
    %593 = vmatpush.msra.mxu0 %v220
    %594 = vmatpush.msra.mxu0 %v218
    %595 = vmatpush.msra.mxu0 %v216
    %596 = vmatpush.msra.mxu0 %v214
    %597 = vmatpush.msra.mxu0 %v212
    %598 = vmatpush.msra.mxu0 %v210
    %599 = vmatpush.msra.mxu0 %v208
    %600 = vmatpush.msra.mxu0 %v206
    %601 = vmatpush.msra.mxu0 %v204
    %602 = vmatmul.f32.gmra.mxu0 %v315
    %v603 = vpop.f32.mrf.mxu0
    %v604 = vadd.f32 %v584, %v603
    %605 = vdwg.mxu0
    %606 = vmatpush.msra.mxu0 %v266
    %607 = vmatpush.msra.mxu0 %v264
    %608 = vmatpush.msra.mxu0 %v262
    %609 = vmatpush.msra.mxu0 %v260
    %610 = vmatpush.msra.mxu0 %v258
    %611 = vmatpush.msra.mxu0 %v256
    %612 = vmatpush.msra.mxu0 %v254
    %613 = vmatpush.msra.mxu0 %v252
    %614 = vmatpush.msra.mxu0 %v250
    %615 = vmatpush.msra.mxu0 %v248
    %616 = vmatpush.msra.mxu0 %v246
    %617 = vmatpush.msra.mxu0 %v244
    %618 = vmatpush.msra.mxu0 %v242
    %619 = vmatpush.msra.mxu0 %v240
    %620 = vmatpush.msra.mxu0 %v238
    %621 = vmatpush.msra.mxu0 %v236
    %622 = vmatmul.f32.gmra.mxu0 %v316
    %v623 = vpop.f32.mrf.mxu0
    %v624 = vadd.f32 %v604, %v623
    %625 = vdwg.mxu0
    %626 = vmatpush.msra.mxu0 %v298
    %627 = vmatpush.msra.mxu0 %v296
    %628 = vmatpush.msra.mxu0 %v294
    %629 = vmatpush.msra.mxu0 %v292
    %630 = vmatpush.msra.mxu0 %v290
    %631 = vmatpush.msra.mxu0 %v288
    %632 = vmatpush.msra.mxu0 %v286
    %633 = vmatpush.msra.mxu0 %v284
    %634 = vmatpush.msra.mxu0 %v282
    %635 = vmatpush.msra.mxu0 %v280
    %636 = vmatpush.msra.mxu0 %v278
    %637 = vmatpush.msra.mxu0 %v276
    %638 = vmatpush.msra.mxu0 %v274
    %639 = vmatpush.msra.mxu0 %v272
    %640 = vmatpush.msra.mxu0 %v270
    %641 = vmatpush.msra.mxu0 %v268
    %642 = vmatmul.f32.gmra.mxu0 %v317
    %v643 = vpop.f32.mrf.mxu0
    %v644 = vadd.f32 %v624, %v643
    %645 = vdwg.mxu0
    %v646 = vmax.f32 %v484, 0.0
    %v647 = vmax.f32 %v644, 0.0
    %v648 = vld [vmem:[%s4] sm:$0xff]
    %v649 = vld [vmem:[%s4 + $0x8] sm:$0xff]
    %v650 = vld [vmem:[%s4 + $0x10] sm:$0xff]
    %v651 = vld [vmem:[%s4 + $0x18] sm:$0xff]
    %v652 = vld [vmem:[%s4 + $0x20] sm:$0xff]
    %v653 = vld [vmem:[%s4 + $0x28] sm:$0xff]
    %v654 = vld [vmem:[%s4 + $0x30] sm:$0xff]
    %v655 = vld [vmem:[%s4 + $0x38] sm:$0xff]
    %v656 = vld [vmem:[%s4 + $0x40] sm:$0xff]
    %v657 = vld [vmem:[%s4 + $0x48] sm:$0xff]
    %v658 = vld [vmem:[%s4 + $0x50] sm:$0xff]
    %v659 = vld [vmem:[%s4 + $0x58] sm:$0xff]
    %v660 = vld [vmem:[%s4 + $0x60] sm:$0xff]
    %v661 = vld [vmem:[%s4 + $0x68] sm:$0xff]
    %v662 = vld [vmem:[%s4 + $0x70] sm:$0xff]
    %v663 = vld [vmem:[%s4 + $0x78] sm:$0xff]
    %v664 = vld [vmem:[%s4 + $0x80] sm:$0xff]
    %v665 = vld [vmem:[%s4 + $0x88] sm:$0xff]
    %v666 = vld [vmem:[%s4 + $0x90] sm:$0xff]
    %v667 = vld [vmem:[%s4 + $0x98] sm:$0xff]
    %v668 = vld [vmem:[%s4 + $0xa0] sm:$0xff]
    %v669 = vld [vmem:[%s4 + $0xa8] sm:$0xff]
    %v670 = vld [vmem:[%s4 + $0xb0] sm:$0xff]
    %v671 = vld [vmem:[%s4 + $0xb8] sm:$0xff]
    %v672 = vld [vmem:[%s4 + $0xc0] sm:$0xff]
    %v673 = vld [vmem:[%s4 + $0xc8] sm:$0xff]
    %v674 = vld [vmem:[%s4 + $0xd0] sm:$0xff]
    %v675 = vld [vmem:[%s4 + $0xd8] sm:$0xff]
    %v676 = vld [vmem:[%s4 + $0xe0] sm:$0xff]
    %v677 = vld [vmem:[%s4 + $0xe8] sm:$0xff]
    %v678 = vld [vmem:[%s4 + $0xf0] sm:$0xff]
    %v679 = vld [vmem:[%s4 + $0xf8] sm:$0xff]
    %v680 = vld [vmem:[%s5] sm:$0x1]
    %v682 = vperm.slane %v680, 0
    %684 = vmatpush.msra.mxu0 %v663
    %685 = vmatpush.msra.mxu0 %v662
    %686 = vmatpush.msra.mxu0 %v661
    %687 = vmatpush.msra.mxu0 %v660
    %688 = vmatpush.msra.mxu0 %v659
    %689 = vmatpush.msra.mxu0 %v658
    %690 = vmatpush.msra.mxu0 %v657
    %691 = vmatpush.msra.mxu0 %v656
    %692 = vmatpush.msra.mxu0 %v655
    %693 = vmatpush.msra.mxu0 %v654
    %694 = vmatpush.msra.mxu0 %v653
    %695 = vmatpush.msra.mxu0 %v652
    %696 = vmatpush.msra.mxu0 %v651
    %697 = vmatpush.msra.mxu0 %v650
    %698 = vmatpush.msra.mxu0 %v649
    %699 = vmatpush.msra.mxu0 %v648
    %700 = vmatmul.f32.gmra.mxu0 %v646
    %v701 = vpop.f32.mrf.mxu0
    %v702 = vadd.f32 %v682, %v701
    %703 = vdwg.mxu0
    %704 = vmatpush.msra.mxu0 %v679
    %705 = vmatpush.msra.mxu0 %v678
    %706 = vmatpush.msra.mxu0 %v677
    %707 = vmatpush.msra.mxu0 %v676
    %708 = vmatpush.msra.mxu0 %v675
    %709 = vmatpush.msra.mxu0 %v674
    %710 = vmatpush.msra.mxu0 %v673
    %711 = vmatpush.msra.mxu0 %v672
    %712 = vmatpush.msra.mxu0 %v671
    %713 = vmatpush.msra.mxu0 %v670
    %714 = vmatpush.msra.mxu0 %v669
    %715 = vmatpush.msra.mxu0 %v668
    %716 = vmatpush.msra.mxu0 %v667
    %717 = vmatpush.msra.mxu0 %v666
    %718 = vmatpush.msra.mxu0 %v665
    %719 = vmatpush.msra.mxu0 %v664
    %720 = vmatmul.f32.gmra.mxu0 %v647
    %v721 = vpop.f32.mrf.mxu0
    %v722 = vadd.f32 %v702, %v721
    %723 = vdwg.mxu0
    %v724 = vld [vmem:[%s1] sm:$0x3]
    %v725 = vmul.f32 %v722, 0.5
    %v726 = vmul.f32 %v725, 1.442695
    %v727 = vpow.pop %v726
    %729 = vrot.lane.b32.xlu0 %v727, 120
    %v730 = vpop.permute.xlu0 %729
    %v732 = vmul.f32 %v724, %v730
    %v733 = vadd.f32 %v732, %v722
    %v734 = vld [vmem:[%s6] sm:$0xff]
    %v735 = vld [vmem:[%s6 + $0x8] sm:$0xff]
    %v736 = vld [vmem:[%s7] sm:$0x3]
    %v738 = vperm.slane %v736, 0
    %v739 = vperm.slane %v736, 1
    %vm742 = vcmask 64512
    %v744 = vsel %vm742, %v733, 0
    %746 = vmatpush.msra.mxu0 0.0
    %747 = vmatpush.msra.mxu0 0.0
    %748 = vmatpush.msra.mxu0 0.0
    %749 = vmatpush.msra.mxu0 0.0
    %750 = vmatpush.msra.mxu0 0.0
    %751 = vmatpush.msra.mxu0 0.0
    %752 = vmatpush.msra.mxu0 0.0
    %753 = vmatpush.msra.mxu0 0.0
    %754 = vmatpush.msra.mxu0 0.0
    %755 = vmatpush.msra.mxu0 0.0
    %756 = vmatpush.msra.mxu0 0.0
    %757 = vmatpush.msra.mxu0 0.0
    %758 = vmatpush.msra.mxu0 0.0
    %759 = vmatpush.msra.mxu0 0.0
    %760 = vmatpush.msra.mxu0 0.0
    %761 = vmatpush.msra.mxu0 %v734
    %762 = vmatmul.f32.gmra.mxu0 %v744
    %v763 = vpop.f32.mrf.mxu0
    %v764 = vadd.f32 %v738, %v763
    %765 = vdwg.mxu0
    %766 = vmatpush.msra.mxu0 0.0
    %767 = vmatpush.msra.mxu0 0.0
    %768 = vmatpush.msra.mxu0 0.0
    %769 = vmatpush.msra.mxu0 0.0
    %770 = vmatpush.msra.mxu0 0.0
    %771 = vmatpush.msra.mxu0 0.0
    %772 = vmatpush.msra.mxu0 0.0
    %773 = vmatpush.msra.mxu0 0.0
    %774 = vmatpush.msra.mxu0 0.0
    %775 = vmatpush.msra.mxu0 0.0
    %776 = vmatpush.msra.mxu0 0.0
    %777 = vmatpush.msra.mxu0 0.0
    %778 = vmatpush.msra.mxu0 0.0
    %779 = vmatpush.msra.mxu0 0.0
    %780 = vmatpush.msra.mxu0 0.0
    %781 = vmatpush.msra.mxu0 %v735
    %782 = vmatmul.f32.gmra.mxu0 %v744
    %v783 = vpop.f32.mrf.mxu0
    %v784 = vadd.f32 %v739, %v783
    %785 = vdwg.mxu0
    %v786 = vmax.f32 %v764, 0.0
    %v787 = vmax.f32 %v784, 0.0
    %v788 = vld [vmem:[%s8] sm:$0xff]
    %v789 = vld [vmem:[%s8 + $0x8] sm:$0xff]
    %v790 = vld [vmem:[%s8 + $0x10] sm:$0xff]
    %v791 = vld [vmem:[%s8 + $0x18] sm:$0xff]
    %v792 = vld [vmem:[%s8 + $0x20] sm:$0xff]
    %v793 = vld [vmem:[%s8 + $0x28] sm:$0xff]
    %v794 = vld [vmem:[%s8 + $0x30] sm:$0xff]
    %v795 = vld [vmem:[%s8 + $0x38] sm:$0xff]
    %v796 = vld [vmem:[%s8 + $0x40] sm:$0xff]
    %v797 = vld [vmem:[%s8 + $0x48] sm:$0xff]
    %v798 = vld [vmem:[%s8 + $0x50] sm:$0xff]
    %v799 = vld [vmem:[%s8 + $0x58] sm:$0xff]
    %v800 = vld [vmem:[%s8 + $0x60] sm:$0xff]
    %v801 = vld [vmem:[%s8 + $0x68] sm:$0xff]
    %v802 = vld [vmem:[%s8 + $0x70] sm:$0xff]
    %v803 = vld [vmem:[%s8 + $0x78] sm:$0xff]
    %v804 = vld [vmem:[%s8 + $0x80] sm:$0xff]
    %v805 = vld [vmem:[%s8 + $0x88] sm:$0xff]
    %v806 = vld [vmem:[%s8 + $0x90] sm:$0xff]
    %v807 = vld [vmem:[%s8 + $0x98] sm:$0xff]
    %v808 = vld [vmem:[%s8 + $0xa0] sm:$0xff]
    %v809 = vld [vmem:[%s8 + $0xa8] sm:$0xff]
    %v810 = vld [vmem:[%s8 + $0xb0] sm:$0xff]
    %v811 = vld [vmem:[%s8 + $0xb8] sm:$0xff]
    %v812 = vld [vmem:[%s8 + $0xc0] sm:$0xff]
    %v813 = vld [vmem:[%s8 + $0xc8] sm:$0xff]
    %v814 = vld [vmem:[%s8 + $0xd0] sm:$0xff]
    %v815 = vld [vmem:[%s8 + $0xd8] sm:$0xff]
    %v816 = vld [vmem:[%s8 + $0xe0] sm:$0xff]
    %v817 = vld [vmem:[%s8 + $0xe8] sm:$0xff]
    %v818 = vld [vmem:[%s8 + $0xf0] sm:$0xff]
    %v819 = vld [vmem:[%s8 + $0xf8] sm:$0xff]
    %v820 = vld [vmem:[%s8 + $0x100] sm:$0xff]
    %v821 = vld [vmem:[%s8 + $0x108] sm:$0xff]
    %v822 = vld [vmem:[%s8 + $0x110] sm:$0xff]
    %v823 = vld [vmem:[%s8 + $0x118] sm:$0xff]
    %v824 = vld [vmem:[%s8 + $0x120] sm:$0xff]
    %v825 = vld [vmem:[%s8 + $0x128] sm:$0xff]
    %v826 = vld [vmem:[%s8 + $0x130] sm:$0xff]
    %v827 = vld [vmem:[%s8 + $0x138] sm:$0xff]
    %v828 = vld [vmem:[%s8 + $0x140] sm:$0xff]
    %v829 = vld [vmem:[%s8 + $0x148] sm:$0xff]
    %v830 = vld [vmem:[%s8 + $0x150] sm:$0xff]
    %v831 = vld [vmem:[%s8 + $0x158] sm:$0xff]
    %v832 = vld [vmem:[%s8 + $0x160] sm:$0xff]
    %v833 = vld [vmem:[%s8 + $0x168] sm:$0xff]
    %v834 = vld [vmem:[%s8 + $0x170] sm:$0xff]
    %v835 = vld [vmem:[%s8 + $0x178] sm:$0xff]
    %v836 = vld [vmem:[%s8 + $0x180] sm:$0xff]
    %v837 = vld [vmem:[%s8 + $0x188] sm:$0xff]
    %v838 = vld [vmem:[%s8 + $0x190] sm:$0xff]
    %v839 = vld [vmem:[%s8 + $0x198] sm:$0xff]
    %v840 = vld [vmem:[%s8 + $0x1a0] sm:$0xff]
    %v841 = vld [vmem:[%s8 + $0x1a8] sm:$0xff]
    %v842 = vld [vmem:[%s8 + $0x1b0] sm:$0xff]
    %v843 = vld [vmem:[%s8 + $0x1b8] sm:$0xff]
    %v844 = vld [vmem:[%s8 + $0x1c0] sm:$0xff]
    %v845 = vld [vmem:[%s8 + $0x1c8] sm:$0xff]
    %v846 = vld [vmem:[%s8 + $0x1d0] sm:$0xff]
    %v847 = vld [vmem:[%s8 + $0x1d8] sm:$0xff]
    %v848 = vld [vmem:[%s8 + $0x1e0] sm:$0xff]
    %v849 = vld [vmem:[%s8 + $0x1e8] sm:$0xff]
    %v850 = vld [vmem:[%s8 + $0x1f0] sm:$0xff]
    %v851 = vld [vmem:[%s8 + $0x1f8] sm:$0xff]
    %v852 = vld [vmem:[%s8 + $0x200] sm:$0xff]
    %v853 = vld [vmem:[%s8 + $0x208] sm:$0xff]
    %v854 = vld [vmem:[%s8 + $0x210] sm:$0xff]
    %v855 = vld [vmem:[%s8 + $0x218] sm:$0xff]
    %v856 = vld [vmem:[%s8 + $0x220] sm:$0xff]
    %v857 = vld [vmem:[%s8 + $0x228] sm:$0xff]
    %v858 = vld [vmem:[%s8 + $0x230] sm:$0xff]
    %v859 = vld [vmem:[%s8 + $0x238] sm:$0xff]
    %v860 = vld [vmem:[%s8 + $0x240] sm:$0xff]
    %v861 = vld [vmem:[%s8 + $0x248] sm:$0xff]
    %v862 = vld [vmem:[%s8 + $0x250] sm:$0xff]
    %v863 = vld [vmem:[%s8 + $0x258] sm:$0xff]
    %v864 = vld [vmem:[%s8 + $0x260] sm:$0xff]
    %v865 = vld [vmem:[%s8 + $0x268] sm:$0xff]
    %v866 = vld [vmem:[%s8 + $0x270] sm:$0xff]
    %v867 = vld [vmem:[%s8 + $0x278] sm:$0xff]
    %v868 = vld [vmem:[%s8 + $0x280] sm:$0xff]
    %v869 = vld [vmem:[%s8 + $0x288] sm:$0xff]
    %v870 = vld [vmem:[%s8 + $0x290] sm:$0xff]
    %v871 = vld [vmem:[%s8 + $0x298] sm:$0xff]
    %v872 = vld [vmem:[%s8 + $0x2a0] sm:$0xff]
    %v873 = vld [vmem:[%s8 + $0x2a8] sm:$0xff]
    %v874 = vld [vmem:[%s8 + $0x2b0] sm:$0xff]
    %v875 = vld [vmem:[%s8 + $0x2b8] sm:$0xff]
    %v876 = vld [vmem:[%s8 + $0x2c0] sm:$0xff]
    %v877 = vld [vmem:[%s8 + $0x2c8] sm:$0xff]
    %v878 = vld [vmem:[%s8 + $0x2d0] sm:$0xff]
    %v879 = vld [vmem:[%s8 + $0x2d8] sm:$0xff]
    %v880 = vld [vmem:[%s8 + $0x2e0] sm:$0xff]
    %v881 = vld [vmem:[%s8 + $0x2e8] sm:$0xff]
    %v882 = vld [vmem:[%s8 + $0x2f0] sm:$0xff]
    %v883 = vld [vmem:[%s8 + $0x2f8] sm:$0xff]
    %v884 = vld [vmem:[%s8 + $0x300] sm:$0xff]
    %v885 = vld [vmem:[%s8 + $0x308] sm:$0xff]
    %v886 = vld [vmem:[%s8 + $0x310] sm:$0xff]
    %v887 = vld [vmem:[%s8 + $0x318] sm:$0xff]
    %v888 = vld [vmem:[%s8 + $0x320] sm:$0xff]
    %v889 = vld [vmem:[%s8 + $0x328] sm:$0xff]
    %v890 = vld [vmem:[%s8 + $0x330] sm:$0xff]
    %v891 = vld [vmem:[%s8 + $0x338] sm:$0xff]
    %v892 = vld [vmem:[%s8 + $0x340] sm:$0xff]
    %v893 = vld [vmem:[%s8 + $0x348] sm:$0xff]
    %v894 = vld [vmem:[%s8 + $0x350] sm:$0xff]
    %v895 = vld [vmem:[%s8 + $0x358] sm:$0xff]
    %v896 = vld [vmem:[%s8 + $0x360] sm:$0xff]
    %v897 = vld [vmem:[%s8 + $0x368] sm:$0xff]
    %v898 = vld [vmem:[%s8 + $0x370] sm:$0xff]
    %v899 = vld [vmem:[%s8 + $0x378] sm:$0xff]
    %v900 = vld [vmem:[%s8 + $0x380] sm:$0xff]
    %v901 = vld [vmem:[%s8 + $0x388] sm:$0xff]
    %v902 = vld [vmem:[%s8 + $0x390] sm:$0xff]
    %v903 = vld [vmem:[%s8 + $0x398] sm:$0xff]
    %v904 = vld [vmem:[%s8 + $0x3a0] sm:$0xff]
    %v905 = vld [vmem:[%s8 + $0x3a8] sm:$0xff]
    %v906 = vld [vmem:[%s8 + $0x3b0] sm:$0xff]
    %v907 = vld [vmem:[%s8 + $0x3b8] sm:$0xff]
    %v908 = vld [vmem:[%s8 + $0x3c0] sm:$0xff]
    %v909 = vld [vmem:[%s8 + $0x3c8] sm:$0xff]
    %v910 = vld [vmem:[%s8 + $0x3d0] sm:$0xff]
    %v911 = vld [vmem:[%s8 + $0x3d8] sm:$0xff]
    %v912 = vld [vmem:[%s8 + $0x3e0] sm:$0xff]
    %v913 = vld [vmem:[%s8 + $0x3e8] sm:$0xff]
    %v914 = vld [vmem:[%s8 + $0x3f0] sm:$0xff]
    %v915 = vld [vmem:[%s8 + $0x3f8] sm:$0xff]
    %v916 = vld [vmem:[%s8 + $0x400] sm:$0xff]
    %v917 = vld [vmem:[%s8 + $0x408] sm:$0xff]
    %v918 = vld [vmem:[%s8 + $0x410] sm:$0xff]
    %v919 = vld [vmem:[%s8 + $0x418] sm:$0xff]
    %v920 = vld [vmem:[%s8 + $0x420] sm:$0xff]
    %v921 = vld [vmem:[%s8 + $0x428] sm:$0xff]
    %v922 = vld [vmem:[%s8 + $0x430] sm:$0xff]
    %v923 = vld [vmem:[%s8 + $0x438] sm:$0xff]
    %v924 = vld [vmem:[%s8 + $0x440] sm:$0xff]
    %v925 = vld [vmem:[%s8 + $0x448] sm:$0xff]
    %v926 = vld [vmem:[%s8 + $0x450] sm:$0xff]
    %v927 = vld [vmem:[%s8 + $0x458] sm:$0xff]
    %v928 = vld [vmem:[%s8 + $0x460] sm:$0xff]
    %v929 = vld [vmem:[%s8 + $0x468] sm:$0xff]
    %v930 = vld [vmem:[%s8 + $0x470] sm:$0xff]
    %v931 = vld [vmem:[%s8 + $0x478] sm:$0xff]
    %v932 = vld [vmem:[%s8 + $0x480] sm:$0xff]
    %v933 = vld [vmem:[%s8 + $0x488] sm:$0xff]
    %v934 = vld [vmem:[%s8 + $0x490] sm:$0xff]
    %v935 = vld [vmem:[%s8 + $0x498] sm:$0xff]
    %v936 = vld [vmem:[%s8 + $0x4a0] sm:$0xff]
    %v937 = vld [vmem:[%s8 + $0x4a8] sm:$0xff]
    %v938 = vld [vmem:[%s8 + $0x4b0] sm:$0xff]
    %v939 = vld [vmem:[%s8 + $0x4b8] sm:$0xff]
    %v940 = vld [vmem:[%s8 + $0x4c0] sm:$0xff]
    %v941 = vld [vmem:[%s8 + $0x4c8] sm:$0xff]
    %v942 = vld [vmem:[%s8 + $0x4d0] sm:$0xff]
    %v943 = vld [vmem:[%s8 + $0x4d8] sm:$0xff]
    %v944 = vld [vmem:[%s8 + $0x4e0] sm:$0xff]
    %v945 = vld [vmem:[%s8 + $0x4e8] sm:$0xff]
    %v946 = vld [vmem:[%s8 + $0x4f0] sm:$0xff]
    %v947 = vld [vmem:[%s8 + $0x4f8] sm:$0xff]
    %v948 = vld [vmem:[%s8 + $0x500] sm:$0xff]
    %v949 = vld [vmem:[%s8 + $0x508] sm:$0xff]
    %v950 = vld [vmem:[%s8 + $0x510] sm:$0xff]
    %v951 = vld [vmem:[%s8 + $0x518] sm:$0xff]
    %v952 = vld [vmem:[%s8 + $0x520] sm:$0xff]
    %v953 = vld [vmem:[%s8 + $0x528] sm:$0xff]
    %v954 = vld [vmem:[%s8 + $0x530] sm:$0xff]
    %v955 = vld [vmem:[%s8 + $0x538] sm:$0xff]
    %v956 = vld [vmem:[%s8 + $0x540] sm:$0xff]
    %v957 = vld [vmem:[%s8 + $0x548] sm:$0xff]
    %v958 = vld [vmem:[%s8 + $0x550] sm:$0xff]
    %v959 = vld [vmem:[%s8 + $0x558] sm:$0xff]
    %v960 = vld [vmem:[%s8 + $0x560] sm:$0xff]
    %v961 = vld [vmem:[%s8 + $0x568] sm:$0xff]
    %v962 = vld [vmem:[%s8 + $0x570] sm:$0xff]
    %v963 = vld [vmem:[%s8 + $0x578] sm:$0xff]
    %v964 = vld [vmem:[%s8 + $0x580] sm:$0xff]
    %v965 = vld [vmem:[%s8 + $0x588] sm:$0xff]
    %v966 = vld [vmem:[%s8 + $0x590] sm:$0xff]
    %v967 = vld [vmem:[%s8 + $0x598] sm:$0xff]
    %v968 = vld [vmem:[%s8 + $0x5a0] sm:$0xff]
    %v969 = vld [vmem:[%s8 + $0x5a8] sm:$0xff]
    %v970 = vld [vmem:[%s8 + $0x5b0] sm:$0xff]
    %v971 = vld [vmem:[%s8 + $0x5b8] sm:$0xff]
    %v972 = vld [vmem:[%s8 + $0x5c0] sm:$0xff]
    %v973 = vld [vmem:[%s8 + $0x5c8] sm:$0xff]
    %v974 = vld [vmem:[%s8 + $0x5d0] sm:$0xff]
    %v975 = vld [vmem:[%s8 + $0x5d8] sm:$0xff]
    %v976 = vld [vmem:[%s8 + $0x5e0] sm:$0xff]
    %v977 = vld [vmem:[%s8 + $0x5e8] sm:$0xff]
    %v978 = vld [vmem:[%s8 + $0x5f0] sm:$0xff]
    %v979 = vld [vmem:[%s8 + $0x5f8] sm:$0xff]
    %v980 = vld [vmem:[%s8 + $0x600] sm:$0xff]
    %v981 = vld [vmem:[%s8 + $0x608] sm:$0xff]
    %v982 = vld [vmem:[%s8 + $0x610] sm:$0xff]
    %v983 = vld [vmem:[%s8 + $0x618] sm:$0xff]
    %v984 = vld [vmem:[%s8 + $0x620] sm:$0xff]
    %v985 = vld [vmem:[%s8 + $0x628] sm:$0xff]
    %v986 = vld [vmem:[%s8 + $0x630] sm:$0xff]
    %v987 = vld [vmem:[%s8 + $0x638] sm:$0xff]
    %v988 = vld [vmem:[%s8 + $0x640] sm:$0xff]
    %v989 = vld [vmem:[%s8 + $0x648] sm:$0xff]
    %v990 = vld [vmem:[%s8 + $0x650] sm:$0xff]
    %v991 = vld [vmem:[%s8 + $0x658] sm:$0xff]
    %v992 = vld [vmem:[%s8 + $0x660] sm:$0xff]
    %v993 = vld [vmem:[%s8 + $0x668] sm:$0xff]
    %v994 = vld [vmem:[%s8 + $0x670] sm:$0xff]
    %v995 = vld [vmem:[%s8 + $0x678] sm:$0xff]
    %v996 = vld [vmem:[%s8 + $0x680] sm:$0xff]
    %v997 = vld [vmem:[%s8 + $0x688] sm:$0xff]
    %v998 = vld [vmem:[%s8 + $0x690] sm:$0xff]
    %v999 = vld [vmem:[%s8 + $0x698] sm:$0xff]
    %v1000 = vld [vmem:[%s8 + $0x6a0] sm:$0xff]
    %v1001 = vld [vmem:[%s8 + $0x6a8] sm:$0xff]
    %v1002 = vld [vmem:[%s8 + $0x6b0] sm:$0xff]
    %v1003 = vld [vmem:[%s8 + $0x6b8] sm:$0xff]
    %v1004 = vld [vmem:[%s8 + $0x6c0] sm:$0xff]
    %v1005 = vld [vmem:[%s8 + $0x6c8] sm:$0xff]
    %v1006 = vld [vmem:[%s8 + $0x6d0] sm:$0xff]
    %v1007 = vld [vmem:[%s8 + $0x6d8] sm:$0xff]
    %v1008 = vld [vmem:[%s8 + $0x6e0] sm:$0xff]
    %v1009 = vld [vmem:[%s8 + $0x6e8] sm:$0xff]
    %v1010 = vld [vmem:[%s8 + $0x6f0] sm:$0xff]
    %v1011 = vld [vmem:[%s8 + $0x6f8] sm:$0xff]
    %v1012 = vld [vmem:[%s8 + $0x700] sm:$0xff]
    %v1013 = vld [vmem:[%s8 + $0x708] sm:$0xff]
    %v1014 = vld [vmem:[%s8 + $0x710] sm:$0xff]
    %v1015 = vld [vmem:[%s8 + $0x718] sm:$0xff]
    %v1016 = vld [vmem:[%s8 + $0x720] sm:$0xff]
    %v1017 = vld [vmem:[%s8 + $0x728] sm:$0xff]
    %v1018 = vld [vmem:[%s8 + $0x730] sm:$0xff]
    %v1019 = vld [vmem:[%s8 + $0x738] sm:$0xff]
    %v1020 = vld [vmem:[%s8 + $0x740] sm:$0xff]
    %v1021 = vld [vmem:[%s8 + $0x748] sm:$0xff]
    %v1022 = vld [vmem:[%s8 + $0x750] sm:$0xff]
    %v1023 = vld [vmem:[%s8 + $0x758] sm:$0xff]
    %v1024 = vld [vmem:[%s8 + $0x760] sm:$0xff]
    %v1025 = vld [vmem:[%s8 + $0x768] sm:$0xff]
    %v1026 = vld [vmem:[%s8 + $0x770] sm:$0xff]
    %v1027 = vld [vmem:[%s8 + $0x778] sm:$0xff]
    %v1028 = vld [vmem:[%s8 + $0x780] sm:$0xff]
    %v1029 = vld [vmem:[%s8 + $0x788] sm:$0xff]
    %v1030 = vld [vmem:[%s8 + $0x790] sm:$0xff]
    %v1031 = vld [vmem:[%s8 + $0x798] sm:$0xff]
    %v1032 = vld [vmem:[%s8 + $0x7a0] sm:$0xff]
    %v1033 = vld [vmem:[%s8 + $0x7a8] sm:$0xff]
    %v1034 = vld [vmem:[%s8 + $0x7b0] sm:$0xff]
    %v1035 = vld [vmem:[%s8 + $0x7b8] sm:$0xff]
    %v1036 = vld [vmem:[%s8 + $0x7c0] sm:$0xff]
    %v1037 = vld [vmem:[%s8 + $0x7c8] sm:$0xff]
    %v1038 = vld [vmem:[%s8 + $0x7d0] sm:$0xff]
    %v1039 = vld [vmem:[%s8 + $0x7d8] sm:$0xff]
    %v1040 = vld [vmem:[%s8 + $0x7e0] sm:$0xff]
    %v1041 = vld [vmem:[%s8 + $0x7e8] sm:$0xff]
    %v1042 = vld [vmem:[%s8 + $0x7f0] sm:$0xff]
    %v1043 = vld [vmem:[%s8 + $0x7f8] sm:$0xff]
    %v1044 = vld [vmem:[%s9] sm:$0xff]
    %v1046 = vperm.slane %v1044, 0
    %v1047 = vperm.slane %v1044, 1
    %v1048 = vperm.slane %v1044, 2
    %v1049 = vperm.slane %v1044, 3
    %v1050 = vperm.slane %v1044, 4
    %v1051 = vperm.slane %v1044, 5
    %v1052 = vperm.slane %v1044, 6
    %v1053 = vperm.slane %v1044, 7
    %1062 = vmatpush.msra.mxu0 %v908
    %1063 = vmatpush.msra.mxu0 %v900
    %1064 = vmatpush.msra.mxu0 %v892
    %1065 = vmatpush.msra.mxu0 %v884
    %1066 = vmatpush.msra.mxu0 %v876
    %1067 = vmatpush.msra.mxu0 %v868
    %1068 = vmatpush.msra.mxu0 %v860
    %1069 = vmatpush.msra.mxu0 %v852
    %1070 = vmatpush.msra.mxu0 %v844
    %1071 = vmatpush.msra.mxu0 %v836
    %1072 = vmatpush.msra.mxu0 %v828
    %1073 = vmatpush.msra.mxu0 %v820
    %1074 = vmatpush.msra.mxu0 %v812
    %1075 = vmatpush.msra.mxu0 %v804
    %1076 = vmatpush.msra.mxu0 %v796
    %1077 = vmatpush.msra.mxu0 %v788
    %1078 = vmatmul.f32.gmra.mxu0 %v786
    %v1079 = vpop.f32.mrf.mxu0
    %v1080 = vadd.f32 %v1046, %v1079
    %1081 = vdwg.mxu0
    %1082 = vmatpush.msra.mxu0 %v1036
    %1083 = vmatpush.msra.mxu0 %v1028
    %1084 = vmatpush.msra.mxu0 %v1020
    %1085 = vmatpush.msra.mxu0 %v1012
    %1086 = vmatpush.msra.mxu0 %v1004
    %1087 = vmatpush.msra.mxu0 %v996
    %1088 = vmatpush.msra.mxu0 %v988
    %1089 = vmatpush.msra.mxu0 %v980
    %1090 = vmatpush.msra.mxu0 %v972
    %1091 = vmatpush.msra.mxu0 %v964
    %1092 = vmatpush.msra.mxu0 %v956
    %1093 = vmatpush.msra.mxu0 %v948
    %1094 = vmatpush.msra.mxu0 %v940
    %1095 = vmatpush.msra.mxu0 %v932
    %1096 = vmatpush.msra.mxu0 %v924
    %1097 = vmatpush.msra.mxu0 %v916
    %1098 = vmatmul.f32.gmra.mxu0 %v787
    %v1099 = vpop.f32.mrf.mxu0
    %v1100 = vadd.f32 %v1080, %v1099
    %1101 = vdwg.mxu0
    %1102 = vmatpush.msra.mxu0 %v909
    %1103 = vmatpush.msra.mxu0 %v901
    %1104 = vmatpush.msra.mxu0 %v893
    %1105 = vmatpush.msra.mxu0 %v885
    %1106 = vmatpush.msra.mxu0 %v877
    %1107 = vmatpush.msra.mxu0 %v869
    %1108 = vmatpush.msra.mxu0 %v861
    %1109 = vmatpush.msra.mxu0 %v853
    %1110 = vmatpush.msra.mxu0 %v845
    %1111 = vmatpush.msra.mxu0 %v837
    %1112 = vmatpush.msra.mxu0 %v829
    %1113 = vmatpush.msra.mxu0 %v821
    %1114 = vmatpush.msra.mxu0 %v813
    %1115 = vmatpush.msra.mxu0 %v805
    %1116 = vmatpush.msra.mxu0 %v797
    %1117 = vmatpush.msra.mxu0 %v789
    %1118 = vmatmul.f32.gmra.mxu0 %v786
    %v1119 = vpop.f32.mrf.mxu0
    %v1120 = vadd.f32 %v1047, %v1119
    %1121 = vdwg.mxu0
    %1122 = vmatpush.msra.mxu0 %v1037
    %1123 = vmatpush.msra.mxu0 %v1029
    %1124 = vmatpush.msra.mxu0 %v1021
    %1125 = vmatpush.msra.mxu0 %v1013
    %1126 = vmatpush.msra.mxu0 %v1005
    %1127 = vmatpush.msra.mxu0 %v997
    %1128 = vmatpush.msra.mxu0 %v989
    %1129 = vmatpush.msra.mxu0 %v981
    %1130 = vmatpush.msra.mxu0 %v973
    %1131 = vmatpush.msra.mxu0 %v965
    %1132 = vmatpush.msra.mxu0 %v957
    %1133 = vmatpush.msra.mxu0 %v949
    %1134 = vmatpush.msra.mxu0 %v941
    %1135 = vmatpush.msra.mxu0 %v933
    %1136 = vmatpush.msra.mxu0 %v925
    %1137 = vmatpush.msra.mxu0 %v917
    %1138 = vmatmul.f32.gmra.mxu0 %v787
    %v1139 = vpop.f32.mrf.mxu0
    %v1140 = vadd.f32 %v1120, %v1139
    %1141 = vdwg.mxu0
    %1142 = vmatpush.msra.mxu0 %v910
    %1143 = vmatpush.msra.mxu0 %v902
    %1144 = vmatpush.msra.mxu0 %v894
    %1145 = vmatpush.msra.mxu0 %v886
    %1146 = vmatpush.msra.mxu0 %v878
    %1147 = vmatpush.msra.mxu0 %v870
    %1148 = vmatpush.msra.mxu0 %v862
    %1149 = vmatpush.msra.mxu0 %v854
    %1150 = vmatpush.msra.mxu0 %v846
    %1151 = vmatpush.msra.mxu0 %v838
    %1152 = vmatpush.msra.mxu0 %v830
    %1153 = vmatpush.msra.mxu0 %v822
    %1154 = vmatpush.msra.mxu0 %v814
    %1155 = vmatpush.msra.mxu0 %v806
    %1156 = vmatpush.msra.mxu0 %v798
    %1157 = vmatpush.msra.mxu0 %v790
    %1158 = vmatmul.f32.gmra.mxu0 %v786
    %v1159 = vpop.f32.mrf.mxu0
    %v1160 = vadd.f32 %v1048, %v1159
    %1161 = vdwg.mxu0
    %1162 = vmatpush.msra.mxu0 %v1038
    %1163 = vmatpush.msra.mxu0 %v1030
    %1164 = vmatpush.msra.mxu0 %v1022
    %1165 = vmatpush.msra.mxu0 %v1014
    %1166 = vmatpush.msra.mxu0 %v1006
    %1167 = vmatpush.msra.mxu0 %v998
    %1168 = vmatpush.msra.mxu0 %v990
    %1169 = vmatpush.msra.mxu0 %v982
    %1170 = vmatpush.msra.mxu0 %v974
    %1171 = vmatpush.msra.mxu0 %v966
    %1172 = vmatpush.msra.mxu0 %v958
    %1173 = vmatpush.msra.mxu0 %v950
    %1174 = vmatpush.msra.mxu0 %v942
    %1175 = vmatpush.msra.mxu0 %v934
    %1176 = vmatpush.msra.mxu0 %v926
    %1177 = vmatpush.msra.mxu0 %v918
    %1178 = vmatmul.f32.gmra.mxu0 %v787
    %v1179 = vpop.f32.mrf.mxu0
    %v1180 = vadd.f32 %v1160, %v1179
    %1181 = vdwg.mxu0
    %1182 = vmatpush.msra.mxu0 %v911
    %1183 = vmatpush.msra.mxu0 %v903
    %1184 = vmatpush.msra.mxu0 %v895
    %1185 = vmatpush.msra.mxu0 %v887
    %1186 = vmatpush.msra.mxu0 %v879
    %1187 = vmatpush.msra.mxu0 %v871
    %1188 = vmatpush.msra.mxu0 %v863
    %1189 = vmatpush.msra.mxu0 %v855
    %1190 = vmatpush.msra.mxu0 %v847
    %1191 = vmatpush.msra.mxu0 %v839
    %1192 = vmatpush.msra.mxu0 %v831
    %1193 = vmatpush.msra.mxu0 %v823
    %1194 = vmatpush.msra.mxu0 %v815
    %1195 = vmatpush.msra.mxu0 %v807
    %1196 = vmatpush.msra.mxu0 %v799
    %1197 = vmatpush.msra.mxu0 %v791
    %1198 = vmatmul.f32.gmra.mxu0 %v786
    %v1199 = vpop.f32.mrf.mxu0
    %v1200 = vadd.f32 %v1049, %v1199
    %1201 = vdwg.mxu0
    %1202 = vmatpush.msra.mxu0 %v1039
    %1203 = vmatpush.msra.mxu0 %v1031
    %1204 = vmatpush.msra.mxu0 %v1023
    %1205 = vmatpush.msra.mxu0 %v1015
    %1206 = vmatpush.msra.mxu0 %v1007
    %1207 = vmatpush.msra.mxu0 %v999
    %1208 = vmatpush.msra.mxu0 %v991
    %1209 = vmatpush.msra.mxu0 %v983
    %1210 = vmatpush.msra.mxu0 %v975
    %1211 = vmatpush.msra.mxu0 %v967
    %1212 = vmatpush.msra.mxu0 %v959
    %1213 = vmatpush.msra.mxu0 %v951
    %1214 = vmatpush.msra.mxu0 %v943
    %1215 = vmatpush.msra.mxu0 %v935
    %1216 = vmatpush.msra.mxu0 %v927
    %1217 = vmatpush.msra.mxu0 %v919
    %1218 = vmatmul.f32.gmra.mxu0 %v787
    %v1219 = vpop.f32.mrf.mxu0
    %v1220 = vadd.f32 %v1200, %v1219
    %1221 = vdwg.mxu0
    %1222 = vmatpush.msra.mxu0 %v912
    %1223 = vmatpush.msra.mxu0 %v904
    %1224 = vmatpush.msra.mxu0 %v896
    %1225 = vmatpush.msra.mxu0 %v888
    %1226 = vmatpush.msra.mxu0 %v880
    %1227 = vmatpush.msra.mxu0 %v872
    %1228 = vmatpush.msra.mxu0 %v864
    %1229 = vmatpush.msra.mxu0 %v856
    %1230 = vmatpush.msra.mxu0 %v848
    %1231 = vmatpush.msra.mxu0 %v840
    %1232 = vmatpush.msra.mxu0 %v832
    %1233 = vmatpush.msra.mxu0 %v824
    %1234 = vmatpush.msra.mxu0 %v816
    %1235 = vmatpush.msra.mxu0 %v808
    %1236 = vmatpush.msra.mxu0 %v800
    %1237 = vmatpush.msra.mxu0 %v792
    %1238 = vmatmul.f32.gmra.mxu0 %v786
    %v1239 = vpop.f32.mrf.mxu0
    %v1240 = vadd.f32 %v1050, %v1239
    %1241 = vdwg.mxu0
    %1242 = vmatpush.msra.mxu0 %v1040
    %1243 = vmatpush.msra.mxu0 %v1032
    %1244 = vmatpush.msra.mxu0 %v1024
    %1245 = vmatpush.msra.mxu0 %v1016
    %1246 = vmatpush.msra.mxu0 %v1008
    %1247 = vmatpush.msra.mxu0 %v1000
    %1248 = vmatpush.msra.mxu0 %v992
    %1249 = vmatpush.msra.mxu0 %v984
    %1250 = vmatpush.msra.mxu0 %v976
    %1251 = vmatpush.msra.mxu0 %v968
    %1252 = vmatpush.msra.mxu0 %v960
    %1253 = vmatpush.msra.mxu0 %v952
    %1254 = vmatpush.msra.mxu0 %v944
    %1255 = vmatpush.msra.mxu0 %v936
    %1256 = vmatpush.msra.mxu0 %v928
    %1257 = vmatpush.msra.mxu0 %v920
    %1258 = vmatmul.f32.gmra.mxu0 %v787
    %v1259 = vpop.f32.mrf.mxu0
    %v1260 = vadd.f32 %v1240, %v1259
    %1261 = vdwg.mxu0
    %1262 = vmatpush.msra.mxu0 %v913
    %1263 = vmatpush.msra.mxu0 %v905
    %1264 = vmatpush.msra.mxu0 %v897
    %1265 = vmatpush.msra.mxu0 %v889
    %1266 = vmatpush.msra.mxu0 %v881
    %1267 = vmatpush.msra.mxu0 %v873
    %1268 = vmatpush.msra.mxu0 %v865
    %1269 = vmatpush.msra.mxu0 %v857
    %1270 = vmatpush.msra.mxu0 %v849
    %1271 = vmatpush.msra.mxu0 %v841
    %1272 = vmatpush.msra.mxu0 %v833
    %1273 = vmatpush.msra.mxu0 %v825
    %1274 = vmatpush.msra.mxu0 %v817
    %1275 = vmatpush.msra.mxu0 %v809
    %1276 = vmatpush.msra.mxu0 %v801
    %1277 = vmatpush.msra.mxu0 %v793
    %1278 = vmatmul.f32.gmra.mxu0 %v786
    %v1279 = vpop.f32.mrf.mxu0
    %v1280 = vadd.f32 %v1051, %v1279
    %1281 = vdwg.mxu0
    %1282 = vmatpush.msra.mxu0 %v1041
    %1283 = vmatpush.msra.mxu0 %v1033
    %1284 = vmatpush.msra.mxu0 %v1025
    %1285 = vmatpush.msra.mxu0 %v1017
    %1286 = vmatpush.msra.mxu0 %v1009
    %1287 = vmatpush.msra.mxu0 %v1001
    %1288 = vmatpush.msra.mxu0 %v993
    %1289 = vmatpush.msra.mxu0 %v985
    %1290 = vmatpush.msra.mxu0 %v977
    %1291 = vmatpush.msra.mxu0 %v969
    %1292 = vmatpush.msra.mxu0 %v961
    %1293 = vmatpush.msra.mxu0 %v953
    %1294 = vmatpush.msra.mxu0 %v945
    %1295 = vmatpush.msra.mxu0 %v937
    %1296 = vmatpush.msra.mxu0 %v929
    %1297 = vmatpush.msra.mxu0 %v921
    %1298 = vmatmul.f32.gmra.mxu0 %v787
    %v1299 = vpop.f32.mrf.mxu0
    %v1300 = vadd.f32 %v1280, %v1299
    %1301 = vdwg.mxu0
    %1302 = vmatpush.msra.mxu0 %v914
    %1303 = vmatpush.msra.mxu0 %v906
    %1304 = vmatpush.msra.mxu0 %v898
    %1305 = vmatpush.msra.mxu0 %v890
    %1306 = vmatpush.msra.mxu0 %v882
    %1307 = vmatpush.msra.mxu0 %v874
    %1308 = vmatpush.msra.mxu0 %v866
    %1309 = vmatpush.msra.mxu0 %v858
    %1310 = vmatpush.msra.mxu0 %v850
    %1311 = vmatpush.msra.mxu0 %v842
    %1312 = vmatpush.msra.mxu0 %v834
    %1313 = vmatpush.msra.mxu0 %v826
    %1314 = vmatpush.msra.mxu0 %v818
    %1315 = vmatpush.msra.mxu0 %v810
    %1316 = vmatpush.msra.mxu0 %v802
    %1317 = vmatpush.msra.mxu0 %v794
    %1318 = vmatmul.f32.gmra.mxu0 %v786
    %v1319 = vpop.f32.mrf.mxu0
    %v1320 = vadd.f32 %v1052, %v1319
    %1321 = vdwg.mxu0
    %1322 = vmatpush.msra.mxu0 %v1042
    %1323 = vmatpush.msra.mxu0 %v1034
    %1324 = vmatpush.msra.mxu0 %v1026
    %1325 = vmatpush.msra.mxu0 %v1018
    %1326 = vmatpush.msra.mxu0 %v1010
    %1327 = vmatpush.msra.mxu0 %v1002
    %1328 = vmatpush.msra.mxu0 %v994
    %1329 = vmatpush.msra.mxu0 %v986
    %1330 = vmatpush.msra.mxu0 %v978
    %1331 = vmatpush.msra.mxu0 %v970
    %1332 = vmatpush.msra.mxu0 %v962
    %1333 = vmatpush.msra.mxu0 %v954
    %1334 = vmatpush.msra.mxu0 %v946
    %1335 = vmatpush.msra.mxu0 %v938
    %1336 = vmatpush.msra.mxu0 %v930
    %1337 = vmatpush.msra.mxu0 %v922
    %1338 = vmatmul.f32.gmra.mxu0 %v787
    %v1339 = vpop.f32.mrf.mxu0
    %v1340 = vadd.f32 %v1320, %v1339
    %1341 = vdwg.mxu0
    %1342 = vmatpush.msra.mxu0 %v915
    %1343 = vmatpush.msra.mxu0 %v907
    %1344 = vmatpush.msra.mxu0 %v899
    %1345 = vmatpush.msra.mxu0 %v891
    %1346 = vmatpush.msra.mxu0 %v883
    %1347 = vmatpush.msra.mxu0 %v875
    %1348 = vmatpush.msra.mxu0 %v867
    %1349 = vmatpush.msra.mxu0 %v859
    %1350 = vmatpush.msra.mxu0 %v851
    %1351 = vmatpush.msra.mxu0 %v843
    %1352 = vmatpush.msra.mxu0 %v835
    %1353 = vmatpush.msra.mxu0 %v827
    %1354 = vmatpush.msra.mxu0 %v819
    %1355 = vmatpush.msra.mxu0 %v811
    %1356 = vmatpush.msra.mxu0 %v803
    %1357 = vmatpush.msra.mxu0 %v795
    %1358 = vmatmul.f32.gmra.mxu0 %v786
    %v1359 = vpop.f32.mrf.mxu0
    %v1360 = vadd.f32 %v1053, %v1359
    %1361 = vdwg.mxu0
    %1362 = vmatpush.msra.mxu0 %v1043
    %1363 = vmatpush.msra.mxu0 %v1035
    %1364 = vmatpush.msra.mxu0 %v1027
    %1365 = vmatpush.msra.mxu0 %v1019
    %1366 = vmatpush.msra.mxu0 %v1011
    %1367 = vmatpush.msra.mxu0 %v1003
    %1368 = vmatpush.msra.mxu0 %v995
    %1369 = vmatpush.msra.mxu0 %v987
    %1370 = vmatpush.msra.mxu0 %v979
    %1371 = vmatpush.msra.mxu0 %v971
    %1372 = vmatpush.msra.mxu0 %v963
    %1373 = vmatpush.msra.mxu0 %v955
    %1374 = vmatpush.msra.mxu0 %v947
    %1375 = vmatpush.msra.mxu0 %v939
    %1376 = vmatpush.msra.mxu0 %v931
    %1377 = vmatpush.msra.mxu0 %v923
    %1378 = vmatmul.f32.gmra.mxu0 %v787
    %v1379 = vpop.f32.mrf.mxu0
    %v1380 = vadd.f32 %v1360, %v1379
    %1381 = vdwg.mxu0
    %v1382 = vmax.f32 %v1100, 0.0
    %v1383 = vmax.f32 %v1140, 0.0
    %v1384 = vmax.f32 %v1180, 0.0
    %v1385 = vmax.f32 %v1220, 0.0
    %v1386 = vmax.f32 %v1260, 0.0
    %v1387 = vmax.f32 %v1300, 0.0
    %v1388 = vmax.f32 %v1340, 0.0
    %v1389 = vmax.f32 %v1380, 0.0
    %v1398 = vrot.slane %v1383, 6
    %v1399 = vrot.slane %v1384, 4
    %v1400 = vrot.slane %v1385, 2
    %v1401 = vrot.slane %v1387, 6
    %v1402 = vrot.slane %v1388, 4
    %v1403 = vrot.slane %v1389, 2
    %vm1404 = vcmask 1041408
    %v1405 = vsel %vm1404, %v1382, %v1398
    %vm1406 = vcmask 1045508
    %v1407 = vsel %vm1406, %v1399, %v1400
    %vm1408 = vcmask 1043456
    %v1409 = vsel %vm1408, %v1405, %v1407
    %v1410 = vsel %vm1404, %v1386, %v1401
    %v1411 = vsel %vm1406, %v1402, %v1403
    %v1412 = vsel %vm1408, %v1410, %v1411
    %1415 = vst [vmem:[%s10] sm:$0xff] %v1409
    %1416 = vst [vmem:[%s10 + $0x8] sm:$0xff] %v1412
    %vm1417 = vcmask 58368
    %1418 = vst.msk [vmem:[#allocation2] sm:$0x3] %vm1417, %v733
    %1419 = vst.msk [vmem:[#allocation4] sm:$0x3] %vm1417, %v722
    %1421 = vrot.lane.b32.xlu0 %v722, 120
    %v1422 = vpop.permute.xlu0 %1421
    %1424 = vst.msk [vmem:[#allocation6] sm:$0x3] %vm1417, %v1422
    // Predicated region
    $region42: #{betavae_forward.13} parent=1 // pred_check
      _
    $region43: #{betavae_forward.13} parent=1 // pred_check_branch
      %1426 = sbr.rel (0) target = $region45
    $region44: #{betavae_forward.13} parent=1 // pred_region
      _
    $region45: #{betavae_forward.13} parent=1 // pred_fallthru
      _
    // Predicated region
    $region46: #{betavae_forward.13} parent=1 // pred_check
      _
    $region47: #{betavae_forward.13} parent=1 // pred_check_branch
      %1428 = sbr.rel (0) target = $region49
    $region48: #{betavae_forward.13} parent=1 // pred_region
      %1430 = vsyncadd [#allocation3], 0
      %s1432 = sshll.u32 [#allocation2], 4
      %s1433 = int_to_ptr.vmem [resolvable:$true] %s1432
      %s1434 = sshll.u32 %s11, 4
      %s1435 = int_to_ptr.hbm [resolvable:$true] %s1434
      %1437 = dma.vmem_to_hbm [thread:$0]  %s1433, 32, %s1435, [#allocation3]
    $region49: #{betavae_forward.13} parent=1 // pred_fallthru
      _
    // Predicated region
    $region50: #{betavae_forward.13} parent=1 // pred_check
      _
    $region51: #{betavae_forward.13} parent=1 // pred_check_branch
      %1439 = sbr.rel (0) target = $region53
    $region52: #{betavae_forward.13} parent=1 // pred_region
      %1441 = vsyncadd [#allocation5], 0
      %s1443 = sshll.u32 [#allocation4], 4
      %s1444 = int_to_ptr.vmem [resolvable:$true] %s1443
      %s1445 = sshll.u32 %s12, 4
      %s1446 = int_to_ptr.hbm [resolvable:$true] %s1445
      %1448 = dma.vmem_to_hbm [thread:$0]  %s1444, 32, %s1446, [#allocation5]
    $region53: #{betavae_forward.13} parent=1 // pred_fallthru
      _
    // Predicated region
    $region54: #{betavae_forward.13} parent=1 // pred_check
      _
    $region55: #{betavae_forward.13} parent=1 // pred_check_branch
      %1450 = sbr.rel (0) target = $region57
    $region56: #{betavae_forward.13} parent=1 // pred_region
      %1452 = vsyncadd [#allocation5], 0
      %s1454 = sshll.u32 [#allocation6], 4
      %s1455 = int_to_ptr.vmem [resolvable:$true] %s1454
      %s1456 = sshll.u32 %s13, 4
      %s1457 = int_to_ptr.hbm [resolvable:$true] %s1456
      %1459 = dma.vmem_to_hbm [thread:$0]  %s1455, 32, %s1457, [#allocation5]
    $region57: #{betavae_forward.13} parent=1 // pred_fallthru
      _
    // Predicated region
    $region58: #{betavae_forward.13} parent=1 // pred_check
      _
    $region59: #{betavae_forward.13} parent=1 // pred_check_branch
      %1461 = sbr.rel (0) target = $region61
    $region60: #{betavae_forward.13} parent=1 // pred_region
      _
    $region61: #{betavae_forward.13} parent=1 // pred_fallthru
      _
    // Predicated region
    $region62: #{betavae_forward.13} parent=1 // pred_check
      _
    $region63: #{betavae_forward.13} parent=1 // pred_check_branch
      %1463 = sbr.rel (0) target = $region65
    $region64: #{betavae_forward.13} parent=1 // pred_region
      %1465 = dma.done [#allocation3], 32
    $region65: #{betavae_forward.13} parent=1 // pred_fallthru
      _
    // Predicated region
    $region66: #{betavae_forward.13} parent=1 // pred_check
      _
    $region67: #{betavae_forward.13} parent=1 // pred_check_branch
      %1467 = sbr.rel (0) target = $region69
    $region68: #{betavae_forward.13} parent=1 // pred_region
      %1469 = dma.done [#allocation5], 32
    $region69: #{betavae_forward.13} parent=1 // pred_fallthru
      _
    // Predicated region
    $region70: #{betavae_forward.13} parent=1 // pred_check
      _
    $region71: #{betavae_forward.13} parent=1 // pred_check_branch
      %1471 = sbr.rel (0) target = $region73
    $region72: #{betavae_forward.13} parent=1 // pred_region
      %1473 = dma.done [#allocation5], 32
    $region73: #{betavae_forward.13} parent=1 // pred_fallthru
      _
    %1474 = vsyncpa [#allocation3], 1
    %1475 = vsyncpa [#allocation5], 1

// kernel: tile.23
$region0: #{tile.23}
  #allocation0 [shape = 's32[1]{0}', space=sflag, size = 0x4, scoped, tag = 'scoped memory for tile.23']
  %s0 = inlined_call_operand.vmem [shape: f32[64], index: 0, kind: input, shape index: {}]
  %s1 = inlined_call_operand.vmem [shape: f32[4,64], index: 1, kind: output, shape index: {}]
  // Predicated region
  $region2: #{tile.23} parent=0 // pred_check
    _
  $region3: #{tile.23} parent=0 // pred_check_branch
    %3 = sbr.rel (0) target = $region5
  $region4: #{tile.23} parent=0 // pred_region
    _
  $region5: #{tile.23} parent=0 // pred_fallthru
    _
  %v4 = vld [vmem:[%s0] ss:$0 sm:$0xff]
  %5 = vst [vmem:[%s1] sm:$0xf] %v4

// kernel: tile.24
$region0: #{tile.24}
  %s0 = inlined_call_operand.vmem [shape: f32[4,64], index: 0, kind: input, shape index: {}]
  %s1 = inlined_call_operand.vmem [shape: f32[1,256], index: 1, kind: output, shape index: {}]
  $region1: #{tile.24} parent=0
    #allocation0 [shape = 'u8[8192]{0}', space=vmem, size = 0x2000, scoped, tag = 'scoped mem for output reshape']
    #allocation1 [shape = 'u8[4096]{0}', space=vmem, size = 0x1000, scoped, tag = 'scoped mem for input reshape']
    %s3 = ssub.s32 16, 1
    %v4 = vld [vmem:[%s0] sm:%s3]
    %5 = vst [vmem:[#allocation1] sm:%s3] %v4
    %s6 = smov 3
    %v7 = vld [vmem:[#allocation1] ss:$2 sm:%s6]
    %vm8 = vcmask 523264
    %9 = vst.msk [vmem:[#allocation0] ss:$8 sm:$0x3] %vm8, %v7
    %s10 = scalar_lea.vmem [#allocation1], 1
    %s11 = smov 3
    %v12 = vld [vmem:[%s10] ss:$2 sm:%s11]
    %13 = vrot.lane.b32.xlu0 %v12, 64
    %v14 = vpop.permute.xlu0 %13
    %vm15 = vcmask 1048064
    %16 = vst.msk [vmem:[#allocation0] ss:$8 sm:$0x3] %vm15, %v14
    %s18 = ssub.s32 2, 1
    %v19 = vld [vmem:[#allocation0] sm:%s18]
    %s21 = ssub.s32 2, 1
    %22 = vst [vmem:[%s1] sm:%s21] %v19
    %s23 = scalar_lea.vmem [#allocation0], 8
    %v24 = vld [vmem:[%s23] sm:%s18]
    %s26 = ssub.s32 2, 1
    %s27 = scalar_lea.vmem %s1, 1
    %28 = vst [vmem:[%s27] sm:%s26] %v24

// kernel: betavae_forward.14
$region0: #{betavae_forward.14}
  #allocation0 [shape = 'u32[]', space=smem, size = 0x4, offset = 0x4, fixed_abs, tag = 'smem constant byte address 0x4 - core index']
  #allocation1 [shape = 'u32[72,128]{1,0:T(1,128)}', space=vmem, size = 0x9000, scoped, tag = 'internal scratch']
  %s0 = inlined_call_operand.vmem [shape: f32[50,256], index: 0, kind: input, shape index: {}]
  %s1 = inlined_call_operand.vmem [shape: f32[256,256], index: 1, kind: input, shape index: {}]
  %s2 = inlined_call_operand.vmem [shape: f32[1,256], index: 2, kind: input, shape index: {}]
  %s3 = inlined_call_operand.vmem [shape: f32[50,256], index: 3, kind: output, shape index: {}]
  %s4 = sld [smem:[#allocation0]]
  $region22: #{betavae_forward.14} parent=0
    _
  %s6 = ssub.s32 1, %s4
  %s7 = scalar_select 0, %s6, %s4
  // Predicated region
  $region2: #{betavae_forward.14} parent=0 // pred_check
    _
  $region3: #{betavae_forward.14} parent=0 // pred_check_branch
    %9 = sbr.rel (0) target = $region5
  $region4: #{betavae_forward.14} parent=0 // pred_region
    _
  $region5: #{betavae_forward.14} parent=0 // pred_fallthru
    _
  // Predicated region
  $region6: #{betavae_forward.14} parent=0 // pred_check
    _
  $region7: #{betavae_forward.14} parent=0 // pred_check_branch
    %11 = sbr.rel (0) target = $region9
  $region8: #{betavae_forward.14} parent=0 // pred_region
    _
  $region9: #{betavae_forward.14} parent=0 // pred_fallthru
    _
  // Predicated region
  $region10: #{betavae_forward.14} parent=0 // pred_check
    _
  $region11: #{betavae_forward.14} parent=0 // pred_check_branch
    %13 = sbr.rel (0) target = $region13
  $region12: #{betavae_forward.14} parent=0 // pred_region
    _
  $region13: #{betavae_forward.14} parent=0 // pred_fallthru
    _
  %v14 = vld [vmem:[%s0] sm:$0xff]
  %v15 = vld [vmem:[%s0 + $0x8] sm:$0xff]
  %v16 = vld [vmem:[%s0 + $0x10] sm:$0xff]
  %v17 = vld [vmem:[%s0 + $0x18] sm:$0xff]
  %v18 = vld [vmem:[%s0 + $0x20] sm:$0xff]
  %v19 = vld [vmem:[%s0 + $0x28] sm:$0xff]
  %v20 = vld [vmem:[%s0 + $0x30] sm:$0xff]
  %v21 = vld [vmem:[%s0 + $0x38] sm:$0xff]
  %v22 = vld [vmem:[%s0 + $0x40] sm:$0xff]
  %v23 = vld [vmem:[%s0 + $0x48] sm:$0xff]
  %v24 = vld [vmem:[%s0 + $0x50] sm:$0xff]
  %v25 = vld [vmem:[%s0 + $0x58] sm:$0xff]
  %v26 = vld [vmem:[%s0 + $0x60] sm:$0x3]
  %v27 = vld [vmem:[%s0 + $0x68] sm:$0x3]
  %v28 = vld [vmem:[%s1] sm:$0xff]
  %v29 = vld [vmem:[%s1 + $0x8] sm:$0xff]
  %v30 = vld [vmem:[%s1 + $0x10] sm:$0xff]
  %v31 = vld [vmem:[%s1 + $0x18] sm:$0xff]
  %v32 = vld [vmem:[%s1 + $0x20] sm:$0xff]
  %v33 = vld [vmem:[%s1 + $0x28] sm:$0xff]
  %v34 = vld [vmem:[%s1 + $0x30] sm:$0xff]
  %v35 = vld [vmem:[%s1 + $0x38] sm:$0xff]
  %v36 = vld [vmem:[%s1 + $0x40] sm:$0xff]
  %v37 = vld [vmem:[%s1 + $0x48] sm:$0xff]
  %v38 = vld [vmem:[%s1 + $0x50] sm:$0xff]
  %v39 = vld [vmem:[%s1 + $0x58] sm:$0xff]
  %v40 = vld [vmem:[%s1 + $0x60] sm:$0xff]
  %v41 = vld [vmem:[%s1 + $0x68] sm:$0xff]
  %v42 = vld [vmem:[%s1 + $0x70] sm:$0xff]
  %v43 = vld [vmem:[%s1 + $0x78] sm:$0xff]
  %v44 = vld [vmem:[%s1 + $0x80] sm:$0xff]
  %v45 = vld [vmem:[%s1 + $0x88] sm:$0xff]
  %v46 = vld [vmem:[%s1 + $0x90] sm:$0xff]
  %v47 = vld [vmem:[%s1 + $0x98] sm:$0xff]
  %v48 = vld [vmem:[%s1 + $0xa0] sm:$0xff]
  %v49 = vld [vmem:[%s1 + $0xa8] sm:$0xff]
  %v50 = vld [vmem:[%s1 + $0xb0] sm:$0xff]
  %v51 = vld [vmem:[%s1 + $0xb8] sm:$0xff]
  %v52 = vld [vmem:[%s1 + $0xc0] sm:$0xff]
  %v53 = vld [vmem:[%s1 + $0xc8] sm:$0xff]
  %v54 = vld [vmem:[%s1 + $0xd0] sm:$0xff]
  %v55 = vld [vmem:[%s1 + $0xd8] sm:$0xff]
  %v56 = vld [vmem:[%s1 + $0xe0] sm:$0xff]
  %v57 = vld [vmem:[%s1 + $0xe8] sm:$0xff]
  %v58 = vld [vmem:[%s1 + $0xf0] sm:$0xff]
  %v59 = vld [vmem:[%s1 + $0xf8] sm:$0xff]
  %v60 = vld [vmem:[%s1 + $0x100] sm:$0xff]
  %v61 = vld [vmem:[%s1 + $0x108] sm:$0xff]
  %v62 = vld [vmem:[%s1 + $0x110] sm:$0xff]
  %v63 = vld [vmem:[%s1 + $0x118] sm:$0xff]
  %v64 = vld [vmem:[%s1 + $0x120] sm:$0xff]
  %v65 = vld [vmem:[%s1 + $0x128] sm:$0xff]
  %v66 = vld [vmem:[%s1 + $0x130] sm:$0xff]
  %v67 = vld [vmem:[%s1 + $0x138] sm:$0xff]
  %v68 = vld [vmem:[%s1 + $0x140] sm:$0xff]
  %v69 = vld [vmem:[%s1 + $0x148] sm:$0xff]
  %v70 = vld [vmem:[%s1 + $0x150] sm:$0xff]
  %v71 = vld [vmem:[%s1 + $0x158] sm:$0xff]
  %v72 = vld [vmem:[%s1 + $0x160] sm:$0xff]
  %v73 = vld [vmem:[%s1 + $0x168] sm:$0xff]
  %v74 = vld [vmem:[%s1 + $0x170] sm:$0xff]
  %v75 = vld [vmem:[%s1 + $0x178] sm:$0xff]
  %v76 = vld [vmem:[%s1 + $0x180] sm:$0xff]
  %v77 = vld [vmem:[%s1 + $0x188] sm:$0xff]
  %v78 = vld [vmem:[%s1 + $0x190] sm:$0xff]
  %v79 = vld [vmem:[%s1 + $0x198] sm:$0xff]
  %v80 = vld [vmem:[%s1 + $0x1a0] sm:$0xff]
  %v81 = vld [vmem:[%s1 + $0x1a8] sm:$0xff]
  %v82 = vld [vmem:[%s1 + $0x1b0] sm:$0xff]
  %v83 = vld [vmem:[%s1 + $0x1b8] sm:$0xff]
  %v84 = vld [vmem:[%s1 + $0x1c0] sm:$0xff]
  %v85 = vld [vmem:[%s1 + $0x1c8] sm:$0xff]
  %v86 = vld [vmem:[%s1 + $0x1d0] sm:$0xff]
  %v87 = vld [vmem:[%s1 + $0x1d8] sm:$0xff]
  %v88 = vld [vmem:[%s1 + $0x1e0] sm:$0xff]
  %v89 = vld [vmem:[%s1 + $0x1e8] sm:$0xff]
  %v90 = vld [vmem:[%s1 + $0x1f0] sm:$0xff]
  %v91 = vld [vmem:[%s1 + $0x1f8] sm:$0xff]
  %v92 = vld [vmem:[%s2] sm:$0x3]
  %v94 = vperm.slane %v92, 0
  %v95 = vperm.slane %v92, 1
  %98 = vmatpush.msra.mxu0 %v58
  %99 = vmatpush.msra.mxu0 %v56
  %100 = vmatpush.msra.mxu0 %v54
  %101 = vmatpush.msra.mxu0 %v52
  %102 = vmatpush.msra.mxu0 %v50
  %103 = vmatpush.msra.mxu0 %v48
  %104 = vmatpush.msra.mxu0 %v46
  %105 = vmatpush.msra.mxu0 %v44
  %106 = vmatpush.msra.mxu0 %v42
  %107 = vmatpush.msra.mxu0 %v40
  %108 = vmatpush.msra.mxu0 %v38
  %109 = vmatpush.msra.mxu0 %v36
  %110 = vmatpush.msra.mxu0 %v34
  %111 = vmatpush.msra.mxu0 %v32
  %112 = vmatpush.msra.mxu0 %v30
  %113 = vmatpush.msra.mxu0 %v28
  %114 = vmatmul.f32.gmra.mxu0 %v14
  %v115 = vpop.f32.mrf.mxu0
  %v116 = vadd.f32 %v94, %v115
  %117 = vmatmul.f32.gmra.mxu0 %v16
  %v118 = vpop.f32.mrf.mxu0
  %v119 = vadd.f32 %v94, %v118
  %120 = vmatmul.f32.gmra.mxu0 %v18
  %v121 = vpop.f32.mrf.mxu0
  %v122 = vadd.f32 %v94, %v121
  %123 = vmatmul.f32.gmra.mxu0 %v20
  %v124 = vpop.f32.mrf.mxu0
  %v125 = vadd.f32 %v94, %v124
  %126 = vmatmul.f32.gmra.mxu0 %v22
  %v127 = vpop.f32.mrf.mxu0
  %v128 = vadd.f32 %v94, %v127
  %129 = vmatmul.f32.gmra.mxu0 %v24
  %v130 = vpop.f32.mrf.mxu0
  %v131 = vadd.f32 %v94, %v130
  %132 = vmatmul.f32.gmra.mxu0 %v26
  %v133 = vpop.f32.mrf.mxu0
  %v134 = vadd.f32 %v94, %v133
  %135 = vdwg.mxu0
  %136 = vmatpush.msra.mxu0 %v90
  %137 = vmatpush.msra.mxu0 %v88
  %138 = vmatpush.msra.mxu0 %v86
  %139 = vmatpush.msra.mxu0 %v84
  %140 = vmatpush.msra.mxu0 %v82
  %141 = vmatpush.msra.mxu0 %v80
  %142 = vmatpush.msra.mxu0 %v78
  %143 = vmatpush.msra.mxu0 %v76
  %144 = vmatpush.msra.mxu0 %v74
  %145 = vmatpush.msra.mxu0 %v72
  %146 = vmatpush.msra.mxu0 %v70
  %147 = vmatpush.msra.mxu0 %v68
  %148 = vmatpush.msra.mxu0 %v66
  %149 = vmatpush.msra.mxu0 %v64
  %150 = vmatpush.msra.mxu0 %v62
  %151 = vmatpush.msra.mxu0 %v60
  %152 = vmatmul.f32.gmra.mxu0 %v15
  %v153 = vpop.f32.mrf.mxu0
  %v154 = vadd.f32 %v116, %v153
  %155 = vmatmul.f32.gmra.mxu0 %v17
  %v156 = vpop.f32.mrf.mxu0
  %v157 = vadd.f32 %v119, %v156
  %158 = vmatmul.f32.gmra.mxu0 %v19
  %v159 = vpop.f32.mrf.mxu0
  %v160 = vadd.f32 %v122, %v159
  %161 = vmatmul.f32.gmra.mxu0 %v21
  %v162 = vpop.f32.mrf.mxu0
  %v163 = vadd.f32 %v125, %v162
  %164 = vmatmul.f32.gmra.mxu0 %v23
  %v165 = vpop.f32.mrf.mxu0
  %v166 = vadd.f32 %v128, %v165
  %167 = vmatmul.f32.gmra.mxu0 %v25
  %v168 = vpop.f32.mrf.mxu0
  %v169 = vadd.f32 %v131, %v168
  %170 = vmatmul.f32.gmra.mxu0 %v27
  %v171 = vpop.f32.mrf.mxu0
  %v172 = vadd.f32 %v134, %v171
  %173 = vdwg.mxu0
  %174 = vmatpush.msra.mxu0 %v59
  %175 = vmatpush.msra.mxu0 %v57
  %176 = vmatpush.msra.mxu0 %v55
  %177 = vmatpush.msra.mxu0 %v53
  %178 = vmatpush.msra.mxu0 %v51
  %179 = vmatpush.msra.mxu0 %v49
  %180 = vmatpush.msra.mxu0 %v47
  %181 = vmatpush.msra.mxu0 %v45
  %182 = vmatpush.msra.mxu0 %v43
  %183 = vmatpush.msra.mxu0 %v41
  %184 = vmatpush.msra.mxu0 %v39
  %185 = vmatpush.msra.mxu0 %v37
  %186 = vmatpush.msra.mxu0 %v35
  %187 = vmatpush.msra.mxu0 %v33
  %188 = vmatpush.msra.mxu0 %v31
  %189 = vmatpush.msra.mxu0 %v29
  %190 = vmatmul.f32.gmra.mxu0 %v14
  %v191 = vpop.f32.mrf.mxu0
  %v192 = vadd.f32 %v95, %v191
  %193 = vmatmul.f32.gmra.mxu0 %v16
  %v194 = vpop.f32.mrf.mxu0
  %v195 = vadd.f32 %v95, %v194
  %196 = vmatmul.f32.gmra.mxu0 %v18
  %v197 = vpop.f32.mrf.mxu0
  %v198 = vadd.f32 %v95, %v197
  %199 = vmatmul.f32.gmra.mxu0 %v20
  %v200 = vpop.f32.mrf.mxu0
  %v201 = vadd.f32 %v95, %v200
  %202 = vmatmul.f32.gmra.mxu0 %v22
  %v203 = vpop.f32.mrf.mxu0
  %v204 = vadd.f32 %v95, %v203
  %205 = vmatmul.f32.gmra.mxu0 %v24
  %v206 = vpop.f32.mrf.mxu0
  %v207 = vadd.f32 %v95, %v206
  %208 = vmatmul.f32.gmra.mxu0 %v26
  %v209 = vpop.f32.mrf.mxu0
  %v210 = vadd.f32 %v95, %v209
  %211 = vdwg.mxu0
  %212 = vmatpush.msra.mxu0 %v91
  %213 = vmatpush.msra.mxu0 %v89
  %214 = vmatpush.msra.mxu0 %v87
  %215 = vmatpush.msra.mxu0 %v85
  %216 = vmatpush.msra.mxu0 %v83
  %217 = vmatpush.msra.mxu0 %v81
  %218 = vmatpush.msra.mxu0 %v79
  %219 = vmatpush.msra.mxu0 %v77
  %220 = vmatpush.msra.mxu0 %v75
  %221 = vmatpush.msra.mxu0 %v73
  %222 = vmatpush.msra.mxu0 %v71
  %223 = vmatpush.msra.mxu0 %v69
  %224 = vmatpush.msra.mxu0 %v67
  %225 = vmatpush.msra.mxu0 %v65
  %226 = vmatpush.msra.mxu0 %v63
  %227 = vmatpush.msra.mxu0 %v61
  %228 = vmatmul.f32.gmra.mxu0 %v15
  %v229 = vpop.f32.mrf.mxu0
  %v230 = vadd.f32 %v192, %v229
  %231 = vmatmul.f32.gmra.mxu0 %v17
  %v232 = vpop.f32.mrf.mxu0
  %v233 = vadd.f32 %v195, %v232
  %234 = vmatmul.f32.gmra.mxu0 %v19
  %v235 = vpop.f32.mrf.mxu0
  %v236 = vadd.f32 %v198, %v235
  %237 = vmatmul.f32.gmra.mxu0 %v21
  %v238 = vpop.f32.mrf.mxu0
  %v239 = vadd.f32 %v201, %v238
  %240 = vmatmul.f32.gmra.mxu0 %v23
  %v241 = vpop.f32.mrf.mxu0
  %v242 = vadd.f32 %v204, %v241
  %243 = vmatmul.f32.gmra.mxu0 %v25
  %v244 = vpop.f32.mrf.mxu0
  %v245 = vadd.f32 %v207, %v244
  %246 = vmatmul.f32.gmra.mxu0 %v27
  %v247 = vpop.f32.mrf.mxu0
  %v248 = vadd.f32 %v210, %v247
  %249 = vdwg.mxu0
  %v250 = vmax.f32 %v154, 0.0
  %v251 = vmax.f32 %v230, 0.0
  %v252 = vmax.f32 %v157, 0.0
  %v253 = vmax.f32 %v233, 0.0
  %v254 = vmax.f32 %v160, 0.0
  %v255 = vmax.f32 %v236, 0.0
  %v256 = vmax.f32 %v163, 0.0
  %v257 = vmax.f32 %v239, 0.0
  %v258 = vmax.f32 %v166, 0.0
  %v259 = vmax.f32 %v242, 0.0
  %v260 = vmax.f32 %v169, 0.0
  %v261 = vmax.f32 %v245, 0.0
  %v262 = vmax.f32 %v172, 0.0
  %v263 = vmax.f32 %v248, 0.0
  %264 = vst [vmem:[%s3] sm:$0xff] %v250
  %265 = vst [vmem:[%s3 + $0x8] sm:$0xff] %v251
  %266 = vst [vmem:[%s3 + $0x10] sm:$0xff] %v252
  %267 = vst [vmem:[%s3 + $0x18] sm:$0xff] %v253
  %268 = vst [vmem:[%s3 + $0x20] sm:$0xff] %v254
  %269 = vst [vmem:[%s3 + $0x28] sm:$0xff] %v255
  %270 = vst [vmem:[%s3 + $0x30] sm:$0xff] %v256
  %271 = vst [vmem:[%s3 + $0x38] sm:$0xff] %v257
  %272 = vst [vmem:[%s3 + $0x40] sm:$0xff] %v258
  %273 = vst [vmem:[%s3 + $0x48] sm:$0xff] %v259
  %274 = vst [vmem:[%s3 + $0x50] sm:$0xff] %v260
  %275 = vst [vmem:[%s3 + $0x58] sm:$0xff] %v261
  %276 = vst [vmem:[%s3 + $0x60] sm:$0x3] %v262
  %277 = vst [vmem:[%s3 + $0x68] sm:$0x3] %v263
  // Predicated region
  $region14: #{betavae_forward.14} parent=0 // pred_check
    _
  $region15: #{betavae_forward.14} parent=0 // pred_check_branch
    %279 = sbr.rel (0) target = $region17
  $region16: #{betavae_forward.14} parent=0 // pred_region
    _
  $region17: #{betavae_forward.14} parent=0 // pred_fallthru
    _
  // Predicated region
  $region18: #{betavae_forward.14} parent=0 // pred_check
    _
  $region19: #{betavae_forward.14} parent=0 // pred_check_branch
    %281 = sbr.rel (0) target = $region21
  $region20: #{betavae_forward.14} parent=0 // pred_region
    _
  $region21: #{betavae_forward.14} parent=0 // pred_fallthru
    _

// kernel: tile.28
$region0: #{tile.28}
  #allocation0 [shape = 's32[1]{0}', space=sflag, size = 0x4, scoped, tag = 'scoped memory for tile.28']
  %s0 = inlined_call_operand.vmem [shape: f32[32], index: 0, kind: input, shape index: {}]
  %s1 = inlined_call_operand.vmem [shape: f32[4,32], index: 1, kind: output, shape index: {}]
  // Predicated region
  $region2: #{tile.28} parent=0 // pred_check
    _
  $region3: #{tile.28} parent=0 // pred_check_branch
    %3 = sbr.rel (0) target = $region5
  $region4: #{tile.28} parent=0 // pred_region
    _
  $region5: #{tile.28} parent=0 // pred_fallthru
    _
  %v4 = vld [vmem:[%s0] ss:$0 sm:$0xff]
  %5 = vst [vmem:[%s1] sm:$0xf] %v4

// kernel: tile.29
$region0: #{tile.29}
  %s0 = inlined_call_operand.vmem [shape: f32[4,32], index: 0, kind: input, shape index: {}]
  %s1 = inlined_call_operand.vmem [shape: f32[1,128], index: 1, kind: output, shape index: {}]
  $region1: #{tile.29} parent=0
    #allocation0 [shape = 'u8[4096]{0}', space=vmem, size = 0x1000, scoped, tag = 'scoped mem for output reshape']
    #allocation1 [shape = 'u8[4096]{0}', space=vmem, size = 0x1000, scoped, tag = 'scoped mem for input reshape']
    %s3 = ssub.s32 16, 1
    %v4 = vld [vmem:[%s0] sm:%s3]
    %5 = vst [vmem:[#allocation1] sm:%s3] %v4
    %v6 = vld [vmem:[#allocation1] sm:$0x1]
    %vm7 = vcmask 261120
    %8 = vst.msk [vmem:[#allocation0] sm:$0x1] %vm7, %v6
    %s9 = scalar_lea.vmem [#allocation1], 3
    %v10 = vld [vmem:[%s9] sm:$0x1]
    %11 = vrot.lane.b32.xlu0 %v10, 96
    %v12 = vpop.permute.xlu0 %11
    %vm13 = vcmask 1048320
    %14 = vst.msk [vmem:[#allocation0] sm:$0x1] %vm13, %v12
    %s15 = scalar_lea.vmem [#allocation1], 2
    %v16 = vld [vmem:[%s15] sm:$0x1]
    %17 = vrot.lane.b32.xlu0 %v16, 64
    %v18 = vpop.permute.xlu0 %17
    %vm19 = vcmask 785920
    %20 = vst.msk [vmem:[#allocation0] sm:$0x1] %vm19, %v18
    %s21 = scalar_lea.vmem [#allocation1], 1
    %v22 = vld [vmem:[%s21] sm:$0x1]
    %23 = vrot.lane.b32.xlu0 %v22, 32
    %v24 = vpop.permute.xlu0 %23
    %vm25 = vcmask 523520
    %26 = vst.msk [vmem:[#allocation0] sm:$0x1] %vm25, %v24
    %s28 = ssub.s32 2, 1
    %v29 = vld [vmem:[#allocation0] sm:%s28]
    %s31 = ssub.s32 2, 1
    %32 = vst [vmem:[%s1] sm:%s31] %v29

// kernel: betavae_forward.15
$region0: #{betavae_forward.15}
  #allocation0 [shape = 'u32[]', space=smem, size = 0x4, offset = 0x4, fixed_abs, tag = 'smem constant byte address 0x4 - core index']
  #allocation1 [shape = 'u32[72,128]{1,0:T(1,128)}', space=vmem, size = 0x9000, scoped, tag = 'internal scratch']
  %s0 = inlined_call_operand.vmem [shape: f32[162,256], index: 0, kind: input, shape index: {}]
  %s1 = inlined_call_operand.vmem [shape: f32[256,128], index: 1, kind: input, shape index: {}]
  %s2 = inlined_call_operand.vmem [shape: f32[1,128], index: 2, kind: input, shape index: {}]
  %s3 = inlined_call_operand.vmem [shape: f32[162,128], index: 3, kind: output, shape index: {}]
  %s4 = sld [smem:[#allocation0]]
  $region22: #{betavae_forward.15} parent=0
    _
  %s6 = ssub.s32 1, %s4
  %s7 = scalar_select 0, %s6, %s4
  // Predicated region
  $region2: #{betavae_forward.15} parent=0 // pred_check
    _
  $region3: #{betavae_forward.15} parent=0 // pred_check_branch
    %9 = sbr.rel (0) target = $region5
  $region4: #{betavae_forward.15} parent=0 // pred_region
    _
  $region5: #{betavae_forward.15} parent=0 // pred_fallthru
    _
  // Predicated region
  $region6: #{betavae_forward.15} parent=0 // pred_check
    _
  $region7: #{betavae_forward.15} parent=0 // pred_check_branch
    %11 = sbr.rel (0) target = $region9
  $region8: #{betavae_forward.15} parent=0 // pred_region
    _
  $region9: #{betavae_forward.15} parent=0 // pred_fallthru
    _
  // Predicated region
  $region10: #{betavae_forward.15} parent=0 // pred_check
    _
  $region11: #{betavae_forward.15} parent=0 // pred_check_branch
    %13 = sbr.rel (0) target = $region13
  $region12: #{betavae_forward.15} parent=0 // pred_region
    _
  $region13: #{betavae_forward.15} parent=0 // pred_fallthru
    _
  %v14 = vld [vmem:[%s0] sm:$0xff]
  %v15 = vld [vmem:[%s0 + $0x8] sm:$0xff]
  %v16 = vld [vmem:[%s0 + $0x10] sm:$0xff]
  %v17 = vld [vmem:[%s0 + $0x18] sm:$0xff]
  %v18 = vld [vmem:[%s0 + $0x20] sm:$0xff]
  %v19 = vld [vmem:[%s0 + $0x28] sm:$0xff]
  %v20 = vld [vmem:[%s0 + $0x30] sm:$0xff]
  %v21 = vld [vmem:[%s0 + $0x38] sm:$0xff]
  %v22 = vld [vmem:[%s0 + $0x40] sm:$0xff]
  %v23 = vld [vmem:[%s0 + $0x48] sm:$0xff]
  %v24 = vld [vmem:[%s0 + $0x50] sm:$0xff]
  %v25 = vld [vmem:[%s0 + $0x58] sm:$0xff]
  %v26 = vld [vmem:[%s0 + $0x60] sm:$0xff]
  %v27 = vld [vmem:[%s0 + $0x68] sm:$0xff]
  %v28 = vld [vmem:[%s0 + $0x70] sm:$0xff]
  %v29 = vld [vmem:[%s0 + $0x78] sm:$0xff]
  %v30 = vld [vmem:[%s0 + $0x80] sm:$0xff]
  %v31 = vld [vmem:[%s0 + $0x88] sm:$0xff]
  %v32 = vld [vmem:[%s0 + $0x90] sm:$0xff]
  %v33 = vld [vmem:[%s0 + $0x98] sm:$0xff]
  %v34 = vld [vmem:[%s0 + $0xa0] sm:$0xff]
  %v35 = vld [vmem:[%s0 + $0xa8] sm:$0xff]
  %v36 = vld [vmem:[%s0 + $0xb0] sm:$0xff]
  %v37 = vld [vmem:[%s0 + $0xb8] sm:$0xff]
  %v38 = vld [vmem:[%s0 + $0xc0] sm:$0xff]
  %v39 = vld [vmem:[%s0 + $0xc8] sm:$0xff]
  %v40 = vld [vmem:[%s0 + $0xd0] sm:$0xff]
  %v41 = vld [vmem:[%s0 + $0xd8] sm:$0xff]
  %v42 = vld [vmem:[%s0 + $0xe0] sm:$0xff]
  %v43 = vld [vmem:[%s0 + $0xe8] sm:$0xff]
  %v44 = vld [vmem:[%s0 + $0xf0] sm:$0xff]
  %v45 = vld [vmem:[%s0 + $0xf8] sm:$0xff]
  %v46 = vld [vmem:[%s0 + $0x100] sm:$0xff]
  %v47 = vld [vmem:[%s0 + $0x108] sm:$0xff]
  %v48 = vld [vmem:[%s0 + $0x110] sm:$0xff]
  %v49 = vld [vmem:[%s0 + $0x118] sm:$0xff]
  %v50 = vld [vmem:[%s0 + $0x120] sm:$0xff]
  %v51 = vld [vmem:[%s0 + $0x128] sm:$0xff]
  %v52 = vld [vmem:[%s0 + $0x130] sm:$0xff]
  %v53 = vld [vmem:[%s0 + $0x138] sm:$0xff]
  %v54 = vld [vmem:[%s0 + $0x140] sm:$0x3]
  %v55 = vld [vmem:[%s0 + $0x148] sm:$0x3]
  %v56 = vld [vmem:[%s1] sm:$0xff]
  %v57 = vld [vmem:[%s1 + $0x8] sm:$0xff]
  %v58 = vld [vmem:[%s1 + $0x10] sm:$0xff]
  %v59 = vld [vmem:[%s1 + $0x18] sm:$0xff]
  %v60 = vld [vmem:[%s1 + $0x20] sm:$0xff]
  %v61 = vld [vmem:[%s1 + $0x28] sm:$0xff]
  %v62 = vld [vmem:[%s1 + $0x30] sm:$0xff]
  %v63 = vld [vmem:[%s1 + $0x38] sm:$0xff]
  %v64 = vld [vmem:[%s1 + $0x40] sm:$0xff]
  %v65 = vld [vmem:[%s1 + $0x48] sm:$0xff]
  %v66 = vld [vmem:[%s1 + $0x50] sm:$0xff]
  %v67 = vld [vmem:[%s1 + $0x58] sm:$0xff]
  %v68 = vld [vmem:[%s1 + $0x60] sm:$0xff]
  %v69 = vld [vmem:[%s1 + $0x68] sm:$0xff]
  %v70 = vld [vmem:[%s1 + $0x70] sm:$0xff]
  %v71 = vld [vmem:[%s1 + $0x78] sm:$0xff]
  %v72 = vld [vmem:[%s1 + $0x80] sm:$0xff]
  %v73 = vld [vmem:[%s1 + $0x88] sm:$0xff]
  %v74 = vld [vmem:[%s1 + $0x90] sm:$0xff]
  %v75 = vld [vmem:[%s1 + $0x98] sm:$0xff]
  %v76 = vld [vmem:[%s1 + $0xa0] sm:$0xff]
  %v77 = vld [vmem:[%s1 + $0xa8] sm:$0xff]
  %v78 = vld [vmem:[%s1 + $0xb0] sm:$0xff]
  %v79 = vld [vmem:[%s1 + $0xb8] sm:$0xff]
  %v80 = vld [vmem:[%s1 + $0xc0] sm:$0xff]
  %v81 = vld [vmem:[%s1 + $0xc8] sm:$0xff]
  %v82 = vld [vmem:[%s1 + $0xd0] sm:$0xff]
  %v83 = vld [vmem:[%s1 + $0xd8] sm:$0xff]
  %v84 = vld [vmem:[%s1 + $0xe0] sm:$0xff]
  %v85 = vld [vmem:[%s1 + $0xe8] sm:$0xff]
  %v86 = vld [vmem:[%s1 + $0xf0] sm:$0xff]
  %v87 = vld [vmem:[%s1 + $0xf8] sm:$0xff]
  %v88 = vld [vmem:[%s2] sm:$0x1]
  %v90 = vperm.slane %v88, 0
  %92 = vmatpush.msra.mxu0 %v71
  %93 = vmatpush.msra.mxu0 %v70
  %94 = vmatpush.msra.mxu0 %v69
  %95 = vmatpush.msra.mxu0 %v68
  %96 = vmatpush.msra.mxu0 %v67
  %97 = vmatpush.msra.mxu0 %v66
  %98 = vmatpush.msra.mxu0 %v65
  %99 = vmatpush.msra.mxu0 %v64
  %100 = vmatpush.msra.mxu0 %v63
  %101 = vmatpush.msra.mxu0 %v62
  %102 = vmatpush.msra.mxu0 %v61
  %103 = vmatpush.msra.mxu0 %v60
  %104 = vmatpush.msra.mxu0 %v59
  %105 = vmatpush.msra.mxu0 %v58
  %106 = vmatpush.msra.mxu0 %v57
  %107 = vmatpush.msra.mxu0 %v56
  %108 = vmatmul.f32.gmra.mxu0 %v14
  %v109 = vpop.f32.mrf.mxu0
  %v110 = vadd.f32 %v90, %v109
  %111 = vmatmul.f32.gmra.mxu0 %v16
  %v112 = vpop.f32.mrf.mxu0
  %v113 = vadd.f32 %v90, %v112
  %114 = vmatmul.f32.gmra.mxu0 %v18
  %v115 = vpop.f32.mrf.mxu0
  %v116 = vadd.f32 %v90, %v115
  %117 = vmatmul.f32.gmra.mxu0 %v20
  %v118 = vpop.f32.mrf.mxu0
  %v119 = vadd.f32 %v90, %v118
  %120 = vmatmul.f32.gmra.mxu0 %v22
  %v121 = vpop.f32.mrf.mxu0
  %v122 = vadd.f32 %v90, %v121
  %123 = vmatmul.f32.gmra.mxu0 %v24
  %v124 = vpop.f32.mrf.mxu0
  %v125 = vadd.f32 %v90, %v124
  %126 = vmatmul.f32.gmra.mxu0 %v26
  %v127 = vpop.f32.mrf.mxu0
  %v128 = vadd.f32 %v90, %v127
  %129 = vmatmul.f32.gmra.mxu0 %v28
  %v130 = vpop.f32.mrf.mxu0
  %v131 = vadd.f32 %v90, %v130
  %132 = vmatmul.f32.gmra.mxu0 %v30
  %v133 = vpop.f32.mrf.mxu0
  %v134 = vadd.f32 %v90, %v133
  %135 = vmatmul.f32.gmra.mxu0 %v32
  %v136 = vpop.f32.mrf.mxu0
  %v137 = vadd.f32 %v90, %v136
  %138 = vmatmul.f32.gmra.mxu0 %v34
  %v139 = vpop.f32.mrf.mxu0
  %v140 = vadd.f32 %v90, %v139
  %141 = vmatmul.f32.gmra.mxu0 %v36
  %v142 = vpop.f32.mrf.mxu0
  %v143 = vadd.f32 %v90, %v142
  %144 = vmatmul.f32.gmra.mxu0 %v38
  %v145 = vpop.f32.mrf.mxu0
  %v146 = vadd.f32 %v90, %v145
  %147 = vmatmul.f32.gmra.mxu0 %v40
  %v148 = vpop.f32.mrf.mxu0
  %v149 = vadd.f32 %v90, %v148
  %150 = vmatmul.f32.gmra.mxu0 %v42
  %v151 = vpop.f32.mrf.mxu0
  %v152 = vadd.f32 %v90, %v151
  %153 = vmatmul.f32.gmra.mxu0 %v44
  %v154 = vpop.f32.mrf.mxu0
  %v155 = vadd.f32 %v90, %v154
  %156 = vmatmul.f32.gmra.mxu0 %v46
  %v157 = vpop.f32.mrf.mxu0
  %v158 = vadd.f32 %v90, %v157
  %159 = vmatmul.f32.gmra.mxu0 %v48
  %v160 = vpop.f32.mrf.mxu0
  %v161 = vadd.f32 %v90, %v160
  %162 = vmatmul.f32.gmra.mxu0 %v50
  %v163 = vpop.f32.mrf.mxu0
  %v164 = vadd.f32 %v90, %v163
  %165 = vmatmul.f32.gmra.mxu0 %v52
  %v166 = vpop.f32.mrf.mxu0
  %v167 = vadd.f32 %v90, %v166
  %168 = vmatmul.f32.gmra.mxu0 %v54
  %v169 = vpop.f32.mrf.mxu0
  %v170 = vadd.f32 %v90, %v169
  %171 = vdwg.mxu0
  %172 = vmatpush.msra.mxu0 %v87
  %173 = vmatpush.msra.mxu0 %v86
  %174 = vmatpush.msra.mxu0 %v85
  %175 = vmatpush.msra.mxu0 %v84
  %176 = vmatpush.msra.mxu0 %v83
  %177 = vmatpush.msra.mxu0 %v82
  %178 = vmatpush.msra.mxu0 %v81
  %179 = vmatpush.msra.mxu0 %v80
  %180 = vmatpush.msra.mxu0 %v79
  %181 = vmatpush.msra.mxu0 %v78
  %182 = vmatpush.msra.mxu0 %v77
  %183 = vmatpush.msra.mxu0 %v76
  %184 = vmatpush.msra.mxu0 %v75
  %185 = vmatpush.msra.mxu0 %v74
  %186 = vmatpush.msra.mxu0 %v73
  %187 = vmatpush.msra.mxu0 %v72
  %188 = vmatmul.f32.gmra.mxu0 %v15
  %v189 = vpop.f32.mrf.mxu0
  %v190 = vadd.f32 %v110, %v189
  %191 = vmatmul.f32.gmra.mxu0 %v17
  %v192 = vpop.f32.mrf.mxu0
  %v193 = vadd.f32 %v113, %v192
  %194 = vmatmul.f32.gmra.mxu0 %v19
  %v195 = vpop.f32.mrf.mxu0
  %v196 = vadd.f32 %v116, %v195
  %197 = vmatmul.f32.gmra.mxu0 %v21
  %v198 = vpop.f32.mrf.mxu0
  %v199 = vadd.f32 %v119, %v198
  %200 = vmatmul.f32.gmra.mxu0 %v23
  %v201 = vpop.f32.mrf.mxu0
  %v202 = vadd.f32 %v122, %v201
  %203 = vmatmul.f32.gmra.mxu0 %v25
  %v204 = vpop.f32.mrf.mxu0
  %v205 = vadd.f32 %v125, %v204
  %206 = vmatmul.f32.gmra.mxu0 %v27
  %v207 = vpop.f32.mrf.mxu0
  %v208 = vadd.f32 %v128, %v207
  %209 = vmatmul.f32.gmra.mxu0 %v29
  %v210 = vpop.f32.mrf.mxu0
  %v211 = vadd.f32 %v131, %v210
  %212 = vmatmul.f32.gmra.mxu0 %v31
  %v213 = vpop.f32.mrf.mxu0
  %v214 = vadd.f32 %v134, %v213
  %215 = vmatmul.f32.gmra.mxu0 %v33
  %v216 = vpop.f32.mrf.mxu0
  %v217 = vadd.f32 %v137, %v216
  %218 = vmatmul.f32.gmra.mxu0 %v35
  %v219 = vpop.f32.mrf.mxu0
  %v220 = vadd.f32 %v140, %v219
  %221 = vmatmul.f32.gmra.mxu0 %v37
  %v222 = vpop.f32.mrf.mxu0
  %v223 = vadd.f32 %v143, %v222
  %224 = vmatmul.f32.gmra.mxu0 %v39
  %v225 = vpop.f32.mrf.mxu0
  %v226 = vadd.f32 %v146, %v225
  %227 = vmatmul.f32.gmra.mxu0 %v41
  %v228 = vpop.f32.mrf.mxu0
  %v229 = vadd.f32 %v149, %v228
  %230 = vmatmul.f32.gmra.mxu0 %v43
  %v231 = vpop.f32.mrf.mxu0
  %v232 = vadd.f32 %v152, %v231
  %233 = vmatmul.f32.gmra.mxu0 %v45
  %v234 = vpop.f32.mrf.mxu0
  %v235 = vadd.f32 %v155, %v234
  %236 = vmatmul.f32.gmra.mxu0 %v47
  %v237 = vpop.f32.mrf.mxu0
  %v238 = vadd.f32 %v158, %v237
  %239 = vmatmul.f32.gmra.mxu0 %v49
  %v240 = vpop.f32.mrf.mxu0
  %v241 = vadd.f32 %v161, %v240
  %242 = vmatmul.f32.gmra.mxu0 %v51
  %v243 = vpop.f32.mrf.mxu0
  %v244 = vadd.f32 %v164, %v243
  %245 = vmatmul.f32.gmra.mxu0 %v53
  %v246 = vpop.f32.mrf.mxu0
  %v247 = vadd.f32 %v167, %v246
  %248 = vmatmul.f32.gmra.mxu0 %v55
  %v249 = vpop.f32.mrf.mxu0
  %v250 = vadd.f32 %v170, %v249
  %251 = vdwg.mxu0
  %v252 = vmax.f32 %v190, 0.0
  %v253 = vmax.f32 %v193, 0.0
  %v254 = vmax.f32 %v196, 0.0
  %v255 = vmax.f32 %v199, 0.0
  %v256 = vmax.f32 %v202, 0.0
  %v257 = vmax.f32 %v205, 0.0
  %v258 = vmax.f32 %v208, 0.0
  %v259 = vmax.f32 %v211, 0.0
  %v260 = vmax.f32 %v214, 0.0
  %v261 = vmax.f32 %v217, 0.0
  %v262 = vmax.f32 %v220, 0.0
  %v263 = vmax.f32 %v223, 0.0
  %v264 = vmax.f32 %v226, 0.0
  %v265 = vmax.f32 %v229, 0.0
  %v266 = vmax.f32 %v232, 0.0
  %v267 = vmax.f32 %v235, 0.0
  %v268 = vmax.f32 %v238, 0.0
  %v269 = vmax.f32 %v241, 0.0
  %v270 = vmax.f32 %v244, 0.0
  %v271 = vmax.f32 %v247, 0.0
  %v272 = vmax.f32 %v250, 0.0
  %273 = vst [vmem:[%s3] sm:$0xff] %v252
  %274 = vst [vmem:[%s3 + $0x8] sm:$0xff] %v253
  %275 = vst [vmem:[%s3 + $0x10] sm:$0xff] %v254
  %276 = vst [vmem:[%s3 + $0x18] sm:$0xff] %v255
  %277 = vst [vmem:[%s3 + $0x20] sm:$0xff] %v256
  %278 = vst [vmem:[%s3 + $0x28] sm:$0xff] %v257
  %279 = vst [vmem:[%s3 + $0x30] sm:$0xff] %v258
  %280 = vst [vmem:[%s3 + $0x38] sm:$0xff] %v259
  %281 = vst [vmem:[%s3 + $0x40] sm:$0xff] %v260
  %282 = vst [vmem:[%s3 + $0x48] sm:$0xff] %v261
  %283 = vst [vmem:[%s3 + $0x50] sm:$0xff] %v262
  %284 = vst [vmem:[%s3 + $0x58] sm:$0xff] %v263
  %285 = vst [vmem:[%s3 + $0x60] sm:$0xff] %v264
  %286 = vst [vmem:[%s3 + $0x68] sm:$0xff] %v265
  %287 = vst [vmem:[%s3 + $0x70] sm:$0xff] %v266
  %288 = vst [vmem:[%s3 + $0x78] sm:$0xff] %v267
  %289 = vst [vmem:[%s3 + $0x80] sm:$0xff] %v268
  %290 = vst [vmem:[%s3 + $0x88] sm:$0xff] %v269
  %291 = vst [vmem:[%s3 + $0x90] sm:$0xff] %v270
  %292 = vst [vmem:[%s3 + $0x98] sm:$0xff] %v271
  %293 = vst [vmem:[%s3 + $0xa0] sm:$0x3] %v272
  // Predicated region
  $region14: #{betavae_forward.15} parent=0 // pred_check
    _
  $region15: #{betavae_forward.15} parent=0 // pred_check_branch
    %295 = sbr.rel (0) target = $region17
  $region16: #{betavae_forward.15} parent=0 // pred_region
    _
  $region17: #{betavae_forward.15} parent=0 // pred_fallthru
    _
  // Predicated region
  $region18: #{betavae_forward.15} parent=0 // pred_check
    _
  $region19: #{betavae_forward.15} parent=0 // pred_check_branch
    %297 = sbr.rel (0) target = $region21
  $region20: #{betavae_forward.15} parent=0 // pred_region
    _
  $region21: #{betavae_forward.15} parent=0 // pred_fallthru
    _

// kernel: betavae_forward.16
$region0: #{betavae_forward.16}
  #allocation0 [shape = 'u32[]', space=smem, size = 0x4, offset = 0x4, fixed_abs, tag = 'smem constant byte address 0x4 - core index']
  #allocation1 [shape = 'u32[72,128]{1,0:T(1,128)}', space=vmem, size = 0x9000, scoped, tag = 'internal scratch']
  %s0 = inlined_call_operand.vmem [shape: f32[578,128], index: 0, kind: input, shape index: {}]
  %s1 = inlined_call_operand.vmem [shape: f32[128,128], index: 1, kind: input, shape index: {}]
  %s2 = inlined_call_operand.vmem [shape: f32[1,128], index: 2, kind: input, shape index: {}]
  %s3 = inlined_call_operand.vmem [shape: f32[578,128], index: 3, kind: output, shape index: {}]
  %s4 = sld [smem:[#allocation0]]
  $region22: #{betavae_forward.16} parent=0
    _
  %s6 = ssub.s32 1, %s4
  %s7 = scalar_select 0, %s6, %s4
  // Predicated region
  $region2: #{betavae_forward.16} parent=0 // pred_check
    _
  $region3: #{betavae_forward.16} parent=0 // pred_check_branch
    %9 = sbr.rel (0) target = $region5
  $region4: #{betavae_forward.16} parent=0 // pred_region
    _
  $region5: #{betavae_forward.16} parent=0 // pred_fallthru
    _
  // Predicated region
  $region6: #{betavae_forward.16} parent=0 // pred_check
    _
  $region7: #{betavae_forward.16} parent=0 // pred_check_branch
    %11 = sbr.rel (0) target = $region9
  $region8: #{betavae_forward.16} parent=0 // pred_region
    _
  $region9: #{betavae_forward.16} parent=0 // pred_fallthru
    _
  // Predicated region
  $region10: #{betavae_forward.16} parent=0 // pred_check
    _
  $region11: #{betavae_forward.16} parent=0 // pred_check_branch
    %13 = sbr.rel (0) target = $region13
  $region12: #{betavae_forward.16} parent=0 // pred_region
    _
  $region13: #{betavae_forward.16} parent=0 // pred_fallthru
    _
  %v14 = vld [vmem:[%s0] sm:$0xff]
  %v15 = vld [vmem:[%s0 + $0x8] sm:$0xff]
  %v16 = vld [vmem:[%s0 + $0x10] sm:$0xff]
  %v17 = vld [vmem:[%s0 + $0x18] sm:$0xff]
  %v18 = vld [vmem:[%s0 + $0x20] sm:$0xff]
  %v19 = vld [vmem:[%s0 + $0x28] sm:$0xff]
  %v20 = vld [vmem:[%s0 + $0x30] sm:$0xff]
  %v21 = vld [vmem:[%s0 + $0x38] sm:$0xff]
  %v22 = vld [vmem:[%s0 + $0x40] sm:$0xff]
  %v23 = vld [vmem:[%s0 + $0x48] sm:$0xff]
  %v24 = vld [vmem:[%s0 + $0x50] sm:$0xff]
  %v25 = vld [vmem:[%s0 + $0x58] sm:$0xff]
  %v26 = vld [vmem:[%s0 + $0x60] sm:$0xff]
  %v27 = vld [vmem:[%s0 + $0x68] sm:$0xff]
  %v28 = vld [vmem:[%s0 + $0x70] sm:$0xff]
  %v29 = vld [vmem:[%s0 + $0x78] sm:$0xff]
  %v30 = vld [vmem:[%s0 + $0x80] sm:$0xff]
  %v31 = vld [vmem:[%s0 + $0x88] sm:$0xff]
  %v32 = vld [vmem:[%s0 + $0x90] sm:$0xff]
  %v33 = vld [vmem:[%s0 + $0x98] sm:$0xff]
  %v34 = vld [vmem:[%s0 + $0xa0] sm:$0xff]
  %v35 = vld [vmem:[%s0 + $0xa8] sm:$0xff]
  %v36 = vld [vmem:[%s0 + $0xb0] sm:$0xff]
  %v37 = vld [vmem:[%s0 + $0xb8] sm:$0xff]
  %v38 = vld [vmem:[%s0 + $0xc0] sm:$0xff]
  %v39 = vld [vmem:[%s0 + $0xc8] sm:$0xff]
  %v40 = vld [vmem:[%s0 + $0xd0] sm:$0xff]
  %v41 = vld [vmem:[%s0 + $0xd8] sm:$0xff]
  %v42 = vld [vmem:[%s0 + $0xe0] sm:$0xff]
  %v43 = vld [vmem:[%s0 + $0xe8] sm:$0xff]
  %v44 = vld [vmem:[%s0 + $0xf0] sm:$0xff]
  %v45 = vld [vmem:[%s0 + $0xf8] sm:$0xff]
  %v46 = vld [vmem:[%s0 + $0x100] sm:$0xff]
  %v47 = vld [vmem:[%s0 + $0x108] sm:$0xff]
  %v48 = vld [vmem:[%s0 + $0x110] sm:$0xff]
  %v49 = vld [vmem:[%s0 + $0x118] sm:$0xff]
  %v50 = vld [vmem:[%s0 + $0x120] sm:$0xff]
  %v51 = vld [vmem:[%s0 + $0x128] sm:$0xff]
  %v52 = vld [vmem:[%s0 + $0x130] sm:$0xff]
  %v53 = vld [vmem:[%s0 + $0x138] sm:$0xff]
  %v54 = vld [vmem:[%s0 + $0x140] sm:$0xff]
  %v55 = vld [vmem:[%s0 + $0x148] sm:$0xff]
  %v56 = vld [vmem:[%s0 + $0x150] sm:$0xff]
  %v57 = vld [vmem:[%s0 + $0x158] sm:$0xff]
  %v58 = vld [vmem:[%s0 + $0x160] sm:$0xff]
  %v59 = vld [vmem:[%s0 + $0x168] sm:$0xff]
  %v60 = vld [vmem:[%s0 + $0x170] sm:$0xff]
  %v61 = vld [vmem:[%s0 + $0x178] sm:$0xff]
  %v62 = vld [vmem:[%s0 + $0x180] sm:$0xff]
  %v63 = vld [vmem:[%s0 + $0x188] sm:$0xff]
  %v64 = vld [vmem:[%s0 + $0x190] sm:$0xff]
  %v65 = vld [vmem:[%s0 + $0x198] sm:$0xff]
  %v66 = vld [vmem:[%s0 + $0x1a0] sm:$0xff]
  %v67 = vld [vmem:[%s0 + $0x1a8] sm:$0xff]
  %v68 = vld [vmem:[%s0 + $0x1b0] sm:$0xff]
  %v69 = vld [vmem:[%s0 + $0x1b8] sm:$0xff]
  %v70 = vld [vmem:[%s0 + $0x1c0] sm:$0xff]
  %v71 = vld [vmem:[%s0 + $0x1c8] sm:$0xff]
  %v72 = vld [vmem:[%s0 + $0x1d0] sm:$0xff]
  %v73 = vld [vmem:[%s0 + $0x1d8] sm:$0xff]
  %v74 = vld [vmem:[%s0 + $0x1e0] sm:$0xff]
  %v75 = vld [vmem:[%s0 + $0x1e8] sm:$0xff]
  %v76 = vld [vmem:[%s0 + $0x1f0] sm:$0xff]
  %v77 = vld [vmem:[%s0 + $0x1f8] sm:$0xff]
  %v78 = vld [vmem:[%s0 + $0x200] sm:$0xff]
  %v79 = vld [vmem:[%s0 + $0x208] sm:$0xff]
  %v80 = vld [vmem:[%s0 + $0x210] sm:$0xff]
  %v81 = vld [vmem:[%s0 + $0x218] sm:$0xff]
  %v82 = vld [vmem:[%s0 + $0x220] sm:$0xff]
  %v83 = vld [vmem:[%s0 + $0x228] sm:$0xff]
  %v84 = vld [vmem:[%s0 + $0x230] sm:$0xff]
  %v85 = vld [vmem:[%s0 + $0x238] sm:$0xff]
  %v86 = vld [vmem:[%s0 + $0x240] sm:$0x3]
  %v87 = vld [vmem:[%s1] sm:$0xff]
  %v88 = vld [vmem:[%s1 + $0x8] sm:$0xff]
  %v89 = vld [vmem:[%s1 + $0x10] sm:$0xff]
  %v90 = vld [vmem:[%s1 + $0x18] sm:$0xff]
  %v91 = vld [vmem:[%s1 + $0x20] sm:$0xff]
  %v92 = vld [vmem:[%s1 + $0x28] sm:$0xff]
  %v93 = vld [vmem:[%s1 + $0x30] sm:$0xff]
  %v94 = vld [vmem:[%s1 + $0x38] sm:$0xff]
  %v95 = vld [vmem:[%s1 + $0x40] sm:$0xff]
  %v96 = vld [vmem:[%s1 + $0x48] sm:$0xff]
  %v97 = vld [vmem:[%s1 + $0x50] sm:$0xff]
  %v98 = vld [vmem:[%s1 + $0x58] sm:$0xff]
  %v99 = vld [vmem:[%s1 + $0x60] sm:$0xff]
  %v100 = vld [vmem:[%s1 + $0x68] sm:$0xff]
  %v101 = vld [vmem:[%s1 + $0x70] sm:$0xff]
  %v102 = vld [vmem:[%s1 + $0x78] sm:$0xff]
  %v103 = vld [vmem:[%s2] sm:$0x1]
  %v105 = vperm.slane %v103, 0
  %107 = vmatpush.msra.mxu0 %v102
  %108 = vmatpush.msra.mxu0 %v101
  %109 = vmatpush.msra.mxu0 %v100
  %110 = vmatpush.msra.mxu0 %v99
  %111 = vmatpush.msra.mxu0 %v98
  %112 = vmatpush.msra.mxu0 %v97
  %113 = vmatpush.msra.mxu0 %v96
  %114 = vmatpush.msra.mxu0 %v95
  %115 = vmatpush.msra.mxu0 %v94
  %116 = vmatpush.msra.mxu0 %v93
  %117 = vmatpush.msra.mxu0 %v92
  %118 = vmatpush.msra.mxu0 %v91
  %119 = vmatpush.msra.mxu0 %v90
  %120 = vmatpush.msra.mxu0 %v89
  %121 = vmatpush.msra.mxu0 %v88
  %122 = vmatpush.msra.mxu0 %v87
  %123 = vmatmul.f32.gmra.mxu0 %v14
  %v124 = vpop.f32.mrf.mxu0
  %v125 = vadd.f32 %v105, %v124
  %126 = vmatmul.f32.gmra.mxu0 %v15
  %v127 = vpop.f32.mrf.mxu0
  %v128 = vadd.f32 %v105, %v127
  %129 = vmatmul.f32.gmra.mxu0 %v16
  %v130 = vpop.f32.mrf.mxu0
  %v131 = vadd.f32 %v105, %v130
  %132 = vmatmul.f32.gmra.mxu0 %v17
  %v133 = vpop.f32.mrf.mxu0
  %v134 = vadd.f32 %v105, %v133
  %135 = vmatmul.f32.gmra.mxu0 %v18
  %v136 = vpop.f32.mrf.mxu0
  %v137 = vadd.f32 %v105, %v136
  %138 = vmatmul.f32.gmra.mxu0 %v19
  %v139 = vpop.f32.mrf.mxu0
  %v140 = vadd.f32 %v105, %v139
  %141 = vmatmul.f32.gmra.mxu0 %v20
  %v142 = vpop.f32.mrf.mxu0
  %v143 = vadd.f32 %v105, %v142
  %144 = vmatmul.f32.gmra.mxu0 %v21
  %v145 = vpop.f32.mrf.mxu0
  %v146 = vadd.f32 %v105, %v145
  %147 = vmatmul.f32.gmra.mxu0 %v22
  %v148 = vpop.f32.mrf.mxu0
  %v149 = vadd.f32 %v105, %v148
  %150 = vmatmul.f32.gmra.mxu0 %v23
  %v151 = vpop.f32.mrf.mxu0
  %v152 = vadd.f32 %v105, %v151
  %153 = vmatmul.f32.gmra.mxu0 %v24
  %v154 = vpop.f32.mrf.mxu0
  %v155 = vadd.f32 %v105, %v154
  %156 = vmatmul.f32.gmra.mxu0 %v25
  %v157 = vpop.f32.mrf.mxu0
  %v158 = vadd.f32 %v105, %v157
  %159 = vmatmul.f32.gmra.mxu0 %v26
  %v160 = vpop.f32.mrf.mxu0
  %v161 = vadd.f32 %v105, %v160
  %162 = vmatmul.f32.gmra.mxu0 %v27
  %v163 = vpop.f32.mrf.mxu0
  %v164 = vadd.f32 %v105, %v163
  %165 = vmatmul.f32.gmra.mxu0 %v28
  %v166 = vpop.f32.mrf.mxu0
  %v167 = vadd.f32 %v105, %v166
  %168 = vmatmul.f32.gmra.mxu0 %v29
  %v169 = vpop.f32.mrf.mxu0
  %v170 = vadd.f32 %v105, %v169
  %171 = vmatmul.f32.gmra.mxu0 %v30
  %v172 = vpop.f32.mrf.mxu0
  %v173 = vadd.f32 %v105, %v172
  %174 = vmatmul.f32.gmra.mxu0 %v31
  %v175 = vpop.f32.mrf.mxu0
  %v176 = vadd.f32 %v105, %v175
  %177 = vmatmul.f32.gmra.mxu0 %v32
  %v178 = vpop.f32.mrf.mxu0
  %v179 = vadd.f32 %v105, %v178
  %180 = vmatmul.f32.gmra.mxu0 %v33
  %v181 = vpop.f32.mrf.mxu0
  %v182 = vadd.f32 %v105, %v181
  %183 = vmatmul.f32.gmra.mxu0 %v34
  %v184 = vpop.f32.mrf.mxu0
  %v185 = vadd.f32 %v105, %v184
  %186 = vmatmul.f32.gmra.mxu0 %v35
  %v187 = vpop.f32.mrf.mxu0
  %v188 = vadd.f32 %v105, %v187
  %189 = vmatmul.f32.gmra.mxu0 %v36
  %v190 = vpop.f32.mrf.mxu0
  %v191 = vadd.f32 %v105, %v190
  %192 = vmatmul.f32.gmra.mxu0 %v37
  %v193 = vpop.f32.mrf.mxu0
  %v194 = vadd.f32 %v105, %v193
  %195 = vmatmul.f32.gmra.mxu0 %v38
  %v196 = vpop.f32.mrf.mxu0
  %v197 = vadd.f32 %v105, %v196
  %198 = vmatmul.f32.gmra.mxu0 %v39
  %v199 = vpop.f32.mrf.mxu0
  %v200 = vadd.f32 %v105, %v199
  %201 = vmatmul.f32.gmra.mxu0 %v40
  %v202 = vpop.f32.mrf.mxu0
  %v203 = vadd.f32 %v105, %v202
  %204 = vmatmul.f32.gmra.mxu0 %v41
  %v205 = vpop.f32.mrf.mxu0
  %v206 = vadd.f32 %v105, %v205
  %207 = vmatmul.f32.gmra.mxu0 %v42
  %v208 = vpop.f32.mrf.mxu0
  %v209 = vadd.f32 %v105, %v208
  %210 = vmatmul.f32.gmra.mxu0 %v43
  %v211 = vpop.f32.mrf.mxu0
  %v212 = vadd.f32 %v105, %v211
  %213 = vmatmul.f32.gmra.mxu0 %v44
  %v214 = vpop.f32.mrf.mxu0
  %v215 = vadd.f32 %v105, %v214
  %216 = vmatmul.f32.gmra.mxu0 %v45
  %v217 = vpop.f32.mrf.mxu0
  %v218 = vadd.f32 %v105, %v217
  %219 = vmatmul.f32.gmra.mxu0 %v46
  %v220 = vpop.f32.mrf.mxu0
  %v221 = vadd.f32 %v105, %v220
  %222 = vmatmul.f32.gmra.mxu0 %v47
  %v223 = vpop.f32.mrf.mxu0
  %v224 = vadd.f32 %v105, %v223
  %225 = vmatmul.f32.gmra.mxu0 %v48
  %v226 = vpop.f32.mrf.mxu0
  %v227 = vadd.f32 %v105, %v226
  %228 = vmatmul.f32.gmra.mxu0 %v49
  %v229 = vpop.f32.mrf.mxu0
  %v230 = vadd.f32 %v105, %v229
  %231 = vmatmul.f32.gmra.mxu0 %v50
  %v232 = vpop.f32.mrf.mxu0
  %v233 = vadd.f32 %v105, %v232
  %234 = vmatmul.f32.gmra.mxu0 %v51
  %v235 = vpop.f32.mrf.mxu0
  %v236 = vadd.f32 %v105, %v235
  %237 = vmatmul.f32.gmra.mxu0 %v52
  %v238 = vpop.f32.mrf.mxu0
  %v239 = vadd.f32 %v105, %v238
  %240 = vmatmul.f32.gmra.mxu0 %v53
  %v241 = vpop.f32.mrf.mxu0
  %v242 = vadd.f32 %v105, %v241
  %243 = vmatmul.f32.gmra.mxu0 %v54
  %v244 = vpop.f32.mrf.mxu0
  %v245 = vadd.f32 %v105, %v244
  %246 = vmatmul.f32.gmra.mxu0 %v55
  %v247 = vpop.f32.mrf.mxu0
  %v248 = vadd.f32 %v105, %v247
  %249 = vmatmul.f32.gmra.mxu0 %v56
  %v250 = vpop.f32.mrf.mxu0
  %v251 = vadd.f32 %v105, %v250
  %252 = vmatmul.f32.gmra.mxu0 %v57
  %v253 = vpop.f32.mrf.mxu0
  %v254 = vadd.f32 %v105, %v253
  %255 = vmatmul.f32.gmra.mxu0 %v58
  %v256 = vpop.f32.mrf.mxu0
  %v257 = vadd.f32 %v105, %v256
  %258 = vmatmul.f32.gmra.mxu0 %v59
  %v259 = vpop.f32.mrf.mxu0
  %v260 = vadd.f32 %v105, %v259
  %261 = vmatmul.f32.gmra.mxu0 %v60
  %v262 = vpop.f32.mrf.mxu0
  %v263 = vadd.f32 %v105, %v262
  %264 = vmatmul.f32.gmra.mxu0 %v61
  %v265 = vpop.f32.mrf.mxu0
  %v266 = vadd.f32 %v105, %v265
  %267 = vmatmul.f32.gmra.mxu0 %v62
  %v268 = vpop.f32.mrf.mxu0
  %v269 = vadd.f32 %v105, %v268
  %270 = vmatmul.f32.gmra.mxu0 %v63
  %v271 = vpop.f32.mrf.mxu0
  %v272 = vadd.f32 %v105, %v271
  %273 = vmatmul.f32.gmra.mxu0 %v64
  %v274 = vpop.f32.mrf.mxu0
  %v275 = vadd.f32 %v105, %v274
  %276 = vmatmul.f32.gmra.mxu0 %v65
  %v277 = vpop.f32.mrf.mxu0
  %v278 = vadd.f32 %v105, %v277
  %279 = vmatmul.f32.gmra.mxu0 %v66
  %v280 = vpop.f32.mrf.mxu0
  %v281 = vadd.f32 %v105, %v280
  %282 = vmatmul.f32.gmra.mxu0 %v67
  %v283 = vpop.f32.mrf.mxu0
  %v284 = vadd.f32 %v105, %v283
  %285 = vmatmul.f32.gmra.mxu0 %v68
  %v286 = vpop.f32.mrf.mxu0
  %v287 = vadd.f32 %v105, %v286
  %288 = vmatmul.f32.gmra.mxu0 %v69
  %v289 = vpop.f32.mrf.mxu0
  %v290 = vadd.f32 %v105, %v289
  %291 = vmatmul.f32.gmra.mxu0 %v70
  %v292 = vpop.f32.mrf.mxu0
  %v293 = vadd.f32 %v105, %v292
  %294 = vmatmul.f32.gmra.mxu0 %v71
  %v295 = vpop.f32.mrf.mxu0
  %v296 = vadd.f32 %v105, %v295
  %297 = vmatmul.f32.gmra.mxu0 %v72
  %v298 = vpop.f32.mrf.mxu0
  %v299 = vadd.f32 %v105, %v298
  %300 = vmatmul.f32.gmra.mxu0 %v73
  %v301 = vpop.f32.mrf.mxu0
  %v302 = vadd.f32 %v105, %v301
  %303 = vmatmul.f32.gmra.mxu0 %v74
  %v304 = vpop.f32.mrf.mxu0
  %v305 = vadd.f32 %v105, %v304
  %306 = vmatmul.f32.gmra.mxu0 %v75
  %v307 = vpop.f32.mrf.mxu0
  %v308 = vadd.f32 %v105, %v307
  %309 = vmatmul.f32.gmra.mxu0 %v76
  %v310 = vpop.f32.mrf.mxu0
  %v311 = vadd.f32 %v105, %v310
  %312 = vmatmul.f32.gmra.mxu0 %v77
  %v313 = vpop.f32.mrf.mxu0
  %v314 = vadd.f32 %v105, %v313
  %315 = vmatmul.f32.gmra.mxu0 %v78
  %v316 = vpop.f32.mrf.mxu0
  %v317 = vadd.f32 %v105, %v316
  %318 = vmatmul.f32.gmra.mxu0 %v79
  %v319 = vpop.f32.mrf.mxu0
  %v320 = vadd.f32 %v105, %v319
  %321 = vmatmul.f32.gmra.mxu0 %v80
  %v322 = vpop.f32.mrf.mxu0
  %v323 = vadd.f32 %v105, %v322
  %324 = vmatmul.f32.gmra.mxu0 %v81
  %v325 = vpop.f32.mrf.mxu0
  %v326 = vadd.f32 %v105, %v325
  %327 = vmatmul.f32.gmra.mxu0 %v82
  %v328 = vpop.f32.mrf.mxu0
  %v329 = vadd.f32 %v105, %v328
  %330 = vmatmul.f32.gmra.mxu0 %v83
  %v331 = vpop.f32.mrf.mxu0
  %v332 = vadd.f32 %v105, %v331
  %333 = vmatmul.f32.gmra.mxu0 %v84
  %v334 = vpop.f32.mrf.mxu0
  %v335 = vadd.f32 %v105, %v334
  %336 = vmatmul.f32.gmra.mxu0 %v85
  %v337 = vpop.f32.mrf.mxu0
  %v338 = vadd.f32 %v105, %v337
  %339 = vmatmul.f32.gmra.mxu0 %v86
  %v340 = vpop.f32.mrf.mxu0
  %v341 = vadd.f32 %v105, %v340
  %342 = vdwg.mxu0
  %v343 = vmax.f32 %v125, 0.0
  %v344 = vmax.f32 %v128, 0.0
  %v345 = vmax.f32 %v131, 0.0
  %v346 = vmax.f32 %v134, 0.0
  %v347 = vmax.f32 %v137, 0.0
  %v348 = vmax.f32 %v140, 0.0
  %v349 = vmax.f32 %v143, 0.0
  %v350 = vmax.f32 %v146, 0.0
  %v351 = vmax.f32 %v149, 0.0
  %v352 = vmax.f32 %v152, 0.0
  %v353 = vmax.f32 %v155, 0.0
  %v354 = vmax.f32 %v158, 0.0
  %v355 = vmax.f32 %v161, 0.0
  %v356 = vmax.f32 %v164, 0.0
  %v357 = vmax.f32 %v167, 0.0
  %v358 = vmax.f32 %v170, 0.0
  %v359 = vmax.f32 %v173, 0.0
  %v360 = vmax.f32 %v176, 0.0
  %v361 = vmax.f32 %v179, 0.0
  %v362 = vmax.f32 %v182, 0.0
  %v363 = vmax.f32 %v185, 0.0
  %v364 = vmax.f32 %v188, 0.0
  %v365 = vmax.f32 %v191, 0.0
  %v366 = vmax.f32 %v194, 0.0
  %v367 = vmax.f32 %v197, 0.0
  %v368 = vmax.f32 %v200, 0.0
  %v369 = vmax.f32 %v203, 0.0
  %v370 = vmax.f32 %v206, 0.0
  %v371 = vmax.f32 %v209, 0.0
  %v372 = vmax.f32 %v212, 0.0
  %v373 = vmax.f32 %v215, 0.0
  %v374 = vmax.f32 %v218, 0.0
  %v375 = vmax.f32 %v221, 0.0
  %v376 = vmax.f32 %v224, 0.0
  %v377 = vmax.f32 %v227, 0.0
  %v378 = vmax.f32 %v230, 0.0
  %v379 = vmax.f32 %v233, 0.0
  %v380 = vmax.f32 %v236, 0.0
  %v381 = vmax.f32 %v239, 0.0
  %v382 = vmax.f32 %v242, 0.0
  %v383 = vmax.f32 %v245, 0.0
  %v384 = vmax.f32 %v248, 0.0
  %v385 = vmax.f32 %v251, 0.0
  %v386 = vmax.f32 %v254, 0.0
  %v387 = vmax.f32 %v257, 0.0
  %v388 = vmax.f32 %v260, 0.0
  %v389 = vmax.f32 %v263, 0.0
  %v390 = vmax.f32 %v266, 0.0
  %v391 = vmax.f32 %v269, 0.0
  %v392 = vmax.f32 %v272, 0.0
  %v393 = vmax.f32 %v275, 0.0
  %v394 = vmax.f32 %v278, 0.0
  %v395 = vmax.f32 %v281, 0.0
  %v396 = vmax.f32 %v284, 0.0
  %v397 = vmax.f32 %v287, 0.0
  %v398 = vmax.f32 %v290, 0.0
  %v399 = vmax.f32 %v293, 0.0
  %v400 = vmax.f32 %v296, 0.0
  %v401 = vmax.f32 %v299, 0.0
  %v402 = vmax.f32 %v302, 0.0
  %v403 = vmax.f32 %v305, 0.0
  %v404 = vmax.f32 %v308, 0.0
  %v405 = vmax.f32 %v311, 0.0
  %v406 = vmax.f32 %v314, 0.0
  %v407 = vmax.f32 %v317, 0.0
  %v408 = vmax.f32 %v320, 0.0
  %v409 = vmax.f32 %v323, 0.0
  %v410 = vmax.f32 %v326, 0.0
  %v411 = vmax.f32 %v329, 0.0
  %v412 = vmax.f32 %v332, 0.0
  %v413 = vmax.f32 %v335, 0.0
  %v414 = vmax.f32 %v338, 0.0
  %v415 = vmax.f32 %v341, 0.0
  %416 = vst [vmem:[%s3] sm:$0xff] %v343
  %417 = vst [vmem:[%s3 + $0x8] sm:$0xff] %v344
  %418 = vst [vmem:[%s3 + $0x10] sm:$0xff] %v345
  %419 = vst [vmem:[%s3 + $0x18] sm:$0xff] %v346
  %420 = vst [vmem:[%s3 + $0x20] sm:$0xff] %v347
  %421 = vst [vmem:[%s3 + $0x28] sm:$0xff] %v348
  %422 = vst [vmem:[%s3 + $0x30] sm:$0xff] %v349
  %423 = vst [vmem:[%s3 + $0x38] sm:$0xff] %v350
  %424 = vst [vmem:[%s3 + $0x40] sm:$0xff] %v351
  %425 = vst [vmem:[%s3 + $0x48] sm:$0xff] %v352
  %426 = vst [vmem:[%s3 + $0x50] sm:$0xff] %v353
  %427 = vst [vmem:[%s3 + $0x58] sm:$0xff] %v354
  %428 = vst [vmem:[%s3 + $0x60] sm:$0xff] %v355
  %429 = vst [vmem:[%s3 + $0x68] sm:$0xff] %v356
  %430 = vst [vmem:[%s3 + $0x70] sm:$0xff] %v357
  %431 = vst [vmem:[%s3 + $0x78] sm:$0xff] %v358
  %432 = vst [vmem:[%s3 + $0x80] sm:$0xff] %v359
  %433 = vst [vmem:[%s3 + $0x88] sm:$0xff] %v360
  %434 = vst [vmem:[%s3 + $0x90] sm:$0xff] %v361
  %435 = vst [vmem:[%s3 + $0x98] sm:$0xff] %v362
  %436 = vst [vmem:[%s3 + $0xa0] sm:$0xff] %v363
  %437 = vst [vmem:[%s3 + $0xa8] sm:$0xff] %v364
  %438 = vst [vmem:[%s3 + $0xb0] sm:$0xff] %v365
  %439 = vst [vmem:[%s3 + $0xb8] sm:$0xff] %v366
  %440 = vst [vmem:[%s3 + $0xc0] sm:$0xff] %v367
  %441 = vst [vmem:[%s3 + $0xc8] sm:$0xff] %v368
  %442 = vst [vmem:[%s3 + $0xd0] sm:$0xff] %v369
  %443 = vst [vmem:[%s3 + $0xd8] sm:$0xff] %v370
  %444 = vst [vmem:[%s3 + $0xe0] sm:$0xff] %v371
  %445 = vst [vmem:[%s3 + $0xe8] sm:$0xff] %v372
  %446 = vst [vmem:[%s3 + $0xf0] sm:$0xff] %v373
  %447 = vst [vmem:[%s3 + $0xf8] sm:$0xff] %v374
  %448 = vst [vmem:[%s3 + $0x100] sm:$0xff] %v375
  %449 = vst [vmem:[%s3 + $0x108] sm:$0xff] %v376
  %450 = vst [vmem:[%s3 + $0x110] sm:$0xff] %v377
  %451 = vst [vmem:[%s3 + $0x118] sm:$0xff] %v378
  %452 = vst [vmem:[%s3 + $0x120] sm:$0xff] %v379
  %453 = vst [vmem:[%s3 + $0x128] sm:$0xff] %v380
  %454 = vst [vmem:[%s3 + $0x130] sm:$0xff] %v381
  %455 = vst [vmem:[%s3 + $0x138] sm:$0xff] %v382
  %456 = vst [vmem:[%s3 + $0x140] sm:$0xff] %v383
  %457 = vst [vmem:[%s3 + $0x148] sm:$0xff] %v384
  %458 = vst [vmem:[%s3 + $0x150] sm:$0xff] %v385
  %459 = vst [vmem:[%s3 + $0x158] sm:$0xff] %v386
  %460 = vst [vmem:[%s3 + $0x160] sm:$0xff] %v387
  %461 = vst [vmem:[%s3 + $0x168] sm:$0xff] %v388
  %462 = vst [vmem:[%s3 + $0x170] sm:$0xff] %v389
  %463 = vst [vmem:[%s3 + $0x178] sm:$0xff] %v390
  %464 = vst [vmem:[%s3 + $0x180] sm:$0xff] %v391
  %465 = vst [vmem:[%s3 + $0x188] sm:$0xff] %v392
  %466 = vst [vmem:[%s3 + $0x190] sm:$0xff] %v393
  %467 = vst [vmem:[%s3 + $0x198] sm:$0xff] %v394
  %468 = vst [vmem:[%s3 + $0x1a0] sm:$0xff] %v395
  %469 = vst [vmem:[%s3 + $0x1a8] sm:$0xff] %v396
  %470 = vst [vmem:[%s3 + $0x1b0] sm:$0xff] %v397
  %471 = vst [vmem:[%s3 + $0x1b8] sm:$0xff] %v398
  %472 = vst [vmem:[%s3 + $0x1c0] sm:$0xff] %v399
  %473 = vst [vmem:[%s3 + $0x1c8] sm:$0xff] %v400
  %474 = vst [vmem:[%s3 + $0x1d0] sm:$0xff] %v401
  %475 = vst [vmem:[%s3 + $0x1d8] sm:$0xff] %v402
  %476 = vst [vmem:[%s3 + $0x1e0] sm:$0xff] %v403
  %477 = vst [vmem:[%s3 + $0x1e8] sm:$0xff] %v404
  %478 = vst [vmem:[%s3 + $0x1f0] sm:$0xff] %v405
  %479 = vst [vmem:[%s3 + $0x1f8] sm:$0xff] %v406
  %480 = vst [vmem:[%s3 + $0x200] sm:$0xff] %v407
  %481 = vst [vmem:[%s3 + $0x208] sm:$0xff] %v408
  %482 = vst [vmem:[%s3 + $0x210] sm:$0xff] %v409
  %483 = vst [vmem:[%s3 + $0x218] sm:$0xff] %v410
  %484 = vst [vmem:[%s3 + $0x220] sm:$0xff] %v411
  %485 = vst [vmem:[%s3 + $0x228] sm:$0xff] %v412
  %486 = vst [vmem:[%s3 + $0x230] sm:$0xff] %v413
  %487 = vst [vmem:[%s3 + $0x238] sm:$0xff] %v414
  %488 = vst [vmem:[%s3 + $0x240] sm:$0x3] %v415
  // Predicated region
  $region14: #{betavae_forward.16} parent=0 // pred_check
    _
  $region15: #{betavae_forward.16} parent=0 // pred_check_branch
    %490 = sbr.rel (0) target = $region17
  $region16: #{betavae_forward.16} parent=0 // pred_region
    _
  $region17: #{betavae_forward.16} parent=0 // pred_fallthru
    _
  // Predicated region
  $region18: #{betavae_forward.16} parent=0 // pred_check
    _
  $region19: #{betavae_forward.16} parent=0 // pred_check_branch
    %492 = sbr.rel (0) target = $region21
  $region20: #{betavae_forward.16} parent=0 // pred_region
    _
  $region21: #{betavae_forward.16} parent=0 // pred_fallthru
    _

// kernel: tile.38
$region0: #{tile.38}
  #allocation0 [shape = 's32[1]{0}', space=sflag, size = 0x4, scoped, tag = 'scoped memory for tile.38']
  %s0 = inlined_call_operand.vmem [shape: f32[3], index: 0, kind: input, shape index: {}]
  %s1 = inlined_call_operand.vmem [shape: f32[4,3], index: 1, kind: output, shape index: {}]
  // Predicated region
  $region2: #{tile.38} parent=0 // pred_check
    _
  $region3: #{tile.38} parent=0 // pred_check_branch
    %3 = sbr.rel (0) target = $region5
  $region4: #{tile.38} parent=0 // pred_region
    _
  $region5: #{tile.38} parent=0 // pred_fallthru
    _
  %v4 = vld [vmem:[%s0] ss:$0 sm:$0xff]
  %5 = vst [vmem:[%s1] sm:$0xf] %v4

// kernel: tile.39
$region0: #{tile.39}
  %s0 = inlined_call_operand.vmem [shape: f32[4,3], index: 0, kind: input, shape index: {}]
  %s1 = inlined_call_operand.vmem [shape: f32[1,12], index: 1, kind: output, shape index: {}]
  $region1: #{tile.39} parent=0
    #allocation0 [shape = 'u8[4096]{0}', space=vmem, size = 0x1000, scoped, tag = 'scoped mem for output reshape']
    #allocation1 [shape = 'u8[4096]{0}', space=vmem, size = 0x1000, scoped, tag = 'scoped mem for input reshape']
    %s3 = ssub.s32 16, 1
    %v4 = vld [vmem:[%s0] sm:%s3]
    %5 = vst [vmem:[#allocation1] sm:%s3] %v4
    %v6 = vld [vmem:[#allocation1] sm:$0x1]
    %vm7 = vcmask 23552
    %8 = vst.msk [vmem:[#allocation0] sm:$0x1] %vm7, %v6
    %s9 = scalar_lea.vmem [#allocation1], 3
    %v10 = vld [vmem:[%s9] sm:$0x1]
    %11 = vrot.lane.b32.xlu0 %v10, 9
    %v12 = vpop.permute.xlu0 %11
    %vm13 = vcmask 97352
    %14 = vst.msk [vmem:[#allocation0] sm:$0x1] %vm13, %v12
    %s15 = scalar_lea.vmem [#allocation1], 2
    %v16 = vld [vmem:[%s15] sm:$0x1]
    %17 = vrot.lane.b32.xlu0 %v16, 6
    %v18 = vpop.permute.xlu0 %17
    %vm19 = vcmask 72752
    %20 = vst.msk [vmem:[#allocation0] sm:$0x1] %vm19, %v18
    %s21 = scalar_lea.vmem [#allocation1], 1
    %v22 = vld [vmem:[%s21] sm:$0x1]
    %23 = vrot.lane.b32.xlu0 %v22, 3
    %v24 = vpop.permute.xlu0 %23
    %vm25 = vcmask 48152
    %26 = vst.msk [vmem:[#allocation0] sm:$0x1] %vm25, %v24
    %s28 = ssub.s32 2, 1
    %v29 = vld [vmem:[#allocation0] sm:%s28]
    %s31 = ssub.s32 2, 1
    %32 = vst [vmem:[%s1] sm:%s31] %v29

// kernel: betavae_forward.17
$region0: #{betavae_forward.17}
  #allocation0 [shape = 'u32[]', space=smem, size = 0x4, offset = 0x4, fixed_abs, tag = 'smem constant byte address 0x4 - core index']
  #allocation1 [shape = 'u32[72,128]{1,0:T(1,128)}', space=vmem, size = 0x9000, scoped, tag = 'internal scratch']
  %s0 = inlined_call_operand.vmem [shape: f32[2184,128], index: 0, kind: input, shape index: {}]
  %s1 = inlined_call_operand.vmem [shape: f32[128,12], index: 1, kind: input, shape index: {}]
  %s2 = inlined_call_operand.vmem [shape: f32[1,12], index: 2, kind: input, shape index: {}]
  %s3 = inlined_call_operand.vmem [shape: f32[2184,12], index: 3, kind: output, shape index: {}]
  %s4 = sld [smem:[#allocation0]]
  $region45: #{betavae_forward.17} parent=0
    _
  %s6 = ssub.s32 1, %s4
  %s7 = scalar_select 0, %s6, %s4
  loop: start=0, step=1, limit=5
  $region2: #{betavae_forward.17} parent=0 // loop_pre_header
    _
  $region3: #{betavae_forward.17} parent=0 // loop_header
    %s9 = sphi 0, %s13
    %p10 = scmp.ge.s32.totalorder %s9, 5
    %s19 = sphi 0, %s21
    %s22 = sphi 0, %s19
    %s23 = sphi 0, %s22
    %s39 = sphi 0, %s23
    %s43 = sphi 0, %s43
    %s45 = sphi 0, %s43
    %s46 = sphi 0, %s45
    %s60 = sphi 0, %s46
    %s64 = sphi 0, %s64
    %s66 = sphi 0, %s64
    %s67 = sphi 0, %s66
    %s81 = sphi 0, %s67
    %s87 = sphi 0, %s89
    %s90 = sphi 0, %s87
    %s91 = sphi 0, %s90
    %s107 = sphi 0, %s91
  $region4: #{betavae_forward.17} parent=0 // loop_header_branch
    %12 = sbr.rel (%p10) target = $region8
  $region5: #{betavae_forward.17} parent=0 // loop_body
    %s14 = ssub.s32 %s9, 1
    %s15 = ssub.s32 %s9, 2
    %s16 = sadd.s32 %s9, 1
    %s17 = ssub.s32 %s9, %s16
    %p18 = scmp.eq.s32.totalorder %s17, 0
    %s20 = sadd.s32 %s19, 1
    %s21 = scalar_select %p18, %s19, %s20
    %p24 = pneg %p18
    %p25 = scmp.eq.s32.totalorder %s9, 2
    %p26 = por %p24, %p25
    %p27 = scmp.ne.s32.totalorder %s19, %s22
    %p28 = scmp.eq.s32.totalorder %s9, 0
    %p29 = por %p27, %p28
    %p30 = scmp.ne.s32.totalorder %s19, %s22
    %p31 = scmp.eq.s32.totalorder %s14, 2
    %p32 = por %p30, %p31
    %p33 = scmp.ne.s32.totalorder %s22, %s23
    %p34 = scmp.eq.s32.totalorder %s14, 0
    %p35 = por %p33, %p34
    %p36 = scmp.ne.s32.totalorder %s22, %s23
    %p37 = scmp.eq.s32.totalorder %s15, 2
    %p38 = por %p36, %p37
    %p40 = scmp.ne.s32.totalorder %s23, %s39
    %p41 = scmp.eq.s32.totalorder %s15, 0
    %p42 = por %p40, %p41
    %s44 = sadd.s32 %s43, 1
    %p47 = scmp.eq.s32.totalorder %s9, 2
    %p48 = scmp.ne.s32.totalorder %s43, %s45
    %p49 = scmp.eq.s32.totalorder %s9, 0
    %p50 = por %p48, %p49
    %p51 = scmp.ne.s32.totalorder %s43, %s45
    %p52 = scmp.eq.s32.totalorder %s14, 2
    %p53 = por %p51, %p52
    %p54 = scmp.ne.s32.totalorder %s45, %s46
    %p55 = scmp.eq.s32.totalorder %s14, 0
    %p56 = por %p54, %p55
    %p57 = scmp.ne.s32.totalorder %s45, %s46
    %p58 = scmp.eq.s32.totalorder %s15, 2
    %p59 = por %p57, %p58
    %p61 = scmp.ne.s32.totalorder %s46, %s60
    %p62 = scmp.eq.s32.totalorder %s15, 0
    %p63 = por %p61, %p62
    %s65 = sadd.s32 %s64, 1
    %p68 = scmp.eq.s32.totalorder %s9, 2
    %p69 = scmp.ne.s32.totalorder %s64, %s66
    %p70 = scmp.eq.s32.totalorder %s9, 0
    %p71 = por %p69, %p70
    %p72 = scmp.ne.s32.totalorder %s64, %s66
    %p73 = scmp.eq.s32.totalorder %s14, 2
    %p74 = por %p72, %p73
    %p75 = scmp.ne.s32.totalorder %s66, %s67
    %p76 = scmp.eq.s32.totalorder %s14, 0
    %p77 = por %p75, %p76
    %p78 = scmp.ne.s32.totalorder %s66, %s67
    %p79 = scmp.eq.s32.totalorder %s15, 2
    %p80 = por %p78, %p79
    %p82 = scmp.ne.s32.totalorder %s67, %s81
    %p83 = scmp.eq.s32.totalorder %s15, 0
    %p84 = por %p82, %p83
    %s85 = ssub.s32 %s9, %s16
    %p86 = scmp.eq.s32.totalorder %s85, 0
    %s88 = sadd.s32 %s87, 1
    %s89 = scalar_select %p86, %s87, %s88
    %p92 = pneg %p86
    %p93 = scmp.eq.s32.totalorder %s9, 2
    %p94 = por %p92, %p93
    %p95 = scmp.ne.s32.totalorder %s87, %s90
    %p96 = scmp.eq.s32.totalorder %s9, 0
    %p97 = por %p95, %p96
    %p98 = scmp.ne.s32.totalorder %s87, %s90
    %p99 = scmp.eq.s32.totalorder %s14, 2
    %p100 = por %p98, %p99
    %p101 = scmp.ne.s32.totalorder %s90, %s91
    %p102 = scmp.eq.s32.totalorder %s14, 0
    %p103 = por %p101, %p102
    %p104 = scmp.ne.s32.totalorder %s90, %s91
    %p105 = scmp.eq.s32.totalorder %s15, 2
    %p106 = por %p104, %p105
    %p108 = scmp.ne.s32.totalorder %s91, %s107
    %p109 = scmp.eq.s32.totalorder %s15, 0
    %p110 = por %p108, %p109
    %p111 = scmp.le.s32.totalorder 1, %s9
    %p112 = scmp.lt.s32.totalorder %s9, 4
    %p113 = pnand %p111, %p112
    %p114 = pneg %p113
    // Predicated region
    $region9: #{betavae_forward.17} parent=5 // pred_check
      _
    $region10: #{betavae_forward.17} parent=5 // pred_check_branch
      %116 = sbr.rel (%p113) target = $region12
    $region11: #{betavae_forward.17} parent=5 // pred_region
      %s117 = ssub.s32 %s9, 1
      // Predicated region
      $region13: #{betavae_forward.17} parent=11 // pred_check
        %p118 = pneg %p56
      $region14: #{betavae_forward.17} parent=11 // pred_check_branch
        %120 = sbr.rel (%p118) target = $region16
      $region15: #{betavae_forward.17} parent=11 // pred_region
        _
      $region16: #{betavae_forward.17} parent=11 // pred_fallthru
        _
      // Predicated region
      $region17: #{betavae_forward.17} parent=11 // pred_check
        %p121 = pneg %p77
      $region18: #{betavae_forward.17} parent=11 // pred_check_branch
        %123 = sbr.rel (%p121) target = $region20
      $region19: #{betavae_forward.17} parent=11 // pred_region
        _
      $region20: #{betavae_forward.17} parent=11 // pred_fallthru
        _
    $region12: #{betavae_forward.17} parent=5 // pred_fallthru
      _
    %p124 = scmp.lt.s32.totalorder %s9, 3
    // Predicated region
    $region21: #{betavae_forward.17} parent=5 // pred_check
      %p125 = pneg %p124
    $region22: #{betavae_forward.17} parent=5 // pred_check_branch
      %127 = sbr.rel (%p125) target = $region24
    $region23: #{betavae_forward.17} parent=5 // pred_region
      // Predicated region
      $region25: #{betavae_forward.17} parent=23 // pred_check
        %p128 = pneg %p29
      $region26: #{betavae_forward.17} parent=23 // pred_check_branch
        %130 = sbr.rel (%p128) target = $region28
      $region27: #{betavae_forward.17} parent=23 // pred_region
        %s131 = smul.u32 91, %s9
        %p132 = scmp.lt.s32.totalorder %s131, 272
        %s133 = scalar_select %p132, %s131, 272
        %s134 = smul.addr %s133, 8
        %s135 = scalar_lea.vmem %s0, %s134
        %s136 = smul.u32 91, %s9
      $region28: #{betavae_forward.17} parent=23 // pred_fallthru
        _
    $region24: #{betavae_forward.17} parent=5 // pred_fallthru
      _
    %p137 = scmp.le.s32.totalorder 1, %s9
    %p138 = scmp.lt.s32.totalorder %s9, 4
    %p139 = pnand %p137, %p138
    %p140 = pneg %p139
    // Predicated region
    $region29: #{betavae_forward.17} parent=5 // pred_check
      _
    $region30: #{betavae_forward.17} parent=5 // pred_check_branch
      %142 = sbr.rel (%p139) target = $region32
    $region31: #{betavae_forward.17} parent=5 // pred_region
      %s143 = ssub.s32 %s9, 1
      %s144 = smul.u32 91, %s14
      %p145 = scmp.lt.s32.totalorder %s144, 272
      %s146 = scalar_select %p145, %s144, 272
      %s147 = smul.addr %s146, 8
      %s148 = scalar_lea.vmem %s0, %s147
      %p149 = pneg %p35
      %p150 = pneg %p32
      %p151 = pneg %p56
      %p152 = pneg %p53
      %p153 = pneg %p77
      %p154 = pneg %p74
      %p155 = pneg %p103
      %p156 = pneg %p100
      %s157 = smul.u32 91, %s14
      %p158 = scmp.lt.s32.totalorder %s157, 272
      %s159 = scalar_select %p158, %s157, 272
      %s160 = smul.addr %s159, 8
      %s161 = scalar_lea.vmem %s3, %s160
      %s162 = smul.u32 91, %s14
      %p163 = scmp.lt.s32.totalorder %s162, 272
      %s164 = scalar_select %p163, %s162, 272
      %s165 = smul.addr %s164, 8
      %s166 = scalar_lea.vmem %s0, %s165
      %s167 = smul.u32 91, %s14
      %s168 = smul.u32 91, %s14
      %p169 = scmp.lt.s32.totalorder %s168, 272
      %s170 = scalar_select %p169, %s168, 272
      %s171 = smul.addr %s170, 8
      %s172 = scalar_lea.vmem %s3, %s171
      %s173 = smul.u32 91, %s14
      %v174 = vld [vmem:[%s166] sm:$0xff]
      %v175 = vld [vmem:[%s166 + $0x8] sm:$0xff]
      %v176 = vld [vmem:[%s166 + $0x10] sm:$0xff]
      %v177 = vld [vmem:[%s166 + $0x18] sm:$0xff]
      %v178 = vld [vmem:[%s166 + $0x20] sm:$0xff]
      %v179 = vld [vmem:[%s166 + $0x28] sm:$0xff]
      %v180 = vld [vmem:[%s166 + $0x30] sm:$0xff]
      %v181 = vld [vmem:[%s166 + $0x38] sm:$0xff]
      %v182 = vld [vmem:[%s166 + $0x40] sm:$0xff]
      %v183 = vld [vmem:[%s166 + $0x48] sm:$0xff]
      %v184 = vld [vmem:[%s166 + $0x50] sm:$0xff]
      %v185 = vld [vmem:[%s166 + $0x58] sm:$0xff]
      %v186 = vld [vmem:[%s166 + $0x60] sm:$0xff]
      %v187 = vld [vmem:[%s166 + $0x68] sm:$0xff]
      %v188 = vld [vmem:[%s166 + $0x70] sm:$0xff]
      %v189 = vld [vmem:[%s166 + $0x78] sm:$0xff]
      %v190 = vld [vmem:[%s166 + $0x80] sm:$0xff]
      %v191 = vld [vmem:[%s166 + $0x88] sm:$0xff]
      %v192 = vld [vmem:[%s166 + $0x90] sm:$0xff]
      %v193 = vld [vmem:[%s166 + $0x98] sm:$0xff]
      %v194 = vld [vmem:[%s166 + $0xa0] sm:$0xff]
      %v195 = vld [vmem:[%s166 + $0xa8] sm:$0xff]
      %v196 = vld [vmem:[%s166 + $0xb0] sm:$0xff]
      %v197 = vld [vmem:[%s166 + $0xb8] sm:$0xff]
      %v198 = vld [vmem:[%s166 + $0xc0] sm:$0xff]
      %v199 = vld [vmem:[%s166 + $0xc8] sm:$0xff]
      %v200 = vld [vmem:[%s166 + $0xd0] sm:$0xff]
      %v201 = vld [vmem:[%s166 + $0xd8] sm:$0xff]
      %v202 = vld [vmem:[%s166 + $0xe0] sm:$0xff]
      %v203 = vld [vmem:[%s166 + $0xe8] sm:$0xff]
      %v204 = vld [vmem:[%s166 + $0xf0] sm:$0xff]
      %v205 = vld [vmem:[%s166 + $0xf8] sm:$0xff]
      %v206 = vld [vmem:[%s166 + $0x100] sm:$0xff]
      %v207 = vld [vmem:[%s166 + $0x108] sm:$0xff]
      %v208 = vld [vmem:[%s166 + $0x110] sm:$0xff]
      %v209 = vld [vmem:[%s166 + $0x118] sm:$0xff]
      %v210 = vld [vmem:[%s166 + $0x120] sm:$0xff]
      %v211 = vld [vmem:[%s166 + $0x128] sm:$0xff]
      %v212 = vld [vmem:[%s166 + $0x130] sm:$0xff]
      %v213 = vld [vmem:[%s166 + $0x138] sm:$0xff]
      %v214 = vld [vmem:[%s166 + $0x140] sm:$0xff]
      %v215 = vld [vmem:[%s166 + $0x148] sm:$0xff]
      %v216 = vld [vmem:[%s166 + $0x150] sm:$0xff]
      %v217 = vld [vmem:[%s166 + $0x158] sm:$0xff]
      %v218 = vld [vmem:[%s166 + $0x160] sm:$0xff]
      %v219 = vld [vmem:[%s166 + $0x168] sm:$0xff]
      %v220 = vld [vmem:[%s166 + $0x170] sm:$0xff]
      %v221 = vld [vmem:[%s166 + $0x178] sm:$0xff]
      %v222 = vld [vmem:[%s166 + $0x180] sm:$0xff]
      %v223 = vld [vmem:[%s166 + $0x188] sm:$0xff]
      %v224 = vld [vmem:[%s166 + $0x190] sm:$0xff]
      %v225 = vld [vmem:[%s166 + $0x198] sm:$0xff]
      %v226 = vld [vmem:[%s166 + $0x1a0] sm:$0xff]
      %v227 = vld [vmem:[%s166 + $0x1a8] sm:$0xff]
      %v228 = vld [vmem:[%s166 + $0x1b0] sm:$0xff]
      %v229 = vld [vmem:[%s166 + $0x1b8] sm:$0xff]
      %v230 = vld [vmem:[%s166 + $0x1c0] sm:$0xff]
      %v231 = vld [vmem:[%s166 + $0x1c8] sm:$0xff]
      %v232 = vld [vmem:[%s166 + $0x1d0] sm:$0xff]
      %v233 = vld [vmem:[%s166 + $0x1d8] sm:$0xff]
      %v234 = vld [vmem:[%s166 + $0x1e0] sm:$0xff]
      %v235 = vld [vmem:[%s166 + $0x1e8] sm:$0xff]
      %v236 = vld [vmem:[%s166 + $0x1f0] sm:$0xff]
      %v237 = vld [vmem:[%s166 + $0x1f8] sm:$0xff]
      %v238 = vld [vmem:[%s166 + $0x200] sm:$0xff]
      %v239 = vld [vmem:[%s166 + $0x208] sm:$0xff]
      %v240 = vld [vmem:[%s166 + $0x210] sm:$0xff]
      %v241 = vld [vmem:[%s166 + $0x218] sm:$0xff]
      %v242 = vld [vmem:[%s166 + $0x220] sm:$0xff]
      %v243 = vld [vmem:[%s166 + $0x228] sm:$0xff]
      %v244 = vld [vmem:[%s166 + $0x230] sm:$0xff]
      %v245 = vld [vmem:[%s166 + $0x238] sm:$0xff]
      %v246 = vld [vmem:[%s166 + $0x240] sm:$0xff]
      %v247 = vld [vmem:[%s166 + $0x248] sm:$0xff]
      %v248 = vld [vmem:[%s166 + $0x250] sm:$0xff]
      %v249 = vld [vmem:[%s166 + $0x258] sm:$0xff]
      %v250 = vld [vmem:[%s166 + $0x260] sm:$0xff]
      %v251 = vld [vmem:[%s166 + $0x268] sm:$0xff]
      %v252 = vld [vmem:[%s166 + $0x270] sm:$0xff]
      %v253 = vld [vmem:[%s166 + $0x278] sm:$0xff]
      %v254 = vld [vmem:[%s166 + $0x280] sm:$0xff]
      %v255 = vld [vmem:[%s166 + $0x288] sm:$0xff]
      %v256 = vld [vmem:[%s166 + $0x290] sm:$0xff]
      %v257 = vld [vmem:[%s166 + $0x298] sm:$0xff]
      %v258 = vld [vmem:[%s166 + $0x2a0] sm:$0xff]
      %v259 = vld [vmem:[%s166 + $0x2a8] sm:$0xff]
      %v260 = vld [vmem:[%s166 + $0x2b0] sm:$0xff]
      %v261 = vld [vmem:[%s166 + $0x2b8] sm:$0xff]
      %v262 = vld [vmem:[%s166 + $0x2c0] sm:$0xff]
      %v263 = vld [vmem:[%s166 + $0x2c8] sm:$0xff]
      %v264 = vld [vmem:[%s166 + $0x2d0] sm:$0xff]
      %v265 = vld [vmem:[%s1] sm:$0xff]
      %v266 = vld [vmem:[%s1 + $0x8] sm:$0xff]
      %v267 = vld [vmem:[%s1 + $0x10] sm:$0xff]
      %v268 = vld [vmem:[%s1 + $0x18] sm:$0xff]
      %v269 = vld [vmem:[%s1 + $0x20] sm:$0xff]
      %v270 = vld [vmem:[%s1 + $0x28] sm:$0xff]
      %v271 = vld [vmem:[%s1 + $0x30] sm:$0xff]
      %v272 = vld [vmem:[%s1 + $0x38] sm:$0xff]
      %v273 = vld [vmem:[%s1 + $0x40] sm:$0xff]
      %v274 = vld [vmem:[%s1 + $0x48] sm:$0xff]
      %v275 = vld [vmem:[%s1 + $0x50] sm:$0xff]
      %v276 = vld [vmem:[%s1 + $0x58] sm:$0xff]
      %v277 = vld [vmem:[%s1 + $0x60] sm:$0xff]
      %v278 = vld [vmem:[%s1 + $0x68] sm:$0xff]
      %v279 = vld [vmem:[%s1 + $0x70] sm:$0xff]
      %v280 = vld [vmem:[%s1 + $0x78] sm:$0xff]
      %v281 = vld [vmem:[%s2] sm:$0x1]
      %v283 = vperm.slane %v281, 0
      %285 = vmatpush.msra.mxu0 %v280
      %286 = vmatpush.msra.mxu0 %v279
      %287 = vmatpush.msra.mxu0 %v278
      %288 = vmatpush.msra.mxu0 %v277
      %289 = vmatpush.msra.mxu0 %v276
      %290 = vmatpush.msra.mxu0 %v275
      %291 = vmatpush.msra.mxu0 %v274
      %292 = vmatpush.msra.mxu0 %v273
      %293 = vmatpush.msra.mxu0 %v272
      %294 = vmatpush.msra.mxu0 %v271
      %295 = vmatpush.msra.mxu0 %v270
      %296 = vmatpush.msra.mxu0 %v269
      %297 = vmatpush.msra.mxu0 %v268
      %298 = vmatpush.msra.mxu0 %v267
      %299 = vmatpush.msra.mxu0 %v266
      %300 = vmatpush.msra.mxu0 %v265
      %301 = vmatmul.f32.gmra.mxu0 %v174
      %v302 = vpop.f32.mrf.mxu0
      %v303 = vadd.f32 %v283, %v302
      %304 = vmatmul.f32.gmra.mxu0 %v175
      %v305 = vpop.f32.mrf.mxu0
      %v306 = vadd.f32 %v283, %v305
      %307 = vmatmul.f32.gmra.mxu0 %v176
      %v308 = vpop.f32.mrf.mxu0
      %v309 = vadd.f32 %v283, %v308
      %310 = vmatmul.f32.gmra.mxu0 %v177
      %v311 = vpop.f32.mrf.mxu0
      %v312 = vadd.f32 %v283, %v311
      %313 = vmatmul.f32.gmra.mxu0 %v178
      %v314 = vpop.f32.mrf.mxu0
      %v315 = vadd.f32 %v283, %v314
      %316 = vmatmul.f32.gmra.mxu0 %v179
      %v317 = vpop.f32.mrf.mxu0
      %v318 = vadd.f32 %v283, %v317
      %319 = vmatmul.f32.gmra.mxu0 %v180
      %v320 = vpop.f32.mrf.mxu0
      %v321 = vadd.f32 %v283, %v320
      %322 = vmatmul.f32.gmra.mxu0 %v181
      %v323 = vpop.f32.mrf.mxu0
      %v324 = vadd.f32 %v283, %v323
      %325 = vmatmul.f32.gmra.mxu0 %v182
      %v326 = vpop.f32.mrf.mxu0
      %v327 = vadd.f32 %v283, %v326
      %328 = vmatmul.f32.gmra.mxu0 %v183
      %v329 = vpop.f32.mrf.mxu0
      %v330 = vadd.f32 %v283, %v329
      %331 = vmatmul.f32.gmra.mxu0 %v184
      %v332 = vpop.f32.mrf.mxu0
      %v333 = vadd.f32 %v283, %v332
      %334 = vmatmul.f32.gmra.mxu0 %v185
      %v335 = vpop.f32.mrf.mxu0
      %v336 = vadd.f32 %v283, %v335
      %337 = vmatmul.f32.gmra.mxu0 %v186
      %v338 = vpop.f32.mrf.mxu0
      %v339 = vadd.f32 %v283, %v338
      %340 = vmatmul.f32.gmra.mxu0 %v187
      %v341 = vpop.f32.mrf.mxu0
      %v342 = vadd.f32 %v283, %v341
      %343 = vmatmul.f32.gmra.mxu0 %v188
      %v344 = vpop.f32.mrf.mxu0
      %v345 = vadd.f32 %v283, %v344
      %346 = vmatmul.f32.gmra.mxu0 %v189
      %v347 = vpop.f32.mrf.mxu0
      %v348 = vadd.f32 %v283, %v347
      %349 = vmatmul.f32.gmra.mxu0 %v190
      %v350 = vpop.f32.mrf.mxu0
      %v351 = vadd.f32 %v283, %v350
      %352 = vmatmul.f32.gmra.mxu0 %v191
      %v353 = vpop.f32.mrf.mxu0
      %v354 = vadd.f32 %v283, %v353
      %355 = vmatmul.f32.gmra.mxu0 %v192
      %v356 = vpop.f32.mrf.mxu0
      %v357 = vadd.f32 %v283, %v356
      %358 = vmatmul.f32.gmra.mxu0 %v193
      %v359 = vpop.f32.mrf.mxu0
      %v360 = vadd.f32 %v283, %v359
      %361 = vmatmul.f32.gmra.mxu0 %v194
      %v362 = vpop.f32.mrf.mxu0
      %v363 = vadd.f32 %v283, %v362
      %364 = vmatmul.f32.gmra.mxu0 %v195
      %v365 = vpop.f32.mrf.mxu0
      %v366 = vadd.f32 %v283, %v365
      %367 = vmatmul.f32.gmra.mxu0 %v196
      %v368 = vpop.f32.mrf.mxu0
      %v369 = vadd.f32 %v283, %v368
      %370 = vmatmul.f32.gmra.mxu0 %v197
      %v371 = vpop.f32.mrf.mxu0
      %v372 = vadd.f32 %v283, %v371
      %373 = vmatmul.f32.gmra.mxu0 %v198
      %v374 = vpop.f32.mrf.mxu0
      %v375 = vadd.f32 %v283, %v374
      %376 = vmatmul.f32.gmra.mxu0 %v199
      %v377 = vpop.f32.mrf.mxu0
      %v378 = vadd.f32 %v283, %v377
      %379 = vmatmul.f32.gmra.mxu0 %v200
      %v380 = vpop.f32.mrf.mxu0
      %v381 = vadd.f32 %v283, %v380
      %382 = vmatmul.f32.gmra.mxu0 %v201
      %v383 = vpop.f32.mrf.mxu0
      %v384 = vadd.f32 %v283, %v383
      %385 = vmatmul.f32.gmra.mxu0 %v202
      %v386 = vpop.f32.mrf.mxu0
      %v387 = vadd.f32 %v283, %v386
      %388 = vmatmul.f32.gmra.mxu0 %v203
      %v389 = vpop.f32.mrf.mxu0
      %v390 = vadd.f32 %v283, %v389
      %391 = vmatmul.f32.gmra.mxu0 %v204
      %v392 = vpop.f32.mrf.mxu0
      %v393 = vadd.f32 %v283, %v392
      %394 = vmatmul.f32.gmra.mxu0 %v205
      %v395 = vpop.f32.mrf.mxu0
      %v396 = vadd.f32 %v283, %v395
      %397 = vmatmul.f32.gmra.mxu0 %v206
      %v398 = vpop.f32.mrf.mxu0
      %v399 = vadd.f32 %v283, %v398
      %400 = vmatmul.f32.gmra.mxu0 %v207
      %v401 = vpop.f32.mrf.mxu0
      %v402 = vadd.f32 %v283, %v401
      %403 = vmatmul.f32.gmra.mxu0 %v208
      %v404 = vpop.f32.mrf.mxu0
      %v405 = vadd.f32 %v283, %v404
      %406 = vmatmul.f32.gmra.mxu0 %v209
      %v407 = vpop.f32.mrf.mxu0
      %v408 = vadd.f32 %v283, %v407
      %409 = vmatmul.f32.gmra.mxu0 %v210
      %v410 = vpop.f32.mrf.mxu0
      %v411 = vadd.f32 %v283, %v410
      %412 = vmatmul.f32.gmra.mxu0 %v211
      %v413 = vpop.f32.mrf.mxu0
      %v414 = vadd.f32 %v283, %v413
      %415 = vmatmul.f32.gmra.mxu0 %v212
      %v416 = vpop.f32.mrf.mxu0
      %v417 = vadd.f32 %v283, %v416
      %418 = vmatmul.f32.gmra.mxu0 %v213
      %v419 = vpop.f32.mrf.mxu0
      %v420 = vadd.f32 %v283, %v419
      %421 = vmatmul.f32.gmra.mxu0 %v214
      %v422 = vpop.f32.mrf.mxu0
      %v423 = vadd.f32 %v283, %v422
      %424 = vmatmul.f32.gmra.mxu0 %v215
      %v425 = vpop.f32.mrf.mxu0
      %v426 = vadd.f32 %v283, %v425
      %427 = vmatmul.f32.gmra.mxu0 %v216
      %v428 = vpop.f32.mrf.mxu0
      %v429 = vadd.f32 %v283, %v428
      %430 = vmatmul.f32.gmra.mxu0 %v217
      %v431 = vpop.f32.mrf.mxu0
      %v432 = vadd.f32 %v283, %v431
      %433 = vmatmul.f32.gmra.mxu0 %v218
      %v434 = vpop.f32.mrf.mxu0
      %v435 = vadd.f32 %v283, %v434
      %436 = vmatmul.f32.gmra.mxu0 %v219
      %v437 = vpop.f32.mrf.mxu0
      %v438 = vadd.f32 %v283, %v437
      %439 = vmatmul.f32.gmra.mxu0 %v220
      %v440 = vpop.f32.mrf.mxu0
      %v441 = vadd.f32 %v283, %v440
      %442 = vmatmul.f32.gmra.mxu0 %v221
      %v443 = vpop.f32.mrf.mxu0
      %v444 = vadd.f32 %v283, %v443
      %445 = vmatmul.f32.gmra.mxu0 %v222
      %v446 = vpop.f32.mrf.mxu0
      %v447 = vadd.f32 %v283, %v446
      %448 = vmatmul.f32.gmra.mxu0 %v223
      %v449 = vpop.f32.mrf.mxu0
      %v450 = vadd.f32 %v283, %v449
      %451 = vmatmul.f32.gmra.mxu0 %v224
      %v452 = vpop.f32.mrf.mxu0
      %v453 = vadd.f32 %v283, %v452
      %454 = vmatmul.f32.gmra.mxu0 %v225
      %v455 = vpop.f32.mrf.mxu0
      %v456 = vadd.f32 %v283, %v455
      %457 = vmatmul.f32.gmra.mxu0 %v226
      %v458 = vpop.f32.mrf.mxu0
      %v459 = vadd.f32 %v283, %v458
      %460 = vmatmul.f32.gmra.mxu0 %v227
      %v461 = vpop.f32.mrf.mxu0
      %v462 = vadd.f32 %v283, %v461
      %463 = vmatmul.f32.gmra.mxu0 %v228
      %v464 = vpop.f32.mrf.mxu0
      %v465 = vadd.f32 %v283, %v464
      %466 = vmatmul.f32.gmra.mxu0 %v229
      %v467 = vpop.f32.mrf.mxu0
      %v468 = vadd.f32 %v283, %v467
      %469 = vmatmul.f32.gmra.mxu0 %v230
      %v470 = vpop.f32.mrf.mxu0
      %v471 = vadd.f32 %v283, %v470
      %472 = vmatmul.f32.gmra.mxu0 %v231
      %v473 = vpop.f32.mrf.mxu0
      %v474 = vadd.f32 %v283, %v473
      %475 = vmatmul.f32.gmra.mxu0 %v232
      %v476 = vpop.f32.mrf.mxu0
      %v477 = vadd.f32 %v283, %v476
      %478 = vmatmul.f32.gmra.mxu0 %v233
      %v479 = vpop.f32.mrf.mxu0
      %v480 = vadd.f32 %v283, %v479
      %481 = vmatmul.f32.gmra.mxu0 %v234
      %v482 = vpop.f32.mrf.mxu0
      %v483 = vadd.f32 %v283, %v482
      %484 = vmatmul.f32.gmra.mxu0 %v235
      %v485 = vpop.f32.mrf.mxu0
      %v486 = vadd.f32 %v283, %v485
      %487 = vmatmul.f32.gmra.mxu0 %v236
      %v488 = vpop.f32.mrf.mxu0
      %v489 = vadd.f32 %v283, %v488
      %490 = vmatmul.f32.gmra.mxu0 %v237
      %v491 = vpop.f32.mrf.mxu0
      %v492 = vadd.f32 %v283, %v491
      %493 = vmatmul.f32.gmra.mxu0 %v238
      %v494 = vpop.f32.mrf.mxu0
      %v495 = vadd.f32 %v283, %v494
      %496 = vmatmul.f32.gmra.mxu0 %v239
      %v497 = vpop.f32.mrf.mxu0
      %v498 = vadd.f32 %v283, %v497
      %499 = vmatmul.f32.gmra.mxu0 %v240
      %v500 = vpop.f32.mrf.mxu0
      %v501 = vadd.f32 %v283, %v500
      %502 = vmatmul.f32.gmra.mxu0 %v241
      %v503 = vpop.f32.mrf.mxu0
      %v504 = vadd.f32 %v283, %v503
      %505 = vmatmul.f32.gmra.mxu0 %v242
      %v506 = vpop.f32.mrf.mxu0
      %v507 = vadd.f32 %v283, %v506
      %508 = vmatmul.f32.gmra.mxu0 %v243
      %v509 = vpop.f32.mrf.mxu0
      %v510 = vadd.f32 %v283, %v509
      %511 = vmatmul.f32.gmra.mxu0 %v244
      %v512 = vpop.f32.mrf.mxu0
      %v513 = vadd.f32 %v283, %v512
      %514 = vmatmul.f32.gmra.mxu0 %v245
      %v515 = vpop.f32.mrf.mxu0
      %v516 = vadd.f32 %v283, %v515
      %517 = vmatmul.f32.gmra.mxu0 %v246
      %v518 = vpop.f32.mrf.mxu0
      %v519 = vadd.f32 %v283, %v518
      %520 = vmatmul.f32.gmra.mxu0 %v247
      %v521 = vpop.f32.mrf.mxu0
      %v522 = vadd.f32 %v283, %v521
      %523 = vmatmul.f32.gmra.mxu0 %v248
      %v524 = vpop.f32.mrf.mxu0
      %v525 = vadd.f32 %v283, %v524
      %526 = vmatmul.f32.gmra.mxu0 %v249
      %v527 = vpop.f32.mrf.mxu0
      %v528 = vadd.f32 %v283, %v527
      %529 = vmatmul.f32.gmra.mxu0 %v250
      %v530 = vpop.f32.mrf.mxu0
      %v531 = vadd.f32 %v283, %v530
      %532 = vmatmul.f32.gmra.mxu0 %v251
      %v533 = vpop.f32.mrf.mxu0
      %v534 = vadd.f32 %v283, %v533
      %535 = vmatmul.f32.gmra.mxu0 %v252
      %v536 = vpop.f32.mrf.mxu0
      %v537 = vadd.f32 %v283, %v536
      %538 = vmatmul.f32.gmra.mxu0 %v253
      %v539 = vpop.f32.mrf.mxu0
      %v540 = vadd.f32 %v283, %v539
      %541 = vmatmul.f32.gmra.mxu0 %v254
      %v542 = vpop.f32.mrf.mxu0
      %v543 = vadd.f32 %v283, %v542
      %544 = vmatmul.f32.gmra.mxu0 %v255
      %v545 = vpop.f32.mrf.mxu0
      %v546 = vadd.f32 %v283, %v545
      %547 = vmatmul.f32.gmra.mxu0 %v256
      %v548 = vpop.f32.mrf.mxu0
      %v549 = vadd.f32 %v283, %v548
      %550 = vmatmul.f32.gmra.mxu0 %v257
      %v551 = vpop.f32.mrf.mxu0
      %v552 = vadd.f32 %v283, %v551
      %553 = vmatmul.f32.gmra.mxu0 %v258
      %v554 = vpop.f32.mrf.mxu0
      %v555 = vadd.f32 %v283, %v554
      %556 = vmatmul.f32.gmra.mxu0 %v259
      %v557 = vpop.f32.mrf.mxu0
      %v558 = vadd.f32 %v283, %v557
      %559 = vmatmul.f32.gmra.mxu0 %v260
      %v560 = vpop.f32.mrf.mxu0
      %v561 = vadd.f32 %v283, %v560
      %562 = vmatmul.f32.gmra.mxu0 %v261
      %v563 = vpop.f32.mrf.mxu0
      %v564 = vadd.f32 %v283, %v563
      %565 = vmatmul.f32.gmra.mxu0 %v262
      %v566 = vpop.f32.mrf.mxu0
      %v567 = vadd.f32 %v283, %v566
      %568 = vmatmul.f32.gmra.mxu0 %v263
      %v569 = vpop.f32.mrf.mxu0
      %v570 = vadd.f32 %v283, %v569
      %571 = vmatmul.f32.gmra.mxu0 %v264
      %v572 = vpop.f32.mrf.mxu0
      %v573 = vadd.f32 %v283, %v572
      %574 = vdwg.mxu0
      %vm575 = vcmask 97280
      %576 = vst.msk [vmem:[%s172] sm:$0xff] %vm575, %v303
      %577 = vst.msk [vmem:[%s172 + $0x8] sm:$0xff] %vm575, %v306
      %578 = vst.msk [vmem:[%s172 + $0x10] sm:$0xff] %vm575, %v309
      %579 = vst.msk [vmem:[%s172 + $0x18] sm:$0xff] %vm575, %v312
      %580 = vst.msk [vmem:[%s172 + $0x20] sm:$0xff] %vm575, %v315
      %581 = vst.msk [vmem:[%s172 + $0x28] sm:$0xff] %vm575, %v318
      %582 = vst.msk [vmem:[%s172 + $0x30] sm:$0xff] %vm575, %v321
      %583 = vst.msk [vmem:[%s172 + $0x38] sm:$0xff] %vm575, %v324
      %584 = vst.msk [vmem:[%s172 + $0x40] sm:$0xff] %vm575, %v327
      %585 = vst.msk [vmem:[%s172 + $0x48] sm:$0xff] %vm575, %v330
      %586 = vst.msk [vmem:[%s172 + $0x50] sm:$0xff] %vm575, %v333
      %587 = vst.msk [vmem:[%s172 + $0x58] sm:$0xff] %vm575, %v336
      %588 = vst.msk [vmem:[%s172 + $0x60] sm:$0xff] %vm575, %v339
      %589 = vst.msk [vmem:[%s172 + $0x68] sm:$0xff] %vm575, %v342
      %590 = vst.msk [vmem:[%s172 + $0x70] sm:$0xff] %vm575, %v345
      %591 = vst.msk [vmem:[%s172 + $0x78] sm:$0xff] %vm575, %v348
      %592 = vst.msk [vmem:[%s172 + $0x80] sm:$0xff] %vm575, %v351
      %593 = vst.msk [vmem:[%s172 + $0x88] sm:$0xff] %vm575, %v354
      %594 = vst.msk [vmem:[%s172 + $0x90] sm:$0xff] %vm575, %v357
      %595 = vst.msk [vmem:[%s172 + $0x98] sm:$0xff] %vm575, %v360
      %596 = vst.msk [vmem:[%s172 + $0xa0] sm:$0xff] %vm575, %v363
      %597 = vst.msk [vmem:[%s172 + $0xa8] sm:$0xff] %vm575, %v366
      %598 = vst.msk [vmem:[%s172 + $0xb0] sm:$0xff] %vm575, %v369
      %599 = vst.msk [vmem:[%s172 + $0xb8] sm:$0xff] %vm575, %v372
      %600 = vst.msk [vmem:[%s172 + $0xc0] sm:$0xff] %vm575, %v375
      %601 = vst.msk [vmem:[%s172 + $0xc8] sm:$0xff] %vm575, %v378
      %602 = vst.msk [vmem:[%s172 + $0xd0] sm:$0xff] %vm575, %v381
      %603 = vst.msk [vmem:[%s172 + $0xd8] sm:$0xff] %vm575, %v384
      %604 = vst.msk [vmem:[%s172 + $0xe0] sm:$0xff] %vm575, %v387
      %605 = vst.msk [vmem:[%s172 + $0xe8] sm:$0xff] %vm575, %v390
      %606 = vst.msk [vmem:[%s172 + $0xf0] sm:$0xff] %vm575, %v393
      %607 = vst.msk [vmem:[%s172 + $0xf8] sm:$0xff] %vm575, %v396
      %608 = vst.msk [vmem:[%s172 + $0x100] sm:$0xff] %vm575, %v399
      %609 = vst.msk [vmem:[%s172 + $0x108] sm:$0xff] %vm575, %v402
      %610 = vst.msk [vmem:[%s172 + $0x110] sm:$0xff] %vm575, %v405
      %611 = vst.msk [vmem:[%s172 + $0x118] sm:$0xff] %vm575, %v408
      %612 = vst.msk [vmem:[%s172 + $0x120] sm:$0xff] %vm575, %v411
      %613 = vst.msk [vmem:[%s172 + $0x128] sm:$0xff] %vm575, %v414
      %614 = vst.msk [vmem:[%s172 + $0x130] sm:$0xff] %vm575, %v417
      %615 = vst.msk [vmem:[%s172 + $0x138] sm:$0xff] %vm575, %v420
      %616 = vst.msk [vmem:[%s172 + $0x140] sm:$0xff] %vm575, %v423
      %617 = vst.msk [vmem:[%s172 + $0x148] sm:$0xff] %vm575, %v426
      %618 = vst.msk [vmem:[%s172 + $0x150] sm:$0xff] %vm575, %v429
      %619 = vst.msk [vmem:[%s172 + $0x158] sm:$0xff] %vm575, %v432
      %620 = vst.msk [vmem:[%s172 + $0x160] sm:$0xff] %vm575, %v435
      %621 = vst.msk [vmem:[%s172 + $0x168] sm:$0xff] %vm575, %v438
      %622 = vst.msk [vmem:[%s172 + $0x170] sm:$0xff] %vm575, %v441
      %623 = vst.msk [vmem:[%s172 + $0x178] sm:$0xff] %vm575, %v444
      %624 = vst.msk [vmem:[%s172 + $0x180] sm:$0xff] %vm575, %v447
      %625 = vst.msk [vmem:[%s172 + $0x188] sm:$0xff] %vm575, %v450
      %626 = vst.msk [vmem:[%s172 + $0x190] sm:$0xff] %vm575, %v453
      %627 = vst.msk [vmem:[%s172 + $0x198] sm:$0xff] %vm575, %v456
      %628 = vst.msk [vmem:[%s172 + $0x1a0] sm:$0xff] %vm575, %v459
      %629 = vst.msk [vmem:[%s172 + $0x1a8] sm:$0xff] %vm575, %v462
      %630 = vst.msk [vmem:[%s172 + $0x1b0] sm:$0xff] %vm575, %v465
      %631 = vst.msk [vmem:[%s172 + $0x1b8] sm:$0xff] %vm575, %v468
      %632 = vst.msk [vmem:[%s172 + $0x1c0] sm:$0xff] %vm575, %v471
      %633 = vst.msk [vmem:[%s172 + $0x1c8] sm:$0xff] %vm575, %v474
      %634 = vst.msk [vmem:[%s172 + $0x1d0] sm:$0xff] %vm575, %v477
      %635 = vst.msk [vmem:[%s172 + $0x1d8] sm:$0xff] %vm575, %v480
      %636 = vst.msk [vmem:[%s172 + $0x1e0] sm:$0xff] %vm575, %v483
      %637 = vst.msk [vmem:[%s172 + $0x1e8] sm:$0xff] %vm575, %v486
      %638 = vst.msk [vmem:[%s172 + $0x1f0] sm:$0xff] %vm575, %v489
      %639 = vst.msk [vmem:[%s172 + $0x1f8] sm:$0xff] %vm575, %v492
      %640 = vst.msk [vmem:[%s172 + $0x200] sm:$0xff] %vm575, %v495
      %641 = vst.msk [vmem:[%s172 + $0x208] sm:$0xff] %vm575, %v498
      %642 = vst.msk [vmem:[%s172 + $0x210] sm:$0xff] %vm575, %v501
      %643 = vst.msk [vmem:[%s172 + $0x218] sm:$0xff] %vm575, %v504
      %644 = vst.msk [vmem:[%s172 + $0x220] sm:$0xff] %vm575, %v507
      %645 = vst.msk [vmem:[%s172 + $0x228] sm:$0xff] %vm575, %v510
      %646 = vst.msk [vmem:[%s172 + $0x230] sm:$0xff] %vm575, %v513
      %647 = vst.msk [vmem:[%s172 + $0x238] sm:$0xff] %vm575, %v516
      %648 = vst.msk [vmem:[%s172 + $0x240] sm:$0xff] %vm575, %v519
      %649 = vst.msk [vmem:[%s172 + $0x248] sm:$0xff] %vm575, %v522
      %650 = vst.msk [vmem:[%s172 + $0x250] sm:$0xff] %vm575, %v525
      %651 = vst.msk [vmem:[%s172 + $0x258] sm:$0xff] %vm575, %v528
      %652 = vst.msk [vmem:[%s172 + $0x260] sm:$0xff] %vm575, %v531
      %653 = vst.msk [vmem:[%s172 + $0x268] sm:$0xff] %vm575, %v534
      %654 = vst.msk [vmem:[%s172 + $0x270] sm:$0xff] %vm575, %v537
      %655 = vst.msk [vmem:[%s172 + $0x278] sm:$0xff] %vm575, %v540
      %656 = vst.msk [vmem:[%s172 + $0x280] sm:$0xff] %vm575, %v543
      %657 = vst.msk [vmem:[%s172 + $0x288] sm:$0xff] %vm575, %v546
      %658 = vst.msk [vmem:[%s172 + $0x290] sm:$0xff] %vm575, %v549
      %659 = vst.msk [vmem:[%s172 + $0x298] sm:$0xff] %vm575, %v552
      %660 = vst.msk [vmem:[%s172 + $0x2a0] sm:$0xff] %vm575, %v555
      %661 = vst.msk [vmem:[%s172 + $0x2a8] sm:$0xff] %vm575, %v558
      %662 = vst.msk [vmem:[%s172 + $0x2b0] sm:$0xff] %vm575, %v561
      %663 = vst.msk [vmem:[%s172 + $0x2b8] sm:$0xff] %vm575, %v564
      %664 = vst.msk [vmem:[%s172 + $0x2c0] sm:$0xff] %vm575, %v567
      %665 = vst.msk [vmem:[%s172 + $0x2c8] sm:$0xff] %vm575, %v570
      %666 = vst.msk [vmem:[%s172 + $0x2d0] sm:$0xff] %vm575, %v573
      %s667 = smul.u32 91, %s14
      %p668 = scmp.lt.s32.totalorder %s667, 272
      %s669 = scalar_select %p668, %s667, 272
      %s670 = smul.addr %s669, 8
      %s671 = scalar_lea.vmem %s3, %s670
      // Predicated region
      $region33: #{betavae_forward.17} parent=31 // pred_check
        %p672 = pneg %p100
      $region34: #{betavae_forward.17} parent=31 // pred_check_branch
        %674 = sbr.rel (%p672) target = $region36
      $region35: #{betavae_forward.17} parent=31 // pred_region
        %s675 = smul.u32 91, %s14
      $region36: #{betavae_forward.17} parent=31 // pred_fallthru
        _
    $region32: #{betavae_forward.17} parent=5 // pred_fallthru
      _
    %p676 = scmp.le.s32.totalorder 2, %s9
    // Predicated region
    $region37: #{betavae_forward.17} parent=5 // pred_check
      %p677 = pneg %p676
    $region38: #{betavae_forward.17} parent=5 // pred_check_branch
      %679 = sbr.rel (%p677) target = $region40
    $region39: #{betavae_forward.17} parent=5 // pred_region
      %s680 = ssub.s32 %s9, 2
      // Predicated region
      $region41: #{betavae_forward.17} parent=39 // pred_check
        %p681 = pneg %p106
      $region42: #{betavae_forward.17} parent=39 // pred_check_branch
        %683 = sbr.rel (%p681) target = $region44
      $region43: #{betavae_forward.17} parent=39 // pred_region
        %s684 = smul.u32 91, %s15
        %p685 = scmp.lt.s32.totalorder %s684, 272
        %s686 = scalar_select %p685, %s684, 272
        %s687 = smul.addr %s686, 8
        %s688 = scalar_lea.vmem %s3, %s687
      $region44: #{betavae_forward.17} parent=39 // pred_fallthru
        _
    $region40: #{betavae_forward.17} parent=5 // pred_fallthru
      _
  $region6: #{betavae_forward.17} parent=0 // loop_footer
    %s13 = sadd.s32 1, %s9
  $region7: #{betavae_forward.17} parent=0 // loop_footer_branch
    %8 = sbr.rel target = $region3
  $region8: #{betavae_forward.17} parent=0 // loop_exit
    _

</llo_original>
